<compile_context>
chip_gen: v6e
topology: v6e:2x2x1
jax: 0.10.0
libtpu: 0.0.40
codegen_flags: <defaults>
</compile_context>

<pallas_src>
import functools

import jax
import jax.numpy as jnp
from jax.experimental import pallas as pl
from jax.experimental.pallas import tpu as pltpu


# -----------------------------------------------------------------------------
# Fused kernel: conv3x3(+BN scale folded)+bias+ReLU -> conv3x3+bias+ReLU
# on one row tile, with a VMEM halo scratch between the two convs.
# -----------------------------------------------------------------------------
def _upblock_conv_kernel(xb_ref, xhalo_ref, w1_ref, b1_ref, w2_ref, b2_ref,
                         o_ref, mid_ref, *, h_valid, n_row_tiles):
    """
    xb_ref   : (1, 1, TH, C1, W+2)   bf16  body rows of this tile (row, chan, width)
    xhalo_ref: (1, 1, 4,  C1, W+2)   bf16  rows t*TH-2, t*TH-1, t*TH+TH, t*TH+TH+1
                                            (zeroed outside the real image)
    w1_ref   : (3, Cmid, 3*C1)       bf16  conv1 taps, [kx][co, ky*C1 + c], BN1 scale folded
    b1_ref   : (Cmid, 1)             f32   folded BN1 shift
    w2_ref   : (3, Cout, 3*Cmid)     bf16  conv2 taps, BN2 scale folded
    b2_ref   : (Cout, 1)             f32   folded BN2 shift
    o_ref    : (1, Cout, TH, W)      bf16  output rows (final NCHW layout)
    mid_ref  : (TH+2, Cmid, W+2)     bf16  conv1 output + halo (VMEM scratch)
    """
    TH = o_ref.shape[2]
    W = o_ref.shape[3]
    Wp = W + 2
    C1 = xb_ref.shape[3]
    Cmid = mid_ref.shape[1]
    Cout = o_ref.shape[1]

    t = pl.program_id(1)

    w1 = w1_ref[...]                                   # (3, Cmid, 3*C1)
    w2 = w2_ref[...]                                   # (3, Cout, 3*Cmid)
    # Hoisted bias broadcasts (JAX does not CSE broadcast_in_dim in a loop).
    b1w = jnp.broadcast_to(b1_ref[...], (Cmid, W)).astype(jnp.float32)
    b2w = jnp.broadcast_to(b2_ref[...], (Cout, W)).astype(jnp.float32)

    # Zero the whole mid scratch once with full-width stores.  This provides
    # conv2's zero-padding columns (0, W+1) and the zero top/bottom padding
    # rows at the image boundary (rows skipped by the pl.when guards below).
    mid_ref[...] = jnp.zeros_like(mid_ref)

    def rows3(jj):
        """Input rows jj-2, jj-1, jj (tile-local), flattened to (3*C1, W+2)."""
        lo = jj - 2
        if lo >= 0 and jj <= TH - 1:                   # fast path: all body rows
            return xb_ref[0, 0, lo:lo + 3, :, :].reshape(3 * C1, Wp)
        parts = []
        for r in (jj - 2, jj - 1, jj):
            if r < 0:                                  # top halo rows 0, 1
                parts.append(xhalo_ref[0, 0, 2 + r, :, :])
            elif r >= TH:                              # bottom halo rows 2, 3
                parts.append(xhalo_ref[0, 0, 2 + (r - TH), :, :])
            else:
                parts.append(xb_ref[0, 0, r, :, :])
        return jnp.concatenate(parts, axis=0)          # (3*C1, W+2)

    # ---- conv1 (+ folded BN1) + ReLU -> mid scratch --------------------------
    def conv1_row(jj):
        flat = rows3(jj)                               # (3*C1, W+2) bf16
        acc = b1w                                      # start from the bias
        for kx in range(3):                            # 3 dots, K = 3*C1
            acc = acc + jnp.dot(w1[kx], flat[:, kx:kx + W],
                                preferred_element_type=jnp.float32)
        mid_ref[jj, :, 1:W + 1] = jnp.maximum(acc, 0.0).astype(mid_ref.dtype)

    # NOTE: unrolled Python loops (tile_h is kept modest by _pick_tile_h);
    # switch to lax.fori_loop with dynamic row indexing for very large tiles.
    for jj in range(TH + 2):
        # mid row jj of tile t is conv1's output at global row g; it must stay
        # zero (conv2's padding) when g is outside the real image.
        statically_safe = (jj >= 1) and \
            ((n_row_tiles - 1) * TH + jj - 1 < h_valid)
        if statically_safe:
            conv1_row(jj)
        else:
            g = t * TH + (jj - 1)

            @pl.when(jnp.logical_and(g >= 0, g < h_valid))
            def _():
                conv1_row(jj)

    # ---- conv2 (+ folded BN2) + ReLU -> output tile (direct NCHW) -------------
    for r in range(TH):
        flat2 = mid_ref[r:r + 3, :, :].reshape(3 * Cmid, Wp)   # bf16
        acc = b2w
        for kx in range(3):                            # 3 dots, K = 3*Cmid
            acc = acc + jnp.dot(w2[kx], flat2[:, kx:kx + W],
                                preferred_element_type=jnp.float32)
        o_ref[0, :, r, :] = jnp.maximum(acc, 0.0).astype(o_ref.dtype)


# -----------------------------------------------------------------------------
# Bilinear x2 upsample (align_corners=False), NCHW, plain-JAX glue.
# -----------------------------------------------------------------------------
def bilinear_upsample_x2(x_nchw):
    N, C, H, W = x_nchw.shape

    def coords(in_size):
        src = (jnp.arange(2 * in_size, dtype=jnp.float32) + 0.5) * 0.5 - 0.5
        src = jnp.clip(src, 0.0, in_size - 1)
        i0 = jnp.floor(src).astype(jnp.int32)
        i1 = jnp.minimum(i0 + 1, in_size - 1)
        return i0, i1, src - i0.astype(jnp.float32)

    h0, h1, lh = coords(H)
    w0, w1, lw = coords(W)
    xr = (x_nchw[:, :, h0, :] * (1.0 - lh)[None, None, :, None]
          + x_nchw[:, :, h1, :] * lh[None, None, :, None])
    out = (xr[:, :, :, w0] * (1.0 - lw)[None, None, None, :]
           + xr[:, :, :, w1] * lw[None, None, None, :])
    return out


# -----------------------------------------------------------------------------
# Row-tile size: VMEM-budget aware (default budget is v7x-safe), multiple of 16
# (bf16 sublane packing).  H no longer has to divide by tile_h (rows padded).
# -----------------------------------------------------------------------------
def _pick_tile_h(H, C1, Cmid, Cout, W, vmem_budget_bytes=12 * 1024 * 1024):
    if H <= 16:
        return H
    # bf16 bytes per tile row held per grid step: double-buffered body + out,
    # single mid scratch (halo / weights are negligible).
    per_row = 2 * (2 * C1 * (W + 2) + Cmid * (W + 2) + 2 * Cout * W)
    th = vmem_budget_bytes // max(per_row, 1)
    th = max(16, min(256, th - th % 16))
    return min(th, ((H + 15) // 16) * 16)


# -----------------------------------------------------------------------------
# Wrapper: upsample -> concat -> fused conv1/conv2 Pallas kernel.
# -----------------------------------------------------------------------------
def upsample_block(params, x_nchw, skip_nchw=None, tile_h=None):
    # bf16 immediately after upsample/concat: every wrapper pass moves bf16.
    up = bilinear_upsample_x2(x_nchw).astype(jnp.bfloat16)
    if skip_nchw is not None:
        x = jnp.concatenate([up, skip_nchw.astype(jnp.bfloat16)], axis=1)
    else:
        x = up
    N, C1, H, W = x.shape

    w1, b1, w2, b2 = params["w1"], params["b1"], params["w2"], params["b2"]
    Cmid = w1.shape[1]
    Cout = w2.shape[1]

    if tile_h is None:
        tile_h = _pick_tile_h(H, C1, Cmid, Cout, W)
    T = -(-H // tile_h)                 # number of row tiles (H padded up)
    Hp = T * tile_h
    Wp = W + 2

    # Row-major (N, H, C, W) layout, rows zero-padded to Hp, width padded by 1
    # for conv1.  The body tiles are a *free* reshape (no duplicated rows).
    xh = jnp.pad(jnp.transpose(x, (0, 2, 1, 3)),
                 ((0, 0), (0, Hp - H), (0, 0), (1, 1)))       # (N, Hp, C1, W+2)
    x_body = xh.reshape(N, T, tile_h, C1, Wp)

    # Tiny per-tile halo tensor (4 rows / tile), zeroed outside the real image.
    tops = jnp.arange(T, dtype=jnp.int32) * tile_h
    rel = jnp.asarray([-2, -1, tile_h, tile_h + 1], dtype=jnp.int32)
    hrows = tops[:, None] + rel[None, :]                      # (T, 4)
    valid = (hrows >= 0) & (hrows < H)
    x_halo = jnp.take(xh, jnp.clip(hrows, 0, Hp - 1).reshape(-1), axis=1)
    x_halo = (x_halo.reshape(N, T, 4, C1, Wp)
              * valid.astype(jnp.bfloat16)[None, :, :, None, None])

    kernel = functools.partial(_upblock_conv_kernel, h_valid=H, n_row_tiles=T)

    # Explicit VMEM budget (v5e scoped default is only 16 MiB; v7x physical 64).
    vmem_need = (2 * tile_h * C1 * Wp * 2 + 2 * 4 * C1 * Wp * 2
                 + 2 * Cout * tile_h * W * 2 + (tile_h + 2) * Cmid * Wp * 2
                 + (w1.size + w2.size) * 2 + (b1.size + b2.size) * 4)
    vmem_limit = int(min(64 << 20, max(32 << 20, 4 * vmem_need)))

    out = pl.pallas_call(
        kernel,
        out_shape=jax.ShapeDtypeStruct((N, Cout, Hp, W), jnp.bfloat16),
        grid_spec=pltpu.PrefetchScalarGridSpec(
            num_scalar_prefetch=0,
            grid=(N, T),
            in_specs=[
                pl.BlockSpec((1, 1, tile_h, C1, Wp), lambda n, t: (n, t, 0, 0, 0)),
                pl.BlockSpec((1, 1, 4, C1, Wp), lambda n, t: (n, t, 0, 0, 0)),
                pl.BlockSpec(w1.shape, lambda n, t: (0, 0, 0)),
                pl.BlockSpec(b1.shape, lambda n, t: (0, 0)),
                pl.BlockSpec(w2.shape, lambda n, t: (0, 0, 0)),
                pl.BlockSpec(b2.shape, lambda n, t: (0, 0)),
            ],
            # Direct NCHW output: no wrapper-side transpose pass.
            out_specs=pl.BlockSpec((1, Cout, tile_h, W),
                                   lambda n, t: (n, 0, t, 0)),
            scratch_shapes=[
                pltpu.VMEM((tile_h + 2, Cmid, Wp), jnp.bfloat16)],
        ),
        compiler_params=pltpu.CompilerParams(
            dimension_semantics=("parallel", "parallel"),
            vmem_limit_bytes=vmem_limit),
    )(x_body, x_halo, w1, b1, w2, b2)

    if Hp != H:
        out = out[:, :, :H, :]
    return out                                            # (N, Cout, H, W) bf16


# -----------------------------------------------------------------------------
# Parameters (deterministic, synthetic).  PyTorch conv weight (Cout, Cin, 3, 3)
# with the BN scale pre-folded, stored kx-major: w[kx][co, ky*Cin + c]; BN shift
# stays a separate f32 per-channel bias.
# -----------------------------------------------------------------------------
def make_params(key, ch_in, ch_out, skip_in, eps=1e-5):
    cin1 = ch_in + skip_in
    k1, k2, k3, k4 = jax.random.split(key, 4)
    w1_pt = 0.1 * jax.random.normal(k1, (ch_out, cin1, 3, 3), jnp.float32)
    w2_pt = 0.1 * jax.random.normal(k2, (ch_out, ch_out, 3, 3), jnp.float32)

    def bn(k, c):
        kg, kb, km, kv = jax.random.split(k, 4)
        gamma = 1.0 + 0.1 * jax.random.normal(kg, (c,), jnp.float32)
        beta = 0.1 * jax.random.normal(kb, (c,), jnp.float32)
        mean = 0.1 * jax.random.normal(km, (c,), jnp.float32)
        var = jnp.abs(jax.random.normal(kv, (c,), jnp.float32)) + 0.5
        scale = gamma / jnp.sqrt(var + eps)
        shift = beta - mean * scale
        return scale, shift

    s1, sh1 = bn(k3, ch_out)
    s2, sh2 = bn(k4, ch_out)

    def fold(w_pt, scale):
        co, ci, _, _ = w_pt.shape
        w = w_pt * scale.reshape(co, 1, 1, 1)          # BN scale folded in
        # kx-major folded layout: out[kx, co, ky*ci + c] = w[co, c, ky, kx]
        return (jnp.transpose(w, (3, 0, 2, 1))
                .reshape(3, co, 3 * ci).astype(jnp.bfloat16))

    return dict(w1=fold(w1_pt, s1), b1=sh1.reshape(ch_out, 1),
                w2=fold(w2_pt, s2), b2=sh2.reshape(ch_out, 1))


# -----------------------------------------------------------------------------
# Pure-XLA reference (same bf16 quantization points as the kernel).
# -----------------------------------------------------------------------------
def upsample_block_reference(params, x_nchw, skip_nchw=None):
    x = bilinear_upsample_x2(x_nchw)
    if skip_nchw is not None:
        x = jnp.concatenate([x, skip_nchw], axis=1)

    def unfold(wf):                                   # (3, Co, 3*Ci) -> OIHW
        _, co, k = wf.shape
        ci = k // 3
        w = wf.astype(jnp.float32).reshape(3, co, 3, ci)   # (kx, co, ky, ci)
        return jnp.transpose(w, (1, 3, 2, 0))              # (co, ci, ky, kx)

    def conv_bias_relu(xin, wf, b):
        y = jax.lax.conv_general_dilated(
            xin.astype(jnp.bfloat16), unfold(wf).astype(jnp.bfloat16),
            window_strides=(1, 1), padding="SAME",
            dimension_numbers=("NCHW", "OIHW", "NCHW"),
            preferred_element_type=jnp.float32)
        return jnp.maximum(y + b.reshape(1, -1, 1, 1), 0.0)

    y = conv_bias_relu(x, params["w1"], params["b1"])
    return conv_bias_relu(y, params["w2"], params["b2"])


if __name__ == "__main__":
    key = jax.random.PRNGKey(0)
    kx, ks, kp = jax.random.split(key, 3)

    # Shapes consistent with the module: ch_in=16, skip_in=8,
    # ch_out = ch_in // 2 = 8, spatial 16 -> upsampled 32.
    N, ch_in, H0, W0 = 2, 16, 16, 16
    skip_in = 8
    ch_out = ch_in // 2

    x = jax.random.normal(kx, (N, ch_in, H0, W0), jnp.float32)               # NCHW
    skip = jax.random.normal(ks, (N, skip_in, 2 * H0, 2 * W0), jnp.float32)  # NCHW
    params = make_params(kp, ch_in, ch_out, skip_in)

    # tile_h=16 -> 2 row tiles per image: exercises the halo path; (N, T)=(2, 2)
    # keeps both v7x TensorCores busy under the "parallel" grid semantics.
    fwd = jax.jit(lambda a, s: upsample_block(params, a, s, tile_h=16))
    out = jax.block_until_ready(fwd(x, skip))

    assert out.shape == (N, ch_out, 2 * H0, 2 * W0), out.shape
    out_f32 = out.astype(jnp.float32)
    assert bool(jnp.all(out_f32 >= 0.0))              # ReLU output

    ref = upsample_block_reference(params, x, skip)
    max_err = float(jnp.max(jnp.abs(out_f32 - ref)))
    # 5e-2 tolerance covers the bf16 output quantization (reference stays f32).
    assert max_err < 5e-2, max_err

    print("KERNEL_OK")
</pallas_src>

<mosaic_0001>
module attributes {stable_mosaic.version = 11 : i64} {
  func.func @_upblock_conv_kernel(%arg0: i32, %arg1: i32, %arg2: memref<1x1x16x24x34xbf16, #tpu.memory_space<vmem>>, %arg3: memref<1x1x4x24x34xbf16, #tpu.memory_space<vmem>>, %arg4: memref<3x8x72xbf16, #tpu.memory_space<vmem>>, %arg5: memref<8x1xf32, #tpu.memory_space<vmem>>, %arg6: memref<3x8x24xbf16, #tpu.memory_space<vmem>>, %arg7: memref<8x1xf32, #tpu.memory_space<vmem>>, %arg8: memref<1x8x16x32xbf16, #tpu.memory_space<vmem>>, %arg9: memref<18x8x34xbf16, #tpu.memory_space<vmem>>) attributes {dimension_semantics = [#tpu.dimension_semantics<parallel>, #tpu.dimension_semantics<parallel>], iteration_bounds = array<i64: 2, 2>, scalar_prefetch = 0 : i64, scratch_operands = 1 : i64, tpu.core_type = #tpu.core_type<tc>, window_params = [{transform_indices = @transform_0, window_bounds = array<i64: 1, 1, 16, 24, 34>}, {transform_indices = @transform_1, window_bounds = array<i64: 1, 1, 4, 24, 34>}, {pipeline_mode = #tpu.pipeline_mode<synchronous>, transform_indices = @transform_2, window_bounds = array<i64: 3, 8, 72>}, {pipeline_mode = #tpu.pipeline_mode<synchronous>, transform_indices = @transform_3, window_bounds = array<i64: 8, 1>}, {pipeline_mode = #tpu.pipeline_mode<synchronous>, transform_indices = @transform_4, window_bounds = array<i64: 3, 8, 24>}, {pipeline_mode = #tpu.pipeline_mode<synchronous>, transform_indices = @transform_5, window_bounds = array<i64: 8, 1>}, {transform_indices = @transform_6, window_bounds = array<i64: 1, 8, 16, 32>}]} {
    %c0 = arith.constant 0 : index
    %c0_0 = arith.constant 0 : index
    %c0_1 = arith.constant 0 : index
    %0 = vector.load %arg4[%c0, %c0_0, %c0_1] : memref<3x8x72xbf16, #tpu.memory_space<vmem>>, vector<3x8x72xbf16>
    %c0_2 = arith.constant 0 : index
    %c0_3 = arith.constant 0 : index
    %c0_4 = arith.constant 0 : index
    %1 = vector.load %arg6[%c0_2, %c0_3, %c0_4] : memref<3x8x24xbf16, #tpu.memory_space<vmem>>, vector<3x8x24xbf16>
    %c0_5 = arith.constant 0 : index
    %c0_6 = arith.constant 0 : index
    %2 = vector.load %arg5[%c0_5, %c0_6] : memref<8x1xf32, #tpu.memory_space<vmem>>, vector<8x1xf32>
    %3 = vector.shape_cast %2 : vector<8x1xf32> to vector<8x1xf32>
    %4 = vector.broadcast %3 : vector<8x1xf32> to vector<8x32xf32>
    %c0_7 = arith.constant 0 : index
    %c0_8 = arith.constant 0 : index
    %5 = vector.load %arg7[%c0_7, %c0_8] : memref<8x1xf32, #tpu.memory_space<vmem>>, vector<8x1xf32>
    %6 = vector.shape_cast %5 : vector<8x1xf32> to vector<8x1xf32>
    %7 = vector.broadcast %6 : vector<8x1xf32> to vector<8x32xf32>
    %cst = arith.constant 0.000000e+00 : bf16
    %8 = vector.broadcast %cst : bf16 to vector<18x8x34xbf16>
    %c0_9 = arith.constant 0 : index
    %c0_10 = arith.constant 0 : index
    %c0_11 = arith.constant 0 : index
    %9 = vector.load %arg9[%c0_9, %c0_10, %c0_11] : memref<18x8x34xbf16, #tpu.memory_space<vmem>>, vector<18x8x34xbf16>
    tpu.vector_store %arg9[%c0_9, %c0_10, %c0_11], %8 {strides = array<i32>} : memref<18x8x34xbf16, #tpu.memory_space<vmem>>, vector<18x8x34xbf16>,
    %c16_i32 = arith.constant 16 : i32
    %10 = arith.muli %arg1, %c16_i32 : i32
    %c-1_i32 = arith.constant -1 : i32
    %11 = arith.addi %10, %c-1_i32 : i32
    %c0_i32 = arith.constant 0 : i32
    %12 = arith.cmpi sge, %11, %c0_i32 : i32
    %c32_i32 = arith.constant 32 : i32
    %13 = arith.cmpi slt, %11, %c32_i32 : i32
    %14 = arith.andi %12, %13 : i1
    %15 = arith.extui %14 : i1 to i32
    %c0_i32_12 = arith.constant 0 : i32
    %16 = arith.cmpi ne, %15, %c0_i32_12 : i32
    scf.if %16 {
      %c0_390 = arith.constant 0 : index
      %c0_391 = arith.constant 0 : index
      %c0_392 = arith.constant 0 : index
      %c0_393 = arith.constant 0 : index
      %c0_394 = arith.constant 0 : index
      %784 = vector.load %arg3[%c0_390, %c0_391, %c0_392, %c0_393, %c0_394] : memref<1x1x4x24x34xbf16, #tpu.memory_space<vmem>>, vector<1x1x1x24x34xbf16>
      %785 = vector.shape_cast %784 : vector<1x1x1x24x34xbf16> to vector<24x34xbf16>
      %c0_395 = arith.constant 0 : index
      %c0_396 = arith.constant 0 : index
      %c1_397 = arith.constant 1 : index
      %c0_398 = arith.constant 0 : index
      %c0_399 = arith.constant 0 : index
      %786 = vector.load %arg3[%c0_395, %c0_396, %c1_397, %c0_398, %c0_399] : memref<1x1x4x24x34xbf16, #tpu.memory_space<vmem>>, vector<1x1x1x24x34xbf16>
      %787 = vector.shape_cast %786 : vector<1x1x1x24x34xbf16> to vector<24x34xbf16>
      %c0_400 = arith.constant 0 : index
      %c0_401 = arith.constant 0 : index
      %c0_402 = arith.constant 0 : index
      %c0_403 = arith.constant 0 : index
      %c0_404 = arith.constant 0 : index
      %788 = vector.load %arg2[%c0_400, %c0_401, %c0_402, %c0_403, %c0_404] : memref<1x1x16x24x34xbf16, #tpu.memory_space<vmem>>, vector<1x1x1x24x34xbf16>
      %789 = vector.shape_cast %788 : vector<1x1x1x24x34xbf16> to vector<24x34xbf16>
      %790 = tpu.concatenate %785, %787, %789 in 0 : vector<24x34xbf16>, vector<24x34xbf16>, vector<24x34xbf16> -> vector<72x34xbf16>
      %791 = vector.extract_strided_slice %0 {offsets = [0, 0, 0], sizes = [1, 8, 72], strides = [1, 1, 1]} : vector<3x8x72xbf16> to vector<1x8x72xbf16>
      %792 = vector.shape_cast %791 : vector<1x8x72xbf16> to vector<8x72xbf16>
      %793 = vector.extract_strided_slice %790 {offsets = [0, 0], sizes = [72, 32], strides = [1, 1]} : vector<72x34xbf16> to vector<72x32xbf16>
      %cst_405 = arith.constant dense<0.000000e+00> : vector<8x32xf32>
      %794 = tpu.matmul %792, %793, %cst_405 {dimension_numbers = #tpu.dot_dimension_numbers<[1], [0], [0], [1], [0, 0, 1, 1], [], []>} : vector<8x72xbf16>, vector<72x32xbf16>, vector<8x32xf32> -> vector<8x32xf32>
      %795 = arith.addf %4, %794 : vector<8x32xf32>
      %796 = vector.extract_strided_slice %0 {offsets = [1, 0, 0], sizes = [1, 8, 72], strides = [1, 1, 1]} : vector<3x8x72xbf16> to vector<1x8x72xbf16>
      %797 = vector.shape_cast %796 : vector<1x8x72xbf16> to vector<8x72xbf16>
      %798 = vector.extract_strided_slice %790 {offsets = [0, 1], sizes = [72, 32], strides = [1, 1]} : vector<72x34xbf16> to vector<72x32xbf16>
      %cst_406 = arith.constant dense<0.000000e+00> : vector<8x32xf32>
      %799 = tpu.matmul %797, %798, %cst_406 {dimension_numbers = #tpu.dot_dimension_numbers<[1], [0], [0], [1], [0, 0, 1, 1], [], []>} : vector<8x72xbf16>, vector<72x32xbf16>, vector<8x32xf32> -> vector<8x32xf32>
      %800 = arith.addf %795, %799 : vector<8x32xf32>
      %801 = vector.extract_strided_slice %0 {offsets = [2, 0, 0], sizes = [1, 8, 72], strides = [1, 1, 1]} : vector<3x8x72xbf16> to vector<1x8x72xbf16>
      %802 = vector.shape_cast %801 : vector<1x8x72xbf16> to vector<8x72xbf16>
      %803 = vector.extract_strided_slice %790 {offsets = [0, 2], sizes = [72, 32], strides = [1, 1]} : vector<72x34xbf16> to vector<72x32xbf16>
      %cst_407 = arith.constant dense<0.000000e+00> : vector<8x32xf32>
      %804 = tpu.matmul %802, %803, %cst_407 {dimension_numbers = #tpu.dot_dimension_numbers<[1], [0], [0], [1], [0, 0, 1, 1], [], []>} : vector<8x72xbf16>, vector<72x32xbf16>, vector<8x32xf32> -> vector<8x32xf32>
      %805 = arith.addf %800, %804 : vector<8x32xf32>
      %cst_408 = arith.constant 0.000000e+00 : f32
      %806 = vector.broadcast %cst_408 : f32 to vector<8x32xf32>
      %807 = arith.maximumf %805, %806 : vector<8x32xf32>
      %808 = arith.truncf %807 : vector<8x32xf32> to vector<8x32xbf16>
      %c0_409 = arith.constant 0 : index
      %c0_410 = arith.constant 0 : index
      %c1_411 = arith.constant 1 : index
      %809 = vector.load %arg9[%c0_409, %c0_410, %c1_411] : memref<18x8x34xbf16, #tpu.memory_space<vmem>>, vector<1x8x32xbf16>
      %810 = vector.shape_cast %809 : vector<1x8x32xbf16> to vector<8x32xbf16>
      %811 = vector.shape_cast %808 : vector<8x32xbf16> to vector<1x8x32xbf16>
      tpu.vector_store %arg9[%c0_409, %c0_410, %c1_411], %811 {strides = array<i32>} : memref<18x8x34xbf16, #tpu.memory_space<vmem>>, vector<1x8x32xbf16>,
    } else {
    }
    %c0_13 = arith.constant 0 : index
    %c0_14 = arith.constant 0 : index
    %c1 = arith.constant 1 : index
    %c0_15 = arith.constant 0 : index
    %c0_16 = arith.constant 0 : index
    %17 = vector.load %arg3[%c0_13, %c0_14, %c1, %c0_15, %c0_16] : memref<1x1x4x24x34xbf16, #tpu.memory_space<vmem>>, vector<1x1x1x24x34xbf16>
    %18 = vector.shape_cast %17 : vector<1x1x1x24x34xbf16> to vector<24x34xbf16>
    %c0_17 = arith.constant 0 : index
    %c0_18 = arith.constant 0 : index
    %c0_19 = arith.constant 0 : index
    %c0_20 = arith.constant 0 : index
    %c0_21 = arith.constant 0 : index
    %19 = vector.load %arg2[%c0_17, %c0_18, %c0_19, %c0_20, %c0_21] : memref<1x1x16x24x34xbf16, #tpu.memory_space<vmem>>, vector<1x1x1x24x34xbf16>
    %20 = vector.shape_cast %19 : vector<1x1x1x24x34xbf16> to vector<24x34xbf16>
    %c0_22 = arith.constant 0 : index
    %c0_23 = arith.constant 0 : index
    %c1_24 = arith.constant 1 : index
    %c0_25 = arith.constant 0 : index
    %c0_26 = arith.constant 0 : index
    %21 = vector.load %arg2[%c0_22, %c0_23, %c1_24, %c0_25, %c0_26] : memref<1x1x16x24x34xbf16, #tpu.memory_space<vmem>>, vector<1x1x1x24x34xbf16>
    %22 = vector.shape_cast %21 : vector<1x1x1x24x34xbf16> to vector<24x34xbf16>
    %23 = tpu.concatenate %18, %20, %22 in 0 : vector<24x34xbf16>, vector<24x34xbf16>, vector<24x34xbf16> -> vector<72x34xbf16>
    %24 = vector.extract_strided_slice %0 {offsets = [0, 0, 0], sizes = [1, 8, 72], strides = [1, 1, 1]} : vector<3x8x72xbf16> to vector<1x8x72xbf16>
    %25 = vector.shape_cast %24 : vector<1x8x72xbf16> to vector<8x72xbf16>
    %26 = vector.extract_strided_slice %23 {offsets = [0, 0], sizes = [72, 32], strides = [1, 1]} : vector<72x34xbf16> to vector<72x32xbf16>
    %cst_27 = arith.constant dense<0.000000e+00> : vector<8x32xf32>
    %27 = tpu.matmul %25, %26, %cst_27 {dimension_numbers = #tpu.dot_dimension_numbers<[1], [0], [0], [1], [0, 0, 1, 1], [], []>} : vector<8x72xbf16>, vector<72x32xbf16>, vector<8x32xf32> -> vector<8x32xf32>
    %28 = arith.addf %4, %27 : vector<8x32xf32>
    %29 = vector.extract_strided_slice %0 {offsets = [1, 0, 0], sizes = [1, 8, 72], strides = [1, 1, 1]} : vector<3x8x72xbf16> to vector<1x8x72xbf16>
    %30 = vector.shape_cast %29 : vector<1x8x72xbf16> to vector<8x72xbf16>
    %31 = vector.extract_strided_slice %23 {offsets = [0, 1], sizes = [72, 32], strides = [1, 1]} : vector<72x34xbf16> to vector<72x32xbf16>
    %cst_28 = arith.constant dense<0.000000e+00> : vector<8x32xf32>
    %32 = tpu.matmul %30, %31, %cst_28 {dimension_numbers = #tpu.dot_dimension_numbers<[1], [0], [0], [1], [0, 0, 1, 1], [], []>} : vector<8x72xbf16>, vector<72x32xbf16>, vector<8x32xf32> -> vector<8x32xf32>
    %33 = arith.addf %28, %32 : vector<8x32xf32>
    %34 = vector.extract_strided_slice %0 {offsets = [2, 0, 0], sizes = [1, 8, 72], strides = [1, 1, 1]} : vector<3x8x72xbf16> to vector<1x8x72xbf16>
    %35 = vector.shape_cast %34 : vector<1x8x72xbf16> to vector<8x72xbf16>
    %36 = vector.extract_strided_slice %23 {offsets = [0, 2], sizes = [72, 32], strides = [1, 1]} : vector<72x34xbf16> to vector<72x32xbf16>
    %cst_29 = arith.constant dense<0.000000e+00> : vector<8x32xf32>
    %37 = tpu.matmul %35, %36, %cst_29 {dimension_numbers = #tpu.dot_dimension_numbers<[1], [0], [0], [1], [0, 0, 1, 1], [], []>} : vector<8x72xbf16>, vector<72x32xbf16>, vector<8x32xf32> -> vector<8x32xf32>
    %38 = arith.addf %33, %37 : vector<8x32xf32>
    %cst_30 = arith.constant 0.000000e+00 : f32
    %39 = vector.broadcast %cst_30 : f32 to vector<8x32xf32>
    %40 = arith.maximumf %38, %39 : vector<8x32xf32>
    %41 = arith.truncf %40 : vector<8x32xf32> to vector<8x32xbf16>
    %c1_31 = arith.constant 1 : index
    %c0_32 = arith.constant 0 : index
    %c1_33 = arith.constant 1 : index
    %42 = vector.load %arg9[%c1_31, %c0_32, %c1_33] : memref<18x8x34xbf16, #tpu.memory_space<vmem>>, vector<1x8x32xbf16>
    %43 = vector.shape_cast %42 : vector<1x8x32xbf16> to vector<8x32xbf16>
    %44 = vector.shape_cast %41 : vector<8x32xbf16> to vector<1x8x32xbf16>
    tpu.vector_store %arg9[%c1_31, %c0_32, %c1_33], %44 {strides = array<i32>} : memref<18x8x34xbf16, #tpu.memory_space<vmem>>, vector<1x8x32xbf16>,
    %c0_34 = arith.constant 0 : index
    %c0_35 = arith.constant 0 : index
    %c0_36 = arith.constant 0 : index
    %c0_37 = arith.constant 0 : index
    %c0_38 = arith.constant 0 : index
    %45 = vector.load %arg2[%c0_34, %c0_35, %c0_36, %c0_37, %c0_38] : memref<1x1x16x24x34xbf16, #tpu.memory_space<vmem>>, vector<1x1x3x24x34xbf16>
    %46 = vector.shape_cast %45 : vector<1x1x3x24x34xbf16> to vector<3x24x34xbf16>
    %47 = vector.shape_cast %46 : vector<3x24x34xbf16> to vector<72x34xbf16>
    %48 = vector.extract_strided_slice %0 {offsets = [0, 0, 0], sizes = [1, 8, 72], strides = [1, 1, 1]} : vector<3x8x72xbf16> to vector<1x8x72xbf16>
    %49 = vector.shape_cast %48 : vector<1x8x72xbf16> to vector<8x72xbf16>
    %50 = vector.extract_strided_slice %47 {offsets = [0, 0], sizes = [72, 32], strides = [1, 1]} : vector<72x34xbf16> to vector<72x32xbf16>
    %cst_39 = arith.constant dense<0.000000e+00> : vector<8x32xf32>
    %51 = tpu.matmul %49, %50, %cst_39 {dimension_numbers = #tpu.dot_dimension_numbers<[1], [0], [0], [1], [0, 0, 1, 1], [], []>} : vector<8x72xbf16>, vector<72x32xbf16>, vector<8x32xf32> -> vector<8x32xf32>
    %52 = arith.addf %4, %51 : vector<8x32xf32>
    %53 = vector.extract_strided_slice %0 {offsets = [1, 0, 0], sizes = [1, 8, 72], strides = [1, 1, 1]} : vector<3x8x72xbf16> to vector<1x8x72xbf16>
    %54 = vector.shape_cast %53 : vector<1x8x72xbf16> to vector<8x72xbf16>
    %55 = vector.extract_strided_slice %47 {offsets = [0, 1], sizes = [72, 32], strides = [1, 1]} : vector<72x34xbf16> to vector<72x32xbf16>
    %cst_40 = arith.constant dense<0.000000e+00> : vector<8x32xf32>
    %56 = tpu.matmul %54, %55, %cst_40 {dimension_numbers = #tpu.dot_dimension_numbers<[1], [0], [0], [1], [0, 0, 1, 1], [], []>} : vector<8x72xbf16>, vector<72x32xbf16>, vector<8x32xf32> -> vector<8x32xf32>
    %57 = arith.addf %52, %56 : vector<8x32xf32>
    %58 = vector.extract_strided_slice %0 {offsets = [2, 0, 0], sizes = [1, 8, 72], strides = [1, 1, 1]} : vector<3x8x72xbf16> to vector<1x8x72xbf16>
    %59 = vector.shape_cast %58 : vector<1x8x72xbf16> to vector<8x72xbf16>
    %60 = vector.extract_strided_slice %47 {offsets = [0, 2], sizes = [72, 32], strides = [1, 1]} : vector<72x34xbf16> to vector<72x32xbf16>
    %cst_41 = arith.constant dense<0.000000e+00> : vector<8x32xf32>
    %61 = tpu.matmul %59, %60, %cst_41 {dimension_numbers = #tpu.dot_dimension_numbers<[1], [0], [0], [1], [0, 0, 1, 1], [], []>} : vector<8x72xbf16>, vector<72x32xbf16>, vector<8x32xf32> -> vector<8x32xf32>
    %62 = arith.addf %57, %61 : vector<8x32xf32>
    %cst_42 = arith.constant 0.000000e+00 : f32
    %63 = vector.broadcast %cst_42 : f32 to vector<8x32xf32>
    %64 = arith.maximumf %62, %63 : vector<8x32xf32>
    %65 = arith.truncf %64 : vector<8x32xf32> to vector<8x32xbf16>
    %c2 = arith.constant 2 : index
    %c0_43 = arith.constant 0 : index
    %c1_44 = arith.constant 1 : index
    %66 = vector.load %arg9[%c2, %c0_43, %c1_44] : memref<18x8x34xbf16, #tpu.memory_space<vmem>>, vector<1x8x32xbf16>
    %67 = vector.shape_cast %66 : vector<1x8x32xbf16> to vector<8x32xbf16>
    %68 = vector.shape_cast %65 : vector<8x32xbf16> to vector<1x8x32xbf16>
    tpu.vector_store %arg9[%c2, %c0_43, %c1_44], %68 {strides = array<i32>} : memref<18x8x34xbf16, #tpu.memory_space<vmem>>, vector<1x8x32xbf16>,
    %c0_45 = arith.constant 0 : index
    %c0_46 = arith.constant 0 : index
    %c1_47 = arith.constant 1 : index
    %c0_48 = arith.constant 0 : index
    %c0_49 = arith.constant 0 : index
    %69 = vector.load %arg2[%c0_45, %c0_46, %c1_47, %c0_48, %c0_49] : memref<1x1x16x24x34xbf16, #tpu.memory_space<vmem>>, vector<1x1x3x24x34xbf16>
    %70 = vector.shape_cast %69 : vector<1x1x3x24x34xbf16> to vector<3x24x34xbf16>
    %71 = vector.shape_cast %70 : vector<3x24x34xbf16> to vector<72x34xbf16>
    %72 = vector.extract_strided_slice %0 {offsets = [0, 0, 0], sizes = [1, 8, 72], strides = [1, 1, 1]} : vector<3x8x72xbf16> to vector<1x8x72xbf16>
    %73 = vector.shape_cast %72 : vector<1x8x72xbf16> to vector<8x72xbf16>
    %74 = vector.extract_strided_slice %71 {offsets = [0, 0], sizes = [72, 32], strides = [1, 1]} : vector<72x34xbf16> to vector<72x32xbf16>
    %cst_50 = arith.constant dense<0.000000e+00> : vector<8x32xf32>
    %75 = tpu.matmul %73, %74, %cst_50 {dimension_numbers = #tpu.dot_dimension_numbers<[1], [0], [0], [1], [0, 0, 1, 1], [], []>} : vector<8x72xbf16>, vector<72x32xbf16>, vector<8x32xf32> -> vector<8x32xf32>
    %76 = arith.addf %4, %75 : vector<8x32xf32>
    %77 = vector.extract_strided_slice %0 {offsets = [1, 0, 0], sizes = [1, 8, 72], strides = [1, 1, 1]} : vector<3x8x72xbf16> to vector<1x8x72xbf16>
    %78 = vector.shape_cast %77 : vector<1x8x72xbf16> to vector<8x72xbf16>
    %79 = vector.extract_strided_slice %71 {offsets = [0, 1], sizes = [72, 32], strides = [1, 1]} : vector<72x34xbf16> to vector<72x32xbf16>
    %cst_51 = arith.constant dense<0.000000e+00> : vector<8x32xf32>
    %80 = tpu.matmul %78, %79, %cst_51 {dimension_numbers = #tpu.dot_dimension_numbers<[1], [0], [0], [1], [0, 0, 1, 1], [], []>} : vector<8x72xbf16>, vector<72x32xbf16>, vector<8x32xf32> -> vector<8x32xf32>
    %81 = arith.addf %76, %80 : vector<8x32xf32>
    %82 = vector.extract_strided_slice %0 {offsets = [2, 0, 0], sizes = [1, 8, 72], strides = [1, 1, 1]} : vector<3x8x72xbf16> to vector<1x8x72xbf16>
    %83 = vector.shape_cast %82 : vector<1x8x72xbf16> to vector<8x72xbf16>
    %84 = vector.extract_strided_slice %71 {offsets = [0, 2], sizes = [72, 32], strides = [1, 1]} : vector<72x34xbf16> to vector<72x32xbf16>
    %cst_52 = arith.constant dense<0.000000e+00> : vector<8x32xf32>
    %85 = tpu.matmul %83, %84, %cst_52 {dimension_numbers = #tpu.dot_dimension_numbers<[1], [0], [0], [1], [0, 0, 1, 1], [], []>} : vector<8x72xbf16>, vector<72x32xbf16>, vector<8x32xf32> -> vector<8x32xf32>
    %86 = arith.addf %81, %85 : vector<8x32xf32>
    %cst_53 = arith.constant 0.000000e+00 : f32
    %87 = vector.broadcast %cst_53 : f32 to vector<8x32xf32>
    %88 = arith.maximumf %86, %87 : vector<8x32xf32>
    %89 = arith.truncf %88 : vector<8x32xf32> to vector<8x32xbf16>
    %c3 = arith.constant 3 : index
    %c0_54 = arith.constant 0 : index
    %c1_55 = arith.constant 1 : index
    %90 = vector.load %arg9[%c3, %c0_54, %c1_55] : memref<18x8x34xbf16, #tpu.memory_space<vmem>>, vector<1x8x32xbf16>
    %91 = vector.shape_cast %90 : vector<1x8x32xbf16> to vector<8x32xbf16>
    %92 = vector.shape_cast %89 : vector<8x32xbf16> to vector<1x8x32xbf16>
    tpu.vector_store %arg9[%c3, %c0_54, %c1_55], %92 {strides = array<i32>} : memref<18x8x34xbf16, #tpu.memory_space<vmem>>, vector<1x8x32xbf16>,
    %c0_56 = arith.constant 0 : index
    %c0_57 = arith.constant 0 : index
    %c2_58 = arith.constant 2 : index
    %c0_59 = arith.constant 0 : index
    %c0_60 = arith.constant 0 : index
    %93 = vector.load %arg2[%c0_56, %c0_57, %c2_58, %c0_59, %c0_60] : memref<1x1x16x24x34xbf16, #tpu.memory_space<vmem>>, vector<1x1x3x24x34xbf16>
    %94 = vector.shape_cast %93 : vector<1x1x3x24x34xbf16> to vector<3x24x34xbf16>
    %95 = vector.shape_cast %94 : vector<3x24x34xbf16> to vector<72x34xbf16>
    %96 = vector.extract_strided_slice %0 {offsets = [0, 0, 0], sizes = [1, 8, 72], strides = [1, 1, 1]} : vector<3x8x72xbf16> to vector<1x8x72xbf16>
    %97 = vector.shape_cast %96 : vector<1x8x72xbf16> to vector<8x72xbf16>
    %98 = vector.extract_strided_slice %95 {offsets = [0, 0], sizes = [72, 32], strides = [1, 1]} : vector<72x34xbf16> to vector<72x32xbf16>
    %cst_61 = arith.constant dense<0.000000e+00> : vector<8x32xf32>
    %99 = tpu.matmul %97, %98, %cst_61 {dimension_numbers = #tpu.dot_dimension_numbers<[1], [0], [0], [1], [0, 0, 1, 1], [], []>} : vector<8x72xbf16>, vector<72x32xbf16>, vector<8x32xf32> -> vector<8x32xf32>
    %100 = arith.addf %4, %99 : vector<8x32xf32>
    %101 = vector.extract_strided_slice %0 {offsets = [1, 0, 0], sizes = [1, 8, 72], strides = [1, 1, 1]} : vector<3x8x72xbf16> to vector<1x8x72xbf16>
    %102 = vector.shape_cast %101 : vector<1x8x72xbf16> to vector<8x72xbf16>
    %103 = vector.extract_strided_slice %95 {offsets = [0, 1], sizes = [72, 32], strides = [1, 1]} : vector<72x34xbf16> to vector<72x32xbf16>
    %cst_62 = arith.constant dense<0.000000e+00> : vector<8x32xf32>
    %104 = tpu.matmul %102, %103, %cst_62 {dimension_numbers = #tpu.dot_dimension_numbers<[1], [0], [0], [1], [0, 0, 1, 1], [], []>} : vector<8x72xbf16>, vector<72x32xbf16>, vector<8x32xf32> -> vector<8x32xf32>
    %105 = arith.addf %100, %104 : vector<8x32xf32>
    %106 = vector.extract_strided_slice %0 {offsets = [2, 0, 0], sizes = [1, 8, 72], strides = [1, 1, 1]} : vector<3x8x72xbf16> to vector<1x8x72xbf16>
    %107 = vector.shape_cast %106 : vector<1x8x72xbf16> to vector<8x72xbf16>
    %108 = vector.extract_strided_slice %95 {offsets = [0, 2], sizes = [72, 32], strides = [1, 1]} : vector<72x34xbf16> to vector<72x32xbf16>
    %cst_63 = arith.constant dense<0.000000e+00> : vector<8x32xf32>
    %109 = tpu.matmul %107, %108, %cst_63 {dimension_numbers = #tpu.dot_dimension_numbers<[1], [0], [0], [1], [0, 0, 1, 1], [], []>} : vector<8x72xbf16>, vector<72x32xbf16>, vector<8x32xf32> -> vector<8x32xf32>
    %110 = arith.addf %105, %109 : vector<8x32xf32>
    %cst_64 = arith.constant 0.000000e+00 : f32
    %111 = vector.broadcast %cst_64 : f32 to vector<8x32xf32>
    %112 = arith.maximumf %110, %111 : vector<8x32xf32>
    %113 = arith.truncf %112 : vector<8x32xf32> to vector<8x32xbf16>
    %c4 = arith.constant 4 : index
    %c0_65 = arith.constant 0 : index
    %c1_66 = arith.constant 1 : index
    %114 = vector.load %arg9[%c4, %c0_65, %c1_66] : memref<18x8x34xbf16, #tpu.memory_space<vmem>>, vector<1x8x32xbf16>
    %115 = vector.shape_cast %114 : vector<1x8x32xbf16> to vector<8x32xbf16>
    %116 = vector.shape_cast %113 : vector<8x32xbf16> to vector<1x8x32xbf16>
    tpu.vector_store %arg9[%c4, %c0_65, %c1_66], %116 {strides = array<i32>} : memref<18x8x34xbf16, #tpu.memory_space<vmem>>, vector<1x8x32xbf16>,
    %c0_67 = arith.constant 0 : index
    %c0_68 = arith.constant 0 : index
    %c3_69 = arith.constant 3 : index
    %c0_70 = arith.constant 0 : index
    %c0_71 = arith.constant 0 : index
    %117 = vector.load %arg2[%c0_67, %c0_68, %c3_69, %c0_70, %c0_71] : memref<1x1x16x24x34xbf16, #tpu.memory_space<vmem>>, vector<1x1x3x24x34xbf16>
    %118 = vector.shape_cast %117 : vector<1x1x3x24x34xbf16> to vector<3x24x34xbf16>
    %119 = vector.shape_cast %118 : vector<3x24x34xbf16> to vector<72x34xbf16>
    %120 = vector.extract_strided_slice %0 {offsets = [0, 0, 0], sizes = [1, 8, 72], strides = [1, 1, 1]} : vector<3x8x72xbf16> to vector<1x8x72xbf16>
    %121 = vector.shape_cast %120 : vector<1x8x72xbf16> to vector<8x72xbf16>
    %122 = vector.extract_strided_slice %119 {offsets = [0, 0], sizes = [72, 32], strides = [1, 1]} : vector<72x34xbf16> to vector<72x32xbf16>
    %cst_72 = arith.constant dense<0.000000e+00> : vector<8x32xf32>
    %123 = tpu.matmul %121, %122, %cst_72 {dimension_numbers = #tpu.dot_dimension_numbers<[1], [0], [0], [1], [0, 0, 1, 1], [], []>} : vector<8x72xbf16>, vector<72x32xbf16>, vector<8x32xf32> -> vector<8x32xf32>
    %124 = arith.addf %4, %123 : vector<8x32xf32>
    %125 = vector.extract_strided_slice %0 {offsets = [1, 0, 0], sizes = [1, 8, 72], strides = [1, 1, 1]} : vector<3x8x72xbf16> to vector<1x8x72xbf16>
    %126 = vector.shape_cast %125 : vector<1x8x72xbf16> to vector<8x72xbf16>
    %127 = vector.extract_strided_slice %119 {offsets = [0, 1], sizes = [72, 32], strides = [1, 1]} : vector<72x34xbf16> to vector<72x32xbf16>
    %cst_73 = arith.constant dense<0.000000e+00> : vector<8x32xf32>
    %128 = tpu.matmul %126, %127, %cst_73 {dimension_numbers = #tpu.dot_dimension_numbers<[1], [0], [0], [1], [0, 0, 1, 1], [], []>} : vector<8x72xbf16>, vector<72x32xbf16>, vector<8x32xf32> -> vector<8x32xf32>
    %129 = arith.addf %124, %128 : vector<8x32xf32>
    %130 = vector.extract_strided_slice %0 {offsets = [2, 0, 0], sizes = [1, 8, 72], strides = [1, 1, 1]} : vector<3x8x72xbf16> to vector<1x8x72xbf16>
    %131 = vector.shape_cast %130 : vector<1x8x72xbf16> to vector<8x72xbf16>
    %132 = vector.extract_strided_slice %119 {offsets = [0, 2], sizes = [72, 32], strides = [1, 1]} : vector<72x34xbf16> to vector<72x32xbf16>
    %cst_74 = arith.constant dense<0.000000e+00> : vector<8x32xf32>
    %133 = tpu.matmul %131, %132, %cst_74 {dimension_numbers = #tpu.dot_dimension_numbers<[1], [0], [0], [1], [0, 0, 1, 1], [], []>} : vector<8x72xbf16>, vector<72x32xbf16>, vector<8x32xf32> -> vector<8x32xf32>
    %134 = arith.addf %129, %133 : vector<8x32xf32>
    %cst_75 = arith.constant 0.000000e+00 : f32
    %135 = vector.broadcast %cst_75 : f32 to vector<8x32xf32>
    %136 = arith.maximumf %134, %135 : vector<8x32xf32>
    %137 = arith.truncf %136 : vector<8x32xf32> to vector<8x32xbf16>
    %c5 = arith.constant 5 : index
    %c0_76 = arith.constant 0 : index
    %c1_77 = arith.constant 1 : index
    %138 = vector.load %arg9[%c5, %c0_76, %c1_77] : memref<18x8x34xbf16, #tpu.memory_space<vmem>>, vector<1x8x32xbf16>
    %139 = vector.shape_cast %138 : vector<1x8x32xbf16> to vector<8x32xbf16>
    %140 = vector.shape_cast %137 : vector<8x32xbf16> to vector<1x8x32xbf16>
    tpu.vector_store %arg9[%c5, %c0_76, %c1_77], %140 {strides = array<i32>} : memref<18x8x34xbf16, #tpu.memory_space<vmem>>, vector<1x8x32xbf16>,
    %c0_78 = arith.constant 0 : index
    %c0_79 = arith.constant 0 : index
    %c4_80 = arith.constant 4 : index
    %c0_81 = arith.constant 0 : index
    %c0_82 = arith.constant 0 : index
    %141 = vector.load %arg2[%c0_78, %c0_79, %c4_80, %c0_81, %c0_82] : memref<1x1x16x24x34xbf16, #tpu.memory_space<vmem>>, vector<1x1x3x24x34xbf16>
    %142 = vector.shape_cast %141 : vector<1x1x3x24x34xbf16> to vector<3x24x34xbf16>
    %143 = vector.shape_cast %142 : vector<3x24x34xbf16> to vector<72x34xbf16>
    %144 = vector.extract_strided_slice %0 {offsets = [0, 0, 0], sizes = [1, 8, 72], strides = [1, 1, 1]} : vector<3x8x72xbf16> to vector<1x8x72xbf16>
    %145 = vector.shape_cast %144 : vector<1x8x72xbf16> to vector<8x72xbf16>
    %146 = vector.extract_strided_slice %143 {offsets = [0, 0], sizes = [72, 32], strides = [1, 1]} : vector<72x34xbf16> to vector<72x32xbf16>
    %cst_83 = arith.constant dense<0.000000e+00> : vector<8x32xf32>
    %147 = tpu.matmul %145, %146, %cst_83 {dimension_numbers = #tpu.dot_dimension_numbers<[1], [0], [0], [1], [0, 0, 1, 1], [], []>} : vector<8x72xbf16>, vector<72x32xbf16>, vector<8x32xf32> -> vector<8x32xf32>
    %148 = arith.addf %4, %147 : vector<8x32xf32>
    %149 = vector.extract_strided_slice %0 {offsets = [1, 0, 0], sizes = [1, 8, 72], strides = [1, 1, 1]} : vector<3x8x72xbf16> to vector<1x8x72xbf16>
    %150 = vector.shape_cast %149 : vector<1x8x72xbf16> to vector<8x72xbf16>
    %151 = vector.extract_strided_slice %143 {offsets = [0, 1], sizes = [72, 32], strides = [1, 1]} : vector<72x34xbf16> to vector<72x32xbf16>
    %cst_84 = arith.constant dense<0.000000e+00> : vector<8x32xf32>
    %152 = tpu.matmul %150, %151, %cst_84 {dimension_numbers = #tpu.dot_dimension_numbers<[1], [0], [0], [1], [0, 0, 1, 1], [], []>} : vector<8x72xbf16>, vector<72x32xbf16>, vector<8x32xf32> -> vector<8x32xf32>
    %153 = arith.addf %148, %152 : vector<8x32xf32>
    %154 = vector.extract_strided_slice %0 {offsets = [2, 0, 0], sizes = [1, 8, 72], strides = [1, 1, 1]} : vector<3x8x72xbf16> to vector<1x8x72xbf16>
    %155 = vector.shape_cast %154 : vector<1x8x72xbf16> to vector<8x72xbf16>
    %156 = vector.extract_strided_slice %143 {offsets = [0, 2], sizes = [72, 32], strides = [1, 1]} : vector<72x34xbf16> to vector<72x32xbf16>
    %cst_85 = arith.constant dense<0.000000e+00> : vector<8x32xf32>
    %157 = tpu.matmul %155, %156, %cst_85 {dimension_numbers = #tpu.dot_dimension_numbers<[1], [0], [0], [1], [0, 0, 1, 1], [], []>} : vector<8x72xbf16>, vector<72x32xbf16>, vector<8x32xf32> -> vector<8x32xf32>
    %158 = arith.addf %153, %157 : vector<8x32xf32>
    %cst_86 = arith.constant 0.000000e+00 : f32
    %159 = vector.broadcast %cst_86 : f32 to vector<8x32xf32>
    %160 = arith.maximumf %158, %159 : vector<8x32xf32>
    %161 = arith.truncf %160 : vector<8x32xf32> to vector<8x32xbf16>
    %c6 = arith.constant 6 : index
    %c0_87 = arith.constant 0 : index
    %c1_88 = arith.constant 1 : index
    %162 = vector.load %arg9[%c6, %c0_87, %c1_88] : memref<18x8x34xbf16, #tpu.memory_space<vmem>>, vector<1x8x32xbf16>
    %163 = vector.shape_cast %162 : vector<1x8x32xbf16> to vector<8x32xbf16>
    %164 = vector.shape_cast %161 : vector<8x32xbf16> to vector<1x8x32xbf16>
    tpu.vector_store %arg9[%c6, %c0_87, %c1_88], %164 {strides = array<i32>} : memref<18x8x34xbf16, #tpu.memory_space<vmem>>, vector<1x8x32xbf16>,
    %c0_89 = arith.constant 0 : index
    %c0_90 = arith.constant 0 : index
    %c5_91 = arith.constant 5 : index
    %c0_92 = arith.constant 0 : index
    %c0_93 = arith.constant 0 : index
    %165 = vector.load %arg2[%c0_89, %c0_90, %c5_91, %c0_92, %c0_93] : memref<1x1x16x24x34xbf16, #tpu.memory_space<vmem>>, vector<1x1x3x24x34xbf16>
    %166 = vector.shape_cast %165 : vector<1x1x3x24x34xbf16> to vector<3x24x34xbf16>
    %167 = vector.shape_cast %166 : vector<3x24x34xbf16> to vector<72x34xbf16>
    %168 = vector.extract_strided_slice %0 {offsets = [0, 0, 0], sizes = [1, 8, 72], strides = [1, 1, 1]} : vector<3x8x72xbf16> to vector<1x8x72xbf16>
    %169 = vector.shape_cast %168 : vector<1x8x72xbf16> to vector<8x72xbf16>
    %170 = vector.extract_strided_slice %167 {offsets = [0, 0], sizes = [72, 32], strides = [1, 1]} : vector<72x34xbf16> to vector<72x32xbf16>
    %cst_94 = arith.constant dense<0.000000e+00> : vector<8x32xf32>
    %171 = tpu.matmul %169, %170, %cst_94 {dimension_numbers = #tpu.dot_dimension_numbers<[1], [0], [0], [1], [0, 0, 1, 1], [], []>} : vector<8x72xbf16>, vector<72x32xbf16>, vector<8x32xf32> -> vector<8x32xf32>
    %172 = arith.addf %4, %171 : vector<8x32xf32>
    %173 = vector.extract_strided_slice %0 {offsets = [1, 0, 0], sizes = [1, 8, 72], strides = [1, 1, 1]} : vector<3x8x72xbf16> to vector<1x8x72xbf16>
    %174 = vector.shape_cast %173 : vector<1x8x72xbf16> to vector<8x72xbf16>
    %175 = vector.extract_strided_slice %167 {offsets = [0, 1], sizes = [72, 32], strides = [1, 1]} : vector<72x34xbf16> to vector<72x32xbf16>
    %cst_95 = arith.constant dense<0.000000e+00> : vector<8x32xf32>
    %176 = tpu.matmul %174, %175, %cst_95 {dimension_numbers = #tpu.dot_dimension_numbers<[1], [0], [0], [1], [0, 0, 1, 1], [], []>} : vector<8x72xbf16>, vector<72x32xbf16>, vector<8x32xf32> -> vector<8x32xf32>
    %177 = arith.addf %172, %176 : vector<8x32xf32>
    %178 = vector.extract_strided_slice %0 {offsets = [2, 0, 0], sizes = [1, 8, 72], strides = [1, 1, 1]} : vector<3x8x72xbf16> to vector<1x8x72xbf16>
    %179 = vector.shape_cast %178 : vector<1x8x72xbf16> to vector<8x72xbf16>
    %180 = vector.extract_strided_slice %167 {offsets = [0, 2], sizes = [72, 32], strides = [1, 1]} : vector<72x34xbf16> to vector<72x32xbf16>
    %cst_96 = arith.constant dense<0.000000e+00> : vector<8x32xf32>
    %181 = tpu.matmul %179, %180, %cst_96 {dimension_numbers = #tpu.dot_dimension_numbers<[1], [0], [0], [1], [0, 0, 1, 1], [], []>} : vector<8x72xbf16>, vector<72x32xbf16>, vector<8x32xf32> -> vector<8x32xf32>
    %182 = arith.addf %177, %181 : vector<8x32xf32>
    %cst_97 = arith.constant 0.000000e+00 : f32
    %183 = vector.broadcast %cst_97 : f32 to vector<8x32xf32>
    %184 = arith.maximumf %182, %183 : vector<8x32xf32>
    %185 = arith.truncf %184 : vector<8x32xf32> to vector<8x32xbf16>
    %c7 = arith.constant 7 : index
    %c0_98 = arith.constant 0 : index
    %c1_99 = arith.constant 1 : index
    %186 = vector.load %arg9[%c7, %c0_98, %c1_99] : memref<18x8x34xbf16, #tpu.memory_space<vmem>>, vector<1x8x32xbf16>
    %187 = vector.shape_cast %186 : vector<1x8x32xbf16> to vector<8x32xbf16>
    %188 = vector.shape_cast %185 : vector<8x32xbf16> to vector<1x8x32xbf16>
    tpu.vector_store %arg9[%c7, %c0_98, %c1_99], %188 {strides = array<i32>} : memref<18x8x34xbf16, #tpu.memory_space<vmem>>, vector<1x8x32xbf16>,
    %c0_100 = arith.constant 0 : index
    %c0_101 = arith.constant 0 : index
    %c6_102 = arith.constant 6 : index
    %c0_103 = arith.constant 0 : index
    %c0_104 = arith.constant 0 : index
    %189 = vector.load %arg2[%c0_100, %c0_101, %c6_102, %c0_103, %c0_104] : memref<1x1x16x24x34xbf16, #tpu.memory_space<vmem>>, vector<1x1x3x24x34xbf16>
    %190 = vector.shape_cast %189 : vector<1x1x3x24x34xbf16> to vector<3x24x34xbf16>
    %191 = vector.shape_cast %190 : vector<3x24x34xbf16> to vector<72x34xbf16>
    %192 = vector.extract_strided_slice %0 {offsets = [0, 0, 0], sizes = [1, 8, 72], strides = [1, 1, 1]} : vector<3x8x72xbf16> to vector<1x8x72xbf16>
    %193 = vector.shape_cast %192 : vector<1x8x72xbf16> to vector<8x72xbf16>
    %194 = vector.extract_strided_slice %191 {offsets = [0, 0], sizes = [72, 32], strides = [1, 1]} : vector<72x34xbf16> to vector<72x32xbf16>
    %cst_105 = arith.constant dense<0.000000e+00> : vector<8x32xf32>
    %195 = tpu.matmul %193, %194, %cst_105 {dimension_numbers = #tpu.dot_dimension_numbers<[1], [0], [0], [1], [0, 0, 1, 1], [], []>} : vector<8x72xbf16>, vector<72x32xbf16>, vector<8x32xf32> -> vector<8x32xf32>
    %196 = arith.addf %4, %195 : vector<8x32xf32>
    %197 = vector.extract_strided_slice %0 {offsets = [1, 0, 0], sizes = [1, 8, 72], strides = [1, 1, 1]} : vector<3x8x72xbf16> to vector<1x8x72xbf16>
    %198 = vector.shape_cast %197 : vector<1x8x72xbf16> to vector<8x72xbf16>
    %199 = vector.extract_strided_slice %191 {offsets = [0, 1], sizes = [72, 32], strides = [1, 1]} : vector<72x34xbf16> to vector<72x32xbf16>
    %cst_106 = arith.constant dense<0.000000e+00> : vector<8x32xf32>
    %200 = tpu.matmul %198, %199, %cst_106 {dimension_numbers = #tpu.dot_dimension_numbers<[1], [0], [0], [1], [0, 0, 1, 1], [], []>} : vector<8x72xbf16>, vector<72x32xbf16>, vector<8x32xf32> -> vector<8x32xf32>
    %201 = arith.addf %196, %200 : vector<8x32xf32>
    %202 = vector.extract_strided_slice %0 {offsets = [2, 0, 0], sizes = [1, 8, 72], strides = [1, 1, 1]} : vector<3x8x72xbf16> to vector<1x8x72xbf16>
    %203 = vector.shape_cast %202 : vector<1x8x72xbf16> to vector<8x72xbf16>
    %204 = vector.extract_strided_slice %191 {offsets = [0, 2], sizes = [72, 32], strides = [1, 1]} : vector<72x34xbf16> to vector<72x32xbf16>
    %cst_107 = arith.constant dense<0.000000e+00> : vector<8x32xf32>
    %205 = tpu.matmul %203, %204, %cst_107 {dimension_numbers = #tpu.dot_dimension_numbers<[1], [0], [0], [1], [0, 0, 1, 1], [], []>} : vector<8x72xbf16>, vector<72x32xbf16>, vector<8x32xf32> -> vector<8x32xf32>
    %206 = arith.addf %201, %205 : vector<8x32xf32>
    %cst_108 = arith.constant 0.000000e+00 : f32
    %207 = vector.broadcast %cst_108 : f32 to vector<8x32xf32>
    %208 = arith.maximumf %206, %207 : vector<8x32xf32>
    %209 = arith.truncf %208 : vector<8x32xf32> to vector<8x32xbf16>
    %c8 = arith.constant 8 : index
    %c0_109 = arith.constant 0 : index
    %c1_110 = arith.constant 1 : index
    %210 = vector.load %arg9[%c8, %c0_109, %c1_110] : memref<18x8x34xbf16, #tpu.memory_space<vmem>>, vector<1x8x32xbf16>
    %211 = vector.shape_cast %210 : vector<1x8x32xbf16> to vector<8x32xbf16>
    %212 = vector.shape_cast %209 : vector<8x32xbf16> to vector<1x8x32xbf16>
    tpu.vector_store %arg9[%c8, %c0_109, %c1_110], %212 {strides = array<i32>} : memref<18x8x34xbf16, #tpu.memory_space<vmem>>, vector<1x8x32xbf16>,
    %c0_111 = arith.constant 0 : index
    %c0_112 = arith.constant 0 : index
    %c7_113 = arith.constant 7 : index
    %c0_114 = arith.constant 0 : index
    %c0_115 = arith.constant 0 : index
    %213 = vector.load %arg2[%c0_111, %c0_112, %c7_113, %c0_114, %c0_115] : memref<1x1x16x24x34xbf16, #tpu.memory_space<vmem>>, vector<1x1x3x24x34xbf16>
    %214 = vector.shape_cast %213 : vector<1x1x3x24x34xbf16> to vector<3x24x34xbf16>
    %215 = vector.shape_cast %214 : vector<3x24x34xbf16> to vector<72x34xbf16>
    %216 = vector.extract_strided_slice %0 {offsets = [0, 0, 0], sizes = [1, 8, 72], strides = [1, 1, 1]} : vector<3x8x72xbf16> to vector<1x8x72xbf16>
    %217 = vector.shape_cast %216 : vector<1x8x72xbf16> to vector<8x72xbf16>
    %218 = vector.extract_strided_slice %215 {offsets = [0, 0], sizes = [72, 32], strides = [1, 1]} : vector<72x34xbf16> to vector<72x32xbf16>
    %cst_116 = arith.constant dense<0.000000e+00> : vector<8x32xf32>
    %219 = tpu.matmul %217, %218, %cst_116 {dimension_numbers = #tpu.dot_dimension_numbers<[1], [0], [0], [1], [0, 0, 1, 1], [], []>} : vector<8x72xbf16>, vector<72x32xbf16>, vector<8x32xf32> -> vector<8x32xf32>
    %220 = arith.addf %4, %219 : vector<8x32xf32>
    %221 = vector.extract_strided_slice %0 {offsets = [1, 0, 0], sizes = [1, 8, 72], strides = [1, 1, 1]} : vector<3x8x72xbf16> to vector<1x8x72xbf16>
    %222 = vector.shape_cast %221 : vector<1x8x72xbf16> to vector<8x72xbf16>
    %223 = vector.extract_strided_slice %215 {offsets = [0, 1], sizes = [72, 32], strides = [1, 1]} : vector<72x34xbf16> to vector<72x32xbf16>
    %cst_117 = arith.constant dense<0.000000e+00> : vector<8x32xf32>
    %224 = tpu.matmul %222, %223, %cst_117 {dimension_numbers = #tpu.dot_dimension_numbers<[1], [0], [0], [1], [0, 0, 1, 1], [], []>} : vector<8x72xbf16>, vector<72x32xbf16>, vector<8x32xf32> -> vector<8x32xf32>
    %225 = arith.addf %220, %224 : vector<8x32xf32>
    %226 = vector.extract_strided_slice %0 {offsets = [2, 0, 0], sizes = [1, 8, 72], strides = [1, 1, 1]} : vector<3x8x72xbf16> to vector<1x8x72xbf16>
    %227 = vector.shape_cast %226 : vector<1x8x72xbf16> to vector<8x72xbf16>
    %228 = vector.extract_strided_slice %215 {offsets = [0, 2], sizes = [72, 32], strides = [1, 1]} : vector<72x34xbf16> to vector<72x32xbf16>
    %cst_118 = arith.constant dense<0.000000e+00> : vector<8x32xf32>
    %229 = tpu.matmul %227, %228, %cst_118 {dimension_numbers = #tpu.dot_dimension_numbers<[1], [0], [0], [1], [0, 0, 1, 1], [], []>} : vector<8x72xbf16>, vector<72x32xbf16>, vector<8x32xf32> -> vector<8x32xf32>
    %230 = arith.addf %225, %229 : vector<8x32xf32>
    %cst_119 = arith.constant 0.000000e+00 : f32
    %231 = vector.broadcast %cst_119 : f32 to vector<8x32xf32>
    %232 = arith.maximumf %230, %231 : vector<8x32xf32>
    %233 = arith.truncf %232 : vector<8x32xf32> to vector<8x32xbf16>
    %c9 = arith.constant 9 : index
    %c0_120 = arith.constant 0 : index
    %c1_121 = arith.constant 1 : index
    %234 = vector.load %arg9[%c9, %c0_120, %c1_121] : memref<18x8x34xbf16, #tpu.memory_space<vmem>>, vector<1x8x32xbf16>
    %235 = vector.shape_cast %234 : vector<1x8x32xbf16> to vector<8x32xbf16>
    %236 = vector.shape_cast %233 : vector<8x32xbf16> to vector<1x8x32xbf16>
    tpu.vector_store %arg9[%c9, %c0_120, %c1_121], %236 {strides = array<i32>} : memref<18x8x34xbf16, #tpu.memory_space<vmem>>, vector<1x8x32xbf16>,
    %c0_122 = arith.constant 0 : index
    %c0_123 = arith.constant 0 : index
    %c8_124 = arith.constant 8 : index
    %c0_125 = arith.constant 0 : index
    %c0_126 = arith.constant 0 : index
    %237 = vector.load %arg2[%c0_122, %c0_123, %c8_124, %c0_125, %c0_126] : memref<1x1x16x24x34xbf16, #tpu.memory_space<vmem>>, vector<1x1x3x24x34xbf16>
    %238 = vector.shape_cast %237 : vector<1x1x3x24x34xbf16> to vector<3x24x34xbf16>
    %239 = vector.shape_cast %238 : vector<3x24x34xbf16> to vector<72x34xbf16>
    %240 = vector.extract_strided_slice %0 {offsets = [0, 0, 0], sizes = [1, 8, 72], strides = [1, 1, 1]} : vector<3x8x72xbf16> to vector<1x8x72xbf16>
    %241 = vector.shape_cast %240 : vector<1x8x72xbf16> to vector<8x72xbf16>
    %242 = vector.extract_strided_slice %239 {offsets = [0, 0], sizes = [72, 32], strides = [1, 1]} : vector<72x34xbf16> to vector<72x32xbf16>
    %cst_127 = arith.constant dense<0.000000e+00> : vector<8x32xf32>
    %243 = tpu.matmul %241, %242, %cst_127 {dimension_numbers = #tpu.dot_dimension_numbers<[1], [0], [0], [1], [0, 0, 1, 1], [], []>} : vector<8x72xbf16>, vector<72x32xbf16>, vector<8x32xf32> -> vector<8x32xf32>
    %244 = arith.addf %4, %243 : vector<8x32xf32>
    %245 = vector.extract_strided_slice %0 {offsets = [1, 0, 0], sizes = [1, 8, 72], strides = [1, 1, 1]} : vector<3x8x72xbf16> to vector<1x8x72xbf16>
    %246 = vector.shape_cast %245 : vector<1x8x72xbf16> to vector<8x72xbf16>
    %247 = vector.extract_strided_slice %239 {offsets = [0, 1], sizes = [72, 32], strides = [1, 1]} : vector<72x34xbf16> to vector<72x32xbf16>
    %cst_128 = arith.constant dense<0.000000e+00> : vector<8x32xf32>
    %248 = tpu.matmul %246, %247, %cst_128 {dimension_numbers = #tpu.dot_dimension_numbers<[1], [0], [0], [1], [0, 0, 1, 1], [], []>} : vector<8x72xbf16>, vector<72x32xbf16>, vector<8x32xf32> -> vector<8x32xf32>
    %249 = arith.addf %244, %248 : vector<8x32xf32>
    %250 = vector.extract_strided_slice %0 {offsets = [2, 0, 0], sizes = [1, 8, 72], strides = [1, 1, 1]} : vector<3x8x72xbf16> to vector<1x8x72xbf16>
    %251 = vector.shape_cast %250 : vector<1x8x72xbf16> to vector<8x72xbf16>
    %252 = vector.extract_strided_slice %239 {offsets = [0, 2], sizes = [72, 32], strides = [1, 1]} : vector<72x34xbf16> to vector<72x32xbf16>
    %cst_129 = arith.constant dense<0.000000e+00> : vector<8x32xf32>
    %253 = tpu.matmul %251, %252, %cst_129 {dimension_numbers = #tpu.dot_dimension_numbers<[1], [0], [0], [1], [0, 0, 1, 1], [], []>} : vector<8x72xbf16>, vector<72x32xbf16>, vector<8x32xf32> -> vector<8x32xf32>
    %254 = arith.addf %249, %253 : vector<8x32xf32>
    %cst_130 = arith.constant 0.000000e+00 : f32
    %255 = vector.broadcast %cst_130 : f32 to vector<8x32xf32>
    %256 = arith.maximumf %254, %255 : vector<8x32xf32>
    %257 = arith.truncf %256 : vector<8x32xf32> to vector<8x32xbf16>
    %c10 = arith.constant 10 : index
    %c0_131 = arith.constant 0 : index
    %c1_132 = arith.constant 1 : index
    %258 = vector.load %arg9[%c10, %c0_131, %c1_132] : memref<18x8x34xbf16, #tpu.memory_space<vmem>>, vector<1x8x32xbf16>
    %259 = vector.shape_cast %258 : vector<1x8x32xbf16> to vector<8x32xbf16>
    %260 = vector.shape_cast %257 : vector<8x32xbf16> to vector<1x8x32xbf16>
    tpu.vector_store %arg9[%c10, %c0_131, %c1_132], %260 {strides = array<i32>} : memref<18x8x34xbf16, #tpu.memory_space<vmem>>, vector<1x8x32xbf16>,
    %c0_133 = arith.constant 0 : index
    %c0_134 = arith.constant 0 : index
    %c9_135 = arith.constant 9 : index
    %c0_136 = arith.constant 0 : index
    %c0_137 = arith.constant 0 : index
    %261 = vector.load %arg2[%c0_133, %c0_134, %c9_135, %c0_136, %c0_137] : memref<1x1x16x24x34xbf16, #tpu.memory_space<vmem>>, vector<1x1x3x24x34xbf16>
    %262 = vector.shape_cast %261 : vector<1x1x3x24x34xbf16> to vector<3x24x34xbf16>
    %263 = vector.shape_cast %262 : vector<3x24x34xbf16> to vector<72x34xbf16>
    %264 = vector.extract_strided_slice %0 {offsets = [0, 0, 0], sizes = [1, 8, 72], strides = [1, 1, 1]} : vector<3x8x72xbf16> to vector<1x8x72xbf16>
    %265 = vector.shape_cast %264 : vector<1x8x72xbf16> to vector<8x72xbf16>
    %266 = vector.extract_strided_slice %263 {offsets = [0, 0], sizes = [72, 32], strides = [1, 1]} : vector<72x34xbf16> to vector<72x32xbf16>
    %cst_138 = arith.constant dense<0.000000e+00> : vector<8x32xf32>
    %267 = tpu.matmul %265, %266, %cst_138 {dimension_numbers = #tpu.dot_dimension_numbers<[1], [0], [0], [1], [0, 0, 1, 1], [], []>} : vector<8x72xbf16>, vector<72x32xbf16>, vector<8x32xf32> -> vector<8x32xf32>
    %268 = arith.addf %4, %267 : vector<8x32xf32>
    %269 = vector.extract_strided_slice %0 {offsets = [1, 0, 0], sizes = [1, 8, 72], strides = [1, 1, 1]} : vector<3x8x72xbf16> to vector<1x8x72xbf16>
    %270 = vector.shape_cast %269 : vector<1x8x72xbf16> to vector<8x72xbf16>
    %271 = vector.extract_strided_slice %263 {offsets = [0, 1], sizes = [72, 32], strides = [1, 1]} : vector<72x34xbf16> to vector<72x32xbf16>
    %cst_139 = arith.constant dense<0.000000e+00> : vector<8x32xf32>
    %272 = tpu.matmul %270, %271, %cst_139 {dimension_numbers = #tpu.dot_dimension_numbers<[1], [0], [0], [1], [0, 0, 1, 1], [], []>} : vector<8x72xbf16>, vector<72x32xbf16>, vector<8x32xf32> -> vector<8x32xf32>
    %273 = arith.addf %268, %272 : vector<8x32xf32>
    %274 = vector.extract_strided_slice %0 {offsets = [2, 0, 0], sizes = [1, 8, 72], strides = [1, 1, 1]} : vector<3x8x72xbf16> to vector<1x8x72xbf16>
    %275 = vector.shape_cast %274 : vector<1x8x72xbf16> to vector<8x72xbf16>
    %276 = vector.extract_strided_slice %263 {offsets = [0, 2], sizes = [72, 32], strides = [1, 1]} : vector<72x34xbf16> to vector<72x32xbf16>
    %cst_140 = arith.constant dense<0.000000e+00> : vector<8x32xf32>
    %277 = tpu.matmul %275, %276, %cst_140 {dimension_numbers = #tpu.dot_dimension_numbers<[1], [0], [0], [1], [0, 0, 1, 1], [], []>} : vector<8x72xbf16>, vector<72x32xbf16>, vector<8x32xf32> -> vector<8x32xf32>
    %278 = arith.addf %273, %277 : vector<8x32xf32>
    %cst_141 = arith.constant 0.000000e+00 : f32
    %279 = vector.broadcast %cst_141 : f32 to vector<8x32xf32>
    %280 = arith.maximumf %278, %279 : vector<8x32xf32>
    %281 = arith.truncf %280 : vector<8x32xf32> to vector<8x32xbf16>
    %c11 = arith.constant 11 : index
    %c0_142 = arith.constant 0 : index
    %c1_143 = arith.constant 1 : index
    %282 = vector.load %arg9[%c11, %c0_142, %c1_143] : memref<18x8x34xbf16, #tpu.memory_space<vmem>>, vector<1x8x32xbf16>
    %283 = vector.shape_cast %282 : vector<1x8x32xbf16> to vector<8x32xbf16>
    %284 = vector.shape_cast %281 : vector<8x32xbf16> to vector<1x8x32xbf16>
    tpu.vector_store %arg9[%c11, %c0_142, %c1_143], %284 {strides = array<i32>} : memref<18x8x34xbf16, #tpu.memory_space<vmem>>, vector<1x8x32xbf16>,
    %c0_144 = arith.constant 0 : index
    %c0_145 = arith.constant 0 : index
    %c10_146 = arith.constant 10 : index
    %c0_147 = arith.constant 0 : index
    %c0_148 = arith.constant 0 : index
    %285 = vector.load %arg2[%c0_144, %c0_145, %c10_146, %c0_147, %c0_148] : memref<1x1x16x24x34xbf16, #tpu.memory_space<vmem>>, vector<1x1x3x24x34xbf16>
    %286 = vector.shape_cast %285 : vector<1x1x3x24x34xbf16> to vector<3x24x34xbf16>
    %287 = vector.shape_cast %286 : vector<3x24x34xbf16> to vector<72x34xbf16>
    %288 = vector.extract_strided_slice %0 {offsets = [0, 0, 0], sizes = [1, 8, 72], strides = [1, 1, 1]} : vector<3x8x72xbf16> to vector<1x8x72xbf16>
    %289 = vector.shape_cast %288 : vector<1x8x72xbf16> to vector<8x72xbf16>
    %290 = vector.extract_strided_slice %287 {offsets = [0, 0], sizes = [72, 32], strides = [1, 1]} : vector<72x34xbf16> to vector<72x32xbf16>
    %cst_149 = arith.constant dense<0.000000e+00> : vector<8x32xf32>
    %291 = tpu.matmul %289, %290, %cst_149 {dimension_numbers = #tpu.dot_dimension_numbers<[1], [0], [0], [1], [0, 0, 1, 1], [], []>} : vector<8x72xbf16>, vector<72x32xbf16>, vector<8x32xf32> -> vector<8x32xf32>
    %292 = arith.addf %4, %291 : vector<8x32xf32>
    %293 = vector.extract_strided_slice %0 {offsets = [1, 0, 0], sizes = [1, 8, 72], strides = [1, 1, 1]} : vector<3x8x72xbf16> to vector<1x8x72xbf16>
    %294 = vector.shape_cast %293 : vector<1x8x72xbf16> to vector<8x72xbf16>
    %295 = vector.extract_strided_slice %287 {offsets = [0, 1], sizes = [72, 32], strides = [1, 1]} : vector<72x34xbf16> to vector<72x32xbf16>
    %cst_150 = arith.constant dense<0.000000e+00> : vector<8x32xf32>
    %296 = tpu.matmul %294, %295, %cst_150 {dimension_numbers = #tpu.dot_dimension_numbers<[1], [0], [0], [1], [0, 0, 1, 1], [], []>} : vector<8x72xbf16>, vector<72x32xbf16>, vector<8x32xf32> -> vector<8x32xf32>
    %297 = arith.addf %292, %296 : vector<8x32xf32>
    %298 = vector.extract_strided_slice %0 {offsets = [2, 0, 0], sizes = [1, 8, 72], strides = [1, 1, 1]} : vector<3x8x72xbf16> to vector<1x8x72xbf16>
    %299 = vector.shape_cast %298 : vector<1x8x72xbf16> to vector<8x72xbf16>
    %300 = vector.extract_strided_slice %287 {offsets = [0, 2], sizes = [72, 32], strides = [1, 1]} : vector<72x34xbf16> to vector<72x32xbf16>
    %cst_151 = arith.constant dense<0.000000e+00> : vector<8x32xf32>
    %301 = tpu.matmul %299, %300, %cst_151 {dimension_numbers = #tpu.dot_dimension_numbers<[1], [0], [0], [1], [0, 0, 1, 1], [], []>} : vector<8x72xbf16>, vector<72x32xbf16>, vector<8x32xf32> -> vector<8x32xf32>
    %302 = arith.addf %297, %301 : vector<8x32xf32>
    %cst_152 = arith.constant 0.000000e+00 : f32
    %303 = vector.broadcast %cst_152 : f32 to vector<8x32xf32>
    %304 = arith.maximumf %302, %303 : vector<8x32xf32>
    %305 = arith.truncf %304 : vector<8x32xf32> to vector<8x32xbf16>
    %c12 = arith.constant 12 : index
    %c0_153 = arith.constant 0 : index
    %c1_154 = arith.constant 1 : index
    %306 = vector.load %arg9[%c12, %c0_153, %c1_154] : memref<18x8x34xbf16, #tpu.memory_space<vmem>>, vector<1x8x32xbf16>
    %307 = vector.shape_cast %306 : vector<1x8x32xbf16> to vector<8x32xbf16>
    %308 = vector.shape_cast %305 : vector<8x32xbf16> to vector<1x8x32xbf16>
    tpu.vector_store %arg9[%c12, %c0_153, %c1_154], %308 {strides = array<i32>} : memref<18x8x34xbf16, #tpu.memory_space<vmem>>, vector<1x8x32xbf16>,
    %c0_155 = arith.constant 0 : index
    %c0_156 = arith.constant 0 : index
    %c11_157 = arith.constant 11 : index
    %c0_158 = arith.constant 0 : index
    %c0_159 = arith.constant 0 : index
    %309 = vector.load %arg2[%c0_155, %c0_156, %c11_157, %c0_158, %c0_159] : memref<1x1x16x24x34xbf16, #tpu.memory_space<vmem>>, vector<1x1x3x24x34xbf16>
    %310 = vector.shape_cast %309 : vector<1x1x3x24x34xbf16> to vector<3x24x34xbf16>
    %311 = vector.shape_cast %310 : vector<3x24x34xbf16> to vector<72x34xbf16>
    %312 = vector.extract_strided_slice %0 {offsets = [0, 0, 0], sizes = [1, 8, 72], strides = [1, 1, 1]} : vector<3x8x72xbf16> to vector<1x8x72xbf16>
    %313 = vector.shape_cast %312 : vector<1x8x72xbf16> to vector<8x72xbf16>
    %314 = vector.extract_strided_slice %311 {offsets = [0, 0], sizes = [72, 32], strides = [1, 1]} : vector<72x34xbf16> to vector<72x32xbf16>
    %cst_160 = arith.constant dense<0.000000e+00> : vector<8x32xf32>
    %315 = tpu.matmul %313, %314, %cst_160 {dimension_numbers = #tpu.dot_dimension_numbers<[1], [0], [0], [1], [0, 0, 1, 1], [], []>} : vector<8x72xbf16>, vector<72x32xbf16>, vector<8x32xf32> -> vector<8x32xf32>
    %316 = arith.addf %4, %315 : vector<8x32xf32>
    %317 = vector.extract_strided_slice %0 {offsets = [1, 0, 0], sizes = [1, 8, 72], strides = [1, 1, 1]} : vector<3x8x72xbf16> to vector<1x8x72xbf16>
    %318 = vector.shape_cast %317 : vector<1x8x72xbf16> to vector<8x72xbf16>
    %319 = vector.extract_strided_slice %311 {offsets = [0, 1], sizes = [72, 32], strides = [1, 1]} : vector<72x34xbf16> to vector<72x32xbf16>
    %cst_161 = arith.constant dense<0.000000e+00> : vector<8x32xf32>
    %320 = tpu.matmul %318, %319, %cst_161 {dimension_numbers = #tpu.dot_dimension_numbers<[1], [0], [0], [1], [0, 0, 1, 1], [], []>} : vector<8x72xbf16>, vector<72x32xbf16>, vector<8x32xf32> -> vector<8x32xf32>
    %321 = arith.addf %316, %320 : vector<8x32xf32>
    %322 = vector.extract_strided_slice %0 {offsets = [2, 0, 0], sizes = [1, 8, 72], strides = [1, 1, 1]} : vector<3x8x72xbf16> to vector<1x8x72xbf16>
    %323 = vector.shape_cast %322 : vector<1x8x72xbf16> to vector<8x72xbf16>
    %324 = vector.extract_strided_slice %311 {offsets = [0, 2], sizes = [72, 32], strides = [1, 1]} : vector<72x34xbf16> to vector<72x32xbf16>
    %cst_162 = arith.constant dense<0.000000e+00> : vector<8x32xf32>
    %325 = tpu.matmul %323, %324, %cst_162 {dimension_numbers = #tpu.dot_dimension_numbers<[1], [0], [0], [1], [0, 0, 1, 1], [], []>} : vector<8x72xbf16>, vector<72x32xbf16>, vector<8x32xf32> -> vector<8x32xf32>
    %326 = arith.addf %321, %325 : vector<8x32xf32>
    %cst_163 = arith.constant 0.000000e+00 : f32
    %327 = vector.broadcast %cst_163 : f32 to vector<8x32xf32>
    %328 = arith.maximumf %326, %327 : vector<8x32xf32>
    %329 = arith.truncf %328 : vector<8x32xf32> to vector<8x32xbf16>
    %c13 = arith.constant 13 : index
    %c0_164 = arith.constant 0 : index
    %c1_165 = arith.constant 1 : index
    %330 = vector.load %arg9[%c13, %c0_164, %c1_165] : memref<18x8x34xbf16, #tpu.memory_space<vmem>>, vector<1x8x32xbf16>
    %331 = vector.shape_cast %330 : vector<1x8x32xbf16> to vector<8x32xbf16>
    %332 = vector.shape_cast %329 : vector<8x32xbf16> to vector<1x8x32xbf16>
    tpu.vector_store %arg9[%c13, %c0_164, %c1_165], %332 {strides = array<i32>} : memref<18x8x34xbf16, #tpu.memory_space<vmem>>, vector<1x8x32xbf16>,
    %c0_166 = arith.constant 0 : index
    %c0_167 = arith.constant 0 : index
    %c12_168 = arith.constant 12 : index
    %c0_169 = arith.constant 0 : index
    %c0_170 = arith.constant 0 : index
    %333 = vector.load %arg2[%c0_166, %c0_167, %c12_168, %c0_169, %c0_170] : memref<1x1x16x24x34xbf16, #tpu.memory_space<vmem>>, vector<1x1x3x24x34xbf16>
    %334 = vector.shape_cast %333 : vector<1x1x3x24x34xbf16> to vector<3x24x34xbf16>
    %335 = vector.shape_cast %334 : vector<3x24x34xbf16> to vector<72x34xbf16>
    %336 = vector.extract_strided_slice %0 {offsets = [0, 0, 0], sizes = [1, 8, 72], strides = [1, 1, 1]} : vector<3x8x72xbf16> to vector<1x8x72xbf16>
    %337 = vector.shape_cast %336 : vector<1x8x72xbf16> to vector<8x72xbf16>
    %338 = vector.extract_strided_slice %335 {offsets = [0, 0], sizes = [72, 32], strides = [1, 1]} : vector<72x34xbf16> to vector<72x32xbf16>
    %cst_171 = arith.constant dense<0.000000e+00> : vector<8x32xf32>
    %339 = tpu.matmul %337, %338, %cst_171 {dimension_numbers = #tpu.dot_dimension_numbers<[1], [0], [0], [1], [0, 0, 1, 1], [], []>} : vector<8x72xbf16>, vector<72x32xbf16>, vector<8x32xf32> -> vector<8x32xf32>
    %340 = arith.addf %4, %339 : vector<8x32xf32>
    %341 = vector.extract_strided_slice %0 {offsets = [1, 0, 0], sizes = [1, 8, 72], strides = [1, 1, 1]} : vector<3x8x72xbf16> to vector<1x8x72xbf16>
    %342 = vector.shape_cast %341 : vector<1x8x72xbf16> to vector<8x72xbf16>
    %343 = vector.extract_strided_slice %335 {offsets = [0, 1], sizes = [72, 32], strides = [1, 1]} : vector<72x34xbf16> to vector<72x32xbf16>
    %cst_172 = arith.constant dense<0.000000e+00> : vector<8x32xf32>
    %344 = tpu.matmul %342, %343, %cst_172 {dimension_numbers = #tpu.dot_dimension_numbers<[1], [0], [0], [1], [0, 0, 1, 1], [], []>} : vector<8x72xbf16>, vector<72x32xbf16>, vector<8x32xf32> -> vector<8x32xf32>
    %345 = arith.addf %340, %344 : vector<8x32xf32>
    %346 = vector.extract_strided_slice %0 {offsets = [2, 0, 0], sizes = [1, 8, 72], strides = [1, 1, 1]} : vector<3x8x72xbf16> to vector<1x8x72xbf16>
    %347 = vector.shape_cast %346 : vector<1x8x72xbf16> to vector<8x72xbf16>
    %348 = vector.extract_strided_slice %335 {offsets = [0, 2], sizes = [72, 32], strides = [1, 1]} : vector<72x34xbf16> to vector<72x32xbf16>
    %cst_173 = arith.constant dense<0.000000e+00> : vector<8x32xf32>
    %349 = tpu.matmul %347, %348, %cst_173 {dimension_numbers = #tpu.dot_dimension_numbers<[1], [0], [0], [1], [0, 0, 1, 1], [], []>} : vector<8x72xbf16>, vector<72x32xbf16>, vector<8x32xf32> -> vector<8x32xf32>
    %350 = arith.addf %345, %349 : vector<8x32xf32>
    %cst_174 = arith.constant 0.000000e+00 : f32
    %351 = vector.broadcast %cst_174 : f32 to vector<8x32xf32>
    %352 = arith.maximumf %350, %351 : vector<8x32xf32>
    %353 = arith.truncf %352 : vector<8x32xf32> to vector<8x32xbf16>
    %c14 = arith.constant 14 : index
    %c0_175 = arith.constant 0 : index
    %c1_176 = arith.constant 1 : index
    %354 = vector.load %arg9[%c14, %c0_175, %c1_176] : memref<18x8x34xbf16, #tpu.memory_space<vmem>>, vector<1x8x32xbf16>
    %355 = vector.shape_cast %354 : vector<1x8x32xbf16> to vector<8x32xbf16>
    %356 = vector.shape_cast %353 : vector<8x32xbf16> to vector<1x8x32xbf16>
    tpu.vector_store %arg9[%c14, %c0_175, %c1_176], %356 {strides = array<i32>} : memref<18x8x34xbf16, #tpu.memory_space<vmem>>, vector<1x8x32xbf16>,
    %c0_177 = arith.constant 0 : index
    %c0_178 = arith.constant 0 : index
    %c13_179 = arith.constant 13 : index
    %c0_180 = arith.constant 0 : index
    %c0_181 = arith.constant 0 : index
    %357 = vector.load %arg2[%c0_177, %c0_178, %c13_179, %c0_180, %c0_181] : memref<1x1x16x24x34xbf16, #tpu.memory_space<vmem>>, vector<1x1x3x24x34xbf16>
    %358 = vector.shape_cast %357 : vector<1x1x3x24x34xbf16> to vector<3x24x34xbf16>
    %359 = vector.shape_cast %358 : vector<3x24x34xbf16> to vector<72x34xbf16>
    %360 = vector.extract_strided_slice %0 {offsets = [0, 0, 0], sizes = [1, 8, 72], strides = [1, 1, 1]} : vector<3x8x72xbf16> to vector<1x8x72xbf16>
    %361 = vector.shape_cast %360 : vector<1x8x72xbf16> to vector<8x72xbf16>
    %362 = vector.extract_strided_slice %359 {offsets = [0, 0], sizes = [72, 32], strides = [1, 1]} : vector<72x34xbf16> to vector<72x32xbf16>
    %cst_182 = arith.constant dense<0.000000e+00> : vector<8x32xf32>
    %363 = tpu.matmul %361, %362, %cst_182 {dimension_numbers = #tpu.dot_dimension_numbers<[1], [0], [0], [1], [0, 0, 1, 1], [], []>} : vector<8x72xbf16>, vector<72x32xbf16>, vector<8x32xf32> -> vector<8x32xf32>
    %364 = arith.addf %4, %363 : vector<8x32xf32>
    %365 = vector.extract_strided_slice %0 {offsets = [1, 0, 0], sizes = [1, 8, 72], strides = [1, 1, 1]} : vector<3x8x72xbf16> to vector<1x8x72xbf16>
    %366 = vector.shape_cast %365 : vector<1x8x72xbf16> to vector<8x72xbf16>
    %367 = vector.extract_strided_slice %359 {offsets = [0, 1], sizes = [72, 32], strides = [1, 1]} : vector<72x34xbf16> to vector<72x32xbf16>
    %cst_183 = arith.constant dense<0.000000e+00> : vector<8x32xf32>
    %368 = tpu.matmul %366, %367, %cst_183 {dimension_numbers = #tpu.dot_dimension_numbers<[1], [0], [0], [1], [0, 0, 1, 1], [], []>} : vector<8x72xbf16>, vector<72x32xbf16>, vector<8x32xf32> -> vector<8x32xf32>
    %369 = arith.addf %364, %368 : vector<8x32xf32>
    %370 = vector.extract_strided_slice %0 {offsets = [2, 0, 0], sizes = [1, 8, 72], strides = [1, 1, 1]} : vector<3x8x72xbf16> to vector<1x8x72xbf16>
    %371 = vector.shape_cast %370 : vector<1x8x72xbf16> to vector<8x72xbf16>
    %372 = vector.extract_strided_slice %359 {offsets = [0, 2], sizes = [72, 32], strides = [1, 1]} : vector<72x34xbf16> to vector<72x32xbf16>
    %cst_184 = arith.constant dense<0.000000e+00> : vector<8x32xf32>
    %373 = tpu.matmul %371, %372, %cst_184 {dimension_numbers = #tpu.dot_dimension_numbers<[1], [0], [0], [1], [0, 0, 1, 1], [], []>} : vector<8x72xbf16>, vector<72x32xbf16>, vector<8x32xf32> -> vector<8x32xf32>
    %374 = arith.addf %369, %373 : vector<8x32xf32>
    %cst_185 = arith.constant 0.000000e+00 : f32
    %375 = vector.broadcast %cst_185 : f32 to vector<8x32xf32>
    %376 = arith.maximumf %374, %375 : vector<8x32xf32>
    %377 = arith.truncf %376 : vector<8x32xf32> to vector<8x32xbf16>
    %c15 = arith.constant 15 : index
    %c0_186 = arith.constant 0 : index
    %c1_187 = arith.constant 1 : index
    %378 = vector.load %arg9[%c15, %c0_186, %c1_187] : memref<18x8x34xbf16, #tpu.memory_space<vmem>>, vector<1x8x32xbf16>
    %379 = vector.shape_cast %378 : vector<1x8x32xbf16> to vector<8x32xbf16>
    %380 = vector.shape_cast %377 : vector<8x32xbf16> to vector<1x8x32xbf16>
    tpu.vector_store %arg9[%c15, %c0_186, %c1_187], %380 {strides = array<i32>} : memref<18x8x34xbf16, #tpu.memory_space<vmem>>, vector<1x8x32xbf16>,
    %c0_188 = arith.constant 0 : index
    %c0_189 = arith.constant 0 : index
    %c14_190 = arith.constant 14 : index
    %c0_191 = arith.constant 0 : index
    %c0_192 = arith.constant 0 : index
    %381 = vector.load %arg2[%c0_188, %c0_189, %c14_190, %c0_191, %c0_192] : memref<1x1x16x24x34xbf16, #tpu.memory_space<vmem>>, vector<1x1x1x24x34xbf16>
    %382 = vector.shape_cast %381 : vector<1x1x1x24x34xbf16> to vector<24x34xbf16>
    %c0_193 = arith.constant 0 : index
    %c0_194 = arith.constant 0 : index
    %c15_195 = arith.constant 15 : index
    %c0_196 = arith.constant 0 : index
    %c0_197 = arith.constant 0 : index
    %383 = vector.load %arg2[%c0_193, %c0_194, %c15_195, %c0_196, %c0_197] : memref<1x1x16x24x34xbf16, #tpu.memory_space<vmem>>, vector<1x1x1x24x34xbf16>
    %384 = vector.shape_cast %383 : vector<1x1x1x24x34xbf16> to vector<24x34xbf16>
    %c0_198 = arith.constant 0 : index
    %c0_199 = arith.constant 0 : index
    %c2_200 = arith.constant 2 : index
    %c0_201 = arith.constant 0 : index
    %c0_202 = arith.constant 0 : index
    %385 = vector.load %arg3[%c0_198, %c0_199, %c2_200, %c0_201, %c0_202] : memref<1x1x4x24x34xbf16, #tpu.memory_space<vmem>>, vector<1x1x1x24x34xbf16>
    %386 = vector.shape_cast %385 : vector<1x1x1x24x34xbf16> to vector<24x34xbf16>
    %387 = tpu.concatenate %382, %384, %386 in 0 : vector<24x34xbf16>, vector<24x34xbf16>, vector<24x34xbf16> -> vector<72x34xbf16>
    %388 = vector.extract_strided_slice %0 {offsets = [0, 0, 0], sizes = [1, 8, 72], strides = [1, 1, 1]} : vector<3x8x72xbf16> to vector<1x8x72xbf16>
    %389 = vector.shape_cast %388 : vector<1x8x72xbf16> to vector<8x72xbf16>
    %390 = vector.extract_strided_slice %387 {offsets = [0, 0], sizes = [72, 32], strides = [1, 1]} : vector<72x34xbf16> to vector<72x32xbf16>
    %cst_203 = arith.constant dense<0.000000e+00> : vector<8x32xf32>
    %391 = tpu.matmul %389, %390, %cst_203 {dimension_numbers = #tpu.dot_dimension_numbers<[1], [0], [0], [1], [0, 0, 1, 1], [], []>} : vector<8x72xbf16>, vector<72x32xbf16>, vector<8x32xf32> -> vector<8x32xf32>
    %392 = arith.addf %4, %391 : vector<8x32xf32>
    %393 = vector.extract_strided_slice %0 {offsets = [1, 0, 0], sizes = [1, 8, 72], strides = [1, 1, 1]} : vector<3x8x72xbf16> to vector<1x8x72xbf16>
    %394 = vector.shape_cast %393 : vector<1x8x72xbf16> to vector<8x72xbf16>
    %395 = vector.extract_strided_slice %387 {offsets = [0, 1], sizes = [72, 32], strides = [1, 1]} : vector<72x34xbf16> to vector<72x32xbf16>
    %cst_204 = arith.constant dense<0.000000e+00> : vector<8x32xf32>
    %396 = tpu.matmul %394, %395, %cst_204 {dimension_numbers = #tpu.dot_dimension_numbers<[1], [0], [0], [1], [0, 0, 1, 1], [], []>} : vector<8x72xbf16>, vector<72x32xbf16>, vector<8x32xf32> -> vector<8x32xf32>
    %397 = arith.addf %392, %396 : vector<8x32xf32>
    %398 = vector.extract_strided_slice %0 {offsets = [2, 0, 0], sizes = [1, 8, 72], strides = [1, 1, 1]} : vector<3x8x72xbf16> to vector<1x8x72xbf16>
    %399 = vector.shape_cast %398 : vector<1x8x72xbf16> to vector<8x72xbf16>
    %400 = vector.extract_strided_slice %387 {offsets = [0, 2], sizes = [72, 32], strides = [1, 1]} : vector<72x34xbf16> to vector<72x32xbf16>
    %cst_205 = arith.constant dense<0.000000e+00> : vector<8x32xf32>
    %401 = tpu.matmul %399, %400, %cst_205 {dimension_numbers = #tpu.dot_dimension_numbers<[1], [0], [0], [1], [0, 0, 1, 1], [], []>} : vector<8x72xbf16>, vector<72x32xbf16>, vector<8x32xf32> -> vector<8x32xf32>
    %402 = arith.addf %397, %401 : vector<8x32xf32>
    %cst_206 = arith.constant 0.000000e+00 : f32
    %403 = vector.broadcast %cst_206 : f32 to vector<8x32xf32>
    %404 = arith.maximumf %402, %403 : vector<8x32xf32>
    %405 = arith.truncf %404 : vector<8x32xf32> to vector<8x32xbf16>
    %c16 = arith.constant 16 : index
    %c0_207 = arith.constant 0 : index
    %c1_208 = arith.constant 1 : index
    %406 = vector.load %arg9[%c16, %c0_207, %c1_208] : memref<18x8x34xbf16, #tpu.memory_space<vmem>>, vector<1x8x32xbf16>
    %407 = vector.shape_cast %406 : vector<1x8x32xbf16> to vector<8x32xbf16>
    %408 = vector.shape_cast %405 : vector<8x32xbf16> to vector<1x8x32xbf16>
    tpu.vector_store %arg9[%c16, %c0_207, %c1_208], %408 {strides = array<i32>} : memref<18x8x34xbf16, #tpu.memory_space<vmem>>, vector<1x8x32xbf16>,
    %c16_i32_209 = arith.constant 16 : i32
    %409 = arith.muli %arg1, %c16_i32_209 : i32
    %c16_i32_210 = arith.constant 16 : i32
    %410 = arith.addi %409, %c16_i32_210 : i32
    %c0_i32_211 = arith.constant 0 : i32
    %411 = arith.cmpi sge, %410, %c0_i32_211 : i32
    %c32_i32_212 = arith.constant 32 : i32
    %412 = arith.cmpi slt, %410, %c32_i32_212 : i32
    %413 = arith.andi %411, %412 : i1
    %414 = arith.extui %413 : i1 to i32
    %c0_i32_213 = arith.constant 0 : i32
    %415 = arith.cmpi ne, %414, %c0_i32_213 : i32
    scf.if %415 {
      %c0_390 = arith.constant 0 : index
      %c0_391 = arith.constant 0 : index
      %c15_392 = arith.constant 15 : index
      %c0_393 = arith.constant 0 : index
      %c0_394 = arith.constant 0 : index
      %784 = vector.load %arg2[%c0_390, %c0_391, %c15_392, %c0_393, %c0_394] : memref<1x1x16x24x34xbf16, #tpu.memory_space<vmem>>, vector<1x1x1x24x34xbf16>
      %785 = vector.shape_cast %784 : vector<1x1x1x24x34xbf16> to vector<24x34xbf16>
      %c0_395 = arith.constant 0 : index
      %c0_396 = arith.constant 0 : index
      %c2_397 = arith.constant 2 : index
      %c0_398 = arith.constant 0 : index
      %c0_399 = arith.constant 0 : index
      %786 = vector.load %arg3[%c0_395, %c0_396, %c2_397, %c0_398, %c0_399] : memref<1x1x4x24x34xbf16, #tpu.memory_space<vmem>>, vector<1x1x1x24x34xbf16>
      %787 = vector.shape_cast %786 : vector<1x1x1x24x34xbf16> to vector<24x34xbf16>
      %c0_400 = arith.constant 0 : index
      %c0_401 = arith.constant 0 : index
      %c3_402 = arith.constant 3 : index
      %c0_403 = arith.constant 0 : index
      %c0_404 = arith.constant 0 : index
      %788 = vector.load %arg3[%c0_400, %c0_401, %c3_402, %c0_403, %c0_404] : memref<1x1x4x24x34xbf16, #tpu.memory_space<vmem>>, vector<1x1x1x24x34xbf16>
      %789 = vector.shape_cast %788 : vector<1x1x1x24x34xbf16> to vector<24x34xbf16>
      %790 = tpu.concatenate %785, %787, %789 in 0 : vector<24x34xbf16>, vector<24x34xbf16>, vector<24x34xbf16> -> vector<72x34xbf16>
      %791 = vector.extract_strided_slice %0 {offsets = [0, 0, 0], sizes = [1, 8, 72], strides = [1, 1, 1]} : vector<3x8x72xbf16> to vector<1x8x72xbf16>
      %792 = vector.shape_cast %791 : vector<1x8x72xbf16> to vector<8x72xbf16>
      %793 = vector.extract_strided_slice %790 {offsets = [0, 0], sizes = [72, 32], strides = [1, 1]} : vector<72x34xbf16> to vector<72x32xbf16>
      %cst_405 = arith.constant dense<0.000000e+00> : vector<8x32xf32>
      %794 = tpu.matmul %792, %793, %cst_405 {dimension_numbers = #tpu.dot_dimension_numbers<[1], [0], [0], [1], [0, 0, 1, 1], [], []>} : vector<8x72xbf16>, vector<72x32xbf16>, vector<8x32xf32> -> vector<8x32xf32>
      %795 = arith.addf %4, %794 : vector<8x32xf32>
      %796 = vector.extract_strided_slice %0 {offsets = [1, 0, 0], sizes = [1, 8, 72], strides = [1, 1, 1]} : vector<3x8x72xbf16> to vector<1x8x72xbf16>
      %797 = vector.shape_cast %796 : vector<1x8x72xbf16> to vector<8x72xbf16>
      %798 = vector.extract_strided_slice %790 {offsets = [0, 1], sizes = [72, 32], strides = [1, 1]} : vector<72x34xbf16> to vector<72x32xbf16>
      %cst_406 = arith.constant dense<0.000000e+00> : vector<8x32xf32>
      %799 = tpu.matmul %797, %798, %cst_406 {dimension_numbers = #tpu.dot_dimension_numbers<[1], [0], [0], [1], [0, 0, 1, 1], [], []>} : vector<8x72xbf16>, vector<72x32xbf16>, vector<8x32xf32> -> vector<8x32xf32>
      %800 = arith.addf %795, %799 : vector<8x32xf32>
      %801 = vector.extract_strided_slice %0 {offsets = [2, 0, 0], sizes = [1, 8, 72], strides = [1, 1, 1]} : vector<3x8x72xbf16> to vector<1x8x72xbf16>
      %802 = vector.shape_cast %801 : vector<1x8x72xbf16> to vector<8x72xbf16>
      %803 = vector.extract_strided_slice %790 {offsets = [0, 2], sizes = [72, 32], strides = [1, 1]} : vector<72x34xbf16> to vector<72x32xbf16>
      %cst_407 = arith.constant dense<0.000000e+00> : vector<8x32xf32>
      %804 = tpu.matmul %802, %803, %cst_407 {dimension_numbers = #tpu.dot_dimension_numbers<[1], [0], [0], [1], [0, 0, 1, 1], [], []>} : vector<8x72xbf16>, vector<72x32xbf16>, vector<8x32xf32> -> vector<8x32xf32>
      %805 = arith.addf %800, %804 : vector<8x32xf32>
      %cst_408 = arith.constant 0.000000e+00 : f32
      %806 = vector.broadcast %cst_408 : f32 to vector<8x32xf32>
      %807 = arith.maximumf %805, %806 : vector<8x32xf32>
      %808 = arith.truncf %807 : vector<8x32xf32> to vector<8x32xbf16>
      %c17 = arith.constant 17 : index
      %c0_409 = arith.constant 0 : index
      %c1_410 = arith.constant 1 : index
      %809 = vector.load %arg9[%c17, %c0_409, %c1_410] : memref<18x8x34xbf16, #tpu.memory_space<vmem>>, vector<1x8x32xbf16>
      %810 = vector.shape_cast %809 : vector<1x8x32xbf16> to vector<8x32xbf16>
      %811 = vector.shape_cast %808 : vector<8x32xbf16> to vector<1x8x32xbf16>
      tpu.vector_store %arg9[%c17, %c0_409, %c1_410], %811 {strides = array<i32>} : memref<18x8x34xbf16, #tpu.memory_space<vmem>>, vector<1x8x32xbf16>,
    } else {
    }
    %c0_214 = arith.constant 0 : index
    %c0_215 = arith.constant 0 : index
    %c0_216 = arith.constant 0 : index
    %416 = vector.load %arg9[%c0_214, %c0_215, %c0_216] : memref<18x8x34xbf16, #tpu.memory_space<vmem>>, vector<3x8x34xbf16>
    %417 = vector.shape_cast %416 : vector<3x8x34xbf16> to vector<24x34xbf16>
    %418 = vector.extract_strided_slice %1 {offsets = [0, 0, 0], sizes = [1, 8, 24], strides = [1, 1, 1]} : vector<3x8x24xbf16> to vector<1x8x24xbf16>
    %419 = vector.shape_cast %418 : vector<1x8x24xbf16> to vector<8x24xbf16>
    %420 = vector.extract_strided_slice %417 {offsets = [0, 0], sizes = [24, 32], strides = [1, 1]} : vector<24x34xbf16> to vector<24x32xbf16>
    %cst_217 = arith.constant dense<0.000000e+00> : vector<8x32xf32>
    %421 = tpu.matmul %419, %420, %cst_217 {dimension_numbers = #tpu.dot_dimension_numbers<[1], [0], [0], [1], [0, 0, 1, 1], [], []>} : vector<8x24xbf16>, vector<24x32xbf16>, vector<8x32xf32> -> vector<8x32xf32>
    %422 = arith.addf %7, %421 : vector<8x32xf32>
    %423 = vector.extract_strided_slice %1 {offsets = [1, 0, 0], sizes = [1, 8, 24], strides = [1, 1, 1]} : vector<3x8x24xbf16> to vector<1x8x24xbf16>
    %424 = vector.shape_cast %423 : vector<1x8x24xbf16> to vector<8x24xbf16>
    %425 = vector.extract_strided_slice %417 {offsets = [0, 1], sizes = [24, 32], strides = [1, 1]} : vector<24x34xbf16> to vector<24x32xbf16>
    %cst_218 = arith.constant dense<0.000000e+00> : vector<8x32xf32>
    %426 = tpu.matmul %424, %425, %cst_218 {dimension_numbers = #tpu.dot_dimension_numbers<[1], [0], [0], [1], [0, 0, 1, 1], [], []>} : vector<8x24xbf16>, vector<24x32xbf16>, vector<8x32xf32> -> vector<8x32xf32>
    %427 = arith.addf %422, %426 : vector<8x32xf32>
    %428 = vector.extract_strided_slice %1 {offsets = [2, 0, 0], sizes = [1, 8, 24], strides = [1, 1, 1]} : vector<3x8x24xbf16> to vector<1x8x24xbf16>
    %429 = vector.shape_cast %428 : vector<1x8x24xbf16> to vector<8x24xbf16>
    %430 = vector.extract_strided_slice %417 {offsets = [0, 2], sizes = [24, 32], strides = [1, 1]} : vector<24x34xbf16> to vector<24x32xbf16>
    %cst_219 = arith.constant dense<0.000000e+00> : vector<8x32xf32>
    %431 = tpu.matmul %429, %430, %cst_219 {dimension_numbers = #tpu.dot_dimension_numbers<[1], [0], [0], [1], [0, 0, 1, 1], [], []>} : vector<8x24xbf16>, vector<24x32xbf16>, vector<8x32xf32> -> vector<8x32xf32>
    %432 = arith.addf %427, %431 : vector<8x32xf32>
    %cst_220 = arith.constant 0.000000e+00 : f32
    %433 = vector.broadcast %cst_220 : f32 to vector<8x32xf32>
    %434 = arith.maximumf %432, %433 : vector<8x32xf32>
    %435 = arith.truncf %434 : vector<8x32xf32> to vector<8x32xbf16>
    %c0_221 = arith.constant 0 : index
    %c0_222 = arith.constant 0 : index
    %c0_223 = arith.constant 0 : index
    %c0_224 = arith.constant 0 : index
    %436 = vector.load %arg8[%c0_221, %c0_222, %c0_223, %c0_224] : memref<1x8x16x32xbf16, #tpu.memory_space<vmem>>, vector<1x8x1x32xbf16>
    %437 = vector.shape_cast %436 : vector<1x8x1x32xbf16> to vector<8x32xbf16>
    %438 = vector.shape_cast %435 : vector<8x32xbf16> to vector<1x8x1x32xbf16>
    tpu.vector_store %arg8[%c0_221, %c0_222, %c0_223, %c0_224], %438 {strides = array<i32>} : memref<1x8x16x32xbf16, #tpu.memory_space<vmem>>, vector<1x8x1x32xbf16>,
    %c1_225 = arith.constant 1 : index
    %c0_226 = arith.constant 0 : index
    %c0_227 = arith.constant 0 : index
    %439 = vector.load %arg9[%c1_225, %c0_226, %c0_227] : memref<18x8x34xbf16, #tpu.memory_space<vmem>>, vector<3x8x34xbf16>
    %440 = vector.shape_cast %439 : vector<3x8x34xbf16> to vector<24x34xbf16>
    %441 = vector.extract_strided_slice %1 {offsets = [0, 0, 0], sizes = [1, 8, 24], strides = [1, 1, 1]} : vector<3x8x24xbf16> to vector<1x8x24xbf16>
    %442 = vector.shape_cast %441 : vector<1x8x24xbf16> to vector<8x24xbf16>
    %443 = vector.extract_strided_slice %440 {offsets = [0, 0], sizes = [24, 32], strides = [1, 1]} : vector<24x34xbf16> to vector<24x32xbf16>
    %cst_228 = arith.constant dense<0.000000e+00> : vector<8x32xf32>
    %444 = tpu.matmul %442, %443, %cst_228 {dimension_numbers = #tpu.dot_dimension_numbers<[1], [0], [0], [1], [0, 0, 1, 1], [], []>} : vector<8x24xbf16>, vector<24x32xbf16>, vector<8x32xf32> -> vector<8x32xf32>
    %445 = arith.addf %7, %444 : vector<8x32xf32>
    %446 = vector.extract_strided_slice %1 {offsets = [1, 0, 0], sizes = [1, 8, 24], strides = [1, 1, 1]} : vector<3x8x24xbf16> to vector<1x8x24xbf16>
    %447 = vector.shape_cast %446 : vector<1x8x24xbf16> to vector<8x24xbf16>
    %448 = vector.extract_strided_slice %440 {offsets = [0, 1], sizes = [24, 32], strides = [1, 1]} : vector<24x34xbf16> to vector<24x32xbf16>
    %cst_229 = arith.constant dense<0.000000e+00> : vector<8x32xf32>
    %449 = tpu.matmul %447, %448, %cst_229 {dimension_numbers = #tpu.dot_dimension_numbers<[1], [0], [0], [1], [0, 0, 1, 1], [], []>} : vector<8x24xbf16>, vector<24x32xbf16>, vector<8x32xf32> -> vector<8x32xf32>
    %450 = arith.addf %445, %449 : vector<8x32xf32>
    %451 = vector.extract_strided_slice %1 {offsets = [2, 0, 0], sizes = [1, 8, 24], strides = [1, 1, 1]} : vector<3x8x24xbf16> to vector<1x8x24xbf16>
    %452 = vector.shape_cast %451 : vector<1x8x24xbf16> to vector<8x24xbf16>
    %453 = vector.extract_strided_slice %440 {offsets = [0, 2], sizes = [24, 32], strides = [1, 1]} : vector<24x34xbf16> to vector<24x32xbf16>
    %cst_230 = arith.constant dense<0.000000e+00> : vector<8x32xf32>
    %454 = tpu.matmul %452, %453, %cst_230 {dimension_numbers = #tpu.dot_dimension_numbers<[1], [0], [0], [1], [0, 0, 1, 1], [], []>} : vector<8x24xbf16>, vector<24x32xbf16>, vector<8x32xf32> -> vector<8x32xf32>
    %455 = arith.addf %450, %454 : vector<8x32xf32>
    %cst_231 = arith.constant 0.000000e+00 : f32
    %456 = vector.broadcast %cst_231 : f32 to vector<8x32xf32>
    %457 = arith.maximumf %455, %456 : vector<8x32xf32>
    %458 = arith.truncf %457 : vector<8x32xf32> to vector<8x32xbf16>
    %c0_232 = arith.constant 0 : index
    %c0_233 = arith.constant 0 : index
    %c1_234 = arith.constant 1 : index
    %c0_235 = arith.constant 0 : index
    %459 = vector.load %arg8[%c0_232, %c0_233, %c1_234, %c0_235] : memref<1x8x16x32xbf16, #tpu.memory_space<vmem>>, vector<1x8x1x32xbf16>
    %460 = vector.shape_cast %459 : vector<1x8x1x32xbf16> to vector<8x32xbf16>
    %461 = vector.shape_cast %458 : vector<8x32xbf16> to vector<1x8x1x32xbf16>
    tpu.vector_store %arg8[%c0_232, %c0_233, %c1_234, %c0_235], %461 {strides = array<i32>} : memref<1x8x16x32xbf16, #tpu.memory_space<vmem>>, vector<1x8x1x32xbf16>,
    %c2_236 = arith.constant 2 : index
    %c0_237 = arith.constant 0 : index
    %c0_238 = arith.constant 0 : index
    %462 = vector.load %arg9[%c2_236, %c0_237, %c0_238] : memref<18x8x34xbf16, #tpu.memory_space<vmem>>, vector<3x8x34xbf16>
    %463 = vector.shape_cast %462 : vector<3x8x34xbf16> to vector<24x34xbf16>
    %464 = vector.extract_strided_slice %1 {offsets = [0, 0, 0], sizes = [1, 8, 24], strides = [1, 1, 1]} : vector<3x8x24xbf16> to vector<1x8x24xbf16>
    %465 = vector.shape_cast %464 : vector<1x8x24xbf16> to vector<8x24xbf16>
    %466 = vector.extract_strided_slice %463 {offsets = [0, 0], sizes = [24, 32], strides = [1, 1]} : vector<24x34xbf16> to vector<24x32xbf16>
    %cst_239 = arith.constant dense<0.000000e+00> : vector<8x32xf32>
    %467 = tpu.matmul %465, %466, %cst_239 {dimension_numbers = #tpu.dot_dimension_numbers<[1], [0], [0], [1], [0, 0, 1, 1], [], []>} : vector<8x24xbf16>, vector<24x32xbf16>, vector<8x32xf32> -> vector<8x32xf32>
    %468 = arith.addf %7, %467 : vector<8x32xf32>
    %469 = vector.extract_strided_slice %1 {offsets = [1, 0, 0], sizes = [1, 8, 24], strides = [1, 1, 1]} : vector<3x8x24xbf16> to vector<1x8x24xbf16>
    %470 = vector.shape_cast %469 : vector<1x8x24xbf16> to vector<8x24xbf16>
    %471 = vector.extract_strided_slice %463 {offsets = [0, 1], sizes = [24, 32], strides = [1, 1]} : vector<24x34xbf16> to vector<24x32xbf16>
    %cst_240 = arith.constant dense<0.000000e+00> : vector<8x32xf32>
    %472 = tpu.matmul %470, %471, %cst_240 {dimension_numbers = #tpu.dot_dimension_numbers<[1], [0], [0], [1], [0, 0, 1, 1], [], []>} : vector<8x24xbf16>, vector<24x32xbf16>, vector<8x32xf32> -> vector<8x32xf32>
    %473 = arith.addf %468, %472 : vector<8x32xf32>
    %474 = vector.extract_strided_slice %1 {offsets = [2, 0, 0], sizes = [1, 8, 24], strides = [1, 1, 1]} : vector<3x8x24xbf16> to vector<1x8x24xbf16>
    %475 = vector.shape_cast %474 : vector<1x8x24xbf16> to vector<8x24xbf16>
    %476 = vector.extract_strided_slice %463 {offsets = [0, 2], sizes = [24, 32], strides = [1, 1]} : vector<24x34xbf16> to vector<24x32xbf16>
    %cst_241 = arith.constant dense<0.000000e+00> : vector<8x32xf32>
    %477 = tpu.matmul %475, %476, %cst_241 {dimension_numbers = #tpu.dot_dimension_numbers<[1], [0], [0], [1], [0, 0, 1, 1], [], []>} : vector<8x24xbf16>, vector<24x32xbf16>, vector<8x32xf32> -> vector<8x32xf32>
    %478 = arith.addf %473, %477 : vector<8x32xf32>
    %cst_242 = arith.constant 0.000000e+00 : f32
    %479 = vector.broadcast %cst_242 : f32 to vector<8x32xf32>
    %480 = arith.maximumf %478, %479 : vector<8x32xf32>
    %481 = arith.truncf %480 : vector<8x32xf32> to vector<8x32xbf16>
    %c0_243 = arith.constant 0 : index
    %c0_244 = arith.constant 0 : index
    %c2_245 = arith.constant 2 : index
    %c0_246 = arith.constant 0 : index
    %482 = vector.load %arg8[%c0_243, %c0_244, %c2_245, %c0_246] : memref<1x8x16x32xbf16, #tpu.memory_space<vmem>>, vector<1x8x1x32xbf16>
    %483 = vector.shape_cast %482 : vector<1x8x1x32xbf16> to vector<8x32xbf16>
    %484 = vector.shape_cast %481 : vector<8x32xbf16> to vector<1x8x1x32xbf16>
    tpu.vector_store %arg8[%c0_243, %c0_244, %c2_245, %c0_246], %484 {strides = array<i32>} : memref<1x8x16x32xbf16, #tpu.memory_space<vmem>>, vector<1x8x1x32xbf16>,
    %c3_247 = arith.constant 3 : index
    %c0_248 = arith.constant 0 : index
    %c0_249 = arith.constant 0 : index
    %485 = vector.load %arg9[%c3_247, %c0_248, %c0_249] : memref<18x8x34xbf16, #tpu.memory_space<vmem>>, vector<3x8x34xbf16>
    %486 = vector.shape_cast %485 : vector<3x8x34xbf16> to vector<24x34xbf16>
    %487 = vector.extract_strided_slice %1 {offsets = [0, 0, 0], sizes = [1, 8, 24], strides = [1, 1, 1]} : vector<3x8x24xbf16> to vector<1x8x24xbf16>
    %488 = vector.shape_cast %487 : vector<1x8x24xbf16> to vector<8x24xbf16>
    %489 = vector.extract_strided_slice %486 {offsets = [0, 0], sizes = [24, 32], strides = [1, 1]} : vector<24x34xbf16> to vector<24x32xbf16>
    %cst_250 = arith.constant dense<0.000000e+00> : vector<8x32xf32>
    %490 = tpu.matmul %488, %489, %cst_250 {dimension_numbers = #tpu.dot_dimension_numbers<[1], [0], [0], [1], [0, 0, 1, 1], [], []>} : vector<8x24xbf16>, vector<24x32xbf16>, vector<8x32xf32> -> vector<8x32xf32>
    %491 = arith.addf %7, %490 : vector<8x32xf32>
    %492 = vector.extract_strided_slice %1 {offsets = [1, 0, 0], sizes = [1, 8, 24], strides = [1, 1, 1]} : vector<3x8x24xbf16> to vector<1x8x24xbf16>
    %493 = vector.shape_cast %492 : vector<1x8x24xbf16> to vector<8x24xbf16>
    %494 = vector.extract_strided_slice %486 {offsets = [0, 1], sizes = [24, 32], strides = [1, 1]} : vector<24x34xbf16> to vector<24x32xbf16>
    %cst_251 = arith.constant dense<0.000000e+00> : vector<8x32xf32>
    %495 = tpu.matmul %493, %494, %cst_251 {dimension_numbers = #tpu.dot_dimension_numbers<[1], [0], [0], [1], [0, 0, 1, 1], [], []>} : vector<8x24xbf16>, vector<24x32xbf16>, vector<8x32xf32> -> vector<8x32xf32>
    %496 = arith.addf %491, %495 : vector<8x32xf32>
    %497 = vector.extract_strided_slice %1 {offsets = [2, 0, 0], sizes = [1, 8, 24], strides = [1, 1, 1]} : vector<3x8x24xbf16> to vector<1x8x24xbf16>
    %498 = vector.shape_cast %497 : vector<1x8x24xbf16> to vector<8x24xbf16>
    %499 = vector.extract_strided_slice %486 {offsets = [0, 2], sizes = [24, 32], strides = [1, 1]} : vector<24x34xbf16> to vector<24x32xbf16>
    %cst_252 = arith.constant dense<0.000000e+00> : vector<8x32xf32>
    %500 = tpu.matmul %498, %499, %cst_252 {dimension_numbers = #tpu.dot_dimension_numbers<[1], [0], [0], [1], [0, 0, 1, 1], [], []>} : vector<8x24xbf16>, vector<24x32xbf16>, vector<8x32xf32> -> vector<8x32xf32>
    %501 = arith.addf %496, %500 : vector<8x32xf32>
    %cst_253 = arith.constant 0.000000e+00 : f32
    %502 = vector.broadcast %cst_253 : f32 to vector<8x32xf32>
    %503 = arith.maximumf %501, %502 : vector<8x32xf32>
    %504 = arith.truncf %503 : vector<8x32xf32> to vector<8x32xbf16>
    %c0_254 = arith.constant 0 : index
    %c0_255 = arith.constant 0 : index
    %c3_256 = arith.constant 3 : index
    %c0_257 = arith.constant 0 : index
    %505 = vector.load %arg8[%c0_254, %c0_255, %c3_256, %c0_257] : memref<1x8x16x32xbf16, #tpu.memory_space<vmem>>, vector<1x8x1x32xbf16>
    %506 = vector.shape_cast %505 : vector<1x8x1x32xbf16> to vector<8x32xbf16>
    %507 = vector.shape_cast %504 : vector<8x32xbf16> to vector<1x8x1x32xbf16>
    tpu.vector_store %arg8[%c0_254, %c0_255, %c3_256, %c0_257], %507 {strides = array<i32>} : memref<1x8x16x32xbf16, #tpu.memory_space<vmem>>, vector<1x8x1x32xbf16>,
    %c4_258 = arith.constant 4 : index
    %c0_259 = arith.constant 0 : index
    %c0_260 = arith.constant 0 : index
    %508 = vector.load %arg9[%c4_258, %c0_259, %c0_260] : memref<18x8x34xbf16, #tpu.memory_space<vmem>>, vector<3x8x34xbf16>
    %509 = vector.shape_cast %508 : vector<3x8x34xbf16> to vector<24x34xbf16>
    %510 = vector.extract_strided_slice %1 {offsets = [0, 0, 0], sizes = [1, 8, 24], strides = [1, 1, 1]} : vector<3x8x24xbf16> to vector<1x8x24xbf16>
    %511 = vector.shape_cast %510 : vector<1x8x24xbf16> to vector<8x24xbf16>
    %512 = vector.extract_strided_slice %509 {offsets = [0, 0], sizes = [24, 32], strides = [1, 1]} : vector<24x34xbf16> to vector<24x32xbf16>
    %cst_261 = arith.constant dense<0.000000e+00> : vector<8x32xf32>
    %513 = tpu.matmul %511, %512, %cst_261 {dimension_numbers = #tpu.dot_dimension_numbers<[1], [0], [0], [1], [0, 0, 1, 1], [], []>} : vector<8x24xbf16>, vector<24x32xbf16>, vector<8x32xf32> -> vector<8x32xf32>
    %514 = arith.addf %7, %513 : vector<8x32xf32>
    %515 = vector.extract_strided_slice %1 {offsets = [1, 0, 0], sizes = [1, 8, 24], strides = [1, 1, 1]} : vector<3x8x24xbf16> to vector<1x8x24xbf16>
    %516 = vector.shape_cast %515 : vector<1x8x24xbf16> to vector<8x24xbf16>
    %517 = vector.extract_strided_slice %509 {offsets = [0, 1], sizes = [24, 32], strides = [1, 1]} : vector<24x34xbf16> to vector<24x32xbf16>
    %cst_262 = arith.constant dense<0.000000e+00> : vector<8x32xf32>
    %518 = tpu.matmul %516, %517, %cst_262 {dimension_numbers = #tpu.dot_dimension_numbers<[1], [0], [0], [1], [0, 0, 1, 1], [], []>} : vector<8x24xbf16>, vector<24x32xbf16>, vector<8x32xf32> -> vector<8x32xf32>
    %519 = arith.addf %514, %518 : vector<8x32xf32>
    %520 = vector.extract_strided_slice %1 {offsets = [2, 0, 0], sizes = [1, 8, 24], strides = [1, 1, 1]} : vector<3x8x24xbf16> to vector<1x8x24xbf16>
    %521 = vector.shape_cast %520 : vector<1x8x24xbf16> to vector<8x24xbf16>
    %522 = vector.extract_strided_slice %509 {offsets = [0, 2], sizes = [24, 32], strides = [1, 1]} : vector<24x34xbf16> to vector<24x32xbf16>
    %cst_263 = arith.constant dense<0.000000e+00> : vector<8x32xf32>
    %523 = tpu.matmul %521, %522, %cst_263 {dimension_numbers = #tpu.dot_dimension_numbers<[1], [0], [0], [1], [0, 0, 1, 1], [], []>} : vector<8x24xbf16>, vector<24x32xbf16>, vector<8x32xf32> -> vector<8x32xf32>
    %524 = arith.addf %519, %523 : vector<8x32xf32>
    %cst_264 = arith.constant 0.000000e+00 : f32
    %525 = vector.broadcast %cst_264 : f32 to vector<8x32xf32>
    %526 = arith.maximumf %524, %525 : vector<8x32xf32>
    %527 = arith.truncf %526 : vector<8x32xf32> to vector<8x32xbf16>
    %c0_265 = arith.constant 0 : index
    %c0_266 = arith.constant 0 : index
    %c4_267 = arith.constant 4 : index
    %c0_268 = arith.constant 0 : index
    %528 = vector.load %arg8[%c0_265, %c0_266, %c4_267, %c0_268] : memref<1x8x16x32xbf16, #tpu.memory_space<vmem>>, vector<1x8x1x32xbf16>
    %529 = vector.shape_cast %528 : vector<1x8x1x32xbf16> to vector<8x32xbf16>
    %530 = vector.shape_cast %527 : vector<8x32xbf16> to vector<1x8x1x32xbf16>
    tpu.vector_store %arg8[%c0_265, %c0_266, %c4_267, %c0_268], %530 {strides = array<i32>} : memref<1x8x16x32xbf16, #tpu.memory_space<vmem>>, vector<1x8x1x32xbf16>,
    %c5_269 = arith.constant 5 : index
    %c0_270 = arith.constant 0 : index
    %c0_271 = arith.constant 0 : index
    %531 = vector.load %arg9[%c5_269, %c0_270, %c0_271] : memref<18x8x34xbf16, #tpu.memory_space<vmem>>, vector<3x8x34xbf16>
    %532 = vector.shape_cast %531 : vector<3x8x34xbf16> to vector<24x34xbf16>
    %533 = vector.extract_strided_slice %1 {offsets = [0, 0, 0], sizes = [1, 8, 24], strides = [1, 1, 1]} : vector<3x8x24xbf16> to vector<1x8x24xbf16>
    %534 = vector.shape_cast %533 : vector<1x8x24xbf16> to vector<8x24xbf16>
    %535 = vector.extract_strided_slice %532 {offsets = [0, 0], sizes = [24, 32], strides = [1, 1]} : vector<24x34xbf16> to vector<24x32xbf16>
    %cst_272 = arith.constant dense<0.000000e+00> : vector<8x32xf32>
    %536 = tpu.matmul %534, %535, %cst_272 {dimension_numbers = #tpu.dot_dimension_numbers<[1], [0], [0], [1], [0, 0, 1, 1], [], []>} : vector<8x24xbf16>, vector<24x32xbf16>, vector<8x32xf32> -> vector<8x32xf32>
    %537 = arith.addf %7, %536 : vector<8x32xf32>
    %538 = vector.extract_strided_slice %1 {offsets = [1, 0, 0], sizes = [1, 8, 24], strides = [1, 1, 1]} : vector<3x8x24xbf16> to vector<1x8x24xbf16>
    %539 = vector.shape_cast %538 : vector<1x8x24xbf16> to vector<8x24xbf16>
    %540 = vector.extract_strided_slice %532 {offsets = [0, 1], sizes = [24, 32], strides = [1, 1]} : vector<24x34xbf16> to vector<24x32xbf16>
    %cst_273 = arith.constant dense<0.000000e+00> : vector<8x32xf32>
    %541 = tpu.matmul %539, %540, %cst_273 {dimension_numbers = #tpu.dot_dimension_numbers<[1], [0], [0], [1], [0, 0, 1, 1], [], []>} : vector<8x24xbf16>, vector<24x32xbf16>, vector<8x32xf32> -> vector<8x32xf32>
    %542 = arith.addf %537, %541 : vector<8x32xf32>
    %543 = vector.extract_strided_slice %1 {offsets = [2, 0, 0], sizes = [1, 8, 24], strides = [1, 1, 1]} : vector<3x8x24xbf16> to vector<1x8x24xbf16>
    %544 = vector.shape_cast %543 : vector<1x8x24xbf16> to vector<8x24xbf16>
    %545 = vector.extract_strided_slice %532 {offsets = [0, 2], sizes = [24, 32], strides = [1, 1]} : vector<24x34xbf16> to vector<24x32xbf16>
    %cst_274 = arith.constant dense<0.000000e+00> : vector<8x32xf32>
    %546 = tpu.matmul %544, %545, %cst_274 {dimension_numbers = #tpu.dot_dimension_numbers<[1], [0], [0], [1], [0, 0, 1, 1], [], []>} : vector<8x24xbf16>, vector<24x32xbf16>, vector<8x32xf32> -> vector<8x32xf32>
    %547 = arith.addf %542, %546 : vector<8x32xf32>
    %cst_275 = arith.constant 0.000000e+00 : f32
    %548 = vector.broadcast %cst_275 : f32 to vector<8x32xf32>
    %549 = arith.maximumf %547, %548 : vector<8x32xf32>
    %550 = arith.truncf %549 : vector<8x32xf32> to vector<8x32xbf16>
    %c0_276 = arith.constant 0 : index
    %c0_277 = arith.constant 0 : index
    %c5_278 = arith.constant 5 : index
    %c0_279 = arith.constant 0 : index
    %551 = vector.load %arg8[%c0_276, %c0_277, %c5_278, %c0_279] : memref<1x8x16x32xbf16, #tpu.memory_space<vmem>>, vector<1x8x1x32xbf16>
    %552 = vector.shape_cast %551 : vector<1x8x1x32xbf16> to vector<8x32xbf16>
    %553 = vector.shape_cast %550 : vector<8x32xbf16> to vector<1x8x1x32xbf16>
    tpu.vector_store %arg8[%c0_276, %c0_277, %c5_278, %c0_279], %553 {strides = array<i32>} : memref<1x8x16x32xbf16, #tpu.memory_space<vmem>>, vector<1x8x1x32xbf16>,
    %c6_280 = arith.constant 6 : index
    %c0_281 = arith.constant 0 : index
    %c0_282 = arith.constant 0 : index
    %554 = vector.load %arg9[%c6_280, %c0_281, %c0_282] : memref<18x8x34xbf16, #tpu.memory_space<vmem>>, vector<3x8x34xbf16>
    %555 = vector.shape_cast %554 : vector<3x8x34xbf16> to vector<24x34xbf16>
    %556 = vector.extract_strided_slice %1 {offsets = [0, 0, 0], sizes = [1, 8, 24], strides = [1, 1, 1]} : vector<3x8x24xbf16> to vector<1x8x24xbf16>
    %557 = vector.shape_cast %556 : vector<1x8x24xbf16> to vector<8x24xbf16>
    %558 = vector.extract_strided_slice %555 {offsets = [0, 0], sizes = [24, 32], strides = [1, 1]} : vector<24x34xbf16> to vector<24x32xbf16>
    %cst_283 = arith.constant dense<0.000000e+00> : vector<8x32xf32>
    %559 = tpu.matmul %557, %558, %cst_283 {dimension_numbers = #tpu.dot_dimension_numbers<[1], [0], [0], [1], [0, 0, 1, 1], [], []>} : vector<8x24xbf16>, vector<24x32xbf16>, vector<8x32xf32> -> vector<8x32xf32>
    %560 = arith.addf %7, %559 : vector<8x32xf32>
    %561 = vector.extract_strided_slice %1 {offsets = [1, 0, 0], sizes = [1, 8, 24], strides = [1, 1, 1]} : vector<3x8x24xbf16> to vector<1x8x24xbf16>
    %562 = vector.shape_cast %561 : vector<1x8x24xbf16> to vector<8x24xbf16>
    %563 = vector.extract_strided_slice %555 {offsets = [0, 1], sizes = [24, 32], strides = [1, 1]} : vector<24x34xbf16> to vector<24x32xbf16>
    %cst_284 = arith.constant dense<0.000000e+00> : vector<8x32xf32>
    %564 = tpu.matmul %562, %563, %cst_284 {dimension_numbers = #tpu.dot_dimension_numbers<[1], [0], [0], [1], [0, 0, 1, 1], [], []>} : vector<8x24xbf16>, vector<24x32xbf16>, vector<8x32xf32> -> vector<8x32xf32>
    %565 = arith.addf %560, %564 : vector<8x32xf32>
    %566 = vector.extract_strided_slice %1 {offsets = [2, 0, 0], sizes = [1, 8, 24], strides = [1, 1, 1]} : vector<3x8x24xbf16> to vector<1x8x24xbf16>
    %567 = vector.shape_cast %566 : vector<1x8x24xbf16> to vector<8x24xbf16>
    %568 = vector.extract_strided_slice %555 {offsets = [0, 2], sizes = [24, 32], strides = [1, 1]} : vector<24x34xbf16> to vector<24x32xbf16>
    %cst_285 = arith.constant dense<0.000000e+00> : vector<8x32xf32>
    %569 = tpu.matmul %567, %568, %cst_285 {dimension_numbers = #tpu.dot_dimension_numbers<[1], [0], [0], [1], [0, 0, 1, 1], [], []>} : vector<8x24xbf16>, vector<24x32xbf16>, vector<8x32xf32> -> vector<8x32xf32>
    %570 = arith.addf %565, %569 : vector<8x32xf32>
    %cst_286 = arith.constant 0.000000e+00 : f32
    %571 = vector.broadcast %cst_286 : f32 to vector<8x32xf32>
    %572 = arith.maximumf %570, %571 : vector<8x32xf32>
    %573 = arith.truncf %572 : vector<8x32xf32> to vector<8x32xbf16>
    %c0_287 = arith.constant 0 : index
    %c0_288 = arith.constant 0 : index
    %c6_289 = arith.constant 6 : index
    %c0_290 = arith.constant 0 : index
    %574 = vector.load %arg8[%c0_287, %c0_288, %c6_289, %c0_290] : memref<1x8x16x32xbf16, #tpu.memory_space<vmem>>, vector<1x8x1x32xbf16>
    %575 = vector.shape_cast %574 : vector<1x8x1x32xbf16> to vector<8x32xbf16>
    %576 = vector.shape_cast %573 : vector<8x32xbf16> to vector<1x8x1x32xbf16>
    tpu.vector_store %arg8[%c0_287, %c0_288, %c6_289, %c0_290], %576 {strides = array<i32>} : memref<1x8x16x32xbf16, #tpu.memory_space<vmem>>, vector<1x8x1x32xbf16>,
    %c7_291 = arith.constant 7 : index
    %c0_292 = arith.constant 0 : index
    %c0_293 = arith.constant 0 : index
    %577 = vector.load %arg9[%c7_291, %c0_292, %c0_293] : memref<18x8x34xbf16, #tpu.memory_space<vmem>>, vector<3x8x34xbf16>
    %578 = vector.shape_cast %577 : vector<3x8x34xbf16> to vector<24x34xbf16>
    %579 = vector.extract_strided_slice %1 {offsets = [0, 0, 0], sizes = [1, 8, 24], strides = [1, 1, 1]} : vector<3x8x24xbf16> to vector<1x8x24xbf16>
    %580 = vector.shape_cast %579 : vector<1x8x24xbf16> to vector<8x24xbf16>
    %581 = vector.extract_strided_slice %578 {offsets = [0, 0], sizes = [24, 32], strides = [1, 1]} : vector<24x34xbf16> to vector<24x32xbf16>
    %cst_294 = arith.constant dense<0.000000e+00> : vector<8x32xf32>
    %582 = tpu.matmul %580, %581, %cst_294 {dimension_numbers = #tpu.dot_dimension_numbers<[1], [0], [0], [1], [0, 0, 1, 1], [], []>} : vector<8x24xbf16>, vector<24x32xbf16>, vector<8x32xf32> -> vector<8x32xf32>
    %583 = arith.addf %7, %582 : vector<8x32xf32>
    %584 = vector.extract_strided_slice %1 {offsets = [1, 0, 0], sizes = [1, 8, 24], strides = [1, 1, 1]} : vector<3x8x24xbf16> to vector<1x8x24xbf16>
    %585 = vector.shape_cast %584 : vector<1x8x24xbf16> to vector<8x24xbf16>
    %586 = vector.extract_strided_slice %578 {offsets = [0, 1], sizes = [24, 32], strides = [1, 1]} : vector<24x34xbf16> to vector<24x32xbf16>
    %cst_295 = arith.constant dense<0.000000e+00> : vector<8x32xf32>
    %587 = tpu.matmul %585, %586, %cst_295 {dimension_numbers = #tpu.dot_dimension_numbers<[1], [0], [0], [1], [0, 0, 1, 1], [], []>} : vector<8x24xbf16>, vector<24x32xbf16>, vector<8x32xf32> -> vector<8x32xf32>
    %588 = arith.addf %583, %587 : vector<8x32xf32>
    %589 = vector.extract_strided_slice %1 {offsets = [2, 0, 0], sizes = [1, 8, 24], strides = [1, 1, 1]} : vector<3x8x24xbf16> to vector<1x8x24xbf16>
    %590 = vector.shape_cast %589 : vector<1x8x24xbf16> to vector<8x24xbf16>
    %591 = vector.extract_strided_slice %578 {offsets = [0, 2], sizes = [24, 32], strides = [1, 1]} : vector<24x34xbf16> to vector<24x32xbf16>
    %cst_296 = arith.constant dense<0.000000e+00> : vector<8x32xf32>
    %592 = tpu.matmul %590, %591, %cst_296 {dimension_numbers = #tpu.dot_dimension_numbers<[1], [0], [0], [1], [0, 0, 1, 1], [], []>} : vector<8x24xbf16>, vector<24x32xbf16>, vector<8x32xf32> -> vector<8x32xf32>
    %593 = arith.addf %588, %592 : vector<8x32xf32>
    %cst_297 = arith.constant 0.000000e+00 : f32
    %594 = vector.broadcast %cst_297 : f32 to vector<8x32xf32>
    %595 = arith.maximumf %593, %594 : vector<8x32xf32>
    %596 = arith.truncf %595 : vector<8x32xf32> to vector<8x32xbf16>
    %c0_298 = arith.constant 0 : index
    %c0_299 = arith.constant 0 : index
    %c7_300 = arith.constant 7 : index
    %c0_301 = arith.constant 0 : index
    %597 = vector.load %arg8[%c0_298, %c0_299, %c7_300, %c0_301] : memref<1x8x16x32xbf16, #tpu.memory_space<vmem>>, vector<1x8x1x32xbf16>
    %598 = vector.shape_cast %597 : vector<1x8x1x32xbf16> to vector<8x32xbf16>
    %599 = vector.shape_cast %596 : vector<8x32xbf16> to vector<1x8x1x32xbf16>
    tpu.vector_store %arg8[%c0_298, %c0_299, %c7_300, %c0_301], %599 {strides = array<i32>} : memref<1x8x16x32xbf16, #tpu.memory_space<vmem>>, vector<1x8x1x32xbf16>,
    %c8_302 = arith.constant 8 : index
    %c0_303 = arith.constant 0 : index
    %c0_304 = arith.constant 0 : index
    %600 = vector.load %arg9[%c8_302, %c0_303, %c0_304] : memref<18x8x34xbf16, #tpu.memory_space<vmem>>, vector<3x8x34xbf16>
    %601 = vector.shape_cast %600 : vector<3x8x34xbf16> to vector<24x34xbf16>
    %602 = vector.extract_strided_slice %1 {offsets = [0, 0, 0], sizes = [1, 8, 24], strides = [1, 1, 1]} : vector<3x8x24xbf16> to vector<1x8x24xbf16>
    %603 = vector.shape_cast %602 : vector<1x8x24xbf16> to vector<8x24xbf16>
    %604 = vector.extract_strided_slice %601 {offsets = [0, 0], sizes = [24, 32], strides = [1, 1]} : vector<24x34xbf16> to vector<24x32xbf16>
    %cst_305 = arith.constant dense<0.000000e+00> : vector<8x32xf32>
    %605 = tpu.matmul %603, %604, %cst_305 {dimension_numbers = #tpu.dot_dimension_numbers<[1], [0], [0], [1], [0, 0, 1, 1], [], []>} : vector<8x24xbf16>, vector<24x32xbf16>, vector<8x32xf32> -> vector<8x32xf32>
    %606 = arith.addf %7, %605 : vector<8x32xf32>
    %607 = vector.extract_strided_slice %1 {offsets = [1, 0, 0], sizes = [1, 8, 24], strides = [1, 1, 1]} : vector<3x8x24xbf16> to vector<1x8x24xbf16>
    %608 = vector.shape_cast %607 : vector<1x8x24xbf16> to vector<8x24xbf16>
    %609 = vector.extract_strided_slice %601 {offsets = [0, 1], sizes = [24, 32], strides = [1, 1]} : vector<24x34xbf16> to vector<24x32xbf16>
    %cst_306 = arith.constant dense<0.000000e+00> : vector<8x32xf32>
    %610 = tpu.matmul %608, %609, %cst_306 {dimension_numbers = #tpu.dot_dimension_numbers<[1], [0], [0], [1], [0, 0, 1, 1], [], []>} : vector<8x24xbf16>, vector<24x32xbf16>, vector<8x32xf32> -> vector<8x32xf32>
    %611 = arith.addf %606, %610 : vector<8x32xf32>
    %612 = vector.extract_strided_slice %1 {offsets = [2, 0, 0], sizes = [1, 8, 24], strides = [1, 1, 1]} : vector<3x8x24xbf16> to vector<1x8x24xbf16>
    %613 = vector.shape_cast %612 : vector<1x8x24xbf16> to vector<8x24xbf16>
    %614 = vector.extract_strided_slice %601 {offsets = [0, 2], sizes = [24, 32], strides = [1, 1]} : vector<24x34xbf16> to vector<24x32xbf16>
    %cst_307 = arith.constant dense<0.000000e+00> : vector<8x32xf32>
    %615 = tpu.matmul %613, %614, %cst_307 {dimension_numbers = #tpu.dot_dimension_numbers<[1], [0], [0], [1], [0, 0, 1, 1], [], []>} : vector<8x24xbf16>, vector<24x32xbf16>, vector<8x32xf32> -> vector<8x32xf32>
    %616 = arith.addf %611, %615 : vector<8x32xf32>
    %cst_308 = arith.constant 0.000000e+00 : f32
    %617 = vector.broadcast %cst_308 : f32 to vector<8x32xf32>
    %618 = arith.maximumf %616, %617 : vector<8x32xf32>
    %619 = arith.truncf %618 : vector<8x32xf32> to vector<8x32xbf16>
    %c0_309 = arith.constant 0 : index
    %c0_310 = arith.constant 0 : index
    %c8_311 = arith.constant 8 : index
    %c0_312 = arith.constant 0 : index
    %620 = vector.load %arg8[%c0_309, %c0_310, %c8_311, %c0_312] : memref<1x8x16x32xbf16, #tpu.memory_space<vmem>>, vector<1x8x1x32xbf16>
    %621 = vector.shape_cast %620 : vector<1x8x1x32xbf16> to vector<8x32xbf16>
    %622 = vector.shape_cast %619 : vector<8x32xbf16> to vector<1x8x1x32xbf16>
    tpu.vector_store %arg8[%c0_309, %c0_310, %c8_311, %c0_312], %622 {strides = array<i32>} : memref<1x8x16x32xbf16, #tpu.memory_space<vmem>>, vector<1x8x1x32xbf16>,
    %c9_313 = arith.constant 9 : index
    %c0_314 = arith.constant 0 : index
    %c0_315 = arith.constant 0 : index
    %623 = vector.load %arg9[%c9_313, %c0_314, %c0_315] : memref<18x8x34xbf16, #tpu.memory_space<vmem>>, vector<3x8x34xbf16>
    %624 = vector.shape_cast %623 : vector<3x8x34xbf16> to vector<24x34xbf16>
    %625 = vector.extract_strided_slice %1 {offsets = [0, 0, 0], sizes = [1, 8, 24], strides = [1, 1, 1]} : vector<3x8x24xbf16> to vector<1x8x24xbf16>
    %626 = vector.shape_cast %625 : vector<1x8x24xbf16> to vector<8x24xbf16>
    %627 = vector.extract_strided_slice %624 {offsets = [0, 0], sizes = [24, 32], strides = [1, 1]} : vector<24x34xbf16> to vector<24x32xbf16>
    %cst_316 = arith.constant dense<0.000000e+00> : vector<8x32xf32>
    %628 = tpu.matmul %626, %627, %cst_316 {dimension_numbers = #tpu.dot_dimension_numbers<[1], [0], [0], [1], [0, 0, 1, 1], [], []>} : vector<8x24xbf16>, vector<24x32xbf16>, vector<8x32xf32> -> vector<8x32xf32>
    %629 = arith.addf %7, %628 : vector<8x32xf32>
    %630 = vector.extract_strided_slice %1 {offsets = [1, 0, 0], sizes = [1, 8, 24], strides = [1, 1, 1]} : vector<3x8x24xbf16> to vector<1x8x24xbf16>
    %631 = vector.shape_cast %630 : vector<1x8x24xbf16> to vector<8x24xbf16>
    %632 = vector.extract_strided_slice %624 {offsets = [0, 1], sizes = [24, 32], strides = [1, 1]} : vector<24x34xbf16> to vector<24x32xbf16>
    %cst_317 = arith.constant dense<0.000000e+00> : vector<8x32xf32>
    %633 = tpu.matmul %631, %632, %cst_317 {dimension_numbers = #tpu.dot_dimension_numbers<[1], [0], [0], [1], [0, 0, 1, 1], [], []>} : vector<8x24xbf16>, vector<24x32xbf16>, vector<8x32xf32> -> vector<8x32xf32>
    %634 = arith.addf %629, %633 : vector<8x32xf32>
    %635 = vector.extract_strided_slice %1 {offsets = [2, 0, 0], sizes = [1, 8, 24], strides = [1, 1, 1]} : vector<3x8x24xbf16> to vector<1x8x24xbf16>
    %636 = vector.shape_cast %635 : vector<1x8x24xbf16> to vector<8x24xbf16>
    %637 = vector.extract_strided_slice %624 {offsets = [0, 2], sizes = [24, 32], strides = [1, 1]} : vector<24x34xbf16> to vector<24x32xbf16>
    %cst_318 = arith.constant dense<0.000000e+00> : vector<8x32xf32>
    %638 = tpu.matmul %636, %637, %cst_318 {dimension_numbers = #tpu.dot_dimension_numbers<[1], [0], [0], [1], [0, 0, 1, 1], [], []>} : vector<8x24xbf16>, vector<24x32xbf16>, vector<8x32xf32> -> vector<8x32xf32>
    %639 = arith.addf %634, %638 : vector<8x32xf32>
    %cst_319 = arith.constant 0.000000e+00 : f32
    %640 = vector.broadcast %cst_319 : f32 to vector<8x32xf32>
    %641 = arith.maximumf %639, %640 : vector<8x32xf32>
    %642 = arith.truncf %641 : vector<8x32xf32> to vector<8x32xbf16>
    %c0_320 = arith.constant 0 : index
    %c0_321 = arith.constant 0 : index
    %c9_322 = arith.constant 9 : index
    %c0_323 = arith.constant 0 : index
    %643 = vector.load %arg8[%c0_320, %c0_321, %c9_322, %c0_323] : memref<1x8x16x32xbf16, #tpu.memory_space<vmem>>, vector<1x8x1x32xbf16>
    %644 = vector.shape_cast %643 : vector<1x8x1x32xbf16> to vector<8x32xbf16>
    %645 = vector.shape_cast %642 : vector<8x32xbf16> to vector<1x8x1x32xbf16>
    tpu.vector_store %arg8[%c0_320, %c0_321, %c9_322, %c0_323], %645 {strides = array<i32>} : memref<1x8x16x32xbf16, #tpu.memory_space<vmem>>, vector<1x8x1x32xbf16>,
    %c10_324 = arith.constant 10 : index
    %c0_325 = arith.constant 0 : index
    %c0_326 = arith.constant 0 : index
    %646 = vector.load %arg9[%c10_324, %c0_325, %c0_326] : memref<18x8x34xbf16, #tpu.memory_space<vmem>>, vector<3x8x34xbf16>
    %647 = vector.shape_cast %646 : vector<3x8x34xbf16> to vector<24x34xbf16>
    %648 = vector.extract_strided_slice %1 {offsets = [0, 0, 0], sizes = [1, 8, 24], strides = [1, 1, 1]} : vector<3x8x24xbf16> to vector<1x8x24xbf16>
    %649 = vector.shape_cast %648 : vector<1x8x24xbf16> to vector<8x24xbf16>
    %650 = vector.extract_strided_slice %647 {offsets = [0, 0], sizes = [24, 32], strides = [1, 1]} : vector<24x34xbf16> to vector<24x32xbf16>
    %cst_327 = arith.constant dense<0.000000e+00> : vector<8x32xf32>
    %651 = tpu.matmul %649, %650, %cst_327 {dimension_numbers = #tpu.dot_dimension_numbers<[1], [0], [0], [1], [0, 0, 1, 1], [], []>} : vector<8x24xbf16>, vector<24x32xbf16>, vector<8x32xf32> -> vector<8x32xf32>
    %652 = arith.addf %7, %651 : vector<8x32xf32>
    %653 = vector.extract_strided_slice %1 {offsets = [1, 0, 0], sizes = [1, 8, 24], strides = [1, 1, 1]} : vector<3x8x24xbf16> to vector<1x8x24xbf16>
    %654 = vector.shape_cast %653 : vector<1x8x24xbf16> to vector<8x24xbf16>
    %655 = vector.extract_strided_slice %647 {offsets = [0, 1], sizes = [24, 32], strides = [1, 1]} : vector<24x34xbf16> to vector<24x32xbf16>
    %cst_328 = arith.constant dense<0.000000e+00> : vector<8x32xf32>
    %656 = tpu.matmul %654, %655, %cst_328 {dimension_numbers = #tpu.dot_dimension_numbers<[1], [0], [0], [1], [0, 0, 1, 1], [], []>} : vector<8x24xbf16>, vector<24x32xbf16>, vector<8x32xf32> -> vector<8x32xf32>
    %657 = arith.addf %652, %656 : vector<8x32xf32>
    %658 = vector.extract_strided_slice %1 {offsets = [2, 0, 0], sizes = [1, 8, 24], strides = [1, 1, 1]} : vector<3x8x24xbf16> to vector<1x8x24xbf16>
    %659 = vector.shape_cast %658 : vector<1x8x24xbf16> to vector<8x24xbf16>
    %660 = vector.extract_strided_slice %647 {offsets = [0, 2], sizes = [24, 32], strides = [1, 1]} : vector<24x34xbf16> to vector<24x32xbf16>
    %cst_329 = arith.constant dense<0.000000e+00> : vector<8x32xf32>
    %661 = tpu.matmul %659, %660, %cst_329 {dimension_numbers = #tpu.dot_dimension_numbers<[1], [0], [0], [1], [0, 0, 1, 1], [], []>} : vector<8x24xbf16>, vector<24x32xbf16>, vector<8x32xf32> -> vector<8x32xf32>
    %662 = arith.addf %657, %661 : vector<8x32xf32>
    %cst_330 = arith.constant 0.000000e+00 : f32
    %663 = vector.broadcast %cst_330 : f32 to vector<8x32xf32>
    %664 = arith.maximumf %662, %663 : vector<8x32xf32>
    %665 = arith.truncf %664 : vector<8x32xf32> to vector<8x32xbf16>
    %c0_331 = arith.constant 0 : index
    %c0_332 = arith.constant 0 : index
    %c10_333 = arith.constant 10 : index
    %c0_334 = arith.constant 0 : index
    %666 = vector.load %arg8[%c0_331, %c0_332, %c10_333, %c0_334] : memref<1x8x16x32xbf16, #tpu.memory_space<vmem>>, vector<1x8x1x32xbf16>
    %667 = vector.shape_cast %666 : vector<1x8x1x32xbf16> to vector<8x32xbf16>
    %668 = vector.shape_cast %665 : vector<8x32xbf16> to vector<1x8x1x32xbf16>
    tpu.vector_store %arg8[%c0_331, %c0_332, %c10_333, %c0_334], %668 {strides = array<i32>} : memref<1x8x16x32xbf16, #tpu.memory_space<vmem>>, vector<1x8x1x32xbf16>,
    %c11_335 = arith.constant 11 : index
    %c0_336 = arith.constant 0 : index
    %c0_337 = arith.constant 0 : index
    %669 = vector.load %arg9[%c11_335, %c0_336, %c0_337] : memref<18x8x34xbf16, #tpu.memory_space<vmem>>, vector<3x8x34xbf16>
    %670 = vector.shape_cast %669 : vector<3x8x34xbf16> to vector<24x34xbf16>
    %671 = vector.extract_strided_slice %1 {offsets = [0, 0, 0], sizes = [1, 8, 24], strides = [1, 1, 1]} : vector<3x8x24xbf16> to vector<1x8x24xbf16>
    %672 = vector.shape_cast %671 : vector<1x8x24xbf16> to vector<8x24xbf16>
    %673 = vector.extract_strided_slice %670 {offsets = [0, 0], sizes = [24, 32], strides = [1, 1]} : vector<24x34xbf16> to vector<24x32xbf16>
    %cst_338 = arith.constant dense<0.000000e+00> : vector<8x32xf32>
    %674 = tpu.matmul %672, %673, %cst_338 {dimension_numbers = #tpu.dot_dimension_numbers<[1], [0], [0], [1], [0, 0, 1, 1], [], []>} : vector<8x24xbf16>, vector<24x32xbf16>, vector<8x32xf32> -> vector<8x32xf32>
    %675 = arith.addf %7, %674 : vector<8x32xf32>
    %676 = vector.extract_strided_slice %1 {offsets = [1, 0, 0], sizes = [1, 8, 24], strides = [1, 1, 1]} : vector<3x8x24xbf16> to vector<1x8x24xbf16>
    %677 = vector.shape_cast %676 : vector<1x8x24xbf16> to vector<8x24xbf16>
    %678 = vector.extract_strided_slice %670 {offsets = [0, 1], sizes = [24, 32], strides = [1, 1]} : vector<24x34xbf16> to vector<24x32xbf16>
    %cst_339 = arith.constant dense<0.000000e+00> : vector<8x32xf32>
    %679 = tpu.matmul %677, %678, %cst_339 {dimension_numbers = #tpu.dot_dimension_numbers<[1], [0], [0], [1], [0, 0, 1, 1], [], []>} : vector<8x24xbf16>, vector<24x32xbf16>, vector<8x32xf32> -> vector<8x32xf32>
    %680 = arith.addf %675, %679 : vector<8x32xf32>
    %681 = vector.extract_strided_slice %1 {offsets = [2, 0, 0], sizes = [1, 8, 24], strides = [1, 1, 1]} : vector<3x8x24xbf16> to vector<1x8x24xbf16>
    %682 = vector.shape_cast %681 : vector<1x8x24xbf16> to vector<8x24xbf16>
    %683 = vector.extract_strided_slice %670 {offsets = [0, 2], sizes = [24, 32], strides = [1, 1]} : vector<24x34xbf16> to vector<24x32xbf16>
    %cst_340 = arith.constant dense<0.000000e+00> : vector<8x32xf32>
    %684 = tpu.matmul %682, %683, %cst_340 {dimension_numbers = #tpu.dot_dimension_numbers<[1], [0], [0], [1], [0, 0, 1, 1], [], []>} : vector<8x24xbf16>, vector<24x32xbf16>, vector<8x32xf32> -> vector<8x32xf32>
    %685 = arith.addf %680, %684 : vector<8x32xf32>
    %cst_341 = arith.constant 0.000000e+00 : f32
    %686 = vector.broadcast %cst_341 : f32 to vector<8x32xf32>
    %687 = arith.maximumf %685, %686 : vector<8x32xf32>
    %688 = arith.truncf %687 : vector<8x32xf32> to vector<8x32xbf16>
    %c0_342 = arith.constant 0 : index
    %c0_343 = arith.constant 0 : index
    %c11_344 = arith.constant 11 : index
    %c0_345 = arith.constant 0 : index
    %689 = vector.load %arg8[%c0_342, %c0_343, %c11_344, %c0_345] : memref<1x8x16x32xbf16, #tpu.memory_space<vmem>>, vector<1x8x1x32xbf16>
    %690 = vector.shape_cast %689 : vector<1x8x1x32xbf16> to vector<8x32xbf16>
    %691 = vector.shape_cast %688 : vector<8x32xbf16> to vector<1x8x1x32xbf16>
    tpu.vector_store %arg8[%c0_342, %c0_343, %c11_344, %c0_345], %691 {strides = array<i32>} : memref<1x8x16x32xbf16, #tpu.memory_space<vmem>>, vector<1x8x1x32xbf16>,
    %c12_346 = arith.constant 12 : index
    %c0_347 = arith.constant 0 : index
    %c0_348 = arith.constant 0 : index
    %692 = vector.load %arg9[%c12_346, %c0_347, %c0_348] : memref<18x8x34xbf16, #tpu.memory_space<vmem>>, vector<3x8x34xbf16>
    %693 = vector.shape_cast %692 : vector<3x8x34xbf16> to vector<24x34xbf16>
    %694 = vector.extract_strided_slice %1 {offsets = [0, 0, 0], sizes = [1, 8, 24], strides = [1, 1, 1]} : vector<3x8x24xbf16> to vector<1x8x24xbf16>
    %695 = vector.shape_cast %694 : vector<1x8x24xbf16> to vector<8x24xbf16>
    %696 = vector.extract_strided_slice %693 {offsets = [0, 0], sizes = [24, 32], strides = [1, 1]} : vector<24x34xbf16> to vector<24x32xbf16>
    %cst_349 = arith.constant dense<0.000000e+00> : vector<8x32xf32>
    %697 = tpu.matmul %695, %696, %cst_349 {dimension_numbers = #tpu.dot_dimension_numbers<[1], [0], [0], [1], [0, 0, 1, 1], [], []>} : vector<8x24xbf16>, vector<24x32xbf16>, vector<8x32xf32> -> vector<8x32xf32>
    %698 = arith.addf %7, %697 : vector<8x32xf32>
    %699 = vector.extract_strided_slice %1 {offsets = [1, 0, 0], sizes = [1, 8, 24], strides = [1, 1, 1]} : vector<3x8x24xbf16> to vector<1x8x24xbf16>
    %700 = vector.shape_cast %699 : vector<1x8x24xbf16> to vector<8x24xbf16>
    %701 = vector.extract_strided_slice %693 {offsets = [0, 1], sizes = [24, 32], strides = [1, 1]} : vector<24x34xbf16> to vector<24x32xbf16>
    %cst_350 = arith.constant dense<0.000000e+00> : vector<8x32xf32>
    %702 = tpu.matmul %700, %701, %cst_350 {dimension_numbers = #tpu.dot_dimension_numbers<[1], [0], [0], [1], [0, 0, 1, 1], [], []>} : vector<8x24xbf16>, vector<24x32xbf16>, vector<8x32xf32> -> vector<8x32xf32>
    %703 = arith.addf %698, %702 : vector<8x32xf32>
    %704 = vector.extract_strided_slice %1 {offsets = [2, 0, 0], sizes = [1, 8, 24], strides = [1, 1, 1]} : vector<3x8x24xbf16> to vector<1x8x24xbf16>
    %705 = vector.shape_cast %704 : vector<1x8x24xbf16> to vector<8x24xbf16>
    %706 = vector.extract_strided_slice %693 {offsets = [0, 2], sizes = [24, 32], strides = [1, 1]} : vector<24x34xbf16> to vector<24x32xbf16>
    %cst_351 = arith.constant dense<0.000000e+00> : vector<8x32xf32>
    %707 = tpu.matmul %705, %706, %cst_351 {dimension_numbers = #tpu.dot_dimension_numbers<[1], [0], [0], [1], [0, 0, 1, 1], [], []>} : vector<8x24xbf16>, vector<24x32xbf16>, vector<8x32xf32> -> vector<8x32xf32>
    %708 = arith.addf %703, %707 : vector<8x32xf32>
    %cst_352 = arith.constant 0.000000e+00 : f32
    %709 = vector.broadcast %cst_352 : f32 to vector<8x32xf32>
    %710 = arith.maximumf %708, %709 : vector<8x32xf32>
    %711 = arith.truncf %710 : vector<8x32xf32> to vector<8x32xbf16>
    %c0_353 = arith.constant 0 : index
    %c0_354 = arith.constant 0 : index
    %c12_355 = arith.constant 12 : index
    %c0_356 = arith.constant 0 : index
    %712 = vector.load %arg8[%c0_353, %c0_354, %c12_355, %c0_356] : memref<1x8x16x32xbf16, #tpu.memory_space<vmem>>, vector<1x8x1x32xbf16>
    %713 = vector.shape_cast %712 : vector<1x8x1x32xbf16> to vector<8x32xbf16>
    %714 = vector.shape_cast %711 : vector<8x32xbf16> to vector<1x8x1x32xbf16>
    tpu.vector_store %arg8[%c0_353, %c0_354, %c12_355, %c0_356], %714 {strides = array<i32>} : memref<1x8x16x32xbf16, #tpu.memory_space<vmem>>, vector<1x8x1x32xbf16>,
    %c13_357 = arith.constant 13 : index
    %c0_358 = arith.constant 0 : index
    %c0_359 = arith.constant 0 : index
    %715 = vector.load %arg9[%c13_357, %c0_358, %c0_359] : memref<18x8x34xbf16, #tpu.memory_space<vmem>>, vector<3x8x34xbf16>
    %716 = vector.shape_cast %715 : vector<3x8x34xbf16> to vector<24x34xbf16>
    %717 = vector.extract_strided_slice %1 {offsets = [0, 0, 0], sizes = [1, 8, 24], strides = [1, 1, 1]} : vector<3x8x24xbf16> to vector<1x8x24xbf16>
    %718 = vector.shape_cast %717 : vector<1x8x24xbf16> to vector<8x24xbf16>
    %719 = vector.extract_strided_slice %716 {offsets = [0, 0], sizes = [24, 32], strides = [1, 1]} : vector<24x34xbf16> to vector<24x32xbf16>
    %cst_360 = arith.constant dense<0.000000e+00> : vector<8x32xf32>
    %720 = tpu.matmul %718, %719, %cst_360 {dimension_numbers = #tpu.dot_dimension_numbers<[1], [0], [0], [1], [0, 0, 1, 1], [], []>} : vector<8x24xbf16>, vector<24x32xbf16>, vector<8x32xf32> -> vector<8x32xf32>
    %721 = arith.addf %7, %720 : vector<8x32xf32>
    %722 = vector.extract_strided_slice %1 {offsets = [1, 0, 0], sizes = [1, 8, 24], strides = [1, 1, 1]} : vector<3x8x24xbf16> to vector<1x8x24xbf16>
    %723 = vector.shape_cast %722 : vector<1x8x24xbf16> to vector<8x24xbf16>
    %724 = vector.extract_strided_slice %716 {offsets = [0, 1], sizes = [24, 32], strides = [1, 1]} : vector<24x34xbf16> to vector<24x32xbf16>
    %cst_361 = arith.constant dense<0.000000e+00> : vector<8x32xf32>
    %725 = tpu.matmul %723, %724, %cst_361 {dimension_numbers = #tpu.dot_dimension_numbers<[1], [0], [0], [1], [0, 0, 1, 1], [], []>} : vector<8x24xbf16>, vector<24x32xbf16>, vector<8x32xf32> -> vector<8x32xf32>
    %726 = arith.addf %721, %725 : vector<8x32xf32>
    %727 = vector.extract_strided_slice %1 {offsets = [2, 0, 0], sizes = [1, 8, 24], strides = [1, 1, 1]} : vector<3x8x24xbf16> to vector<1x8x24xbf16>
    %728 = vector.shape_cast %727 : vector<1x8x24xbf16> to vector<8x24xbf16>
    %729 = vector.extract_strided_slice %716 {offsets = [0, 2], sizes = [24, 32], strides = [1, 1]} : vector<24x34xbf16> to vector<24x32xbf16>
    %cst_362 = arith.constant dense<0.000000e+00> : vector<8x32xf32>
    %730 = tpu.matmul %728, %729, %cst_362 {dimension_numbers = #tpu.dot_dimension_numbers<[1], [0], [0], [1], [0, 0, 1, 1], [], []>} : vector<8x24xbf16>, vector<24x32xbf16>, vector<8x32xf32> -> vector<8x32xf32>
    %731 = arith.addf %726, %730 : vector<8x32xf32>
    %cst_363 = arith.constant 0.000000e+00 : f32
    %732 = vector.broadcast %cst_363 : f32 to vector<8x32xf32>
    %733 = arith.maximumf %731, %732 : vector<8x32xf32>
    %734 = arith.truncf %733 : vector<8x32xf32> to vector<8x32xbf16>
    %c0_364 = arith.constant 0 : index
    %c0_365 = arith.constant 0 : index
    %c13_366 = arith.constant 13 : index
    %c0_367 = arith.constant 0 : index
    %735 = vector.load %arg8[%c0_364, %c0_365, %c13_366, %c0_367] : memref<1x8x16x32xbf16, #tpu.memory_space<vmem>>, vector<1x8x1x32xbf16>
    %736 = vector.shape_cast %735 : vector<1x8x1x32xbf16> to vector<8x32xbf16>
    %737 = vector.shape_cast %734 : vector<8x32xbf16> to vector<1x8x1x32xbf16>
    tpu.vector_store %arg8[%c0_364, %c0_365, %c13_366, %c0_367], %737 {strides = array<i32>} : memref<1x8x16x32xbf16, #tpu.memory_space<vmem>>, vector<1x8x1x32xbf16>,
    %c14_368 = arith.constant 14 : index
    %c0_369 = arith.constant 0 : index
    %c0_370 = arith.constant 0 : index
    %738 = vector.load %arg9[%c14_368, %c0_369, %c0_370] : memref<18x8x34xbf16, #tpu.memory_space<vmem>>, vector<3x8x34xbf16>
    %739 = vector.shape_cast %738 : vector<3x8x34xbf16> to vector<24x34xbf16>
    %740 = vector.extract_strided_slice %1 {offsets = [0, 0, 0], sizes = [1, 8, 24], strides = [1, 1, 1]} : vector<3x8x24xbf16> to vector<1x8x24xbf16>
    %741 = vector.shape_cast %740 : vector<1x8x24xbf16> to vector<8x24xbf16>
    %742 = vector.extract_strided_slice %739 {offsets = [0, 0], sizes = [24, 32], strides = [1, 1]} : vector<24x34xbf16> to vector<24x32xbf16>
    %cst_371 = arith.constant dense<0.000000e+00> : vector<8x32xf32>
    %743 = tpu.matmul %741, %742, %cst_371 {dimension_numbers = #tpu.dot_dimension_numbers<[1], [0], [0], [1], [0, 0, 1, 1], [], []>} : vector<8x24xbf16>, vector<24x32xbf16>, vector<8x32xf32> -> vector<8x32xf32>
    %744 = arith.addf %7, %743 : vector<8x32xf32>
    %745 = vector.extract_strided_slice %1 {offsets = [1, 0, 0], sizes = [1, 8, 24], strides = [1, 1, 1]} : vector<3x8x24xbf16> to vector<1x8x24xbf16>
    %746 = vector.shape_cast %745 : vector<1x8x24xbf16> to vector<8x24xbf16>
    %747 = vector.extract_strided_slice %739 {offsets = [0, 1], sizes = [24, 32], strides = [1, 1]} : vector<24x34xbf16> to vector<24x32xbf16>
    %cst_372 = arith.constant dense<0.000000e+00> : vector<8x32xf32>
    %748 = tpu.matmul %746, %747, %cst_372 {dimension_numbers = #tpu.dot_dimension_numbers<[1], [0], [0], [1], [0, 0, 1, 1], [], []>} : vector<8x24xbf16>, vector<24x32xbf16>, vector<8x32xf32> -> vector<8x32xf32>
    %749 = arith.addf %744, %748 : vector<8x32xf32>
    %750 = vector.extract_strided_slice %1 {offsets = [2, 0, 0], sizes = [1, 8, 24], strides = [1, 1, 1]} : vector<3x8x24xbf16> to vector<1x8x24xbf16>
    %751 = vector.shape_cast %750 : vector<1x8x24xbf16> to vector<8x24xbf16>
    %752 = vector.extract_strided_slice %739 {offsets = [0, 2], sizes = [24, 32], strides = [1, 1]} : vector<24x34xbf16> to vector<24x32xbf16>
    %cst_373 = arith.constant dense<0.000000e+00> : vector<8x32xf32>
    %753 = tpu.matmul %751, %752, %cst_373 {dimension_numbers = #tpu.dot_dimension_numbers<[1], [0], [0], [1], [0, 0, 1, 1], [], []>} : vector<8x24xbf16>, vector<24x32xbf16>, vector<8x32xf32> -> vector<8x32xf32>
    %754 = arith.addf %749, %753 : vector<8x32xf32>
    %cst_374 = arith.constant 0.000000e+00 : f32
    %755 = vector.broadcast %cst_374 : f32 to vector<8x32xf32>
    %756 = arith.maximumf %754, %755 : vector<8x32xf32>
    %757 = arith.truncf %756 : vector<8x32xf32> to vector<8x32xbf16>
    %c0_375 = arith.constant 0 : index
    %c0_376 = arith.constant 0 : index
    %c14_377 = arith.constant 14 : index
    %c0_378 = arith.constant 0 : index
    %758 = vector.load %arg8[%c0_375, %c0_376, %c14_377, %c0_378] : memref<1x8x16x32xbf16, #tpu.memory_space<vmem>>, vector<1x8x1x32xbf16>
    %759 = vector.shape_cast %758 : vector<1x8x1x32xbf16> to vector<8x32xbf16>
    %760 = vector.shape_cast %757 : vector<8x32xbf16> to vector<1x8x1x32xbf16>
    tpu.vector_store %arg8[%c0_375, %c0_376, %c14_377, %c0_378], %760 {strides = array<i32>} : memref<1x8x16x32xbf16, #tpu.memory_space<vmem>>, vector<1x8x1x32xbf16>,
    %c15_379 = arith.constant 15 : index
    %c0_380 = arith.constant 0 : index
    %c0_381 = arith.constant 0 : index
    %761 = vector.load %arg9[%c15_379, %c0_380, %c0_381] : memref<18x8x34xbf16, #tpu.memory_space<vmem>>, vector<3x8x34xbf16>
    %762 = vector.shape_cast %761 : vector<3x8x34xbf16> to vector<24x34xbf16>
    %763 = vector.extract_strided_slice %1 {offsets = [0, 0, 0], sizes = [1, 8, 24], strides = [1, 1, 1]} : vector<3x8x24xbf16> to vector<1x8x24xbf16>
    %764 = vector.shape_cast %763 : vector<1x8x24xbf16> to vector<8x24xbf16>
    %765 = vector.extract_strided_slice %762 {offsets = [0, 0], sizes = [24, 32], strides = [1, 1]} : vector<24x34xbf16> to vector<24x32xbf16>
    %cst_382 = arith.constant dense<0.000000e+00> : vector<8x32xf32>
    %766 = tpu.matmul %764, %765, %cst_382 {dimension_numbers = #tpu.dot_dimension_numbers<[1], [0], [0], [1], [0, 0, 1, 1], [], []>} : vector<8x24xbf16>, vector<24x32xbf16>, vector<8x32xf32> -> vector<8x32xf32>
    %767 = arith.addf %7, %766 : vector<8x32xf32>
    %768 = vector.extract_strided_slice %1 {offsets = [1, 0, 0], sizes = [1, 8, 24], strides = [1, 1, 1]} : vector<3x8x24xbf16> to vector<1x8x24xbf16>
    %769 = vector.shape_cast %768 : vector<1x8x24xbf16> to vector<8x24xbf16>
    %770 = vector.extract_strided_slice %762 {offsets = [0, 1], sizes = [24, 32], strides = [1, 1]} : vector<24x34xbf16> to vector<24x32xbf16>
    %cst_383 = arith.constant dense<0.000000e+00> : vector<8x32xf32>
    %771 = tpu.matmul %769, %770, %cst_383 {dimension_numbers = #tpu.dot_dimension_numbers<[1], [0], [0], [1], [0, 0, 1, 1], [], []>} : vector<8x24xbf16>, vector<24x32xbf16>, vector<8x32xf32> -> vector<8x32xf32>
    %772 = arith.addf %767, %771 : vector<8x32xf32>
    %773 = vector.extract_strided_slice %1 {offsets = [2, 0, 0], sizes = [1, 8, 24], strides = [1, 1, 1]} : vector<3x8x24xbf16> to vector<1x8x24xbf16>
    %774 = vector.shape_cast %773 : vector<1x8x24xbf16> to vector<8x24xbf16>
    %775 = vector.extract_strided_slice %762 {offsets = [0, 2], sizes = [24, 32], strides = [1, 1]} : vector<24x34xbf16> to vector<24x32xbf16>
    %cst_384 = arith.constant dense<0.000000e+00> : vector<8x32xf32>
    %776 = tpu.matmul %774, %775, %cst_384 {dimension_numbers = #tpu.dot_dimension_numbers<[1], [0], [0], [1], [0, 0, 1, 1], [], []>} : vector<8x24xbf16>, vector<24x32xbf16>, vector<8x32xf32> -> vector<8x32xf32>
    %777 = arith.addf %772, %776 : vector<8x32xf32>
    %cst_385 = arith.constant 0.000000e+00 : f32
    %778 = vector.broadcast %cst_385 : f32 to vector<8x32xf32>
    %779 = arith.maximumf %777, %778 : vector<8x32xf32>
    %780 = arith.truncf %779 : vector<8x32xf32> to vector<8x32xbf16>
    %c0_386 = arith.constant 0 : index
    %c0_387 = arith.constant 0 : index
    %c15_388 = arith.constant 15 : index
    %c0_389 = arith.constant 0 : index
    %781 = vector.load %arg8[%c0_386, %c0_387, %c15_388, %c0_389] : memref<1x8x16x32xbf16, #tpu.memory_space<vmem>>, vector<1x8x1x32xbf16>
    %782 = vector.shape_cast %781 : vector<1x8x1x32xbf16> to vector<8x32xbf16>
    %783 = vector.shape_cast %780 : vector<8x32xbf16> to vector<1x8x1x32xbf16>
    tpu.vector_store %arg8[%c0_386, %c0_387, %c15_388, %c0_389], %783 {strides = array<i32>} : memref<1x8x16x32xbf16, #tpu.memory_space<vmem>>, vector<1x8x1x32xbf16>,
    return
  }
  func.func @transform_0(%arg0: i32, %arg1: i32) -> (i32, i32, i32, i32, i32) {
    %c0_i32 = arith.constant 0 : i32
    %c0_i32_0 = arith.constant 0 : i32
    %c0_i32_1 = arith.constant 0 : i32
    %c0_i32_2 = arith.constant 0 : i32
    return %arg0, %arg1, %c0_i32, %c0_i32_0, %c0_i32_1 : i32, i32, i32, i32, i32
  }
  func.func @transform_1(%arg0: i32, %arg1: i32) -> (i32, i32, i32, i32, i32) {
    %c0_i32 = arith.constant 0 : i32
    %c0_i32_0 = arith.constant 0 : i32
    %c0_i32_1 = arith.constant 0 : i32
    %c0_i32_2 = arith.constant 0 : i32
    return %arg0, %arg1, %c0_i32, %c0_i32_0, %c0_i32_1 : i32, i32, i32, i32, i32
  }
  func.func @transform_2(%arg0: i32, %arg1: i32) -> (i32, i32, i32) {
    %c0_i32 = arith.constant 0 : i32
    %c0_i32_0 = arith.constant 0 : i32
    %c0_i32_1 = arith.constant 0 : i32
    %c0_i32_2 = arith.constant 0 : i32
    return %c0_i32, %c0_i32_0, %c0_i32_1 : i32, i32, i32
  }
  func.func @transform_3(%arg0: i32, %arg1: i32) -> (i32, i32) {
    %c0_i32 = arith.constant 0 : i32
    %c0_i32_0 = arith.constant 0 : i32
    %c0_i32_1 = arith.constant 0 : i32
    return %c0_i32, %c0_i32_0 : i32, i32
  }
  func.func @transform_4(%arg0: i32, %arg1: i32) -> (i32, i32, i32) {
    %c0_i32 = arith.constant 0 : i32
    %c0_i32_0 = arith.constant 0 : i32
    %c0_i32_1 = arith.constant 0 : i32
    %c0_i32_2 = arith.constant 0 : i32
    return %c0_i32, %c0_i32_0, %c0_i32_1 : i32, i32, i32
  }
  func.func @transform_5(%arg0: i32, %arg1: i32) -> (i32, i32) {
    %c0_i32 = arith.constant 0 : i32
    %c0_i32_0 = arith.constant 0 : i32
    %c0_i32_1 = arith.constant 0 : i32
    return %c0_i32, %c0_i32_0 : i32, i32
  }
  func.func @transform_6(%arg0: i32, %arg1: i32) -> (i32, i32, i32, i32) {
    %c0_i32 = arith.constant 0 : i32
    %c0_i32_0 = arith.constant 0 : i32
    %c0_i32_1 = arith.constant 0 : i32
    return %arg0, %c0_i32, %arg1, %c0_i32_0 : i32, i32, i32, i32
  }
}

</mosaic_0001>

<llo_original>
// kernel: _lambda_.1
$region0: #{_lambda_.1}
  #allocation0 [shape = 'u32[]', space=smem, size = 0x4, offset = 0x4, fixed_abs, tag = 'smem constant byte address 0x4 - core index']
  #allocation1 [shape = 'u32[144,128]{1,0:T(1,128)}', space=vmem, size = 0x12000, scoped, tag = 'internal scratch']
  #allocation2 [shape = 'bf16[18,8,34]{2,1,0:T(8,128)(2,1)}', space=vmem, size = 0x9000, scoped, tag = 'scratch operand']
  #allocation5 [shape = 's32[]', space=sflag, size = 0x4, offset = 0, fixed_abs, tag = 'sflag constant byte address 0x0 - dummy sync flag']
  %s0 = inlined_call_operand.vmem [shape: bf16[2,2,16,24,34], index: 0, kind: input, shape index: {}]
  %s1 = inlined_call_operand.vmem [shape: bf16[2,2,4,24,34], index: 1, kind: input, shape index: {}]
  %s2 = inlined_call_operand.vmem [shape: bf16[3,8,72], index: 2, kind: input, shape index: {}]
  %s3 = inlined_call_operand.vmem [shape: f32[8,1], index: 3, kind: input, shape index: {}]
  %s4 = inlined_call_operand.vmem [shape: bf16[3,8,24], index: 4, kind: input, shape index: {}]
  %s5 = inlined_call_operand.vmem [shape: f32[8,1], index: 5, kind: input, shape index: {}]
  %s6 = inlined_call_operand.hbm [shape: bf16[2,8,32,32], index: 6, kind: output, shape index: {}]
  %s7 = sld [smem:[#allocation0]]
  $region65: #{_lambda_.1} parent=0
    _
  %s9 = ssub.s32 1, %s7
  %s10 = scalar_select 0, %s9, %s7
  $region1: #{_lambda_.1} parent=0
    #allocation3 [shape = 'u8[65536]{0}', space=vmem, size = 0x10000, scoped, tag = 'output window, operand 0']
    #allocation4 [shape = 's32[2]{0}', space=sflag, size = 0x8, scoped, tag = 'scoped memory for _lambda_.1']
    %11 = vsyncpa [#allocation4], 0
    %s12 = scalar_lea.sflag [#allocation4], 1
    %13 = vsyncpa %s12, 0
    loop: start=0, step=1, limit=6
    $region2: #{_lambda_.1} parent=1 // loop_pre_header
      _
    $region3: #{_lambda_.1} parent=1 // loop_header
      %s15 = sphi 0, %s19
      %p16 = scmp.ge.s32.totalorder %s15, 6
      %s22 = sphi 0, %s34
      %s23 = sphi 0, %s30
      %s24 = sphi 0, %s22
      %s25 = sphi 0, %s23
      %s26 = sphi 0, %s24
      %s27 = sphi 0, %s25
      %s39 = sphi 0, %s41
      %s42 = sphi 0, %s39
      %s43 = sphi 0, %s42
      %s59 = sphi 0, %s43
      %s67 = sphi 0, %s69
      %s70 = sphi 0, %s67
      %s71 = sphi 0, %s70
      %s87 = sphi 0, %s71
      %s91 = sphi 0, %s91
      %s93 = sphi 0, %s91
      %s94 = sphi 0, %s93
      %s108 = sphi 0, %s94
      %s112 = sphi 0, %s112
      %s114 = sphi 0, %s112
      %s115 = sphi 0, %s114
      %s129 = sphi 0, %s115
      %s133 = sphi 0, %s133
      %s135 = sphi 0, %s133
      %s136 = sphi 0, %s135
      %s150 = sphi 0, %s136
      %s154 = sphi 0, %s154
      %s156 = sphi 0, %s154
      %s157 = sphi 0, %s156
      %s171 = sphi 0, %s157
      %s179 = sphi 0, %s181
      %s182 = sphi 0, %s179
      %s183 = sphi 0, %s182
      %s199 = sphi 0, %s183
    $region4: #{_lambda_.1} parent=1 // loop_header_branch
      %18 = sbr.rel (%p16) target = $region8
    $region5: #{_lambda_.1} parent=1 // loop_body
      %s20 = ssub.s32 %s15, 1
      %s21 = ssub.s32 %s15, 2
      %s28 = sadd.s32 1, %s23
      %p29 = scmp.ge.s32.totalorder %s28, 2
      %s30 = scalar_select %p29, 0, %s28
      %s31 = sadd.s32 1, %s22
      %s32 = scalar_select %p29, %s31, %s22
      %p33 = scmp.ge.s32.totalorder %s32, 2
      %s34 = scalar_select %p33, 0, %s32
      %s35 = ssub.s32 %s22, %s34
      %s36 = ssub.s32 %s23, %s30
      %s37 = sor.u32 %s35, %s36
      %p38 = scmp.eq.s32.totalorder %s37, 0
      %s40 = sadd.s32 %s39, 1
      %s41 = scalar_select %p38, %s39, %s40
      %p44 = pneg %p38
      %p45 = scmp.eq.s32.totalorder %s15, 3
      %p46 = por %p44, %p45
      %p47 = scmp.ne.s32.totalorder %s39, %s42
      %p48 = scmp.eq.s32.totalorder %s15, 0
      %p49 = por %p47, %p48
      %p50 = scmp.ne.s32.totalorder %s39, %s42
      %p51 = scmp.eq.s32.totalorder %s20, 3
      %p52 = por %p50, %p51
      %p53 = scmp.ne.s32.totalorder %s42, %s43
      %p54 = scmp.eq.s32.totalorder %s20, 0
      %p55 = por %p53, %p54
      %p56 = scmp.ne.s32.totalorder %s42, %s43
      %p57 = scmp.eq.s32.totalorder %s21, 3
      %p58 = por %p56, %p57
      %p60 = scmp.ne.s32.totalorder %s43, %s59
      %p61 = scmp.eq.s32.totalorder %s21, 0
      %p62 = por %p60, %p61
      %s63 = ssub.s32 %s22, %s34
      %s64 = ssub.s32 %s23, %s30
      %s65 = sor.u32 %s63, %s64
      %p66 = scmp.eq.s32.totalorder %s65, 0
      %s68 = sadd.s32 %s67, 1
      %s69 = scalar_select %p66, %s67, %s68
      %p72 = pneg %p66
      %p73 = scmp.eq.s32.totalorder %s15, 3
      %p74 = por %p72, %p73
      %p75 = scmp.ne.s32.totalorder %s67, %s70
      %p76 = scmp.eq.s32.totalorder %s15, 0
      %p77 = por %p75, %p76
      %p78 = scmp.ne.s32.totalorder %s67, %s70
      %p79 = scmp.eq.s32.totalorder %s20, 3
      %p80 = por %p78, %p79
      %p81 = scmp.ne.s32.totalorder %s70, %s71
      %p82 = scmp.eq.s32.totalorder %s20, 0
      %p83 = por %p81, %p82
      %p84 = scmp.ne.s32.totalorder %s70, %s71
      %p85 = scmp.eq.s32.totalorder %s21, 3
      %p86 = por %p84, %p85
      %p88 = scmp.ne.s32.totalorder %s71, %s87
      %p89 = scmp.eq.s32.totalorder %s21, 0
      %p90 = por %p88, %p89
      %s92 = sadd.s32 %s91, 1
      %p95 = scmp.eq.s32.totalorder %s15, 3
      %p96 = scmp.ne.s32.totalorder %s91, %s93
      %p97 = scmp.eq.s32.totalorder %s15, 0
      %p98 = por %p96, %p97
      %p99 = scmp.ne.s32.totalorder %s91, %s93
      %p100 = scmp.eq.s32.totalorder %s20, 3
      %p101 = por %p99, %p100
      %p102 = scmp.ne.s32.totalorder %s93, %s94
      %p103 = scmp.eq.s32.totalorder %s20, 0
      %p104 = por %p102, %p103
      %p105 = scmp.ne.s32.totalorder %s93, %s94
      %p106 = scmp.eq.s32.totalorder %s21, 3
      %p107 = por %p105, %p106
      %p109 = scmp.ne.s32.totalorder %s94, %s108
      %p110 = scmp.eq.s32.totalorder %s21, 0
      %p111 = por %p109, %p110
      %s113 = sadd.s32 %s112, 1
      %p116 = scmp.eq.s32.totalorder %s15, 3
      %p117 = scmp.ne.s32.totalorder %s112, %s114
      %p118 = scmp.eq.s32.totalorder %s15, 0
      %p119 = por %p117, %p118
      %p120 = scmp.ne.s32.totalorder %s112, %s114
      %p121 = scmp.eq.s32.totalorder %s20, 3
      %p122 = por %p120, %p121
      %p123 = scmp.ne.s32.totalorder %s114, %s115
      %p124 = scmp.eq.s32.totalorder %s20, 0
      %p125 = por %p123, %p124
      %p126 = scmp.ne.s32.totalorder %s114, %s115
      %p127 = scmp.eq.s32.totalorder %s21, 3
      %p128 = por %p126, %p127
      %p130 = scmp.ne.s32.totalorder %s115, %s129
      %p131 = scmp.eq.s32.totalorder %s21, 0
      %p132 = por %p130, %p131
      %s134 = sadd.s32 %s133, 1
      %p137 = scmp.eq.s32.totalorder %s15, 3
      %p138 = scmp.ne.s32.totalorder %s133, %s135
      %p139 = scmp.eq.s32.totalorder %s15, 0
      %p140 = por %p138, %p139
      %p141 = scmp.ne.s32.totalorder %s133, %s135
      %p142 = scmp.eq.s32.totalorder %s20, 3
      %p143 = por %p141, %p142
      %p144 = scmp.ne.s32.totalorder %s135, %s136
      %p145 = scmp.eq.s32.totalorder %s20, 0
      %p146 = por %p144, %p145
      %p147 = scmp.ne.s32.totalorder %s135, %s136
      %p148 = scmp.eq.s32.totalorder %s21, 3
      %p149 = por %p147, %p148
      %p151 = scmp.ne.s32.totalorder %s136, %s150
      %p152 = scmp.eq.s32.totalorder %s21, 0
      %p153 = por %p151, %p152
      %s155 = sadd.s32 %s154, 1
      %p158 = scmp.eq.s32.totalorder %s15, 3
      %p159 = scmp.ne.s32.totalorder %s154, %s156
      %p160 = scmp.eq.s32.totalorder %s15, 0
      %p161 = por %p159, %p160
      %p162 = scmp.ne.s32.totalorder %s154, %s156
      %p163 = scmp.eq.s32.totalorder %s20, 3
      %p164 = por %p162, %p163
      %p165 = scmp.ne.s32.totalorder %s156, %s157
      %p166 = scmp.eq.s32.totalorder %s20, 0
      %p167 = por %p165, %p166
      %p168 = scmp.ne.s32.totalorder %s156, %s157
      %p169 = scmp.eq.s32.totalorder %s21, 3
      %p170 = por %p168, %p169
      %p172 = scmp.ne.s32.totalorder %s157, %s171
      %p173 = scmp.eq.s32.totalorder %s21, 0
      %p174 = por %p172, %p173
      %s175 = ssub.s32 %s22, %s34
      %s176 = ssub.s32 %s23, %s30
      %s177 = sor.u32 %s175, %s176
      %p178 = scmp.eq.s32.totalorder %s177, 0
      %s180 = sadd.s32 %s179, 1
      %s181 = scalar_select %p178, %s179, %s180
      %p184 = pneg %p178
      %p185 = scmp.eq.s32.totalorder %s15, 3
      %p186 = por %p184, %p185
      %p187 = scmp.ne.s32.totalorder %s179, %s182
      %p188 = scmp.eq.s32.totalorder %s15, 0
      %p189 = por %p187, %p188
      %p190 = scmp.ne.s32.totalorder %s179, %s182
      %p191 = scmp.eq.s32.totalorder %s20, 3
      %p192 = por %p190, %p191
      %p193 = scmp.ne.s32.totalorder %s182, %s183
      %p194 = scmp.eq.s32.totalorder %s20, 0
      %p195 = por %p193, %p194
      %p196 = scmp.ne.s32.totalorder %s182, %s183
      %p197 = scmp.eq.s32.totalorder %s21, 3
      %p198 = por %p196, %p197
      %p200 = scmp.ne.s32.totalorder %s183, %s199
      %p201 = scmp.eq.s32.totalorder %s21, 0
      %p202 = por %p200, %p201
      %p203 = scmp.le.s32.totalorder 1, %s15
      %p204 = scmp.lt.s32.totalorder %s15, 5
      %p205 = pnand %p203, %p204
      %p206 = pneg %p205
      // Predicated region
      $region9: #{_lambda_.1} parent=5 // pred_check
        _
      $region10: #{_lambda_.1} parent=5 // pred_check_branch
        %208 = sbr.rel (%p205) target = $region12
      $region11: #{_lambda_.1} parent=5 // pred_region
        %s209 = ssub.s32 %s15, 1
        // Predicated region
        $region13: #{_lambda_.1} parent=11 // pred_check
          %p210 = pneg %p104
        $region14: #{_lambda_.1} parent=11 // pred_check_branch
          %212 = sbr.rel (%p210) target = $region16
        $region15: #{_lambda_.1} parent=11 // pred_region
          _
        $region16: #{_lambda_.1} parent=11 // pred_fallthru
          _
        // Predicated region
        $region17: #{_lambda_.1} parent=11 // pred_check
          %p213 = pneg %p125
        $region18: #{_lambda_.1} parent=11 // pred_check_branch
          %215 = sbr.rel (%p213) target = $region20
        $region19: #{_lambda_.1} parent=11 // pred_region
          _
        $region20: #{_lambda_.1} parent=11 // pred_fallthru
          _
        // Predicated region
        $region21: #{_lambda_.1} parent=11 // pred_check
          %p216 = pneg %p146
        $region22: #{_lambda_.1} parent=11 // pred_check_branch
          %218 = sbr.rel (%p216) target = $region24
        $region23: #{_lambda_.1} parent=11 // pred_region
          _
        $region24: #{_lambda_.1} parent=11 // pred_fallthru
          _
        // Predicated region
        $region25: #{_lambda_.1} parent=11 // pred_check
          %p219 = pneg %p167
        $region26: #{_lambda_.1} parent=11 // pred_check_branch
          %221 = sbr.rel (%p219) target = $region28
        $region27: #{_lambda_.1} parent=11 // pred_region
          _
        $region28: #{_lambda_.1} parent=11 // pred_fallthru
          _
      $region12: #{_lambda_.1} parent=5 // pred_fallthru
        _
      %p222 = scmp.lt.s32.totalorder %s15, 4
      // Predicated region
      $region29: #{_lambda_.1} parent=5 // pred_check
        %p223 = pneg %p222
      $region30: #{_lambda_.1} parent=5 // pred_check_branch
        %225 = sbr.rel (%p223) target = $region32
      $region31: #{_lambda_.1} parent=5 // pred_region
        // Predicated region
        $region33: #{_lambda_.1} parent=31 // pred_check
          %p226 = pneg %p49
        $region34: #{_lambda_.1} parent=31 // pred_check_branch
          %228 = sbr.rel (%p226) target = $region36
        $region35: #{_lambda_.1} parent=31 // pred_region
          %p229 = scmp.lt.s32.totalorder %s22, 1
          %s230 = scalar_select %p229, %s22, 1
          %p231 = scmp.lt.s32.totalorder %s23, 1
          %s232 = scalar_select %p231, %s23, 1
          %s233 = smul.addr %s232, 48
          %s234 = smul.addr %s230, 96
          %s235 = sadd.s32 %s233, %s234
          %s236 = smul.addr %s235, 4
          %s237 = scalar_lea.vmem %s0, %s236
        $region36: #{_lambda_.1} parent=31 // pred_fallthru
          _
        // Predicated region
        $region37: #{_lambda_.1} parent=31 // pred_check
          %p238 = pneg %p77
        $region38: #{_lambda_.1} parent=31 // pred_check_branch
          %240 = sbr.rel (%p238) target = $region40
        $region39: #{_lambda_.1} parent=31 // pred_region
          %p241 = scmp.lt.s32.totalorder %s22, 1
          %s242 = scalar_select %p241, %s22, 1
          %p243 = scmp.lt.s32.totalorder %s23, 1
          %s244 = scalar_select %p243, %s23, 1
          %s245 = smul.addr %s244, 12
          %s246 = smul.addr %s242, 24
          %s247 = sadd.s32 %s245, %s246
          %s248 = smul.addr %s247, 4
          %s249 = scalar_lea.vmem %s1, %s248
        $region40: #{_lambda_.1} parent=31 // pred_fallthru
          _
      $region32: #{_lambda_.1} parent=5 // pred_fallthru
        _
      %p250 = scmp.le.s32.totalorder 1, %s15
      %p251 = scmp.lt.s32.totalorder %s15, 5
      %p252 = pnand %p250, %p251
      %p253 = pneg %p252
      // Predicated region
      $region41: #{_lambda_.1} parent=5 // pred_check
        _
      $region42: #{_lambda_.1} parent=5 // pred_check_branch
        %255 = sbr.rel (%p252) target = $region44
      $region43: #{_lambda_.1} parent=5 // pred_region
        %s256 = ssub.s32 %s15, 1
        %p257 = scmp.lt.s32.totalorder %s24, 1
        %s258 = scalar_select %p257, %s24, 1
        %p259 = scmp.lt.s32.totalorder %s25, 1
        %s260 = scalar_select %p259, %s25, 1
        %s261 = smul.addr %s260, 48
        %s262 = smul.addr %s258, 96
        %s263 = sadd.s32 %s261, %s262
        %s264 = smul.addr %s263, 4
        %s265 = scalar_lea.vmem %s0, %s264
        %p266 = pneg %p55
        %p267 = pneg %p52
        %p268 = scmp.lt.s32.totalorder %s24, 1
        %s269 = scalar_select %p268, %s24, 1
        %p270 = scmp.lt.s32.totalorder %s25, 1
        %s271 = scalar_select %p270, %s25, 1
        %s272 = smul.addr %s271, 12
        %s273 = smul.addr %s269, 24
        %s274 = sadd.s32 %s272, %s273
        %s275 = smul.addr %s274, 4
        %s276 = scalar_lea.vmem %s1, %s275
        %p277 = pneg %p83
        %p278 = pneg %p80
        %p279 = pneg %p104
        %p280 = pneg %p101
        %p281 = pneg %p125
        %p282 = pneg %p122
        %p283 = pneg %p146
        %p284 = pneg %p143
        %p285 = pneg %p167
        %p286 = pneg %p164
        %p287 = pneg %p195
        %p288 = pneg %p192
        %s289 = sand.u32 %s182, 1
        %s290 = scalar_lea.sflag [#allocation4], %s289
        %s291 = sand.u32 %s182, 1
        %s292 = smul.addr %s291, 64
        %s293 = scalar_lea.vmem [#allocation3], %s292
        %p294 = scmp.lt.s32.totalorder %s24, 1
        %s295 = scalar_select %p294, %s24, 1
        %p296 = scmp.lt.s32.totalorder %s25, 1
        %s297 = scalar_select %p296, %s25, 1
        %s298 = smul.addr %s297, 48
        %s299 = smul.addr %s295, 96
        %s300 = sadd.s32 %s298, %s299
        %s301 = smul.addr %s300, 4
        %s302 = scalar_lea.vmem %s0, %s301
        %p303 = scmp.lt.s32.totalorder %s24, 1
        %s304 = scalar_select %p303, %s24, 1
        %p305 = scmp.lt.s32.totalorder %s25, 1
        %s306 = scalar_select %p305, %s25, 1
        %s307 = smul.addr %s306, 12
        %s308 = smul.addr %s304, 24
        %s309 = sadd.s32 %s307, %s308
        %s310 = smul.addr %s309, 4
        %s311 = scalar_lea.vmem %s1, %s310
        %s312 = smul.u32 2, %s25
        %v314 = vld [vmem:[%s2] sm:$0xf]
        %v315 = vld [vmem:[%s2 + $0x4] sm:$0xf]
        %v316 = vld [vmem:[%s2 + $0x8] sm:$0xf]
        %v317 = vld [vmem:[%s4] sm:$0xf]
        %v318 = vld [vmem:[%s4 + $0x4] sm:$0xf]
        %v319 = vld [vmem:[%s4 + $0x8] sm:$0xf]
        %v320 = vld [vmem:[%s3] sm:$0xff]
        %322 = vset.pattern.permute.xlu0 0
        %323 = vperm.xlu0 %322, %v320
        %v324 = vpop.permute.xlu0 %323
        %v326 = vld [vmem:[%s5] sm:$0xff]
        %328 = vset.pattern.permute.xlu0 0
        %329 = vperm.xlu0 %328, %v326
        %v330 = vpop.permute.xlu0 %329
        %vm332 = vcmask 273408
        %333 = vst.msk [vmem:[#allocation2] sm:$0xf] %vm332, 0
        %334 = vst.msk [vmem:[#allocation2 + $0x4] sm:$0xf] %vm332, 0
        %335 = vst.msk [vmem:[#allocation2 + $0x8] sm:$0xf] %vm332, 0
        %336 = vst.msk [vmem:[#allocation2 + $0xc] sm:$0xf] %vm332, 0
        %337 = vst.msk [vmem:[#allocation2 + $0x10] sm:$0xf] %vm332, 0
        %338 = vst.msk [vmem:[#allocation2 + $0x14] sm:$0xf] %vm332, 0
        %339 = vst.msk [vmem:[#allocation2 + $0x18] sm:$0xf] %vm332, 0
        %340 = vst.msk [vmem:[#allocation2 + $0x1c] sm:$0xf] %vm332, 0
        %341 = vst.msk [vmem:[#allocation2 + $0x20] sm:$0xf] %vm332, 0
        %342 = vst.msk [vmem:[#allocation2 + $0x24] sm:$0xf] %vm332, 0
        %343 = vst.msk [vmem:[#allocation2 + $0x28] sm:$0xf] %vm332, 0
        %344 = vst.msk [vmem:[#allocation2 + $0x2c] sm:$0xf] %vm332, 0
        %345 = vst.msk [vmem:[#allocation2 + $0x30] sm:$0xf] %vm332, 0
        %346 = vst.msk [vmem:[#allocation2 + $0x34] sm:$0xf] %vm332, 0
        %347 = vst.msk [vmem:[#allocation2 + $0x38] sm:$0xf] %vm332, 0
        %348 = vst.msk [vmem:[#allocation2 + $0x3c] sm:$0xf] %vm332, 0
        %349 = vst.msk [vmem:[#allocation2 + $0x40] sm:$0xf] %vm332, 0
        %350 = vst.msk [vmem:[#allocation2 + $0x44] sm:$0xf] %vm332, 0
        %s351 = smul.u32 %s25, 16
        %s352 = sadd.s32 %s351, 4294967295
        %p353 = scmp.ge.s32.totalorder %s352, 0
        %p354 = scmp.lt.s32.totalorder %s352, 32
        %p355 = pnand %p353, %p354
        %p356 = pneg %p355
        // Predicated region
        $region45: #{_lambda_.1} parent=43 // pred_check
          _
        $region46: #{_lambda_.1} parent=43 // pred_check_branch
          %358 = sbr.rel (%p355) target = $region48
        $region47: #{_lambda_.1} parent=43 // pred_region
          %v359 = vld [vmem:[%s311] sm:$0xf]
          %v360 = vld [vmem:[%s311 + $0x4] sm:$0xf]
          %v361 = vld [vmem:[%s311 + $0x8] sm:$0xf]
          %s362 = scalar_lea.vmem %s311, 12
          %v363 = vld [vmem:[%s362] sm:$0xf]
          %v364 = vld [vmem:[%s362 + $0x4] sm:$0xf]
          %v365 = vld [vmem:[%s362 + $0x8] sm:$0xf]
          %v366 = vld [vmem:[%s302] sm:$0xf]
          %v367 = vld [vmem:[%s302 + $0x4] sm:$0xf]
          %v368 = vld [vmem:[%s302 + $0x8] sm:$0xf]
          %v372 = vunpack.c.l.b16 %v359
          %v373 = vunpack.c.l.b16 %v360
          %v374 = vunpack.c.l.b16 %v361
          %v375 = vpack.c.b16 %v373, %v372
          %v376 = vpack.c.b16 %v374, %v374
          %v381 = vunpack.c.l.b16 %v363
          %v382 = vunpack.c.l.b16 %v364
          %v383 = vunpack.c.l.b16 %v365
          %v384 = vpack.c.b16 %v381, %v381
          %v385 = vpack.c.b16 %v383, %v382
          %v390 = vunpack.c.l.b16 %v366
          %v391 = vunpack.c.l.b16 %v367
          %v392 = vunpack.c.l.b16 %v368
          %v393 = vpack.c.b16 %v391, %v390
          %v394 = vpack.c.b16 %v392, %v392
          %vm396 = vcmask 1043456
          %v399 = vsel %vm396, %v376, %v384
          %vm401 = vcmask 588800
          %v403 = vsel %vm401, %v314, 0
          %v406 = vsel %vm396, %v394, 0
          %408 = vmatprep.subr.bf16.mxu0 0
          %409 = vmatpush1.bf16.msra.mxu0 0
          %410 = vmatprep.subr.bf16.mxu0 0
          %411 = vmatpush1.bf16.msra.mxu0 0
          %412 = vmatprep.subr.bf16.mxu0 0
          %413 = vmatpush1.bf16.msra.mxu0 0
          %414 = vmatprep.subr.bf16.mxu0 0
          %415 = vmatpush1.bf16.msra.mxu0 %v406
          %416 = vmatprep.subr.bf16.mxu0 0
          %417 = vmatpush1.bf16.msra.mxu0 %v393
          %418 = vmatprep.subr.bf16.mxu0 0
          %419 = vmatpush1.bf16.msra.mxu0 %v385
          %420 = vmatprep.subr.bf16.mxu0 0
          %421 = vmatpush1.bf16.msra.mxu0 %v399
          %422 = vmatprep.subr.bf16.mxu0 0
          %423 = vmatpush1.bf16.msra.mxu0 %v375
          %424 = vmatprep.subr.bf16.mxu0 0
          %425 = vmatpush2.bf16.msra.mxu0 0
          %426 = vmatprep.subr.bf16.mxu0 0
          %427 = vmatpush2.bf16.msra.mxu0 0
          %428 = vmatprep.subr.bf16.mxu0 0
          %429 = vmatpush2.bf16.msra.mxu0 0
          %430 = vmatprep.subr.bf16.mxu0 0
          %431 = vmatpush2.bf16.msra.mxu0 0
          %432 = vmatprep.subr.bf16.mxu0 0
          %433 = vmatpush2.bf16.msra.mxu0 0
          %434 = vmatprep.subr.bf16.mxu0 0
          %435 = vmatpush2.bf16.msra.mxu0 0
          %436 = vmatprep.subr.bf16.mxu0 0
          %437 = vmatpush2.bf16.msra.mxu0 0
          %438 = vmatprep.subr.bf16.mxu0 0
          %439 = vmatpush2.bf16.msra.mxu0 0
          %440 = vmatprep.mubr.bf16.mxu0 0
          %441 = vmatmul.mubr.bf16.gmra.mxu0 %v403
          %v442 = vpop.f32.mrf.mxu0
          %v443 = vadd.f32 0.0, %v442
          %v444 = vpop.f32.mrf.mxu0
          %v445 = vpop.f32.mrf.mxu0
          %v446 = vpop.f32.mrf.mxu0
          %447 = vdwg.mxu0
          %v448 = vadd.f32 %v324, %v443
          %450 = vrot.lane.b32.xlu0 %v375, 127
          %v451 = vpop.permute.xlu0 %450
          %452 = vrot.lane.b32.xlu0 %v399, 127
          %v453 = vpop.permute.xlu0 %452
          %454 = vrot.lane.b32.xlu0 %v385, 127
          %v455 = vpop.permute.xlu0 %454
          %456 = vrot.lane.b32.xlu0 %v393, 127
          %v457 = vpop.permute.xlu0 %456
          %458 = vrot.lane.b32.xlu0 %v394, 127
          %v459 = vpop.permute.xlu0 %458
          %v465 = vsel %vm401, %v315, 0
          %v468 = vsel %vm396, %v459, 0
          %470 = vmatprep.subr.bf16.mxu0 0
          %471 = vmatpush1.bf16.msra.mxu0 0
          %472 = vmatprep.subr.bf16.mxu0 0
          %473 = vmatpush1.bf16.msra.mxu0 0
          %474 = vmatprep.subr.bf16.mxu0 0
          %475 = vmatpush1.bf16.msra.mxu0 0
          %476 = vmatprep.subr.bf16.mxu0 0
          %477 = vmatpush1.bf16.msra.mxu0 %v468
          %478 = vmatprep.subr.bf16.mxu0 0
          %479 = vmatpush1.bf16.msra.mxu0 %v457
          %480 = vmatprep.subr.bf16.mxu0 0
          %481 = vmatpush1.bf16.msra.mxu0 %v455
          %482 = vmatprep.subr.bf16.mxu0 0
          %483 = vmatpush1.bf16.msra.mxu0 %v453
          %484 = vmatprep.subr.bf16.mxu0 0
          %485 = vmatpush1.bf16.msra.mxu0 %v451
          %486 = vmatprep.subr.bf16.mxu0 0
          %487 = vmatpush2.bf16.msra.mxu0 0
          %488 = vmatprep.subr.bf16.mxu0 0
          %489 = vmatpush2.bf16.msra.mxu0 0
          %490 = vmatprep.subr.bf16.mxu0 0
          %491 = vmatpush2.bf16.msra.mxu0 0
          %492 = vmatprep.subr.bf16.mxu0 0
          %493 = vmatpush2.bf16.msra.mxu0 0
          %494 = vmatprep.subr.bf16.mxu0 0
          %495 = vmatpush2.bf16.msra.mxu0 0
          %496 = vmatprep.subr.bf16.mxu0 0
          %497 = vmatpush2.bf16.msra.mxu0 0
          %498 = vmatprep.subr.bf16.mxu0 0
          %499 = vmatpush2.bf16.msra.mxu0 0
          %500 = vmatprep.subr.bf16.mxu0 0
          %501 = vmatpush2.bf16.msra.mxu0 0
          %502 = vmatprep.mubr.bf16.mxu0 0
          %503 = vmatmul.mubr.bf16.gmra.mxu0 %v465
          %v504 = vpop.f32.mrf.mxu0
          %v505 = vadd.f32 0.0, %v504
          %v506 = vpop.f32.mrf.mxu0
          %v507 = vpop.f32.mrf.mxu0
          %v508 = vpop.f32.mrf.mxu0
          %509 = vdwg.mxu0
          %v510 = vadd.f32 %v448, %v505
          %511 = vrot.lane.b32.xlu0 %v375, 126
          %v512 = vpop.permute.xlu0 %511
          %513 = vrot.lane.b32.xlu0 %v399, 126
          %v514 = vpop.permute.xlu0 %513
          %515 = vrot.lane.b32.xlu0 %v385, 126
          %v516 = vpop.permute.xlu0 %515
          %517 = vrot.lane.b32.xlu0 %v393, 126
          %v518 = vpop.permute.xlu0 %517
          %519 = vrot.lane.b32.xlu0 %v394, 126
          %v520 = vpop.permute.xlu0 %519
          %v526 = vsel %vm401, %v316, 0
          %v529 = vsel %vm396, %v520, 0
          %531 = vmatprep.subr.bf16.mxu0 0
          %532 = vmatpush1.bf16.msra.mxu0 0
          %533 = vmatprep.subr.bf16.mxu0 0
          %534 = vmatpush1.bf16.msra.mxu0 0
          %535 = vmatprep.subr.bf16.mxu0 0
          %536 = vmatpush1.bf16.msra.mxu0 0
          %537 = vmatprep.subr.bf16.mxu0 0
          %538 = vmatpush1.bf16.msra.mxu0 %v529
          %539 = vmatprep.subr.bf16.mxu0 0
          %540 = vmatpush1.bf16.msra.mxu0 %v518
          %541 = vmatprep.subr.bf16.mxu0 0
          %542 = vmatpush1.bf16.msra.mxu0 %v516
          %543 = vmatprep.subr.bf16.mxu0 0
          %544 = vmatpush1.bf16.msra.mxu0 %v514
          %545 = vmatprep.subr.bf16.mxu0 0
          %546 = vmatpush1.bf16.msra.mxu0 %v512
          %547 = vmatprep.subr.bf16.mxu0 0
          %548 = vmatpush2.bf16.msra.mxu0 0
          %549 = vmatprep.subr.bf16.mxu0 0
          %550 = vmatpush2.bf16.msra.mxu0 0
          %551 = vmatprep.subr.bf16.mxu0 0
          %552 = vmatpush2.bf16.msra.mxu0 0
          %553 = vmatprep.subr.bf16.mxu0 0
          %554 = vmatpush2.bf16.msra.mxu0 0
          %555 = vmatprep.subr.bf16.mxu0 0
          %556 = vmatpush2.bf16.msra.mxu0 0
          %557 = vmatprep.subr.bf16.mxu0 0
          %558 = vmatpush2.bf16.msra.mxu0 0
          %559 = vmatprep.subr.bf16.mxu0 0
          %560 = vmatpush2.bf16.msra.mxu0 0
          %561 = vmatprep.subr.bf16.mxu0 0
          %562 = vmatpush2.bf16.msra.mxu0 0
          %563 = vmatprep.mubr.bf16.mxu0 0
          %564 = vmatmul.mubr.bf16.gmra.mxu0 %v526
          %v565 = vpop.f32.mrf.mxu0
          %v566 = vadd.f32 0.0, %v565
          %v567 = vpop.f32.mrf.mxu0
          %v568 = vpop.f32.mrf.mxu0
          %v569 = vpop.f32.mrf.mxu0
          %570 = vdwg.mxu0
          %v571 = vadd.f32 %v510, %v566
          %v572 = vmax.f32 %v571, 0.0
          %v573 = vpack.c.bf16 %v572, %v572
          %v575 = vunpack.c.l.b16 %v573
          %v576 = vpack.c.b16 %v575, %v575
          %577 = vrot.lane.b32.xlu0 %v576, 1
          %v578 = vpop.permute.xlu0 %577
          %vm580 = vcmask 265224
          %581 = vst.msk [vmem:[#allocation2] sm:$0xf] %vm580, %v578
        $region48: #{_lambda_.1} parent=43 // pred_fallthru
          _
        %s582 = scalar_lea.vmem %s311, 12
        %v583 = vld [vmem:[%s582] sm:$0xf]
        %v584 = vld [vmem:[%s582 + $0x4] sm:$0xf]
        %v585 = vld [vmem:[%s582 + $0x8] sm:$0xf]
        %v586 = vld [vmem:[%s302] sm:$0xf]
        %v587 = vld [vmem:[%s302 + $0x4] sm:$0xf]
        %v588 = vld [vmem:[%s302 + $0x8] sm:$0xf]
        %s589 = scalar_lea.vmem %s302, 12
        %v590 = vld [vmem:[%s589] sm:$0xf]
        %v591 = vld [vmem:[%s589 + $0x4] sm:$0xf]
        %v592 = vld [vmem:[%s589 + $0x8] sm:$0xf]
        %v596 = vunpack.c.l.b16 %v583
        %v597 = vunpack.c.l.b16 %v584
        %v598 = vunpack.c.l.b16 %v585
        %v599 = vpack.c.b16 %v597, %v596
        %v600 = vpack.c.b16 %v598, %v598
        %v605 = vunpack.c.l.b16 %v586
        %v606 = vunpack.c.l.b16 %v587
        %v607 = vunpack.c.l.b16 %v588
        %v608 = vpack.c.b16 %v605, %v605
        %v609 = vpack.c.b16 %v607, %v606
        %v614 = vunpack.c.l.b16 %v590
        %v615 = vunpack.c.l.b16 %v591
        %v616 = vunpack.c.l.b16 %v592
        %v617 = vpack.c.b16 %v615, %v614
        %v618 = vpack.c.b16 %v616, %v616
        %vm620 = vcmask 1043456
        %v623 = vsel %vm620, %v600, %v608
        %vm625 = vcmask 588800
        %v627 = vsel %vm625, %v314, 0
        %v630 = vsel %vm620, %v618, 0
        %632 = vmatprep.subr.bf16.mxu0 0
        %633 = vmatpush1.bf16.msra.mxu0 0
        %634 = vmatprep.subr.bf16.mxu0 0
        %635 = vmatpush1.bf16.msra.mxu0 0
        %636 = vmatprep.subr.bf16.mxu0 0
        %637 = vmatpush1.bf16.msra.mxu0 0
        %638 = vmatprep.subr.bf16.mxu0 0
        %639 = vmatpush1.bf16.msra.mxu0 %v630
        %640 = vmatprep.subr.bf16.mxu0 0
        %641 = vmatpush1.bf16.msra.mxu0 %v617
        %642 = vmatprep.subr.bf16.mxu0 0
        %643 = vmatpush1.bf16.msra.mxu0 %v609
        %644 = vmatprep.subr.bf16.mxu0 0
        %645 = vmatpush1.bf16.msra.mxu0 %v623
        %646 = vmatprep.subr.bf16.mxu0 0
        %647 = vmatpush1.bf16.msra.mxu0 %v599
        %648 = vmatprep.subr.bf16.mxu0 0
        %649 = vmatpush2.bf16.msra.mxu0 0
        %650 = vmatprep.subr.bf16.mxu0 0
        %651 = vmatpush2.bf16.msra.mxu0 0
        %652 = vmatprep.subr.bf16.mxu0 0
        %653 = vmatpush2.bf16.msra.mxu0 0
        %654 = vmatprep.subr.bf16.mxu0 0
        %655 = vmatpush2.bf16.msra.mxu0 0
        %656 = vmatprep.subr.bf16.mxu0 0
        %657 = vmatpush2.bf16.msra.mxu0 0
        %658 = vmatprep.subr.bf16.mxu0 0
        %659 = vmatpush2.bf16.msra.mxu0 0
        %660 = vmatprep.subr.bf16.mxu0 0
        %661 = vmatpush2.bf16.msra.mxu0 0
        %662 = vmatprep.subr.bf16.mxu0 0
        %663 = vmatpush2.bf16.msra.mxu0 0
        %664 = vmatprep.mubr.bf16.mxu0 0
        %665 = vmatmul.mubr.bf16.gmra.mxu0 %v627
        %v666 = vpop.f32.mrf.mxu0
        %v667 = vadd.f32 0.0, %v666
        %v668 = vpop.f32.mrf.mxu0
        %v669 = vpop.f32.mrf.mxu0
        %v670 = vpop.f32.mrf.mxu0
        %671 = vdwg.mxu0
        %v672 = vadd.f32 %v324, %v667
        %674 = vrot.lane.b32.xlu0 %v599, 127
        %v675 = vpop.permute.xlu0 %674
        %676 = vrot.lane.b32.xlu0 %v623, 127
        %v677 = vpop.permute.xlu0 %676
        %678 = vrot.lane.b32.xlu0 %v609, 127
        %v679 = vpop.permute.xlu0 %678
        %680 = vrot.lane.b32.xlu0 %v617, 127
        %v681 = vpop.permute.xlu0 %680
        %682 = vrot.lane.b32.xlu0 %v618, 127
        %v683 = vpop.permute.xlu0 %682
        %v689 = vsel %vm625, %v315, 0
        %v692 = vsel %vm620, %v683, 0
        %694 = vmatprep.subr.bf16.mxu0 0
        %695 = vmatpush1.bf16.msra.mxu0 0
        %696 = vmatprep.subr.bf16.mxu0 0
        %697 = vmatpush1.bf16.msra.mxu0 0
        %698 = vmatprep.subr.bf16.mxu0 0
        %699 = vmatpush1.bf16.msra.mxu0 0
        %700 = vmatprep.subr.bf16.mxu0 0
        %701 = vmatpush1.bf16.msra.mxu0 %v692
        %702 = vmatprep.subr.bf16.mxu0 0
        %703 = vmatpush1.bf16.msra.mxu0 %v681
        %704 = vmatprep.subr.bf16.mxu0 0
        %705 = vmatpush1.bf16.msra.mxu0 %v679
        %706 = vmatprep.subr.bf16.mxu0 0
        %707 = vmatpush1.bf16.msra.mxu0 %v677
        %708 = vmatprep.subr.bf16.mxu0 0
        %709 = vmatpush1.bf16.msra.mxu0 %v675
        %710 = vmatprep.subr.bf16.mxu0 0
        %711 = vmatpush2.bf16.msra.mxu0 0
        %712 = vmatprep.subr.bf16.mxu0 0
        %713 = vmatpush2.bf16.msra.mxu0 0
        %714 = vmatprep.subr.bf16.mxu0 0
        %715 = vmatpush2.bf16.msra.mxu0 0
        %716 = vmatprep.subr.bf16.mxu0 0
        %717 = vmatpush2.bf16.msra.mxu0 0
        %718 = vmatprep.subr.bf16.mxu0 0
        %719 = vmatpush2.bf16.msra.mxu0 0
        %720 = vmatprep.subr.bf16.mxu0 0
        %721 = vmatpush2.bf16.msra.mxu0 0
        %722 = vmatprep.subr.bf16.mxu0 0
        %723 = vmatpush2.bf16.msra.mxu0 0
        %724 = vmatprep.subr.bf16.mxu0 0
        %725 = vmatpush2.bf16.msra.mxu0 0
        %726 = vmatprep.mubr.bf16.mxu0 0
        %727 = vmatmul.mubr.bf16.gmra.mxu0 %v689
        %v728 = vpop.f32.mrf.mxu0
        %v729 = vadd.f32 0.0, %v728
        %v730 = vpop.f32.mrf.mxu0
        %v731 = vpop.f32.mrf.mxu0
        %v732 = vpop.f32.mrf.mxu0
        %733 = vdwg.mxu0
        %v734 = vadd.f32 %v672, %v729
        %735 = vrot.lane.b32.xlu0 %v599, 126
        %v736 = vpop.permute.xlu0 %735
        %737 = vrot.lane.b32.xlu0 %v623, 126
        %v738 = vpop.permute.xlu0 %737
        %739 = vrot.lane.b32.xlu0 %v609, 126
        %v740 = vpop.permute.xlu0 %739
        %741 = vrot.lane.b32.xlu0 %v617, 126
        %v742 = vpop.permute.xlu0 %741
        %743 = vrot.lane.b32.xlu0 %v618, 126
        %v744 = vpop.permute.xlu0 %743
        %v750 = vsel %vm625, %v316, 0
        %v753 = vsel %vm620, %v744, 0
        %755 = vmatprep.subr.bf16.mxu0 0
        %756 = vmatpush1.bf16.msra.mxu0 0
        %757 = vmatprep.subr.bf16.mxu0 0
        %758 = vmatpush1.bf16.msra.mxu0 0
        %759 = vmatprep.subr.bf16.mxu0 0
        %760 = vmatpush1.bf16.msra.mxu0 0
        %761 = vmatprep.subr.bf16.mxu0 0
        %762 = vmatpush1.bf16.msra.mxu0 %v753
        %763 = vmatprep.subr.bf16.mxu0 0
        %764 = vmatpush1.bf16.msra.mxu0 %v742
        %765 = vmatprep.subr.bf16.mxu0 0
        %766 = vmatpush1.bf16.msra.mxu0 %v740
        %767 = vmatprep.subr.bf16.mxu0 0
        %768 = vmatpush1.bf16.msra.mxu0 %v738
        %769 = vmatprep.subr.bf16.mxu0 0
        %770 = vmatpush1.bf16.msra.mxu0 %v736
        %771 = vmatprep.subr.bf16.mxu0 0
        %772 = vmatpush2.bf16.msra.mxu0 0
        %773 = vmatprep.subr.bf16.mxu0 0
        %774 = vmatpush2.bf16.msra.mxu0 0
        %775 = vmatprep.subr.bf16.mxu0 0
        %776 = vmatpush2.bf16.msra.mxu0 0
        %777 = vmatprep.subr.bf16.mxu0 0
        %778 = vmatpush2.bf16.msra.mxu0 0
        %779 = vmatprep.subr.bf16.mxu0 0
        %780 = vmatpush2.bf16.msra.mxu0 0
        %781 = vmatprep.subr.bf16.mxu0 0
        %782 = vmatpush2.bf16.msra.mxu0 0
        %783 = vmatprep.subr.bf16.mxu0 0
        %784 = vmatpush2.bf16.msra.mxu0 0
        %785 = vmatprep.subr.bf16.mxu0 0
        %786 = vmatpush2.bf16.msra.mxu0 0
        %787 = vmatprep.mubr.bf16.mxu0 0
        %788 = vmatmul.mubr.bf16.gmra.mxu0 %v750
        %v789 = vpop.f32.mrf.mxu0
        %v790 = vadd.f32 0.0, %v789
        %v791 = vpop.f32.mrf.mxu0
        %v792 = vpop.f32.mrf.mxu0
        %v793 = vpop.f32.mrf.mxu0
        %794 = vdwg.mxu0
        %v795 = vadd.f32 %v734, %v790
        %v796 = vmax.f32 %v795, 0.0
        %v797 = vpack.c.bf16 %v796, %v796
        %v799 = vunpack.c.l.b16 %v797
        %v800 = vpack.c.b16 %v799, %v799
        %801 = vrot.lane.b32.xlu0 %v800, 1
        %v802 = vpop.permute.xlu0 %801
        %s804 = scalar_lea.vmem [#allocation2], 4
        %vm805 = vcmask 265224
        %806 = vst.msk [vmem:[%s804] sm:$0xf] %vm805, %v802
        %v807 = vld [vmem:[%s302] sm:$0xf]
        %v808 = vld [vmem:[%s302 + $0x4] sm:$0xf]
        %v809 = vld [vmem:[%s302 + $0x8] sm:$0xf]
        %v810 = vld [vmem:[%s302 + $0xc] sm:$0xf]
        %v811 = vld [vmem:[%s302 + $0x10] sm:$0xf]
        %v812 = vld [vmem:[%s302 + $0x14] sm:$0xf]
        %v813 = vld [vmem:[%s302 + $0x18] sm:$0xf]
        %v814 = vld [vmem:[%s302 + $0x1c] sm:$0xf]
        %v815 = vld [vmem:[%s302 + $0x20] sm:$0xf]
        %v825 = vunpack.c.l.b16 %v807
        %v826 = vunpack.c.l.b16 %v808
        %v827 = vunpack.c.l.b16 %v809
        %v828 = vunpack.c.l.b16 %v810
        %v829 = vunpack.c.l.b16 %v811
        %v830 = vunpack.c.l.b16 %v812
        %v831 = vunpack.c.l.b16 %v813
        %v832 = vunpack.c.l.b16 %v814
        %v833 = vunpack.c.l.b16 %v815
        %v834 = vpack.c.b16 %v826, %v825
        %v835 = vpack.c.b16 %v828, %v827
        %v836 = vpack.c.b16 %v830, %v829
        %v837 = vpack.c.b16 %v832, %v831
        %v838 = vpack.c.b16 %v833, %v833
        %v844 = vsel %vm620, %v838, 0
        %846 = vmatprep.subr.bf16.mxu0 0
        %847 = vmatpush1.bf16.msra.mxu0 0
        %848 = vmatprep.subr.bf16.mxu0 0
        %849 = vmatpush1.bf16.msra.mxu0 0
        %850 = vmatprep.subr.bf16.mxu0 0
        %851 = vmatpush1.bf16.msra.mxu0 0
        %852 = vmatprep.subr.bf16.mxu0 0
        %853 = vmatpush1.bf16.msra.mxu0 %v844
        %854 = vmatprep.subr.bf16.mxu0 0
        %855 = vmatpush1.bf16.msra.mxu0 %v837
        %856 = vmatprep.subr.bf16.mxu0 0
        %857 = vmatpush1.bf16.msra.mxu0 %v836
        %858 = vmatprep.subr.bf16.mxu0 0
        %859 = vmatpush1.bf16.msra.mxu0 %v835
        %860 = vmatprep.subr.bf16.mxu0 0
        %861 = vmatpush1.bf16.msra.mxu0 %v834
        %862 = vmatprep.subr.bf16.mxu0 0
        %863 = vmatpush2.bf16.msra.mxu0 0
        %864 = vmatprep.subr.bf16.mxu0 0
        %865 = vmatpush2.bf16.msra.mxu0 0
        %866 = vmatprep.subr.bf16.mxu0 0
        %867 = vmatpush2.bf16.msra.mxu0 0
        %868 = vmatprep.subr.bf16.mxu0 0
        %869 = vmatpush2.bf16.msra.mxu0 0
        %870 = vmatprep.subr.bf16.mxu0 0
        %871 = vmatpush2.bf16.msra.mxu0 0
        %872 = vmatprep.subr.bf16.mxu0 0
        %873 = vmatpush2.bf16.msra.mxu0 0
        %874 = vmatprep.subr.bf16.mxu0 0
        %875 = vmatpush2.bf16.msra.mxu0 0
        %876 = vmatprep.subr.bf16.mxu0 0
        %877 = vmatpush2.bf16.msra.mxu0 0
        %878 = vmatprep.mubr.bf16.mxu0 0
        %879 = vmatmul.mubr.bf16.gmra.mxu0 %v627
        %v880 = vpop.f32.mrf.mxu0
        %v881 = vadd.f32 0.0, %v880
        %v882 = vpop.f32.mrf.mxu0
        %v883 = vpop.f32.mrf.mxu0
        %v884 = vpop.f32.mrf.mxu0
        %885 = vdwg.mxu0
        %v886 = vadd.f32 %v324, %v881
        %887 = vrot.lane.b32.xlu0 %v834, 127
        %v888 = vpop.permute.xlu0 %887
        %889 = vrot.lane.b32.xlu0 %v835, 127
        %v890 = vpop.permute.xlu0 %889
        %891 = vrot.lane.b32.xlu0 %v836, 127
        %v892 = vpop.permute.xlu0 %891
        %893 = vrot.lane.b32.xlu0 %v837, 127
        %v894 = vpop.permute.xlu0 %893
        %895 = vrot.lane.b32.xlu0 %v838, 127
        %v896 = vpop.permute.xlu0 %895
        %v902 = vsel %vm620, %v896, 0
        %904 = vmatprep.subr.bf16.mxu0 0
        %905 = vmatpush1.bf16.msra.mxu0 0
        %906 = vmatprep.subr.bf16.mxu0 0
        %907 = vmatpush1.bf16.msra.mxu0 0
        %908 = vmatprep.subr.bf16.mxu0 0
        %909 = vmatpush1.bf16.msra.mxu0 0
        %910 = vmatprep.subr.bf16.mxu0 0
        %911 = vmatpush1.bf16.msra.mxu0 %v902
        %912 = vmatprep.subr.bf16.mxu0 0
        %913 = vmatpush1.bf16.msra.mxu0 %v894
        %914 = vmatprep.subr.bf16.mxu0 0
        %915 = vmatpush1.bf16.msra.mxu0 %v892
        %916 = vmatprep.subr.bf16.mxu0 0
        %917 = vmatpush1.bf16.msra.mxu0 %v890
        %918 = vmatprep.subr.bf16.mxu0 0
        %919 = vmatpush1.bf16.msra.mxu0 %v888
        %920 = vmatprep.subr.bf16.mxu0 0
        %921 = vmatpush2.bf16.msra.mxu0 0
        %922 = vmatprep.subr.bf16.mxu0 0
        %923 = vmatpush2.bf16.msra.mxu0 0
        %924 = vmatprep.subr.bf16.mxu0 0
        %925 = vmatpush2.bf16.msra.mxu0 0
        %926 = vmatprep.subr.bf16.mxu0 0
        %927 = vmatpush2.bf16.msra.mxu0 0
        %928 = vmatprep.subr.bf16.mxu0 0
        %929 = vmatpush2.bf16.msra.mxu0 0
        %930 = vmatprep.subr.bf16.mxu0 0
        %931 = vmatpush2.bf16.msra.mxu0 0
        %932 = vmatprep.subr.bf16.mxu0 0
        %933 = vmatpush2.bf16.msra.mxu0 0
        %934 = vmatprep.subr.bf16.mxu0 0
        %935 = vmatpush2.bf16.msra.mxu0 0
        %936 = vmatprep.mubr.bf16.mxu0 0
        %937 = vmatmul.mubr.bf16.gmra.mxu0 %v689
        %v938 = vpop.f32.mrf.mxu0
        %v939 = vadd.f32 0.0, %v938
        %v940 = vpop.f32.mrf.mxu0
        %v941 = vpop.f32.mrf.mxu0
        %v942 = vpop.f32.mrf.mxu0
        %943 = vdwg.mxu0
        %v944 = vadd.f32 %v886, %v939
        %945 = vrot.lane.b32.xlu0 %v834, 126
        %v946 = vpop.permute.xlu0 %945
        %947 = vrot.lane.b32.xlu0 %v835, 126
        %v948 = vpop.permute.xlu0 %947
        %949 = vrot.lane.b32.xlu0 %v836, 126
        %v950 = vpop.permute.xlu0 %949
        %951 = vrot.lane.b32.xlu0 %v837, 126
        %v952 = vpop.permute.xlu0 %951
        %953 = vrot.lane.b32.xlu0 %v838, 126
        %v954 = vpop.permute.xlu0 %953
        %v960 = vsel %vm620, %v954, 0
        %962 = vmatprep.subr.bf16.mxu0 0
        %963 = vmatpush1.bf16.msra.mxu0 0
        %964 = vmatprep.subr.bf16.mxu0 0
        %965 = vmatpush1.bf16.msra.mxu0 0
        %966 = vmatprep.subr.bf16.mxu0 0
        %967 = vmatpush1.bf16.msra.mxu0 0
        %968 = vmatprep.subr.bf16.mxu0 0
        %969 = vmatpush1.bf16.msra.mxu0 %v960
        %970 = vmatprep.subr.bf16.mxu0 0
        %971 = vmatpush1.bf16.msra.mxu0 %v952
        %972 = vmatprep.subr.bf16.mxu0 0
        %973 = vmatpush1.bf16.msra.mxu0 %v950
        %974 = vmatprep.subr.bf16.mxu0 0
        %975 = vmatpush1.bf16.msra.mxu0 %v948
        %976 = vmatprep.subr.bf16.mxu0 0
        %977 = vmatpush1.bf16.msra.mxu0 %v946
        %978 = vmatprep.subr.bf16.mxu0 0
        %979 = vmatpush2.bf16.msra.mxu0 0
        %980 = vmatprep.subr.bf16.mxu0 0
        %981 = vmatpush2.bf16.msra.mxu0 0
        %982 = vmatprep.subr.bf16.mxu0 0
        %983 = vmatpush2.bf16.msra.mxu0 0
        %984 = vmatprep.subr.bf16.mxu0 0
        %985 = vmatpush2.bf16.msra.mxu0 0
        %986 = vmatprep.subr.bf16.mxu0 0
        %987 = vmatpush2.bf16.msra.mxu0 0
        %988 = vmatprep.subr.bf16.mxu0 0
        %989 = vmatpush2.bf16.msra.mxu0 0
        %990 = vmatprep.subr.bf16.mxu0 0
        %991 = vmatpush2.bf16.msra.mxu0 0
        %992 = vmatprep.subr.bf16.mxu0 0
        %993 = vmatpush2.bf16.msra.mxu0 0
        %994 = vmatprep.mubr.bf16.mxu0 0
        %995 = vmatmul.mubr.bf16.gmra.mxu0 %v750
        %v996 = vpop.f32.mrf.mxu0
        %v997 = vadd.f32 0.0, %v996
        %v998 = vpop.f32.mrf.mxu0
        %v999 = vpop.f32.mrf.mxu0
        %v1000 = vpop.f32.mrf.mxu0
        %1001 = vdwg.mxu0
        %v1002 = vadd.f32 %v944, %v997
        %v1003 = vmax.f32 %v1002, 0.0
        %v1004 = vpack.c.bf16 %v1003, %v1003
        %v1006 = vunpack.c.l.b16 %v1004
        %v1007 = vpack.c.b16 %v1006, %v1006
        %1008 = vrot.lane.b32.xlu0 %v1007, 1
        %v1009 = vpop.permute.xlu0 %1008
        %s1011 = scalar_lea.vmem [#allocation2], 8
        %1012 = vst.msk [vmem:[%s1011] sm:$0xf] %vm805, %v1009
        %v1013 = vld [vmem:[%s589] sm:$0xf]
        %v1014 = vld [vmem:[%s589 + $0x4] sm:$0xf]
        %v1015 = vld [vmem:[%s589 + $0x8] sm:$0xf]
        %v1016 = vld [vmem:[%s589 + $0xc] sm:$0xf]
        %v1017 = vld [vmem:[%s589 + $0x10] sm:$0xf]
        %v1018 = vld [vmem:[%s589 + $0x14] sm:$0xf]
        %v1019 = vld [vmem:[%s589 + $0x18] sm:$0xf]
        %v1020 = vld [vmem:[%s589 + $0x1c] sm:$0xf]
        %v1021 = vld [vmem:[%s589 + $0x20] sm:$0xf]
        %v1031 = vunpack.c.l.b16 %v1013
        %v1032 = vunpack.c.l.b16 %v1014
        %v1033 = vunpack.c.l.b16 %v1015
        %v1034 = vunpack.c.l.b16 %v1016
        %v1035 = vunpack.c.l.b16 %v1017
        %v1036 = vunpack.c.l.b16 %v1018
        %v1037 = vunpack.c.l.b16 %v1019
        %v1038 = vunpack.c.l.b16 %v1020
        %v1039 = vunpack.c.l.b16 %v1021
        %v1040 = vpack.c.b16 %v1032, %v1031
        %v1041 = vpack.c.b16 %v1034, %v1033
        %v1042 = vpack.c.b16 %v1036, %v1035
        %v1043 = vpack.c.b16 %v1038, %v1037
        %v1044 = vpack.c.b16 %v1039, %v1039
        %v1050 = vsel %vm620, %v1044, 0
        %1052 = vmatprep.subr.bf16.mxu0 0
        %1053 = vmatpush1.bf16.msra.mxu0 0
        %1054 = vmatprep.subr.bf16.mxu0 0
        %1055 = vmatpush1.bf16.msra.mxu0 0
        %1056 = vmatprep.subr.bf16.mxu0 0
        %1057 = vmatpush1.bf16.msra.mxu0 0
        %1058 = vmatprep.subr.bf16.mxu0 0
        %1059 = vmatpush1.bf16.msra.mxu0 %v1050
        %1060 = vmatprep.subr.bf16.mxu0 0
        %1061 = vmatpush1.bf16.msra.mxu0 %v1043
        %1062 = vmatprep.subr.bf16.mxu0 0
        %1063 = vmatpush1.bf16.msra.mxu0 %v1042
        %1064 = vmatprep.subr.bf16.mxu0 0
        %1065 = vmatpush1.bf16.msra.mxu0 %v1041
        %1066 = vmatprep.subr.bf16.mxu0 0
        %1067 = vmatpush1.bf16.msra.mxu0 %v1040
        %1068 = vmatprep.subr.bf16.mxu0 0
        %1069 = vmatpush2.bf16.msra.mxu0 0
        %1070 = vmatprep.subr.bf16.mxu0 0
        %1071 = vmatpush2.bf16.msra.mxu0 0
        %1072 = vmatprep.subr.bf16.mxu0 0
        %1073 = vmatpush2.bf16.msra.mxu0 0
        %1074 = vmatprep.subr.bf16.mxu0 0
        %1075 = vmatpush2.bf16.msra.mxu0 0
        %1076 = vmatprep.subr.bf16.mxu0 0
        %1077 = vmatpush2.bf16.msra.mxu0 0
        %1078 = vmatprep.subr.bf16.mxu0 0
        %1079 = vmatpush2.bf16.msra.mxu0 0
        %1080 = vmatprep.subr.bf16.mxu0 0
        %1081 = vmatpush2.bf16.msra.mxu0 0
        %1082 = vmatprep.subr.bf16.mxu0 0
        %1083 = vmatpush2.bf16.msra.mxu0 0
        %1084 = vmatprep.mubr.bf16.mxu0 0
        %1085 = vmatmul.mubr.bf16.gmra.mxu0 %v627
        %v1086 = vpop.f32.mrf.mxu0
        %v1087 = vadd.f32 0.0, %v1086
        %v1088 = vpop.f32.mrf.mxu0
        %v1089 = vpop.f32.mrf.mxu0
        %v1090 = vpop.f32.mrf.mxu0
        %1091 = vdwg.mxu0
        %v1092 = vadd.f32 %v324, %v1087
        %1093 = vrot.lane.b32.xlu0 %v1040, 127
        %v1094 = vpop.permute.xlu0 %1093
        %1095 = vrot.lane.b32.xlu0 %v1041, 127
        %v1096 = vpop.permute.xlu0 %1095
        %1097 = vrot.lane.b32.xlu0 %v1042, 127
        %v1098 = vpop.permute.xlu0 %1097
        %1099 = vrot.lane.b32.xlu0 %v1043, 127
        %v1100 = vpop.permute.xlu0 %1099
        %1101 = vrot.lane.b32.xlu0 %v1044, 127
        %v1102 = vpop.permute.xlu0 %1101
        %v1108 = vsel %vm620, %v1102, 0
        %1110 = vmatprep.subr.bf16.mxu0 0
        %1111 = vmatpush1.bf16.msra.mxu0 0
        %1112 = vmatprep.subr.bf16.mxu0 0
        %1113 = vmatpush1.bf16.msra.mxu0 0
        %1114 = vmatprep.subr.bf16.mxu0 0
        %1115 = vmatpush1.bf16.msra.mxu0 0
        %1116 = vmatprep.subr.bf16.mxu0 0
        %1117 = vmatpush1.bf16.msra.mxu0 %v1108
        %1118 = vmatprep.subr.bf16.mxu0 0
        %1119 = vmatpush1.bf16.msra.mxu0 %v1100
        %1120 = vmatprep.subr.bf16.mxu0 0
        %1121 = vmatpush1.bf16.msra.mxu0 %v1098
        %1122 = vmatprep.subr.bf16.mxu0 0
        %1123 = vmatpush1.bf16.msra.mxu0 %v1096
        %1124 = vmatprep.subr.bf16.mxu0 0
        %1125 = vmatpush1.bf16.msra.mxu0 %v1094
        %1126 = vmatprep.subr.bf16.mxu0 0
        %1127 = vmatpush2.bf16.msra.mxu0 0
        %1128 = vmatprep.subr.bf16.mxu0 0
        %1129 = vmatpush2.bf16.msra.mxu0 0
        %1130 = vmatprep.subr.bf16.mxu0 0
        %1131 = vmatpush2.bf16.msra.mxu0 0
        %1132 = vmatprep.subr.bf16.mxu0 0
        %1133 = vmatpush2.bf16.msra.mxu0 0
        %1134 = vmatprep.subr.bf16.mxu0 0
        %1135 = vmatpush2.bf16.msra.mxu0 0
        %1136 = vmatprep.subr.bf16.mxu0 0
        %1137 = vmatpush2.bf16.msra.mxu0 0
        %1138 = vmatprep.subr.bf16.mxu0 0
        %1139 = vmatpush2.bf16.msra.mxu0 0
        %1140 = vmatprep.subr.bf16.mxu0 0
        %1141 = vmatpush2.bf16.msra.mxu0 0
        %1142 = vmatprep.mubr.bf16.mxu0 0
        %1143 = vmatmul.mubr.bf16.gmra.mxu0 %v689
        %v1144 = vpop.f32.mrf.mxu0
        %v1145 = vadd.f32 0.0, %v1144
        %v1146 = vpop.f32.mrf.mxu0
        %v1147 = vpop.f32.mrf.mxu0
        %v1148 = vpop.f32.mrf.mxu0
        %1149 = vdwg.mxu0
        %v1150 = vadd.f32 %v1092, %v1145
        %1151 = vrot.lane.b32.xlu0 %v1040, 126
        %v1152 = vpop.permute.xlu0 %1151
        %1153 = vrot.lane.b32.xlu0 %v1041, 126
        %v1154 = vpop.permute.xlu0 %1153
        %1155 = vrot.lane.b32.xlu0 %v1042, 126
        %v1156 = vpop.permute.xlu0 %1155
        %1157 = vrot.lane.b32.xlu0 %v1043, 126
        %v1158 = vpop.permute.xlu0 %1157
        %1159 = vrot.lane.b32.xlu0 %v1044, 126
        %v1160 = vpop.permute.xlu0 %1159
        %v1166 = vsel %vm620, %v1160, 0
        %1168 = vmatprep.subr.bf16.mxu0 0
        %1169 = vmatpush1.bf16.msra.mxu0 0
        %1170 = vmatprep.subr.bf16.mxu0 0
        %1171 = vmatpush1.bf16.msra.mxu0 0
        %1172 = vmatprep.subr.bf16.mxu0 0
        %1173 = vmatpush1.bf16.msra.mxu0 0
        %1174 = vmatprep.subr.bf16.mxu0 0
        %1175 = vmatpush1.bf16.msra.mxu0 %v1166
        %1176 = vmatprep.subr.bf16.mxu0 0
        %1177 = vmatpush1.bf16.msra.mxu0 %v1158
        %1178 = vmatprep.subr.bf16.mxu0 0
        %1179 = vmatpush1.bf16.msra.mxu0 %v1156
        %1180 = vmatprep.subr.bf16.mxu0 0
        %1181 = vmatpush1.bf16.msra.mxu0 %v1154
        %1182 = vmatprep.subr.bf16.mxu0 0
        %1183 = vmatpush1.bf16.msra.mxu0 %v1152
        %1184 = vmatprep.subr.bf16.mxu0 0
        %1185 = vmatpush2.bf16.msra.mxu0 0
        %1186 = vmatprep.subr.bf16.mxu0 0
        %1187 = vmatpush2.bf16.msra.mxu0 0
        %1188 = vmatprep.subr.bf16.mxu0 0
        %1189 = vmatpush2.bf16.msra.mxu0 0
        %1190 = vmatprep.subr.bf16.mxu0 0
        %1191 = vmatpush2.bf16.msra.mxu0 0
        %1192 = vmatprep.subr.bf16.mxu0 0
        %1193 = vmatpush2.bf16.msra.mxu0 0
        %1194 = vmatprep.subr.bf16.mxu0 0
        %1195 = vmatpush2.bf16.msra.mxu0 0
        %1196 = vmatprep.subr.bf16.mxu0 0
        %1197 = vmatpush2.bf16.msra.mxu0 0
        %1198 = vmatprep.subr.bf16.mxu0 0
        %1199 = vmatpush2.bf16.msra.mxu0 0
        %1200 = vmatprep.mubr.bf16.mxu0 0
        %1201 = vmatmul.mubr.bf16.gmra.mxu0 %v750
        %v1202 = vpop.f32.mrf.mxu0
        %v1203 = vadd.f32 0.0, %v1202
        %v1204 = vpop.f32.mrf.mxu0
        %v1205 = vpop.f32.mrf.mxu0
        %v1206 = vpop.f32.mrf.mxu0
        %1207 = vdwg.mxu0
        %v1208 = vadd.f32 %v1150, %v1203
        %v1209 = vmax.f32 %v1208, 0.0
        %v1210 = vpack.c.bf16 %v1209, %v1209
        %v1212 = vunpack.c.l.b16 %v1210
        %v1213 = vpack.c.b16 %v1212, %v1212
        %1214 = vrot.lane.b32.xlu0 %v1213, 1
        %v1215 = vpop.permute.xlu0 %1214
        %s1217 = scalar_lea.vmem [#allocation2], 12
        %1218 = vst.msk [vmem:[%s1217] sm:$0xf] %vm805, %v1215
        %s1219 = scalar_lea.vmem %s302, 24
        %v1220 = vld [vmem:[%s1219] sm:$0xf]
        %v1221 = vld [vmem:[%s1219 + $0x4] sm:$0xf]
        %v1222 = vld [vmem:[%s1219 + $0x8] sm:$0xf]
        %v1223 = vld [vmem:[%s1219 + $0xc] sm:$0xf]
        %v1224 = vld [vmem:[%s1219 + $0x10] sm:$0xf]
        %v1225 = vld [vmem:[%s1219 + $0x14] sm:$0xf]
        %v1226 = vld [vmem:[%s1219 + $0x18] sm:$0xf]
        %v1227 = vld [vmem:[%s1219 + $0x1c] sm:$0xf]
        %v1228 = vld [vmem:[%s1219 + $0x20] sm:$0xf]
        %v1238 = vunpack.c.l.b16 %v1220
        %v1239 = vunpack.c.l.b16 %v1221
        %v1240 = vunpack.c.l.b16 %v1222
        %v1241 = vunpack.c.l.b16 %v1223
        %v1242 = vunpack.c.l.b16 %v1224
        %v1243 = vunpack.c.l.b16 %v1225
        %v1244 = vunpack.c.l.b16 %v1226
        %v1245 = vunpack.c.l.b16 %v1227
        %v1246 = vunpack.c.l.b16 %v1228
        %v1247 = vpack.c.b16 %v1239, %v1238
        %v1248 = vpack.c.b16 %v1241, %v1240
        %v1249 = vpack.c.b16 %v1243, %v1242
        %v1250 = vpack.c.b16 %v1245, %v1244
        %v1251 = vpack.c.b16 %v1246, %v1246
        %v1257 = vsel %vm620, %v1251, 0
        %1259 = vmatprep.subr.bf16.mxu0 0
        %1260 = vmatpush1.bf16.msra.mxu0 0
        %1261 = vmatprep.subr.bf16.mxu0 0
        %1262 = vmatpush1.bf16.msra.mxu0 0
        %1263 = vmatprep.subr.bf16.mxu0 0
        %1264 = vmatpush1.bf16.msra.mxu0 0
        %1265 = vmatprep.subr.bf16.mxu0 0
        %1266 = vmatpush1.bf16.msra.mxu0 %v1257
        %1267 = vmatprep.subr.bf16.mxu0 0
        %1268 = vmatpush1.bf16.msra.mxu0 %v1250
        %1269 = vmatprep.subr.bf16.mxu0 0
        %1270 = vmatpush1.bf16.msra.mxu0 %v1249
        %1271 = vmatprep.subr.bf16.mxu0 0
        %1272 = vmatpush1.bf16.msra.mxu0 %v1248
        %1273 = vmatprep.subr.bf16.mxu0 0
        %1274 = vmatpush1.bf16.msra.mxu0 %v1247
        %1275 = vmatprep.subr.bf16.mxu0 0
        %1276 = vmatpush2.bf16.msra.mxu0 0
        %1277 = vmatprep.subr.bf16.mxu0 0
        %1278 = vmatpush2.bf16.msra.mxu0 0
        %1279 = vmatprep.subr.bf16.mxu0 0
        %1280 = vmatpush2.bf16.msra.mxu0 0
        %1281 = vmatprep.subr.bf16.mxu0 0
        %1282 = vmatpush2.bf16.msra.mxu0 0
        %1283 = vmatprep.subr.bf16.mxu0 0
        %1284 = vmatpush2.bf16.msra.mxu0 0
        %1285 = vmatprep.subr.bf16.mxu0 0
        %1286 = vmatpush2.bf16.msra.mxu0 0
        %1287 = vmatprep.subr.bf16.mxu0 0
        %1288 = vmatpush2.bf16.msra.mxu0 0
        %1289 = vmatprep.subr.bf16.mxu0 0
        %1290 = vmatpush2.bf16.msra.mxu0 0
        %1291 = vmatprep.mubr.bf16.mxu0 0
        %1292 = vmatmul.mubr.bf16.gmra.mxu0 %v627
        %v1293 = vpop.f32.mrf.mxu0
        %v1294 = vadd.f32 0.0, %v1293
        %v1295 = vpop.f32.mrf.mxu0
        %v1296 = vpop.f32.mrf.mxu0
        %v1297 = vpop.f32.mrf.mxu0
        %1298 = vdwg.mxu0
        %v1299 = vadd.f32 %v324, %v1294
        %1300 = vrot.lane.b32.xlu0 %v1247, 127
        %v1301 = vpop.permute.xlu0 %1300
        %1302 = vrot.lane.b32.xlu0 %v1248, 127
        %v1303 = vpop.permute.xlu0 %1302
        %1304 = vrot.lane.b32.xlu0 %v1249, 127
        %v1305 = vpop.permute.xlu0 %1304
        %1306 = vrot.lane.b32.xlu0 %v1250, 127
        %v1307 = vpop.permute.xlu0 %1306
        %1308 = vrot.lane.b32.xlu0 %v1251, 127
        %v1309 = vpop.permute.xlu0 %1308
        %v1315 = vsel %vm620, %v1309, 0
        %1317 = vmatprep.subr.bf16.mxu0 0
        %1318 = vmatpush1.bf16.msra.mxu0 0
        %1319 = vmatprep.subr.bf16.mxu0 0
        %1320 = vmatpush1.bf16.msra.mxu0 0
        %1321 = vmatprep.subr.bf16.mxu0 0
        %1322 = vmatpush1.bf16.msra.mxu0 0
        %1323 = vmatprep.subr.bf16.mxu0 0
        %1324 = vmatpush1.bf16.msra.mxu0 %v1315
        %1325 = vmatprep.subr.bf16.mxu0 0
        %1326 = vmatpush1.bf16.msra.mxu0 %v1307
        %1327 = vmatprep.subr.bf16.mxu0 0
        %1328 = vmatpush1.bf16.msra.mxu0 %v1305
        %1329 = vmatprep.subr.bf16.mxu0 0
        %1330 = vmatpush1.bf16.msra.mxu0 %v1303
        %1331 = vmatprep.subr.bf16.mxu0 0
        %1332 = vmatpush1.bf16.msra.mxu0 %v1301
        %1333 = vmatprep.subr.bf16.mxu0 0
        %1334 = vmatpush2.bf16.msra.mxu0 0
        %1335 = vmatprep.subr.bf16.mxu0 0
        %1336 = vmatpush2.bf16.msra.mxu0 0
        %1337 = vmatprep.subr.bf16.mxu0 0
        %1338 = vmatpush2.bf16.msra.mxu0 0
        %1339 = vmatprep.subr.bf16.mxu0 0
        %1340 = vmatpush2.bf16.msra.mxu0 0
        %1341 = vmatprep.subr.bf16.mxu0 0
        %1342 = vmatpush2.bf16.msra.mxu0 0
        %1343 = vmatprep.subr.bf16.mxu0 0
        %1344 = vmatpush2.bf16.msra.mxu0 0
        %1345 = vmatprep.subr.bf16.mxu0 0
        %1346 = vmatpush2.bf16.msra.mxu0 0
        %1347 = vmatprep.subr.bf16.mxu0 0
        %1348 = vmatpush2.bf16.msra.mxu0 0
        %1349 = vmatprep.mubr.bf16.mxu0 0
        %1350 = vmatmul.mubr.bf16.gmra.mxu0 %v689
        %v1351 = vpop.f32.mrf.mxu0
        %v1352 = vadd.f32 0.0, %v1351
        %v1353 = vpop.f32.mrf.mxu0
        %v1354 = vpop.f32.mrf.mxu0
        %v1355 = vpop.f32.mrf.mxu0
        %1356 = vdwg.mxu0
        %v1357 = vadd.f32 %v1299, %v1352
        %1358 = vrot.lane.b32.xlu0 %v1247, 126
        %v1359 = vpop.permute.xlu0 %1358
        %1360 = vrot.lane.b32.xlu0 %v1248, 126
        %v1361 = vpop.permute.xlu0 %1360
        %1362 = vrot.lane.b32.xlu0 %v1249, 126
        %v1363 = vpop.permute.xlu0 %1362
        %1364 = vrot.lane.b32.xlu0 %v1250, 126
        %v1365 = vpop.permute.xlu0 %1364
        %1366 = vrot.lane.b32.xlu0 %v1251, 126
        %v1367 = vpop.permute.xlu0 %1366
        %v1373 = vsel %vm620, %v1367, 0
        %1375 = vmatprep.subr.bf16.mxu0 0
        %1376 = vmatpush1.bf16.msra.mxu0 0
        %1377 = vmatprep.subr.bf16.mxu0 0
        %1378 = vmatpush1.bf16.msra.mxu0 0
        %1379 = vmatprep.subr.bf16.mxu0 0
        %1380 = vmatpush1.bf16.msra.mxu0 0
        %1381 = vmatprep.subr.bf16.mxu0 0
        %1382 = vmatpush1.bf16.msra.mxu0 %v1373
        %1383 = vmatprep.subr.bf16.mxu0 0
        %1384 = vmatpush1.bf16.msra.mxu0 %v1365
        %1385 = vmatprep.subr.bf16.mxu0 0
        %1386 = vmatpush1.bf16.msra.mxu0 %v1363
        %1387 = vmatprep.subr.bf16.mxu0 0
        %1388 = vmatpush1.bf16.msra.mxu0 %v1361
        %1389 = vmatprep.subr.bf16.mxu0 0
        %1390 = vmatpush1.bf16.msra.mxu0 %v1359
        %1391 = vmatprep.subr.bf16.mxu0 0
        %1392 = vmatpush2.bf16.msra.mxu0 0
        %1393 = vmatprep.subr.bf16.mxu0 0
        %1394 = vmatpush2.bf16.msra.mxu0 0
        %1395 = vmatprep.subr.bf16.mxu0 0
        %1396 = vmatpush2.bf16.msra.mxu0 0
        %1397 = vmatprep.subr.bf16.mxu0 0
        %1398 = vmatpush2.bf16.msra.mxu0 0
        %1399 = vmatprep.subr.bf16.mxu0 0
        %1400 = vmatpush2.bf16.msra.mxu0 0
        %1401 = vmatprep.subr.bf16.mxu0 0
        %1402 = vmatpush2.bf16.msra.mxu0 0
        %1403 = vmatprep.subr.bf16.mxu0 0
        %1404 = vmatpush2.bf16.msra.mxu0 0
        %1405 = vmatprep.subr.bf16.mxu0 0
        %1406 = vmatpush2.bf16.msra.mxu0 0
        %1407 = vmatprep.mubr.bf16.mxu0 0
        %1408 = vmatmul.mubr.bf16.gmra.mxu0 %v750
        %v1409 = vpop.f32.mrf.mxu0
        %v1410 = vadd.f32 0.0, %v1409
        %v1411 = vpop.f32.mrf.mxu0
        %v1412 = vpop.f32.mrf.mxu0
        %v1413 = vpop.f32.mrf.mxu0
        %1414 = vdwg.mxu0
        %v1415 = vadd.f32 %v1357, %v1410
        %v1416 = vmax.f32 %v1415, 0.0
        %v1417 = vpack.c.bf16 %v1416, %v1416
        %v1419 = vunpack.c.l.b16 %v1417
        %v1420 = vpack.c.b16 %v1419, %v1419
        %1421 = vrot.lane.b32.xlu0 %v1420, 1
        %v1422 = vpop.permute.xlu0 %1421
        %s1424 = scalar_lea.vmem [#allocation2], 16
        %1425 = vst.msk [vmem:[%s1424] sm:$0xf] %vm805, %v1422
        %s1426 = scalar_lea.vmem %s302, 36
        %v1427 = vld [vmem:[%s1426] sm:$0xf]
        %v1428 = vld [vmem:[%s1426 + $0x4] sm:$0xf]
        %v1429 = vld [vmem:[%s1426 + $0x8] sm:$0xf]
        %v1430 = vld [vmem:[%s1426 + $0xc] sm:$0xf]
        %v1431 = vld [vmem:[%s1426 + $0x10] sm:$0xf]
        %v1432 = vld [vmem:[%s1426 + $0x14] sm:$0xf]
        %v1433 = vld [vmem:[%s1426 + $0x18] sm:$0xf]
        %v1434 = vld [vmem:[%s1426 + $0x1c] sm:$0xf]
        %v1435 = vld [vmem:[%s1426 + $0x20] sm:$0xf]
        %v1445 = vunpack.c.l.b16 %v1427
        %v1446 = vunpack.c.l.b16 %v1428
        %v1447 = vunpack.c.l.b16 %v1429
        %v1448 = vunpack.c.l.b16 %v1430
        %v1449 = vunpack.c.l.b16 %v1431
        %v1450 = vunpack.c.l.b16 %v1432
        %v1451 = vunpack.c.l.b16 %v1433
        %v1452 = vunpack.c.l.b16 %v1434
        %v1453 = vunpack.c.l.b16 %v1435
        %v1454 = vpack.c.b16 %v1446, %v1445
        %v1455 = vpack.c.b16 %v1448, %v1447
        %v1456 = vpack.c.b16 %v1450, %v1449
        %v1457 = vpack.c.b16 %v1452, %v1451
        %v1458 = vpack.c.b16 %v1453, %v1453
        %v1464 = vsel %vm620, %v1458, 0
        %1466 = vmatprep.subr.bf16.mxu0 0
        %1467 = vmatpush1.bf16.msra.mxu0 0
        %1468 = vmatprep.subr.bf16.mxu0 0
        %1469 = vmatpush1.bf16.msra.mxu0 0
        %1470 = vmatprep.subr.bf16.mxu0 0
        %1471 = vmatpush1.bf16.msra.mxu0 0
        %1472 = vmatprep.subr.bf16.mxu0 0
        %1473 = vmatpush1.bf16.msra.mxu0 %v1464
        %1474 = vmatprep.subr.bf16.mxu0 0
        %1475 = vmatpush1.bf16.msra.mxu0 %v1457
        %1476 = vmatprep.subr.bf16.mxu0 0
        %1477 = vmatpush1.bf16.msra.mxu0 %v1456
        %1478 = vmatprep.subr.bf16.mxu0 0
        %1479 = vmatpush1.bf16.msra.mxu0 %v1455
        %1480 = vmatprep.subr.bf16.mxu0 0
        %1481 = vmatpush1.bf16.msra.mxu0 %v1454
        %1482 = vmatprep.subr.bf16.mxu0 0
        %1483 = vmatpush2.bf16.msra.mxu0 0
        %1484 = vmatprep.subr.bf16.mxu0 0
        %1485 = vmatpush2.bf16.msra.mxu0 0
        %1486 = vmatprep.subr.bf16.mxu0 0
        %1487 = vmatpush2.bf16.msra.mxu0 0
        %1488 = vmatprep.subr.bf16.mxu0 0
        %1489 = vmatpush2.bf16.msra.mxu0 0
        %1490 = vmatprep.subr.bf16.mxu0 0
        %1491 = vmatpush2.bf16.msra.mxu0 0
        %1492 = vmatprep.subr.bf16.mxu0 0
        %1493 = vmatpush2.bf16.msra.mxu0 0
        %1494 = vmatprep.subr.bf16.mxu0 0
        %1495 = vmatpush2.bf16.msra.mxu0 0
        %1496 = vmatprep.subr.bf16.mxu0 0
        %1497 = vmatpush2.bf16.msra.mxu0 0
        %1498 = vmatprep.mubr.bf16.mxu0 0
        %1499 = vmatmul.mubr.bf16.gmra.mxu0 %v627
        %v1500 = vpop.f32.mrf.mxu0
        %v1501 = vadd.f32 0.0, %v1500
        %v1502 = vpop.f32.mrf.mxu0
        %v1503 = vpop.f32.mrf.mxu0
        %v1504 = vpop.f32.mrf.mxu0
        %1505 = vdwg.mxu0
        %v1506 = vadd.f32 %v324, %v1501
        %1507 = vrot.lane.b32.xlu0 %v1454, 127
        %v1508 = vpop.permute.xlu0 %1507
        %1509 = vrot.lane.b32.xlu0 %v1455, 127
        %v1510 = vpop.permute.xlu0 %1509
        %1511 = vrot.lane.b32.xlu0 %v1456, 127
        %v1512 = vpop.permute.xlu0 %1511
        %1513 = vrot.lane.b32.xlu0 %v1457, 127
        %v1514 = vpop.permute.xlu0 %1513
        %1515 = vrot.lane.b32.xlu0 %v1458, 127
        %v1516 = vpop.permute.xlu0 %1515
        %v1522 = vsel %vm620, %v1516, 0
        %1524 = vmatprep.subr.bf16.mxu0 0
        %1525 = vmatpush1.bf16.msra.mxu0 0
        %1526 = vmatprep.subr.bf16.mxu0 0
        %1527 = vmatpush1.bf16.msra.mxu0 0
        %1528 = vmatprep.subr.bf16.mxu0 0
        %1529 = vmatpush1.bf16.msra.mxu0 0
        %1530 = vmatprep.subr.bf16.mxu0 0
        %1531 = vmatpush1.bf16.msra.mxu0 %v1522
        %1532 = vmatprep.subr.bf16.mxu0 0
        %1533 = vmatpush1.bf16.msra.mxu0 %v1514
        %1534 = vmatprep.subr.bf16.mxu0 0
        %1535 = vmatpush1.bf16.msra.mxu0 %v1512
        %1536 = vmatprep.subr.bf16.mxu0 0
        %1537 = vmatpush1.bf16.msra.mxu0 %v1510
        %1538 = vmatprep.subr.bf16.mxu0 0
        %1539 = vmatpush1.bf16.msra.mxu0 %v1508
        %1540 = vmatprep.subr.bf16.mxu0 0
        %1541 = vmatpush2.bf16.msra.mxu0 0
        %1542 = vmatprep.subr.bf16.mxu0 0
        %1543 = vmatpush2.bf16.msra.mxu0 0
        %1544 = vmatprep.subr.bf16.mxu0 0
        %1545 = vmatpush2.bf16.msra.mxu0 0
        %1546 = vmatprep.subr.bf16.mxu0 0
        %1547 = vmatpush2.bf16.msra.mxu0 0
        %1548 = vmatprep.subr.bf16.mxu0 0
        %1549 = vmatpush2.bf16.msra.mxu0 0
        %1550 = vmatprep.subr.bf16.mxu0 0
        %1551 = vmatpush2.bf16.msra.mxu0 0
        %1552 = vmatprep.subr.bf16.mxu0 0
        %1553 = vmatpush2.bf16.msra.mxu0 0
        %1554 = vmatprep.subr.bf16.mxu0 0
        %1555 = vmatpush2.bf16.msra.mxu0 0
        %1556 = vmatprep.mubr.bf16.mxu0 0
        %1557 = vmatmul.mubr.bf16.gmra.mxu0 %v689
        %v1558 = vpop.f32.mrf.mxu0
        %v1559 = vadd.f32 0.0, %v1558
        %v1560 = vpop.f32.mrf.mxu0
        %v1561 = vpop.f32.mrf.mxu0
        %v1562 = vpop.f32.mrf.mxu0
        %1563 = vdwg.mxu0
        %v1564 = vadd.f32 %v1506, %v1559
        %1565 = vrot.lane.b32.xlu0 %v1454, 126
        %v1566 = vpop.permute.xlu0 %1565
        %1567 = vrot.lane.b32.xlu0 %v1455, 126
        %v1568 = vpop.permute.xlu0 %1567
        %1569 = vrot.lane.b32.xlu0 %v1456, 126
        %v1570 = vpop.permute.xlu0 %1569
        %1571 = vrot.lane.b32.xlu0 %v1457, 126
        %v1572 = vpop.permute.xlu0 %1571
        %1573 = vrot.lane.b32.xlu0 %v1458, 126
        %v1574 = vpop.permute.xlu0 %1573
        %v1580 = vsel %vm620, %v1574, 0
        %1582 = vmatprep.subr.bf16.mxu0 0
        %1583 = vmatpush1.bf16.msra.mxu0 0
        %1584 = vmatprep.subr.bf16.mxu0 0
        %1585 = vmatpush1.bf16.msra.mxu0 0
        %1586 = vmatprep.subr.bf16.mxu0 0
        %1587 = vmatpush1.bf16.msra.mxu0 0
        %1588 = vmatprep.subr.bf16.mxu0 0
        %1589 = vmatpush1.bf16.msra.mxu0 %v1580
        %1590 = vmatprep.subr.bf16.mxu0 0
        %1591 = vmatpush1.bf16.msra.mxu0 %v1572
        %1592 = vmatprep.subr.bf16.mxu0 0
        %1593 = vmatpush1.bf16.msra.mxu0 %v1570
        %1594 = vmatprep.subr.bf16.mxu0 0
        %1595 = vmatpush1.bf16.msra.mxu0 %v1568
        %1596 = vmatprep.subr.bf16.mxu0 0
        %1597 = vmatpush1.bf16.msra.mxu0 %v1566
        %1598 = vmatprep.subr.bf16.mxu0 0
        %1599 = vmatpush2.bf16.msra.mxu0 0
        %1600 = vmatprep.subr.bf16.mxu0 0
        %1601 = vmatpush2.bf16.msra.mxu0 0
        %1602 = vmatprep.subr.bf16.mxu0 0
        %1603 = vmatpush2.bf16.msra.mxu0 0
        %1604 = vmatprep.subr.bf16.mxu0 0
        %1605 = vmatpush2.bf16.msra.mxu0 0
        %1606 = vmatprep.subr.bf16.mxu0 0
        %1607 = vmatpush2.bf16.msra.mxu0 0
        %1608 = vmatprep.subr.bf16.mxu0 0
        %1609 = vmatpush2.bf16.msra.mxu0 0
        %1610 = vmatprep.subr.bf16.mxu0 0
        %1611 = vmatpush2.bf16.msra.mxu0 0
        %1612 = vmatprep.subr.bf16.mxu0 0
        %1613 = vmatpush2.bf16.msra.mxu0 0
        %1614 = vmatprep.mubr.bf16.mxu0 0
        %1615 = vmatmul.mubr.bf16.gmra.mxu0 %v750
        %v1616 = vpop.f32.mrf.mxu0
        %v1617 = vadd.f32 0.0, %v1616
        %v1618 = vpop.f32.mrf.mxu0
        %v1619 = vpop.f32.mrf.mxu0
        %v1620 = vpop.f32.mrf.mxu0
        %1621 = vdwg.mxu0
        %v1622 = vadd.f32 %v1564, %v1617
        %v1623 = vmax.f32 %v1622, 0.0
        %v1624 = vpack.c.bf16 %v1623, %v1623
        %v1626 = vunpack.c.l.b16 %v1624
        %v1627 = vpack.c.b16 %v1626, %v1626
        %1628 = vrot.lane.b32.xlu0 %v1627, 1
        %v1629 = vpop.permute.xlu0 %1628
        %s1631 = scalar_lea.vmem [#allocation2], 20
        %1632 = vst.msk [vmem:[%s1631] sm:$0xf] %vm805, %v1629
        %s1633 = scalar_lea.vmem %s302, 48
        %v1634 = vld [vmem:[%s1633] sm:$0xf]
        %v1635 = vld [vmem:[%s1633 + $0x4] sm:$0xf]
        %v1636 = vld [vmem:[%s1633 + $0x8] sm:$0xf]
        %v1637 = vld [vmem:[%s1633 + $0xc] sm:$0xf]
        %v1638 = vld [vmem:[%s1633 + $0x10] sm:$0xf]
        %v1639 = vld [vmem:[%s1633 + $0x14] sm:$0xf]
        %v1640 = vld [vmem:[%s1633 + $0x18] sm:$0xf]
        %v1641 = vld [vmem:[%s1633 + $0x1c] sm:$0xf]
        %v1642 = vld [vmem:[%s1633 + $0x20] sm:$0xf]
        %v1652 = vunpack.c.l.b16 %v1634
        %v1653 = vunpack.c.l.b16 %v1635
        %v1654 = vunpack.c.l.b16 %v1636
        %v1655 = vunpack.c.l.b16 %v1637
        %v1656 = vunpack.c.l.b16 %v1638
        %v1657 = vunpack.c.l.b16 %v1639
        %v1658 = vunpack.c.l.b16 %v1640
        %v1659 = vunpack.c.l.b16 %v1641
        %v1660 = vunpack.c.l.b16 %v1642
        %v1661 = vpack.c.b16 %v1653, %v1652
        %v1662 = vpack.c.b16 %v1655, %v1654
        %v1663 = vpack.c.b16 %v1657, %v1656
        %v1664 = vpack.c.b16 %v1659, %v1658
        %v1665 = vpack.c.b16 %v1660, %v1660
        %v1671 = vsel %vm620, %v1665, 0
        %1673 = vmatprep.subr.bf16.mxu0 0
        %1674 = vmatpush1.bf16.msra.mxu0 0
        %1675 = vmatprep.subr.bf16.mxu0 0
        %1676 = vmatpush1.bf16.msra.mxu0 0
        %1677 = vmatprep.subr.bf16.mxu0 0
        %1678 = vmatpush1.bf16.msra.mxu0 0
        %1679 = vmatprep.subr.bf16.mxu0 0
        %1680 = vmatpush1.bf16.msra.mxu0 %v1671
        %1681 = vmatprep.subr.bf16.mxu0 0
        %1682 = vmatpush1.bf16.msra.mxu0 %v1664
        %1683 = vmatprep.subr.bf16.mxu0 0
        %1684 = vmatpush1.bf16.msra.mxu0 %v1663
        %1685 = vmatprep.subr.bf16.mxu0 0
        %1686 = vmatpush1.bf16.msra.mxu0 %v1662
        %1687 = vmatprep.subr.bf16.mxu0 0
        %1688 = vmatpush1.bf16.msra.mxu0 %v1661
        %1689 = vmatprep.subr.bf16.mxu0 0
        %1690 = vmatpush2.bf16.msra.mxu0 0
        %1691 = vmatprep.subr.bf16.mxu0 0
        %1692 = vmatpush2.bf16.msra.mxu0 0
        %1693 = vmatprep.subr.bf16.mxu0 0
        %1694 = vmatpush2.bf16.msra.mxu0 0
        %1695 = vmatprep.subr.bf16.mxu0 0
        %1696 = vmatpush2.bf16.msra.mxu0 0
        %1697 = vmatprep.subr.bf16.mxu0 0
        %1698 = vmatpush2.bf16.msra.mxu0 0
        %1699 = vmatprep.subr.bf16.mxu0 0
        %1700 = vmatpush2.bf16.msra.mxu0 0
        %1701 = vmatprep.subr.bf16.mxu0 0
        %1702 = vmatpush2.bf16.msra.mxu0 0
        %1703 = vmatprep.subr.bf16.mxu0 0
        %1704 = vmatpush2.bf16.msra.mxu0 0
        %1705 = vmatprep.mubr.bf16.mxu0 0
        %1706 = vmatmul.mubr.bf16.gmra.mxu0 %v627
        %v1707 = vpop.f32.mrf.mxu0
        %v1708 = vadd.f32 0.0, %v1707
        %v1709 = vpop.f32.mrf.mxu0
        %v1710 = vpop.f32.mrf.mxu0
        %v1711 = vpop.f32.mrf.mxu0
        %1712 = vdwg.mxu0
        %v1713 = vadd.f32 %v324, %v1708
        %1714 = vrot.lane.b32.xlu0 %v1661, 127
        %v1715 = vpop.permute.xlu0 %1714
        %1716 = vrot.lane.b32.xlu0 %v1662, 127
        %v1717 = vpop.permute.xlu0 %1716
        %1718 = vrot.lane.b32.xlu0 %v1663, 127
        %v1719 = vpop.permute.xlu0 %1718
        %1720 = vrot.lane.b32.xlu0 %v1664, 127
        %v1721 = vpop.permute.xlu0 %1720
        %1722 = vrot.lane.b32.xlu0 %v1665, 127
        %v1723 = vpop.permute.xlu0 %1722
        %v1729 = vsel %vm620, %v1723, 0
        %1731 = vmatprep.subr.bf16.mxu0 0
        %1732 = vmatpush1.bf16.msra.mxu0 0
        %1733 = vmatprep.subr.bf16.mxu0 0
        %1734 = vmatpush1.bf16.msra.mxu0 0
        %1735 = vmatprep.subr.bf16.mxu0 0
        %1736 = vmatpush1.bf16.msra.mxu0 0
        %1737 = vmatprep.subr.bf16.mxu0 0
        %1738 = vmatpush1.bf16.msra.mxu0 %v1729
        %1739 = vmatprep.subr.bf16.mxu0 0
        %1740 = vmatpush1.bf16.msra.mxu0 %v1721
        %1741 = vmatprep.subr.bf16.mxu0 0
        %1742 = vmatpush1.bf16.msra.mxu0 %v1719
        %1743 = vmatprep.subr.bf16.mxu0 0
        %1744 = vmatpush1.bf16.msra.mxu0 %v1717
        %1745 = vmatprep.subr.bf16.mxu0 0
        %1746 = vmatpush1.bf16.msra.mxu0 %v1715
        %1747 = vmatprep.subr.bf16.mxu0 0
        %1748 = vmatpush2.bf16.msra.mxu0 0
        %1749 = vmatprep.subr.bf16.mxu0 0
        %1750 = vmatpush2.bf16.msra.mxu0 0
        %1751 = vmatprep.subr.bf16.mxu0 0
        %1752 = vmatpush2.bf16.msra.mxu0 0
        %1753 = vmatprep.subr.bf16.mxu0 0
        %1754 = vmatpush2.bf16.msra.mxu0 0
        %1755 = vmatprep.subr.bf16.mxu0 0
        %1756 = vmatpush2.bf16.msra.mxu0 0
        %1757 = vmatprep.subr.bf16.mxu0 0
        %1758 = vmatpush2.bf16.msra.mxu0 0
        %1759 = vmatprep.subr.bf16.mxu0 0
        %1760 = vmatpush2.bf16.msra.mxu0 0
        %1761 = vmatprep.subr.bf16.mxu0 0
        %1762 = vmatpush2.bf16.msra.mxu0 0
        %1763 = vmatprep.mubr.bf16.mxu0 0
        %1764 = vmatmul.mubr.bf16.gmra.mxu0 %v689
        %v1765 = vpop.f32.mrf.mxu0
        %v1766 = vadd.f32 0.0, %v1765
        %v1767 = vpop.f32.mrf.mxu0
        %v1768 = vpop.f32.mrf.mxu0
        %v1769 = vpop.f32.mrf.mxu0
        %1770 = vdwg.mxu0
        %v1771 = vadd.f32 %v1713, %v1766
        %1772 = vrot.lane.b32.xlu0 %v1661, 126
        %v1773 = vpop.permute.xlu0 %1772
        %1774 = vrot.lane.b32.xlu0 %v1662, 126
        %v1775 = vpop.permute.xlu0 %1774
        %1776 = vrot.lane.b32.xlu0 %v1663, 126
        %v1777 = vpop.permute.xlu0 %1776
        %1778 = vrot.lane.b32.xlu0 %v1664, 126
        %v1779 = vpop.permute.xlu0 %1778
        %1780 = vrot.lane.b32.xlu0 %v1665, 126
        %v1781 = vpop.permute.xlu0 %1780
        %v1787 = vsel %vm620, %v1781, 0
        %1789 = vmatprep.subr.bf16.mxu0 0
        %1790 = vmatpush1.bf16.msra.mxu0 0
        %1791 = vmatprep.subr.bf16.mxu0 0
        %1792 = vmatpush1.bf16.msra.mxu0 0
        %1793 = vmatprep.subr.bf16.mxu0 0
        %1794 = vmatpush1.bf16.msra.mxu0 0
        %1795 = vmatprep.subr.bf16.mxu0 0
        %1796 = vmatpush1.bf16.msra.mxu0 %v1787
        %1797 = vmatprep.subr.bf16.mxu0 0
        %1798 = vmatpush1.bf16.msra.mxu0 %v1779
        %1799 = vmatprep.subr.bf16.mxu0 0
        %1800 = vmatpush1.bf16.msra.mxu0 %v1777
        %1801 = vmatprep.subr.bf16.mxu0 0
        %1802 = vmatpush1.bf16.msra.mxu0 %v1775
        %1803 = vmatprep.subr.bf16.mxu0 0
        %1804 = vmatpush1.bf16.msra.mxu0 %v1773
        %1805 = vmatprep.subr.bf16.mxu0 0
        %1806 = vmatpush2.bf16.msra.mxu0 0
        %1807 = vmatprep.subr.bf16.mxu0 0
        %1808 = vmatpush2.bf16.msra.mxu0 0
        %1809 = vmatprep.subr.bf16.mxu0 0
        %1810 = vmatpush2.bf16.msra.mxu0 0
        %1811 = vmatprep.subr.bf16.mxu0 0
        %1812 = vmatpush2.bf16.msra.mxu0 0
        %1813 = vmatprep.subr.bf16.mxu0 0
        %1814 = vmatpush2.bf16.msra.mxu0 0
        %1815 = vmatprep.subr.bf16.mxu0 0
        %1816 = vmatpush2.bf16.msra.mxu0 0
        %1817 = vmatprep.subr.bf16.mxu0 0
        %1818 = vmatpush2.bf16.msra.mxu0 0
        %1819 = vmatprep.subr.bf16.mxu0 0
        %1820 = vmatpush2.bf16.msra.mxu0 0
        %1821 = vmatprep.mubr.bf16.mxu0 0
        %1822 = vmatmul.mubr.bf16.gmra.mxu0 %v750
        %v1823 = vpop.f32.mrf.mxu0
        %v1824 = vadd.f32 0.0, %v1823
        %v1825 = vpop.f32.mrf.mxu0
        %v1826 = vpop.f32.mrf.mxu0
        %v1827 = vpop.f32.mrf.mxu0
        %1828 = vdwg.mxu0
        %v1829 = vadd.f32 %v1771, %v1824
        %v1830 = vmax.f32 %v1829, 0.0
        %v1831 = vpack.c.bf16 %v1830, %v1830
        %v1833 = vunpack.c.l.b16 %v1831
        %v1834 = vpack.c.b16 %v1833, %v1833
        %1835 = vrot.lane.b32.xlu0 %v1834, 1
        %v1836 = vpop.permute.xlu0 %1835
        %s1838 = scalar_lea.vmem [#allocation2], 24
        %1839 = vst.msk [vmem:[%s1838] sm:$0xf] %vm805, %v1836
        %s1840 = scalar_lea.vmem %s302, 60
        %v1841 = vld [vmem:[%s1840] sm:$0xf]
        %v1842 = vld [vmem:[%s1840 + $0x4] sm:$0xf]
        %v1843 = vld [vmem:[%s1840 + $0x8] sm:$0xf]
        %v1844 = vld [vmem:[%s1840 + $0xc] sm:$0xf]
        %v1845 = vld [vmem:[%s1840 + $0x10] sm:$0xf]
        %v1846 = vld [vmem:[%s1840 + $0x14] sm:$0xf]
        %v1847 = vld [vmem:[%s1840 + $0x18] sm:$0xf]
        %v1848 = vld [vmem:[%s1840 + $0x1c] sm:$0xf]
        %v1849 = vld [vmem:[%s1840 + $0x20] sm:$0xf]
        %v1859 = vunpack.c.l.b16 %v1841
        %v1860 = vunpack.c.l.b16 %v1842
        %v1861 = vunpack.c.l.b16 %v1843
        %v1862 = vunpack.c.l.b16 %v1844
        %v1863 = vunpack.c.l.b16 %v1845
        %v1864 = vunpack.c.l.b16 %v1846
        %v1865 = vunpack.c.l.b16 %v1847
        %v1866 = vunpack.c.l.b16 %v1848
        %v1867 = vunpack.c.l.b16 %v1849
        %v1868 = vpack.c.b16 %v1860, %v1859
        %v1869 = vpack.c.b16 %v1862, %v1861
        %v1870 = vpack.c.b16 %v1864, %v1863
        %v1871 = vpack.c.b16 %v1866, %v1865
        %v1872 = vpack.c.b16 %v1867, %v1867
        %v1878 = vsel %vm620, %v1872, 0
        %1880 = vmatprep.subr.bf16.mxu0 0
        %1881 = vmatpush1.bf16.msra.mxu0 0
        %1882 = vmatprep.subr.bf16.mxu0 0
        %1883 = vmatpush1.bf16.msra.mxu0 0
        %1884 = vmatprep.subr.bf16.mxu0 0
        %1885 = vmatpush1.bf16.msra.mxu0 0
        %1886 = vmatprep.subr.bf16.mxu0 0
        %1887 = vmatpush1.bf16.msra.mxu0 %v1878
        %1888 = vmatprep.subr.bf16.mxu0 0
        %1889 = vmatpush1.bf16.msra.mxu0 %v1871
        %1890 = vmatprep.subr.bf16.mxu0 0
        %1891 = vmatpush1.bf16.msra.mxu0 %v1870
        %1892 = vmatprep.subr.bf16.mxu0 0
        %1893 = vmatpush1.bf16.msra.mxu0 %v1869
        %1894 = vmatprep.subr.bf16.mxu0 0
        %1895 = vmatpush1.bf16.msra.mxu0 %v1868
        %1896 = vmatprep.subr.bf16.mxu0 0
        %1897 = vmatpush2.bf16.msra.mxu0 0
        %1898 = vmatprep.subr.bf16.mxu0 0
        %1899 = vmatpush2.bf16.msra.mxu0 0
        %1900 = vmatprep.subr.bf16.mxu0 0
        %1901 = vmatpush2.bf16.msra.mxu0 0
        %1902 = vmatprep.subr.bf16.mxu0 0
        %1903 = vmatpush2.bf16.msra.mxu0 0
        %1904 = vmatprep.subr.bf16.mxu0 0
        %1905 = vmatpush2.bf16.msra.mxu0 0
        %1906 = vmatprep.subr.bf16.mxu0 0
        %1907 = vmatpush2.bf16.msra.mxu0 0
        %1908 = vmatprep.subr.bf16.mxu0 0
        %1909 = vmatpush2.bf16.msra.mxu0 0
        %1910 = vmatprep.subr.bf16.mxu0 0
        %1911 = vmatpush2.bf16.msra.mxu0 0
        %1912 = vmatprep.mubr.bf16.mxu0 0
        %1913 = vmatmul.mubr.bf16.gmra.mxu0 %v627
        %v1914 = vpop.f32.mrf.mxu0
        %v1915 = vadd.f32 0.0, %v1914
        %v1916 = vpop.f32.mrf.mxu0
        %v1917 = vpop.f32.mrf.mxu0
        %v1918 = vpop.f32.mrf.mxu0
        %1919 = vdwg.mxu0
        %v1920 = vadd.f32 %v324, %v1915
        %1921 = vrot.lane.b32.xlu0 %v1868, 127
        %v1922 = vpop.permute.xlu0 %1921
        %1923 = vrot.lane.b32.xlu0 %v1869, 127
        %v1924 = vpop.permute.xlu0 %1923
        %1925 = vrot.lane.b32.xlu0 %v1870, 127
        %v1926 = vpop.permute.xlu0 %1925
        %1927 = vrot.lane.b32.xlu0 %v1871, 127
        %v1928 = vpop.permute.xlu0 %1927
        %1929 = vrot.lane.b32.xlu0 %v1872, 127
        %v1930 = vpop.permute.xlu0 %1929
        %v1936 = vsel %vm620, %v1930, 0
        %1938 = vmatprep.subr.bf16.mxu0 0
        %1939 = vmatpush1.bf16.msra.mxu0 0
        %1940 = vmatprep.subr.bf16.mxu0 0
        %1941 = vmatpush1.bf16.msra.mxu0 0
        %1942 = vmatprep.subr.bf16.mxu0 0
        %1943 = vmatpush1.bf16.msra.mxu0 0
        %1944 = vmatprep.subr.bf16.mxu0 0
        %1945 = vmatpush1.bf16.msra.mxu0 %v1936
        %1946 = vmatprep.subr.bf16.mxu0 0
        %1947 = vmatpush1.bf16.msra.mxu0 %v1928
        %1948 = vmatprep.subr.bf16.mxu0 0
        %1949 = vmatpush1.bf16.msra.mxu0 %v1926
        %1950 = vmatprep.subr.bf16.mxu0 0
        %1951 = vmatpush1.bf16.msra.mxu0 %v1924
        %1952 = vmatprep.subr.bf16.mxu0 0
        %1953 = vmatpush1.bf16.msra.mxu0 %v1922
        %1954 = vmatprep.subr.bf16.mxu0 0
        %1955 = vmatpush2.bf16.msra.mxu0 0
        %1956 = vmatprep.subr.bf16.mxu0 0
        %1957 = vmatpush2.bf16.msra.mxu0 0
        %1958 = vmatprep.subr.bf16.mxu0 0
        %1959 = vmatpush2.bf16.msra.mxu0 0
        %1960 = vmatprep.subr.bf16.mxu0 0
        %1961 = vmatpush2.bf16.msra.mxu0 0
        %1962 = vmatprep.subr.bf16.mxu0 0
        %1963 = vmatpush2.bf16.msra.mxu0 0
        %1964 = vmatprep.subr.bf16.mxu0 0
        %1965 = vmatpush2.bf16.msra.mxu0 0
        %1966 = vmatprep.subr.bf16.mxu0 0
        %1967 = vmatpush2.bf16.msra.mxu0 0
        %1968 = vmatprep.subr.bf16.mxu0 0
        %1969 = vmatpush2.bf16.msra.mxu0 0
        %1970 = vmatprep.mubr.bf16.mxu0 0
        %1971 = vmatmul.mubr.bf16.gmra.mxu0 %v689
        %v1972 = vpop.f32.mrf.mxu0
        %v1973 = vadd.f32 0.0, %v1972
        %v1974 = vpop.f32.mrf.mxu0
        %v1975 = vpop.f32.mrf.mxu0
        %v1976 = vpop.f32.mrf.mxu0
        %1977 = vdwg.mxu0
        %v1978 = vadd.f32 %v1920, %v1973
        %1979 = vrot.lane.b32.xlu0 %v1868, 126
        %v1980 = vpop.permute.xlu0 %1979
        %1981 = vrot.lane.b32.xlu0 %v1869, 126
        %v1982 = vpop.permute.xlu0 %1981
        %1983 = vrot.lane.b32.xlu0 %v1870, 126
        %v1984 = vpop.permute.xlu0 %1983
        %1985 = vrot.lane.b32.xlu0 %v1871, 126
        %v1986 = vpop.permute.xlu0 %1985
        %1987 = vrot.lane.b32.xlu0 %v1872, 126
        %v1988 = vpop.permute.xlu0 %1987
        %v1994 = vsel %vm620, %v1988, 0
        %1996 = vmatprep.subr.bf16.mxu0 0
        %1997 = vmatpush1.bf16.msra.mxu0 0
        %1998 = vmatprep.subr.bf16.mxu0 0
        %1999 = vmatpush1.bf16.msra.mxu0 0
        %2000 = vmatprep.subr.bf16.mxu0 0
        %2001 = vmatpush1.bf16.msra.mxu0 0
        %2002 = vmatprep.subr.bf16.mxu0 0
        %2003 = vmatpush1.bf16.msra.mxu0 %v1994
        %2004 = vmatprep.subr.bf16.mxu0 0
        %2005 = vmatpush1.bf16.msra.mxu0 %v1986
        %2006 = vmatprep.subr.bf16.mxu0 0
        %2007 = vmatpush1.bf16.msra.mxu0 %v1984
        %2008 = vmatprep.subr.bf16.mxu0 0
        %2009 = vmatpush1.bf16.msra.mxu0 %v1982
        %2010 = vmatprep.subr.bf16.mxu0 0
        %2011 = vmatpush1.bf16.msra.mxu0 %v1980
        %2012 = vmatprep.subr.bf16.mxu0 0
        %2013 = vmatpush2.bf16.msra.mxu0 0
        %2014 = vmatprep.subr.bf16.mxu0 0
        %2015 = vmatpush2.bf16.msra.mxu0 0
        %2016 = vmatprep.subr.bf16.mxu0 0
        %2017 = vmatpush2.bf16.msra.mxu0 0
        %2018 = vmatprep.subr.bf16.mxu0 0
        %2019 = vmatpush2.bf16.msra.mxu0 0
        %2020 = vmatprep.subr.bf16.mxu0 0
        %2021 = vmatpush2.bf16.msra.mxu0 0
        %2022 = vmatprep.subr.bf16.mxu0 0
        %2023 = vmatpush2.bf16.msra.mxu0 0
        %2024 = vmatprep.subr.bf16.mxu0 0
        %2025 = vmatpush2.bf16.msra.mxu0 0
        %2026 = vmatprep.subr.bf16.mxu0 0
        %2027 = vmatpush2.bf16.msra.mxu0 0
        %2028 = vmatprep.mubr.bf16.mxu0 0
        %2029 = vmatmul.mubr.bf16.gmra.mxu0 %v750
        %v2030 = vpop.f32.mrf.mxu0
        %v2031 = vadd.f32 0.0, %v2030
        %v2032 = vpop.f32.mrf.mxu0
        %v2033 = vpop.f32.mrf.mxu0
        %v2034 = vpop.f32.mrf.mxu0
        %2035 = vdwg.mxu0
        %v2036 = vadd.f32 %v1978, %v2031
        %v2037 = vmax.f32 %v2036, 0.0
        %v2038 = vpack.c.bf16 %v2037, %v2037
        %v2040 = vunpack.c.l.b16 %v2038
        %v2041 = vpack.c.b16 %v2040, %v2040
        %2042 = vrot.lane.b32.xlu0 %v2041, 1
        %v2043 = vpop.permute.xlu0 %2042
        %s2045 = scalar_lea.vmem [#allocation2], 28
        %2046 = vst.msk [vmem:[%s2045] sm:$0xf] %vm805, %v2043
        %s2047 = scalar_lea.vmem %s302, 72
        %v2048 = vld [vmem:[%s2047] sm:$0xf]
        %v2049 = vld [vmem:[%s2047 + $0x4] sm:$0xf]
        %v2050 = vld [vmem:[%s2047 + $0x8] sm:$0xf]
        %v2051 = vld [vmem:[%s2047 + $0xc] sm:$0xf]
        %v2052 = vld [vmem:[%s2047 + $0x10] sm:$0xf]
        %v2053 = vld [vmem:[%s2047 + $0x14] sm:$0xf]
        %v2054 = vld [vmem:[%s2047 + $0x18] sm:$0xf]
        %v2055 = vld [vmem:[%s2047 + $0x1c] sm:$0xf]
        %v2056 = vld [vmem:[%s2047 + $0x20] sm:$0xf]
        %v2066 = vunpack.c.l.b16 %v2048
        %v2067 = vunpack.c.l.b16 %v2049
        %v2068 = vunpack.c.l.b16 %v2050
        %v2069 = vunpack.c.l.b16 %v2051
        %v2070 = vunpack.c.l.b16 %v2052
        %v2071 = vunpack.c.l.b16 %v2053
        %v2072 = vunpack.c.l.b16 %v2054
        %v2073 = vunpack.c.l.b16 %v2055
        %v2074 = vunpack.c.l.b16 %v2056
        %v2075 = vpack.c.b16 %v2067, %v2066
        %v2076 = vpack.c.b16 %v2069, %v2068
        %v2077 = vpack.c.b16 %v2071, %v2070
        %v2078 = vpack.c.b16 %v2073, %v2072
        %v2079 = vpack.c.b16 %v2074, %v2074
        %v2085 = vsel %vm620, %v2079, 0
        %2087 = vmatprep.subr.bf16.mxu0 0
        %2088 = vmatpush1.bf16.msra.mxu0 0
        %2089 = vmatprep.subr.bf16.mxu0 0
        %2090 = vmatpush1.bf16.msra.mxu0 0
        %2091 = vmatprep.subr.bf16.mxu0 0
        %2092 = vmatpush1.bf16.msra.mxu0 0
        %2093 = vmatprep.subr.bf16.mxu0 0
        %2094 = vmatpush1.bf16.msra.mxu0 %v2085
        %2095 = vmatprep.subr.bf16.mxu0 0
        %2096 = vmatpush1.bf16.msra.mxu0 %v2078
        %2097 = vmatprep.subr.bf16.mxu0 0
        %2098 = vmatpush1.bf16.msra.mxu0 %v2077
        %2099 = vmatprep.subr.bf16.mxu0 0
        %2100 = vmatpush1.bf16.msra.mxu0 %v2076
        %2101 = vmatprep.subr.bf16.mxu0 0
        %2102 = vmatpush1.bf16.msra.mxu0 %v2075
        %2103 = vmatprep.subr.bf16.mxu0 0
        %2104 = vmatpush2.bf16.msra.mxu0 0
        %2105 = vmatprep.subr.bf16.mxu0 0
        %2106 = vmatpush2.bf16.msra.mxu0 0
        %2107 = vmatprep.subr.bf16.mxu0 0
        %2108 = vmatpush2.bf16.msra.mxu0 0
        %2109 = vmatprep.subr.bf16.mxu0 0
        %2110 = vmatpush2.bf16.msra.mxu0 0
        %2111 = vmatprep.subr.bf16.mxu0 0
        %2112 = vmatpush2.bf16.msra.mxu0 0
        %2113 = vmatprep.subr.bf16.mxu0 0
        %2114 = vmatpush2.bf16.msra.mxu0 0
        %2115 = vmatprep.subr.bf16.mxu0 0
        %2116 = vmatpush2.bf16.msra.mxu0 0
        %2117 = vmatprep.subr.bf16.mxu0 0
        %2118 = vmatpush2.bf16.msra.mxu0 0
        %2119 = vmatprep.mubr.bf16.mxu0 0
        %2120 = vmatmul.mubr.bf16.gmra.mxu0 %v627
        %v2121 = vpop.f32.mrf.mxu0
        %v2122 = vadd.f32 0.0, %v2121
        %v2123 = vpop.f32.mrf.mxu0
        %v2124 = vpop.f32.mrf.mxu0
        %v2125 = vpop.f32.mrf.mxu0
        %2126 = vdwg.mxu0
        %v2127 = vadd.f32 %v324, %v2122
        %2128 = vrot.lane.b32.xlu0 %v2075, 127
        %v2129 = vpop.permute.xlu0 %2128
        %2130 = vrot.lane.b32.xlu0 %v2076, 127
        %v2131 = vpop.permute.xlu0 %2130
        %2132 = vrot.lane.b32.xlu0 %v2077, 127
        %v2133 = vpop.permute.xlu0 %2132
        %2134 = vrot.lane.b32.xlu0 %v2078, 127
        %v2135 = vpop.permute.xlu0 %2134
        %2136 = vrot.lane.b32.xlu0 %v2079, 127
        %v2137 = vpop.permute.xlu0 %2136
        %v2143 = vsel %vm620, %v2137, 0
        %2145 = vmatprep.subr.bf16.mxu0 0
        %2146 = vmatpush1.bf16.msra.mxu0 0
        %2147 = vmatprep.subr.bf16.mxu0 0
        %2148 = vmatpush1.bf16.msra.mxu0 0
        %2149 = vmatprep.subr.bf16.mxu0 0
        %2150 = vmatpush1.bf16.msra.mxu0 0
        %2151 = vmatprep.subr.bf16.mxu0 0
        %2152 = vmatpush1.bf16.msra.mxu0 %v2143
        %2153 = vmatprep.subr.bf16.mxu0 0
        %2154 = vmatpush1.bf16.msra.mxu0 %v2135
        %2155 = vmatprep.subr.bf16.mxu0 0
        %2156 = vmatpush1.bf16.msra.mxu0 %v2133
        %2157 = vmatprep.subr.bf16.mxu0 0
        %2158 = vmatpush1.bf16.msra.mxu0 %v2131
        %2159 = vmatprep.subr.bf16.mxu0 0
        %2160 = vmatpush1.bf16.msra.mxu0 %v2129
        %2161 = vmatprep.subr.bf16.mxu0 0
        %2162 = vmatpush2.bf16.msra.mxu0 0
        %2163 = vmatprep.subr.bf16.mxu0 0
        %2164 = vmatpush2.bf16.msra.mxu0 0
        %2165 = vmatprep.subr.bf16.mxu0 0
        %2166 = vmatpush2.bf16.msra.mxu0 0
        %2167 = vmatprep.subr.bf16.mxu0 0
        %2168 = vmatpush2.bf16.msra.mxu0 0
        %2169 = vmatprep.subr.bf16.mxu0 0
        %2170 = vmatpush2.bf16.msra.mxu0 0
        %2171 = vmatprep.subr.bf16.mxu0 0
        %2172 = vmatpush2.bf16.msra.mxu0 0
        %2173 = vmatprep.subr.bf16.mxu0 0
        %2174 = vmatpush2.bf16.msra.mxu0 0
        %2175 = vmatprep.subr.bf16.mxu0 0
        %2176 = vmatpush2.bf16.msra.mxu0 0
        %2177 = vmatprep.mubr.bf16.mxu0 0
        %2178 = vmatmul.mubr.bf16.gmra.mxu0 %v689
        %v2179 = vpop.f32.mrf.mxu0
        %v2180 = vadd.f32 0.0, %v2179
        %v2181 = vpop.f32.mrf.mxu0
        %v2182 = vpop.f32.mrf.mxu0
        %v2183 = vpop.f32.mrf.mxu0
        %2184 = vdwg.mxu0
        %v2185 = vadd.f32 %v2127, %v2180
        %2186 = vrot.lane.b32.xlu0 %v2075, 126
        %v2187 = vpop.permute.xlu0 %2186
        %2188 = vrot.lane.b32.xlu0 %v2076, 126
        %v2189 = vpop.permute.xlu0 %2188
        %2190 = vrot.lane.b32.xlu0 %v2077, 126
        %v2191 = vpop.permute.xlu0 %2190
        %2192 = vrot.lane.b32.xlu0 %v2078, 126
        %v2193 = vpop.permute.xlu0 %2192
        %2194 = vrot.lane.b32.xlu0 %v2079, 126
        %v2195 = vpop.permute.xlu0 %2194
        %v2201 = vsel %vm620, %v2195, 0
        %2203 = vmatprep.subr.bf16.mxu0 0
        %2204 = vmatpush1.bf16.msra.mxu0 0
        %2205 = vmatprep.subr.bf16.mxu0 0
        %2206 = vmatpush1.bf16.msra.mxu0 0
        %2207 = vmatprep.subr.bf16.mxu0 0
        %2208 = vmatpush1.bf16.msra.mxu0 0
        %2209 = vmatprep.subr.bf16.mxu0 0
        %2210 = vmatpush1.bf16.msra.mxu0 %v2201
        %2211 = vmatprep.subr.bf16.mxu0 0
        %2212 = vmatpush1.bf16.msra.mxu0 %v2193
        %2213 = vmatprep.subr.bf16.mxu0 0
        %2214 = vmatpush1.bf16.msra.mxu0 %v2191
        %2215 = vmatprep.subr.bf16.mxu0 0
        %2216 = vmatpush1.bf16.msra.mxu0 %v2189
        %2217 = vmatprep.subr.bf16.mxu0 0
        %2218 = vmatpush1.bf16.msra.mxu0 %v2187
        %2219 = vmatprep.subr.bf16.mxu0 0
        %2220 = vmatpush2.bf16.msra.mxu0 0
        %2221 = vmatprep.subr.bf16.mxu0 0
        %2222 = vmatpush2.bf16.msra.mxu0 0
        %2223 = vmatprep.subr.bf16.mxu0 0
        %2224 = vmatpush2.bf16.msra.mxu0 0
        %2225 = vmatprep.subr.bf16.mxu0 0
        %2226 = vmatpush2.bf16.msra.mxu0 0
        %2227 = vmatprep.subr.bf16.mxu0 0
        %2228 = vmatpush2.bf16.msra.mxu0 0
        %2229 = vmatprep.subr.bf16.mxu0 0
        %2230 = vmatpush2.bf16.msra.mxu0 0
        %2231 = vmatprep.subr.bf16.mxu0 0
        %2232 = vmatpush2.bf16.msra.mxu0 0
        %2233 = vmatprep.subr.bf16.mxu0 0
        %2234 = vmatpush2.bf16.msra.mxu0 0
        %2235 = vmatprep.mubr.bf16.mxu0 0
        %2236 = vmatmul.mubr.bf16.gmra.mxu0 %v750
        %v2237 = vpop.f32.mrf.mxu0
        %v2238 = vadd.f32 0.0, %v2237
        %v2239 = vpop.f32.mrf.mxu0
        %v2240 = vpop.f32.mrf.mxu0
        %v2241 = vpop.f32.mrf.mxu0
        %2242 = vdwg.mxu0
        %v2243 = vadd.f32 %v2185, %v2238
        %v2244 = vmax.f32 %v2243, 0.0
        %v2245 = vpack.c.bf16 %v2244, %v2244
        %v2247 = vunpack.c.l.b16 %v2245
        %v2248 = vpack.c.b16 %v2247, %v2247
        %2249 = vrot.lane.b32.xlu0 %v2248, 1
        %v2250 = vpop.permute.xlu0 %2249
        %s2252 = scalar_lea.vmem [#allocation2], 32
        %2253 = vst.msk [vmem:[%s2252] sm:$0xf] %vm805, %v2250
        %s2254 = scalar_lea.vmem %s302, 84
        %v2255 = vld [vmem:[%s2254] sm:$0xf]
        %v2256 = vld [vmem:[%s2254 + $0x4] sm:$0xf]
        %v2257 = vld [vmem:[%s2254 + $0x8] sm:$0xf]
        %v2258 = vld [vmem:[%s2254 + $0xc] sm:$0xf]
        %v2259 = vld [vmem:[%s2254 + $0x10] sm:$0xf]
        %v2260 = vld [vmem:[%s2254 + $0x14] sm:$0xf]
        %v2261 = vld [vmem:[%s2254 + $0x18] sm:$0xf]
        %v2262 = vld [vmem:[%s2254 + $0x1c] sm:$0xf]
        %v2263 = vld [vmem:[%s2254 + $0x20] sm:$0xf]
        %v2273 = vunpack.c.l.b16 %v2255
        %v2274 = vunpack.c.l.b16 %v2256
        %v2275 = vunpack.c.l.b16 %v2257
        %v2276 = vunpack.c.l.b16 %v2258
        %v2277 = vunpack.c.l.b16 %v2259
        %v2278 = vunpack.c.l.b16 %v2260
        %v2279 = vunpack.c.l.b16 %v2261
        %v2280 = vunpack.c.l.b16 %v2262
        %v2281 = vunpack.c.l.b16 %v2263
        %v2282 = vpack.c.b16 %v2274, %v2273
        %v2283 = vpack.c.b16 %v2276, %v2275
        %v2284 = vpack.c.b16 %v2278, %v2277
        %v2285 = vpack.c.b16 %v2280, %v2279
        %v2286 = vpack.c.b16 %v2281, %v2281
        %v2292 = vsel %vm620, %v2286, 0
        %2294 = vmatprep.subr.bf16.mxu0 0
        %2295 = vmatpush1.bf16.msra.mxu0 0
        %2296 = vmatprep.subr.bf16.mxu0 0
        %2297 = vmatpush1.bf16.msra.mxu0 0
        %2298 = vmatprep.subr.bf16.mxu0 0
        %2299 = vmatpush1.bf16.msra.mxu0 0
        %2300 = vmatprep.subr.bf16.mxu0 0
        %2301 = vmatpush1.bf16.msra.mxu0 %v2292
        %2302 = vmatprep.subr.bf16.mxu0 0
        %2303 = vmatpush1.bf16.msra.mxu0 %v2285
        %2304 = vmatprep.subr.bf16.mxu0 0
        %2305 = vmatpush1.bf16.msra.mxu0 %v2284
        %2306 = vmatprep.subr.bf16.mxu0 0
        %2307 = vmatpush1.bf16.msra.mxu0 %v2283
        %2308 = vmatprep.subr.bf16.mxu0 0
        %2309 = vmatpush1.bf16.msra.mxu0 %v2282
        %2310 = vmatprep.subr.bf16.mxu0 0
        %2311 = vmatpush2.bf16.msra.mxu0 0
        %2312 = vmatprep.subr.bf16.mxu0 0
        %2313 = vmatpush2.bf16.msra.mxu0 0
        %2314 = vmatprep.subr.bf16.mxu0 0
        %2315 = vmatpush2.bf16.msra.mxu0 0
        %2316 = vmatprep.subr.bf16.mxu0 0
        %2317 = vmatpush2.bf16.msra.mxu0 0
        %2318 = vmatprep.subr.bf16.mxu0 0
        %2319 = vmatpush2.bf16.msra.mxu0 0
        %2320 = vmatprep.subr.bf16.mxu0 0
        %2321 = vmatpush2.bf16.msra.mxu0 0
        %2322 = vmatprep.subr.bf16.mxu0 0
        %2323 = vmatpush2.bf16.msra.mxu0 0
        %2324 = vmatprep.subr.bf16.mxu0 0
        %2325 = vmatpush2.bf16.msra.mxu0 0
        %2326 = vmatprep.mubr.bf16.mxu0 0
        %2327 = vmatmul.mubr.bf16.gmra.mxu0 %v627
        %v2328 = vpop.f32.mrf.mxu0
        %v2329 = vadd.f32 0.0, %v2328
        %v2330 = vpop.f32.mrf.mxu0
        %v2331 = vpop.f32.mrf.mxu0
        %v2332 = vpop.f32.mrf.mxu0
        %2333 = vdwg.mxu0
        %v2334 = vadd.f32 %v324, %v2329
        %2335 = vrot.lane.b32.xlu0 %v2282, 127
        %v2336 = vpop.permute.xlu0 %2335
        %2337 = vrot.lane.b32.xlu0 %v2283, 127
        %v2338 = vpop.permute.xlu0 %2337
        %2339 = vrot.lane.b32.xlu0 %v2284, 127
        %v2340 = vpop.permute.xlu0 %2339
        %2341 = vrot.lane.b32.xlu0 %v2285, 127
        %v2342 = vpop.permute.xlu0 %2341
        %2343 = vrot.lane.b32.xlu0 %v2286, 127
        %v2344 = vpop.permute.xlu0 %2343
        %v2350 = vsel %vm620, %v2344, 0
        %2352 = vmatprep.subr.bf16.mxu0 0
        %2353 = vmatpush1.bf16.msra.mxu0 0
        %2354 = vmatprep.subr.bf16.mxu0 0
        %2355 = vmatpush1.bf16.msra.mxu0 0
        %2356 = vmatprep.subr.bf16.mxu0 0
        %2357 = vmatpush1.bf16.msra.mxu0 0
        %2358 = vmatprep.subr.bf16.mxu0 0
        %2359 = vmatpush1.bf16.msra.mxu0 %v2350
        %2360 = vmatprep.subr.bf16.mxu0 0
        %2361 = vmatpush1.bf16.msra.mxu0 %v2342
        %2362 = vmatprep.subr.bf16.mxu0 0
        %2363 = vmatpush1.bf16.msra.mxu0 %v2340
        %2364 = vmatprep.subr.bf16.mxu0 0
        %2365 = vmatpush1.bf16.msra.mxu0 %v2338
        %2366 = vmatprep.subr.bf16.mxu0 0
        %2367 = vmatpush1.bf16.msra.mxu0 %v2336
        %2368 = vmatprep.subr.bf16.mxu0 0
        %2369 = vmatpush2.bf16.msra.mxu0 0
        %2370 = vmatprep.subr.bf16.mxu0 0
        %2371 = vmatpush2.bf16.msra.mxu0 0
        %2372 = vmatprep.subr.bf16.mxu0 0
        %2373 = vmatpush2.bf16.msra.mxu0 0
        %2374 = vmatprep.subr.bf16.mxu0 0
        %2375 = vmatpush2.bf16.msra.mxu0 0
        %2376 = vmatprep.subr.bf16.mxu0 0
        %2377 = vmatpush2.bf16.msra.mxu0 0
        %2378 = vmatprep.subr.bf16.mxu0 0
        %2379 = vmatpush2.bf16.msra.mxu0 0
        %2380 = vmatprep.subr.bf16.mxu0 0
        %2381 = vmatpush2.bf16.msra.mxu0 0
        %2382 = vmatprep.subr.bf16.mxu0 0
        %2383 = vmatpush2.bf16.msra.mxu0 0
        %2384 = vmatprep.mubr.bf16.mxu0 0
        %2385 = vmatmul.mubr.bf16.gmra.mxu0 %v689
        %v2386 = vpop.f32.mrf.mxu0
        %v2387 = vadd.f32 0.0, %v2386
        %v2388 = vpop.f32.mrf.mxu0
        %v2389 = vpop.f32.mrf.mxu0
        %v2390 = vpop.f32.mrf.mxu0
        %2391 = vdwg.mxu0
        %v2392 = vadd.f32 %v2334, %v2387
        %2393 = vrot.lane.b32.xlu0 %v2282, 126
        %v2394 = vpop.permute.xlu0 %2393
        %2395 = vrot.lane.b32.xlu0 %v2283, 126
        %v2396 = vpop.permute.xlu0 %2395
        %2397 = vrot.lane.b32.xlu0 %v2284, 126
        %v2398 = vpop.permute.xlu0 %2397
        %2399 = vrot.lane.b32.xlu0 %v2285, 126
        %v2400 = vpop.permute.xlu0 %2399
        %2401 = vrot.lane.b32.xlu0 %v2286, 126
        %v2402 = vpop.permute.xlu0 %2401
        %v2408 = vsel %vm620, %v2402, 0
        %2410 = vmatprep.subr.bf16.mxu0 0
        %2411 = vmatpush1.bf16.msra.mxu0 0
        %2412 = vmatprep.subr.bf16.mxu0 0
        %2413 = vmatpush1.bf16.msra.mxu0 0
        %2414 = vmatprep.subr.bf16.mxu0 0
        %2415 = vmatpush1.bf16.msra.mxu0 0
        %2416 = vmatprep.subr.bf16.mxu0 0
        %2417 = vmatpush1.bf16.msra.mxu0 %v2408
        %2418 = vmatprep.subr.bf16.mxu0 0
        %2419 = vmatpush1.bf16.msra.mxu0 %v2400
        %2420 = vmatprep.subr.bf16.mxu0 0
        %2421 = vmatpush1.bf16.msra.mxu0 %v2398
        %2422 = vmatprep.subr.bf16.mxu0 0
        %2423 = vmatpush1.bf16.msra.mxu0 %v2396
        %2424 = vmatprep.subr.bf16.mxu0 0
        %2425 = vmatpush1.bf16.msra.mxu0 %v2394
        %2426 = vmatprep.subr.bf16.mxu0 0
        %2427 = vmatpush2.bf16.msra.mxu0 0
        %2428 = vmatprep.subr.bf16.mxu0 0
        %2429 = vmatpush2.bf16.msra.mxu0 0
        %2430 = vmatprep.subr.bf16.mxu0 0
        %2431 = vmatpush2.bf16.msra.mxu0 0
        %2432 = vmatprep.subr.bf16.mxu0 0
        %2433 = vmatpush2.bf16.msra.mxu0 0
        %2434 = vmatprep.subr.bf16.mxu0 0
        %2435 = vmatpush2.bf16.msra.mxu0 0
        %2436 = vmatprep.subr.bf16.mxu0 0
        %2437 = vmatpush2.bf16.msra.mxu0 0
        %2438 = vmatprep.subr.bf16.mxu0 0
        %2439 = vmatpush2.bf16.msra.mxu0 0
        %2440 = vmatprep.subr.bf16.mxu0 0
        %2441 = vmatpush2.bf16.msra.mxu0 0
        %2442 = vmatprep.mubr.bf16.mxu0 0
        %2443 = vmatmul.mubr.bf16.gmra.mxu0 %v750
        %v2444 = vpop.f32.mrf.mxu0
        %v2445 = vadd.f32 0.0, %v2444
        %v2446 = vpop.f32.mrf.mxu0
        %v2447 = vpop.f32.mrf.mxu0
        %v2448 = vpop.f32.mrf.mxu0
        %2449 = vdwg.mxu0
        %v2450 = vadd.f32 %v2392, %v2445
        %v2451 = vmax.f32 %v2450, 0.0
        %v2452 = vpack.c.bf16 %v2451, %v2451
        %v2454 = vunpack.c.l.b16 %v2452
        %v2455 = vpack.c.b16 %v2454, %v2454
        %2456 = vrot.lane.b32.xlu0 %v2455, 1
        %v2457 = vpop.permute.xlu0 %2456
        %s2459 = scalar_lea.vmem [#allocation2], 36
        %2460 = vst.msk [vmem:[%s2459] sm:$0xf] %vm805, %v2457
        %s2461 = scalar_lea.vmem %s302, 96
        %v2462 = vld [vmem:[%s2461] sm:$0xf]
        %v2463 = vld [vmem:[%s2461 + $0x4] sm:$0xf]
        %v2464 = vld [vmem:[%s2461 + $0x8] sm:$0xf]
        %v2465 = vld [vmem:[%s2461 + $0xc] sm:$0xf]
        %v2466 = vld [vmem:[%s2461 + $0x10] sm:$0xf]
        %v2467 = vld [vmem:[%s2461 + $0x14] sm:$0xf]
        %v2468 = vld [vmem:[%s2461 + $0x18] sm:$0xf]
        %v2469 = vld [vmem:[%s2461 + $0x1c] sm:$0xf]
        %v2470 = vld [vmem:[%s2461 + $0x20] sm:$0xf]
        %v2480 = vunpack.c.l.b16 %v2462
        %v2481 = vunpack.c.l.b16 %v2463
        %v2482 = vunpack.c.l.b16 %v2464
        %v2483 = vunpack.c.l.b16 %v2465
        %v2484 = vunpack.c.l.b16 %v2466
        %v2485 = vunpack.c.l.b16 %v2467
        %v2486 = vunpack.c.l.b16 %v2468
        %v2487 = vunpack.c.l.b16 %v2469
        %v2488 = vunpack.c.l.b16 %v2470
        %v2489 = vpack.c.b16 %v2481, %v2480
        %v2490 = vpack.c.b16 %v2483, %v2482
        %v2491 = vpack.c.b16 %v2485, %v2484
        %v2492 = vpack.c.b16 %v2487, %v2486
        %v2493 = vpack.c.b16 %v2488, %v2488
        %v2499 = vsel %vm620, %v2493, 0
        %2501 = vmatprep.subr.bf16.mxu0 0
        %2502 = vmatpush1.bf16.msra.mxu0 0
        %2503 = vmatprep.subr.bf16.mxu0 0
        %2504 = vmatpush1.bf16.msra.mxu0 0
        %2505 = vmatprep.subr.bf16.mxu0 0
        %2506 = vmatpush1.bf16.msra.mxu0 0
        %2507 = vmatprep.subr.bf16.mxu0 0
        %2508 = vmatpush1.bf16.msra.mxu0 %v2499
        %2509 = vmatprep.subr.bf16.mxu0 0
        %2510 = vmatpush1.bf16.msra.mxu0 %v2492
        %2511 = vmatprep.subr.bf16.mxu0 0
        %2512 = vmatpush1.bf16.msra.mxu0 %v2491
        %2513 = vmatprep.subr.bf16.mxu0 0
        %2514 = vmatpush1.bf16.msra.mxu0 %v2490
        %2515 = vmatprep.subr.bf16.mxu0 0
        %2516 = vmatpush1.bf16.msra.mxu0 %v2489
        %2517 = vmatprep.subr.bf16.mxu0 0
        %2518 = vmatpush2.bf16.msra.mxu0 0
        %2519 = vmatprep.subr.bf16.mxu0 0
        %2520 = vmatpush2.bf16.msra.mxu0 0
        %2521 = vmatprep.subr.bf16.mxu0 0
        %2522 = vmatpush2.bf16.msra.mxu0 0
        %2523 = vmatprep.subr.bf16.mxu0 0
        %2524 = vmatpush2.bf16.msra.mxu0 0
        %2525 = vmatprep.subr.bf16.mxu0 0
        %2526 = vmatpush2.bf16.msra.mxu0 0
        %2527 = vmatprep.subr.bf16.mxu0 0
        %2528 = vmatpush2.bf16.msra.mxu0 0
        %2529 = vmatprep.subr.bf16.mxu0 0
        %2530 = vmatpush2.bf16.msra.mxu0 0
        %2531 = vmatprep.subr.bf16.mxu0 0
        %2532 = vmatpush2.bf16.msra.mxu0 0
        %2533 = vmatprep.mubr.bf16.mxu0 0
        %2534 = vmatmul.mubr.bf16.gmra.mxu0 %v627
        %v2535 = vpop.f32.mrf.mxu0
        %v2536 = vadd.f32 0.0, %v2535
        %v2537 = vpop.f32.mrf.mxu0
        %v2538 = vpop.f32.mrf.mxu0
        %v2539 = vpop.f32.mrf.mxu0
        %2540 = vdwg.mxu0
        %v2541 = vadd.f32 %v324, %v2536
        %2542 = vrot.lane.b32.xlu0 %v2489, 127
        %v2543 = vpop.permute.xlu0 %2542
        %2544 = vrot.lane.b32.xlu0 %v2490, 127
        %v2545 = vpop.permute.xlu0 %2544
        %2546 = vrot.lane.b32.xlu0 %v2491, 127
        %v2547 = vpop.permute.xlu0 %2546
        %2548 = vrot.lane.b32.xlu0 %v2492, 127
        %v2549 = vpop.permute.xlu0 %2548
        %2550 = vrot.lane.b32.xlu0 %v2493, 127
        %v2551 = vpop.permute.xlu0 %2550
        %v2557 = vsel %vm620, %v2551, 0
        %2559 = vmatprep.subr.bf16.mxu0 0
        %2560 = vmatpush1.bf16.msra.mxu0 0
        %2561 = vmatprep.subr.bf16.mxu0 0
        %2562 = vmatpush1.bf16.msra.mxu0 0
        %2563 = vmatprep.subr.bf16.mxu0 0
        %2564 = vmatpush1.bf16.msra.mxu0 0
        %2565 = vmatprep.subr.bf16.mxu0 0
        %2566 = vmatpush1.bf16.msra.mxu0 %v2557
        %2567 = vmatprep.subr.bf16.mxu0 0
        %2568 = vmatpush1.bf16.msra.mxu0 %v2549
        %2569 = vmatprep.subr.bf16.mxu0 0
        %2570 = vmatpush1.bf16.msra.mxu0 %v2547
        %2571 = vmatprep.subr.bf16.mxu0 0
        %2572 = vmatpush1.bf16.msra.mxu0 %v2545
        %2573 = vmatprep.subr.bf16.mxu0 0
        %2574 = vmatpush1.bf16.msra.mxu0 %v2543
        %2575 = vmatprep.subr.bf16.mxu0 0
        %2576 = vmatpush2.bf16.msra.mxu0 0
        %2577 = vmatprep.subr.bf16.mxu0 0
        %2578 = vmatpush2.bf16.msra.mxu0 0
        %2579 = vmatprep.subr.bf16.mxu0 0
        %2580 = vmatpush2.bf16.msra.mxu0 0
        %2581 = vmatprep.subr.bf16.mxu0 0
        %2582 = vmatpush2.bf16.msra.mxu0 0
        %2583 = vmatprep.subr.bf16.mxu0 0
        %2584 = vmatpush2.bf16.msra.mxu0 0
        %2585 = vmatprep.subr.bf16.mxu0 0
        %2586 = vmatpush2.bf16.msra.mxu0 0
        %2587 = vmatprep.subr.bf16.mxu0 0
        %2588 = vmatpush2.bf16.msra.mxu0 0
        %2589 = vmatprep.subr.bf16.mxu0 0
        %2590 = vmatpush2.bf16.msra.mxu0 0
        %2591 = vmatprep.mubr.bf16.mxu0 0
        %2592 = vmatmul.mubr.bf16.gmra.mxu0 %v689
        %v2593 = vpop.f32.mrf.mxu0
        %v2594 = vadd.f32 0.0, %v2593
        %v2595 = vpop.f32.mrf.mxu0
        %v2596 = vpop.f32.mrf.mxu0
        %v2597 = vpop.f32.mrf.mxu0
        %2598 = vdwg.mxu0
        %v2599 = vadd.f32 %v2541, %v2594
        %2600 = vrot.lane.b32.xlu0 %v2489, 126
        %v2601 = vpop.permute.xlu0 %2600
        %2602 = vrot.lane.b32.xlu0 %v2490, 126
        %v2603 = vpop.permute.xlu0 %2602
        %2604 = vrot.lane.b32.xlu0 %v2491, 126
        %v2605 = vpop.permute.xlu0 %2604
        %2606 = vrot.lane.b32.xlu0 %v2492, 126
        %v2607 = vpop.permute.xlu0 %2606
        %2608 = vrot.lane.b32.xlu0 %v2493, 126
        %v2609 = vpop.permute.xlu0 %2608
        %v2615 = vsel %vm620, %v2609, 0
        %2617 = vmatprep.subr.bf16.mxu0 0
        %2618 = vmatpush1.bf16.msra.mxu0 0
        %2619 = vmatprep.subr.bf16.mxu0 0
        %2620 = vmatpush1.bf16.msra.mxu0 0
        %2621 = vmatprep.subr.bf16.mxu0 0
        %2622 = vmatpush1.bf16.msra.mxu0 0
        %2623 = vmatprep.subr.bf16.mxu0 0
        %2624 = vmatpush1.bf16.msra.mxu0 %v2615
        %2625 = vmatprep.subr.bf16.mxu0 0
        %2626 = vmatpush1.bf16.msra.mxu0 %v2607
        %2627 = vmatprep.subr.bf16.mxu0 0
        %2628 = vmatpush1.bf16.msra.mxu0 %v2605
        %2629 = vmatprep.subr.bf16.mxu0 0
        %2630 = vmatpush1.bf16.msra.mxu0 %v2603
        %2631 = vmatprep.subr.bf16.mxu0 0
        %2632 = vmatpush1.bf16.msra.mxu0 %v2601
        %2633 = vmatprep.subr.bf16.mxu0 0
        %2634 = vmatpush2.bf16.msra.mxu0 0
        %2635 = vmatprep.subr.bf16.mxu0 0
        %2636 = vmatpush2.bf16.msra.mxu0 0
        %2637 = vmatprep.subr.bf16.mxu0 0
        %2638 = vmatpush2.bf16.msra.mxu0 0
        %2639 = vmatprep.subr.bf16.mxu0 0
        %2640 = vmatpush2.bf16.msra.mxu0 0
        %2641 = vmatprep.subr.bf16.mxu0 0
        %2642 = vmatpush2.bf16.msra.mxu0 0
        %2643 = vmatprep.subr.bf16.mxu0 0
        %2644 = vmatpush2.bf16.msra.mxu0 0
        %2645 = vmatprep.subr.bf16.mxu0 0
        %2646 = vmatpush2.bf16.msra.mxu0 0
        %2647 = vmatprep.subr.bf16.mxu0 0
        %2648 = vmatpush2.bf16.msra.mxu0 0
        %2649 = vmatprep.mubr.bf16.mxu0 0
        %2650 = vmatmul.mubr.bf16.gmra.mxu0 %v750
        %v2651 = vpop.f32.mrf.mxu0
        %v2652 = vadd.f32 0.0, %v2651
        %v2653 = vpop.f32.mrf.mxu0
        %v2654 = vpop.f32.mrf.mxu0
        %v2655 = vpop.f32.mrf.mxu0
        %2656 = vdwg.mxu0
        %v2657 = vadd.f32 %v2599, %v2652
        %v2658 = vmax.f32 %v2657, 0.0
        %v2659 = vpack.c.bf16 %v2658, %v2658
        %v2661 = vunpack.c.l.b16 %v2659
        %v2662 = vpack.c.b16 %v2661, %v2661
        %2663 = vrot.lane.b32.xlu0 %v2662, 1
        %v2664 = vpop.permute.xlu0 %2663
        %s2666 = scalar_lea.vmem [#allocation2], 40
        %2667 = vst.msk [vmem:[%s2666] sm:$0xf] %vm805, %v2664
        %s2668 = scalar_lea.vmem %s302, 108
        %v2669 = vld [vmem:[%s2668] sm:$0xf]
        %v2670 = vld [vmem:[%s2668 + $0x4] sm:$0xf]
        %v2671 = vld [vmem:[%s2668 + $0x8] sm:$0xf]
        %v2672 = vld [vmem:[%s2668 + $0xc] sm:$0xf]
        %v2673 = vld [vmem:[%s2668 + $0x10] sm:$0xf]
        %v2674 = vld [vmem:[%s2668 + $0x14] sm:$0xf]
        %v2675 = vld [vmem:[%s2668 + $0x18] sm:$0xf]
        %v2676 = vld [vmem:[%s2668 + $0x1c] sm:$0xf]
        %v2677 = vld [vmem:[%s2668 + $0x20] sm:$0xf]
        %v2687 = vunpack.c.l.b16 %v2669
        %v2688 = vunpack.c.l.b16 %v2670
        %v2689 = vunpack.c.l.b16 %v2671
        %v2690 = vunpack.c.l.b16 %v2672
        %v2691 = vunpack.c.l.b16 %v2673
        %v2692 = vunpack.c.l.b16 %v2674
        %v2693 = vunpack.c.l.b16 %v2675
        %v2694 = vunpack.c.l.b16 %v2676
        %v2695 = vunpack.c.l.b16 %v2677
        %v2696 = vpack.c.b16 %v2688, %v2687
        %v2697 = vpack.c.b16 %v2690, %v2689
        %v2698 = vpack.c.b16 %v2692, %v2691
        %v2699 = vpack.c.b16 %v2694, %v2693
        %v2700 = vpack.c.b16 %v2695, %v2695
        %v2706 = vsel %vm620, %v2700, 0
        %2708 = vmatprep.subr.bf16.mxu0 0
        %2709 = vmatpush1.bf16.msra.mxu0 0
        %2710 = vmatprep.subr.bf16.mxu0 0
        %2711 = vmatpush1.bf16.msra.mxu0 0
        %2712 = vmatprep.subr.bf16.mxu0 0
        %2713 = vmatpush1.bf16.msra.mxu0 0
        %2714 = vmatprep.subr.bf16.mxu0 0
        %2715 = vmatpush1.bf16.msra.mxu0 %v2706
        %2716 = vmatprep.subr.bf16.mxu0 0
        %2717 = vmatpush1.bf16.msra.mxu0 %v2699
        %2718 = vmatprep.subr.bf16.mxu0 0
        %2719 = vmatpush1.bf16.msra.mxu0 %v2698
        %2720 = vmatprep.subr.bf16.mxu0 0
        %2721 = vmatpush1.bf16.msra.mxu0 %v2697
        %2722 = vmatprep.subr.bf16.mxu0 0
        %2723 = vmatpush1.bf16.msra.mxu0 %v2696
        %2724 = vmatprep.subr.bf16.mxu0 0
        %2725 = vmatpush2.bf16.msra.mxu0 0
        %2726 = vmatprep.subr.bf16.mxu0 0
        %2727 = vmatpush2.bf16.msra.mxu0 0
        %2728 = vmatprep.subr.bf16.mxu0 0
        %2729 = vmatpush2.bf16.msra.mxu0 0
        %2730 = vmatprep.subr.bf16.mxu0 0
        %2731 = vmatpush2.bf16.msra.mxu0 0
        %2732 = vmatprep.subr.bf16.mxu0 0
        %2733 = vmatpush2.bf16.msra.mxu0 0
        %2734 = vmatprep.subr.bf16.mxu0 0
        %2735 = vmatpush2.bf16.msra.mxu0 0
        %2736 = vmatprep.subr.bf16.mxu0 0
        %2737 = vmatpush2.bf16.msra.mxu0 0
        %2738 = vmatprep.subr.bf16.mxu0 0
        %2739 = vmatpush2.bf16.msra.mxu0 0
        %2740 = vmatprep.mubr.bf16.mxu0 0
        %2741 = vmatmul.mubr.bf16.gmra.mxu0 %v627
        %v2742 = vpop.f32.mrf.mxu0
        %v2743 = vadd.f32 0.0, %v2742
        %v2744 = vpop.f32.mrf.mxu0
        %v2745 = vpop.f32.mrf.mxu0
        %v2746 = vpop.f32.mrf.mxu0
        %2747 = vdwg.mxu0
        %v2748 = vadd.f32 %v324, %v2743
        %2749 = vrot.lane.b32.xlu0 %v2696, 127
        %v2750 = vpop.permute.xlu0 %2749
        %2751 = vrot.lane.b32.xlu0 %v2697, 127
        %v2752 = vpop.permute.xlu0 %2751
        %2753 = vrot.lane.b32.xlu0 %v2698, 127
        %v2754 = vpop.permute.xlu0 %2753
        %2755 = vrot.lane.b32.xlu0 %v2699, 127
        %v2756 = vpop.permute.xlu0 %2755
        %2757 = vrot.lane.b32.xlu0 %v2700, 127
        %v2758 = vpop.permute.xlu0 %2757
        %v2764 = vsel %vm620, %v2758, 0
        %2766 = vmatprep.subr.bf16.mxu0 0
        %2767 = vmatpush1.bf16.msra.mxu0 0
        %2768 = vmatprep.subr.bf16.mxu0 0
        %2769 = vmatpush1.bf16.msra.mxu0 0
        %2770 = vmatprep.subr.bf16.mxu0 0
        %2771 = vmatpush1.bf16.msra.mxu0 0
        %2772 = vmatprep.subr.bf16.mxu0 0
        %2773 = vmatpush1.bf16.msra.mxu0 %v2764
        %2774 = vmatprep.subr.bf16.mxu0 0
        %2775 = vmatpush1.bf16.msra.mxu0 %v2756
        %2776 = vmatprep.subr.bf16.mxu0 0
        %2777 = vmatpush1.bf16.msra.mxu0 %v2754
        %2778 = vmatprep.subr.bf16.mxu0 0
        %2779 = vmatpush1.bf16.msra.mxu0 %v2752
        %2780 = vmatprep.subr.bf16.mxu0 0
        %2781 = vmatpush1.bf16.msra.mxu0 %v2750
        %2782 = vmatprep.subr.bf16.mxu0 0
        %2783 = vmatpush2.bf16.msra.mxu0 0
        %2784 = vmatprep.subr.bf16.mxu0 0
        %2785 = vmatpush2.bf16.msra.mxu0 0
        %2786 = vmatprep.subr.bf16.mxu0 0
        %2787 = vmatpush2.bf16.msra.mxu0 0
        %2788 = vmatprep.subr.bf16.mxu0 0
        %2789 = vmatpush2.bf16.msra.mxu0 0
        %2790 = vmatprep.subr.bf16.mxu0 0
        %2791 = vmatpush2.bf16.msra.mxu0 0
        %2792 = vmatprep.subr.bf16.mxu0 0
        %2793 = vmatpush2.bf16.msra.mxu0 0
        %2794 = vmatprep.subr.bf16.mxu0 0
        %2795 = vmatpush2.bf16.msra.mxu0 0
        %2796 = vmatprep.subr.bf16.mxu0 0
        %2797 = vmatpush2.bf16.msra.mxu0 0
        %2798 = vmatprep.mubr.bf16.mxu0 0
        %2799 = vmatmul.mubr.bf16.gmra.mxu0 %v689
        %v2800 = vpop.f32.mrf.mxu0
        %v2801 = vadd.f32 0.0, %v2800
        %v2802 = vpop.f32.mrf.mxu0
        %v2803 = vpop.f32.mrf.mxu0
        %v2804 = vpop.f32.mrf.mxu0
        %2805 = vdwg.mxu0
        %v2806 = vadd.f32 %v2748, %v2801
        %2807 = vrot.lane.b32.xlu0 %v2696, 126
        %v2808 = vpop.permute.xlu0 %2807
        %2809 = vrot.lane.b32.xlu0 %v2697, 126
        %v2810 = vpop.permute.xlu0 %2809
        %2811 = vrot.lane.b32.xlu0 %v2698, 126
        %v2812 = vpop.permute.xlu0 %2811
        %2813 = vrot.lane.b32.xlu0 %v2699, 126
        %v2814 = vpop.permute.xlu0 %2813
        %2815 = vrot.lane.b32.xlu0 %v2700, 126
        %v2816 = vpop.permute.xlu0 %2815
        %v2822 = vsel %vm620, %v2816, 0
        %2824 = vmatprep.subr.bf16.mxu0 0
        %2825 = vmatpush1.bf16.msra.mxu0 0
        %2826 = vmatprep.subr.bf16.mxu0 0
        %2827 = vmatpush1.bf16.msra.mxu0 0
        %2828 = vmatprep.subr.bf16.mxu0 0
        %2829 = vmatpush1.bf16.msra.mxu0 0
        %2830 = vmatprep.subr.bf16.mxu0 0
        %2831 = vmatpush1.bf16.msra.mxu0 %v2822
        %2832 = vmatprep.subr.bf16.mxu0 0
        %2833 = vmatpush1.bf16.msra.mxu0 %v2814
        %2834 = vmatprep.subr.bf16.mxu0 0
        %2835 = vmatpush1.bf16.msra.mxu0 %v2812
        %2836 = vmatprep.subr.bf16.mxu0 0
        %2837 = vmatpush1.bf16.msra.mxu0 %v2810
        %2838 = vmatprep.subr.bf16.mxu0 0
        %2839 = vmatpush1.bf16.msra.mxu0 %v2808
        %2840 = vmatprep.subr.bf16.mxu0 0
        %2841 = vmatpush2.bf16.msra.mxu0 0
        %2842 = vmatprep.subr.bf16.mxu0 0
        %2843 = vmatpush2.bf16.msra.mxu0 0
        %2844 = vmatprep.subr.bf16.mxu0 0
        %2845 = vmatpush2.bf16.msra.mxu0 0
        %2846 = vmatprep.subr.bf16.mxu0 0
        %2847 = vmatpush2.bf16.msra.mxu0 0
        %2848 = vmatprep.subr.bf16.mxu0 0
        %2849 = vmatpush2.bf16.msra.mxu0 0
        %2850 = vmatprep.subr.bf16.mxu0 0
        %2851 = vmatpush2.bf16.msra.mxu0 0
        %2852 = vmatprep.subr.bf16.mxu0 0
        %2853 = vmatpush2.bf16.msra.mxu0 0
        %2854 = vmatprep.subr.bf16.mxu0 0
        %2855 = vmatpush2.bf16.msra.mxu0 0
        %2856 = vmatprep.mubr.bf16.mxu0 0
        %2857 = vmatmul.mubr.bf16.gmra.mxu0 %v750
        %v2858 = vpop.f32.mrf.mxu0
        %v2859 = vadd.f32 0.0, %v2858
        %v2860 = vpop.f32.mrf.mxu0
        %v2861 = vpop.f32.mrf.mxu0
        %v2862 = vpop.f32.mrf.mxu0
        %2863 = vdwg.mxu0
        %v2864 = vadd.f32 %v2806, %v2859
        %v2865 = vmax.f32 %v2864, 0.0
        %v2866 = vpack.c.bf16 %v2865, %v2865
        %v2868 = vunpack.c.l.b16 %v2866
        %v2869 = vpack.c.b16 %v2868, %v2868
        %2870 = vrot.lane.b32.xlu0 %v2869, 1
        %v2871 = vpop.permute.xlu0 %2870
        %s2873 = scalar_lea.vmem [#allocation2], 44
        %2874 = vst.msk [vmem:[%s2873] sm:$0xf] %vm805, %v2871
        %s2875 = scalar_lea.vmem %s302, 120
        %v2876 = vld [vmem:[%s2875] sm:$0xf]
        %v2877 = vld [vmem:[%s2875 + $0x4] sm:$0xf]
        %v2878 = vld [vmem:[%s2875 + $0x8] sm:$0xf]
        %v2879 = vld [vmem:[%s2875 + $0xc] sm:$0xf]
        %v2880 = vld [vmem:[%s2875 + $0x10] sm:$0xf]
        %v2881 = vld [vmem:[%s2875 + $0x14] sm:$0xf]
        %v2882 = vld [vmem:[%s2875 + $0x18] sm:$0xf]
        %v2883 = vld [vmem:[%s2875 + $0x1c] sm:$0xf]
        %v2884 = vld [vmem:[%s2875 + $0x20] sm:$0xf]
        %v2894 = vunpack.c.l.b16 %v2876
        %v2895 = vunpack.c.l.b16 %v2877
        %v2896 = vunpack.c.l.b16 %v2878
        %v2897 = vunpack.c.l.b16 %v2879
        %v2898 = vunpack.c.l.b16 %v2880
        %v2899 = vunpack.c.l.b16 %v2881
        %v2900 = vunpack.c.l.b16 %v2882
        %v2901 = vunpack.c.l.b16 %v2883
        %v2902 = vunpack.c.l.b16 %v2884
        %v2903 = vpack.c.b16 %v2895, %v2894
        %v2904 = vpack.c.b16 %v2897, %v2896
        %v2905 = vpack.c.b16 %v2899, %v2898
        %v2906 = vpack.c.b16 %v2901, %v2900
        %v2907 = vpack.c.b16 %v2902, %v2902
        %v2913 = vsel %vm620, %v2907, 0
        %2915 = vmatprep.subr.bf16.mxu0 0
        %2916 = vmatpush1.bf16.msra.mxu0 0
        %2917 = vmatprep.subr.bf16.mxu0 0
        %2918 = vmatpush1.bf16.msra.mxu0 0
        %2919 = vmatprep.subr.bf16.mxu0 0
        %2920 = vmatpush1.bf16.msra.mxu0 0
        %2921 = vmatprep.subr.bf16.mxu0 0
        %2922 = vmatpush1.bf16.msra.mxu0 %v2913
        %2923 = vmatprep.subr.bf16.mxu0 0
        %2924 = vmatpush1.bf16.msra.mxu0 %v2906
        %2925 = vmatprep.subr.bf16.mxu0 0
        %2926 = vmatpush1.bf16.msra.mxu0 %v2905
        %2927 = vmatprep.subr.bf16.mxu0 0
        %2928 = vmatpush1.bf16.msra.mxu0 %v2904
        %2929 = vmatprep.subr.bf16.mxu0 0
        %2930 = vmatpush1.bf16.msra.mxu0 %v2903
        %2931 = vmatprep.subr.bf16.mxu0 0
        %2932 = vmatpush2.bf16.msra.mxu0 0
        %2933 = vmatprep.subr.bf16.mxu0 0
        %2934 = vmatpush2.bf16.msra.mxu0 0
        %2935 = vmatprep.subr.bf16.mxu0 0
        %2936 = vmatpush2.bf16.msra.mxu0 0
        %2937 = vmatprep.subr.bf16.mxu0 0
        %2938 = vmatpush2.bf16.msra.mxu0 0
        %2939 = vmatprep.subr.bf16.mxu0 0
        %2940 = vmatpush2.bf16.msra.mxu0 0
        %2941 = vmatprep.subr.bf16.mxu0 0
        %2942 = vmatpush2.bf16.msra.mxu0 0
        %2943 = vmatprep.subr.bf16.mxu0 0
        %2944 = vmatpush2.bf16.msra.mxu0 0
        %2945 = vmatprep.subr.bf16.mxu0 0
        %2946 = vmatpush2.bf16.msra.mxu0 0
        %2947 = vmatprep.mubr.bf16.mxu0 0
        %2948 = vmatmul.mubr.bf16.gmra.mxu0 %v627
        %v2949 = vpop.f32.mrf.mxu0
        %v2950 = vadd.f32 0.0, %v2949
        %v2951 = vpop.f32.mrf.mxu0
        %v2952 = vpop.f32.mrf.mxu0
        %v2953 = vpop.f32.mrf.mxu0
        %2954 = vdwg.mxu0
        %v2955 = vadd.f32 %v324, %v2950
        %2956 = vrot.lane.b32.xlu0 %v2903, 127
        %v2957 = vpop.permute.xlu0 %2956
        %2958 = vrot.lane.b32.xlu0 %v2904, 127
        %v2959 = vpop.permute.xlu0 %2958
        %2960 = vrot.lane.b32.xlu0 %v2905, 127
        %v2961 = vpop.permute.xlu0 %2960
        %2962 = vrot.lane.b32.xlu0 %v2906, 127
        %v2963 = vpop.permute.xlu0 %2962
        %2964 = vrot.lane.b32.xlu0 %v2907, 127
        %v2965 = vpop.permute.xlu0 %2964
        %v2971 = vsel %vm620, %v2965, 0
        %2973 = vmatprep.subr.bf16.mxu0 0
        %2974 = vmatpush1.bf16.msra.mxu0 0
        %2975 = vmatprep.subr.bf16.mxu0 0
        %2976 = vmatpush1.bf16.msra.mxu0 0
        %2977 = vmatprep.subr.bf16.mxu0 0
        %2978 = vmatpush1.bf16.msra.mxu0 0
        %2979 = vmatprep.subr.bf16.mxu0 0
        %2980 = vmatpush1.bf16.msra.mxu0 %v2971
        %2981 = vmatprep.subr.bf16.mxu0 0
        %2982 = vmatpush1.bf16.msra.mxu0 %v2963
        %2983 = vmatprep.subr.bf16.mxu0 0
        %2984 = vmatpush1.bf16.msra.mxu0 %v2961
        %2985 = vmatprep.subr.bf16.mxu0 0
        %2986 = vmatpush1.bf16.msra.mxu0 %v2959
        %2987 = vmatprep.subr.bf16.mxu0 0
        %2988 = vmatpush1.bf16.msra.mxu0 %v2957
        %2989 = vmatprep.subr.bf16.mxu0 0
        %2990 = vmatpush2.bf16.msra.mxu0 0
        %2991 = vmatprep.subr.bf16.mxu0 0
        %2992 = vmatpush2.bf16.msra.mxu0 0
        %2993 = vmatprep.subr.bf16.mxu0 0
        %2994 = vmatpush2.bf16.msra.mxu0 0
        %2995 = vmatprep.subr.bf16.mxu0 0
        %2996 = vmatpush2.bf16.msra.mxu0 0
        %2997 = vmatprep.subr.bf16.mxu0 0
        %2998 = vmatpush2.bf16.msra.mxu0 0
        %2999 = vmatprep.subr.bf16.mxu0 0
        %3000 = vmatpush2.bf16.msra.mxu0 0
        %3001 = vmatprep.subr.bf16.mxu0 0
        %3002 = vmatpush2.bf16.msra.mxu0 0
        %3003 = vmatprep.subr.bf16.mxu0 0
        %3004 = vmatpush2.bf16.msra.mxu0 0
        %3005 = vmatprep.mubr.bf16.mxu0 0
        %3006 = vmatmul.mubr.bf16.gmra.mxu0 %v689
        %v3007 = vpop.f32.mrf.mxu0
        %v3008 = vadd.f32 0.0, %v3007
        %v3009 = vpop.f32.mrf.mxu0
        %v3010 = vpop.f32.mrf.mxu0
        %v3011 = vpop.f32.mrf.mxu0
        %3012 = vdwg.mxu0
        %v3013 = vadd.f32 %v2955, %v3008
        %3014 = vrot.lane.b32.xlu0 %v2903, 126
        %v3015 = vpop.permute.xlu0 %3014
        %3016 = vrot.lane.b32.xlu0 %v2904, 126
        %v3017 = vpop.permute.xlu0 %3016
        %3018 = vrot.lane.b32.xlu0 %v2905, 126
        %v3019 = vpop.permute.xlu0 %3018
        %3020 = vrot.lane.b32.xlu0 %v2906, 126
        %v3021 = vpop.permute.xlu0 %3020
        %3022 = vrot.lane.b32.xlu0 %v2907, 126
        %v3023 = vpop.permute.xlu0 %3022
        %v3029 = vsel %vm620, %v3023, 0
        %3031 = vmatprep.subr.bf16.mxu0 0
        %3032 = vmatpush1.bf16.msra.mxu0 0
        %3033 = vmatprep.subr.bf16.mxu0 0
        %3034 = vmatpush1.bf16.msra.mxu0 0
        %3035 = vmatprep.subr.bf16.mxu0 0
        %3036 = vmatpush1.bf16.msra.mxu0 0
        %3037 = vmatprep.subr.bf16.mxu0 0
        %3038 = vmatpush1.bf16.msra.mxu0 %v3029
        %3039 = vmatprep.subr.bf16.mxu0 0
        %3040 = vmatpush1.bf16.msra.mxu0 %v3021
        %3041 = vmatprep.subr.bf16.mxu0 0
        %3042 = vmatpush1.bf16.msra.mxu0 %v3019
        %3043 = vmatprep.subr.bf16.mxu0 0
        %3044 = vmatpush1.bf16.msra.mxu0 %v3017
        %3045 = vmatprep.subr.bf16.mxu0 0
        %3046 = vmatpush1.bf16.msra.mxu0 %v3015
        %3047 = vmatprep.subr.bf16.mxu0 0
        %3048 = vmatpush2.bf16.msra.mxu0 0
        %3049 = vmatprep.subr.bf16.mxu0 0
        %3050 = vmatpush2.bf16.msra.mxu0 0
        %3051 = vmatprep.subr.bf16.mxu0 0
        %3052 = vmatpush2.bf16.msra.mxu0 0
        %3053 = vmatprep.subr.bf16.mxu0 0
        %3054 = vmatpush2.bf16.msra.mxu0 0
        %3055 = vmatprep.subr.bf16.mxu0 0
        %3056 = vmatpush2.bf16.msra.mxu0 0
        %3057 = vmatprep.subr.bf16.mxu0 0
        %3058 = vmatpush2.bf16.msra.mxu0 0
        %3059 = vmatprep.subr.bf16.mxu0 0
        %3060 = vmatpush2.bf16.msra.mxu0 0
        %3061 = vmatprep.subr.bf16.mxu0 0
        %3062 = vmatpush2.bf16.msra.mxu0 0
        %3063 = vmatprep.mubr.bf16.mxu0 0
        %3064 = vmatmul.mubr.bf16.gmra.mxu0 %v750
        %v3065 = vpop.f32.mrf.mxu0
        %v3066 = vadd.f32 0.0, %v3065
        %v3067 = vpop.f32.mrf.mxu0
        %v3068 = vpop.f32.mrf.mxu0
        %v3069 = vpop.f32.mrf.mxu0
        %3070 = vdwg.mxu0
        %v3071 = vadd.f32 %v3013, %v3066
        %v3072 = vmax.f32 %v3071, 0.0
        %v3073 = vpack.c.bf16 %v3072, %v3072
        %v3075 = vunpack.c.l.b16 %v3073
        %v3076 = vpack.c.b16 %v3075, %v3075
        %3077 = vrot.lane.b32.xlu0 %v3076, 1
        %v3078 = vpop.permute.xlu0 %3077
        %s3080 = scalar_lea.vmem [#allocation2], 48
        %3081 = vst.msk [vmem:[%s3080] sm:$0xf] %vm805, %v3078
        %s3082 = scalar_lea.vmem %s302, 132
        %v3083 = vld [vmem:[%s3082] sm:$0xf]
        %v3084 = vld [vmem:[%s3082 + $0x4] sm:$0xf]
        %v3085 = vld [vmem:[%s3082 + $0x8] sm:$0xf]
        %v3086 = vld [vmem:[%s3082 + $0xc] sm:$0xf]
        %v3087 = vld [vmem:[%s3082 + $0x10] sm:$0xf]
        %v3088 = vld [vmem:[%s3082 + $0x14] sm:$0xf]
        %v3089 = vld [vmem:[%s3082 + $0x18] sm:$0xf]
        %v3090 = vld [vmem:[%s3082 + $0x1c] sm:$0xf]
        %v3091 = vld [vmem:[%s3082 + $0x20] sm:$0xf]
        %v3101 = vunpack.c.l.b16 %v3083
        %v3102 = vunpack.c.l.b16 %v3084
        %v3103 = vunpack.c.l.b16 %v3085
        %v3104 = vunpack.c.l.b16 %v3086
        %v3105 = vunpack.c.l.b16 %v3087
        %v3106 = vunpack.c.l.b16 %v3088
        %v3107 = vunpack.c.l.b16 %v3089
        %v3108 = vunpack.c.l.b16 %v3090
        %v3109 = vunpack.c.l.b16 %v3091
        %v3110 = vpack.c.b16 %v3102, %v3101
        %v3111 = vpack.c.b16 %v3104, %v3103
        %v3112 = vpack.c.b16 %v3106, %v3105
        %v3113 = vpack.c.b16 %v3108, %v3107
        %v3114 = vpack.c.b16 %v3109, %v3109
        %v3120 = vsel %vm620, %v3114, 0
        %3122 = vmatprep.subr.bf16.mxu0 0
        %3123 = vmatpush1.bf16.msra.mxu0 0
        %3124 = vmatprep.subr.bf16.mxu0 0
        %3125 = vmatpush1.bf16.msra.mxu0 0
        %3126 = vmatprep.subr.bf16.mxu0 0
        %3127 = vmatpush1.bf16.msra.mxu0 0
        %3128 = vmatprep.subr.bf16.mxu0 0
        %3129 = vmatpush1.bf16.msra.mxu0 %v3120
        %3130 = vmatprep.subr.bf16.mxu0 0
        %3131 = vmatpush1.bf16.msra.mxu0 %v3113
        %3132 = vmatprep.subr.bf16.mxu0 0
        %3133 = vmatpush1.bf16.msra.mxu0 %v3112
        %3134 = vmatprep.subr.bf16.mxu0 0
        %3135 = vmatpush1.bf16.msra.mxu0 %v3111
        %3136 = vmatprep.subr.bf16.mxu0 0
        %3137 = vmatpush1.bf16.msra.mxu0 %v3110
        %3138 = vmatprep.subr.bf16.mxu0 0
        %3139 = vmatpush2.bf16.msra.mxu0 0
        %3140 = vmatprep.subr.bf16.mxu0 0
        %3141 = vmatpush2.bf16.msra.mxu0 0
        %3142 = vmatprep.subr.bf16.mxu0 0
        %3143 = vmatpush2.bf16.msra.mxu0 0
        %3144 = vmatprep.subr.bf16.mxu0 0
        %3145 = vmatpush2.bf16.msra.mxu0 0
        %3146 = vmatprep.subr.bf16.mxu0 0
        %3147 = vmatpush2.bf16.msra.mxu0 0
        %3148 = vmatprep.subr.bf16.mxu0 0
        %3149 = vmatpush2.bf16.msra.mxu0 0
        %3150 = vmatprep.subr.bf16.mxu0 0
        %3151 = vmatpush2.bf16.msra.mxu0 0
        %3152 = vmatprep.subr.bf16.mxu0 0
        %3153 = vmatpush2.bf16.msra.mxu0 0
        %3154 = vmatprep.mubr.bf16.mxu0 0
        %3155 = vmatmul.mubr.bf16.gmra.mxu0 %v627
        %v3156 = vpop.f32.mrf.mxu0
        %v3157 = vadd.f32 0.0, %v3156
        %v3158 = vpop.f32.mrf.mxu0
        %v3159 = vpop.f32.mrf.mxu0
        %v3160 = vpop.f32.mrf.mxu0
        %3161 = vdwg.mxu0
        %v3162 = vadd.f32 %v324, %v3157
        %3163 = vrot.lane.b32.xlu0 %v3110, 127
        %v3164 = vpop.permute.xlu0 %3163
        %3165 = vrot.lane.b32.xlu0 %v3111, 127
        %v3166 = vpop.permute.xlu0 %3165
        %3167 = vrot.lane.b32.xlu0 %v3112, 127
        %v3168 = vpop.permute.xlu0 %3167
        %3169 = vrot.lane.b32.xlu0 %v3113, 127
        %v3170 = vpop.permute.xlu0 %3169
        %3171 = vrot.lane.b32.xlu0 %v3114, 127
        %v3172 = vpop.permute.xlu0 %3171
        %v3178 = vsel %vm620, %v3172, 0
        %3180 = vmatprep.subr.bf16.mxu0 0
        %3181 = vmatpush1.bf16.msra.mxu0 0
        %3182 = vmatprep.subr.bf16.mxu0 0
        %3183 = vmatpush1.bf16.msra.mxu0 0
        %3184 = vmatprep.subr.bf16.mxu0 0
        %3185 = vmatpush1.bf16.msra.mxu0 0
        %3186 = vmatprep.subr.bf16.mxu0 0
        %3187 = vmatpush1.bf16.msra.mxu0 %v3178
        %3188 = vmatprep.subr.bf16.mxu0 0
        %3189 = vmatpush1.bf16.msra.mxu0 %v3170
        %3190 = vmatprep.subr.bf16.mxu0 0
        %3191 = vmatpush1.bf16.msra.mxu0 %v3168
        %3192 = vmatprep.subr.bf16.mxu0 0
        %3193 = vmatpush1.bf16.msra.mxu0 %v3166
        %3194 = vmatprep.subr.bf16.mxu0 0
        %3195 = vmatpush1.bf16.msra.mxu0 %v3164
        %3196 = vmatprep.subr.bf16.mxu0 0
        %3197 = vmatpush2.bf16.msra.mxu0 0
        %3198 = vmatprep.subr.bf16.mxu0 0
        %3199 = vmatpush2.bf16.msra.mxu0 0
        %3200 = vmatprep.subr.bf16.mxu0 0
        %3201 = vmatpush2.bf16.msra.mxu0 0
        %3202 = vmatprep.subr.bf16.mxu0 0
        %3203 = vmatpush2.bf16.msra.mxu0 0
        %3204 = vmatprep.subr.bf16.mxu0 0
        %3205 = vmatpush2.bf16.msra.mxu0 0
        %3206 = vmatprep.subr.bf16.mxu0 0
        %3207 = vmatpush2.bf16.msra.mxu0 0
        %3208 = vmatprep.subr.bf16.mxu0 0
        %3209 = vmatpush2.bf16.msra.mxu0 0
        %3210 = vmatprep.subr.bf16.mxu0 0
        %3211 = vmatpush2.bf16.msra.mxu0 0
        %3212 = vmatprep.mubr.bf16.mxu0 0
        %3213 = vmatmul.mubr.bf16.gmra.mxu0 %v689
        %v3214 = vpop.f32.mrf.mxu0
        %v3215 = vadd.f32 0.0, %v3214
        %v3216 = vpop.f32.mrf.mxu0
        %v3217 = vpop.f32.mrf.mxu0
        %v3218 = vpop.f32.mrf.mxu0
        %3219 = vdwg.mxu0
        %v3220 = vadd.f32 %v3162, %v3215
        %3221 = vrot.lane.b32.xlu0 %v3110, 126
        %v3222 = vpop.permute.xlu0 %3221
        %3223 = vrot.lane.b32.xlu0 %v3111, 126
        %v3224 = vpop.permute.xlu0 %3223
        %3225 = vrot.lane.b32.xlu0 %v3112, 126
        %v3226 = vpop.permute.xlu0 %3225
        %3227 = vrot.lane.b32.xlu0 %v3113, 126
        %v3228 = vpop.permute.xlu0 %3227
        %3229 = vrot.lane.b32.xlu0 %v3114, 126
        %v3230 = vpop.permute.xlu0 %3229
        %v3236 = vsel %vm620, %v3230, 0
        %3238 = vmatprep.subr.bf16.mxu0 0
        %3239 = vmatpush1.bf16.msra.mxu0 0
        %3240 = vmatprep.subr.bf16.mxu0 0
        %3241 = vmatpush1.bf16.msra.mxu0 0
        %3242 = vmatprep.subr.bf16.mxu0 0
        %3243 = vmatpush1.bf16.msra.mxu0 0
        %3244 = vmatprep.subr.bf16.mxu0 0
        %3245 = vmatpush1.bf16.msra.mxu0 %v3236
        %3246 = vmatprep.subr.bf16.mxu0 0
        %3247 = vmatpush1.bf16.msra.mxu0 %v3228
        %3248 = vmatprep.subr.bf16.mxu0 0
        %3249 = vmatpush1.bf16.msra.mxu0 %v3226
        %3250 = vmatprep.subr.bf16.mxu0 0
        %3251 = vmatpush1.bf16.msra.mxu0 %v3224
        %3252 = vmatprep.subr.bf16.mxu0 0
        %3253 = vmatpush1.bf16.msra.mxu0 %v3222
        %3254 = vmatprep.subr.bf16.mxu0 0
        %3255 = vmatpush2.bf16.msra.mxu0 0
        %3256 = vmatprep.subr.bf16.mxu0 0
        %3257 = vmatpush2.bf16.msra.mxu0 0
        %3258 = vmatprep.subr.bf16.mxu0 0
        %3259 = vmatpush2.bf16.msra.mxu0 0
        %3260 = vmatprep.subr.bf16.mxu0 0
        %3261 = vmatpush2.bf16.msra.mxu0 0
        %3262 = vmatprep.subr.bf16.mxu0 0
        %3263 = vmatpush2.bf16.msra.mxu0 0
        %3264 = vmatprep.subr.bf16.mxu0 0
        %3265 = vmatpush2.bf16.msra.mxu0 0
        %3266 = vmatprep.subr.bf16.mxu0 0
        %3267 = vmatpush2.bf16.msra.mxu0 0
        %3268 = vmatprep.subr.bf16.mxu0 0
        %3269 = vmatpush2.bf16.msra.mxu0 0
        %3270 = vmatprep.mubr.bf16.mxu0 0
        %3271 = vmatmul.mubr.bf16.gmra.mxu0 %v750
        %v3272 = vpop.f32.mrf.mxu0
        %v3273 = vadd.f32 0.0, %v3272
        %v3274 = vpop.f32.mrf.mxu0
        %v3275 = vpop.f32.mrf.mxu0
        %v3276 = vpop.f32.mrf.mxu0
        %3277 = vdwg.mxu0
        %v3278 = vadd.f32 %v3220, %v3273
        %v3279 = vmax.f32 %v3278, 0.0
        %v3280 = vpack.c.bf16 %v3279, %v3279
        %v3282 = vunpack.c.l.b16 %v3280
        %v3283 = vpack.c.b16 %v3282, %v3282
        %3284 = vrot.lane.b32.xlu0 %v3283, 1
        %v3285 = vpop.permute.xlu0 %3284
        %s3287 = scalar_lea.vmem [#allocation2], 52
        %3288 = vst.msk [vmem:[%s3287] sm:$0xf] %vm805, %v3285
        %s3289 = scalar_lea.vmem %s302, 144
        %v3290 = vld [vmem:[%s3289] sm:$0xf]
        %v3291 = vld [vmem:[%s3289 + $0x4] sm:$0xf]
        %v3292 = vld [vmem:[%s3289 + $0x8] sm:$0xf]
        %v3293 = vld [vmem:[%s3289 + $0xc] sm:$0xf]
        %v3294 = vld [vmem:[%s3289 + $0x10] sm:$0xf]
        %v3295 = vld [vmem:[%s3289 + $0x14] sm:$0xf]
        %v3296 = vld [vmem:[%s3289 + $0x18] sm:$0xf]
        %v3297 = vld [vmem:[%s3289 + $0x1c] sm:$0xf]
        %v3298 = vld [vmem:[%s3289 + $0x20] sm:$0xf]
        %v3308 = vunpack.c.l.b16 %v3290
        %v3309 = vunpack.c.l.b16 %v3291
        %v3310 = vunpack.c.l.b16 %v3292
        %v3311 = vunpack.c.l.b16 %v3293
        %v3312 = vunpack.c.l.b16 %v3294
        %v3313 = vunpack.c.l.b16 %v3295
        %v3314 = vunpack.c.l.b16 %v3296
        %v3315 = vunpack.c.l.b16 %v3297
        %v3316 = vunpack.c.l.b16 %v3298
        %v3317 = vpack.c.b16 %v3309, %v3308
        %v3318 = vpack.c.b16 %v3311, %v3310
        %v3319 = vpack.c.b16 %v3313, %v3312
        %v3320 = vpack.c.b16 %v3315, %v3314
        %v3321 = vpack.c.b16 %v3316, %v3316
        %v3327 = vsel %vm620, %v3321, 0
        %3329 = vmatprep.subr.bf16.mxu0 0
        %3330 = vmatpush1.bf16.msra.mxu0 0
        %3331 = vmatprep.subr.bf16.mxu0 0
        %3332 = vmatpush1.bf16.msra.mxu0 0
        %3333 = vmatprep.subr.bf16.mxu0 0
        %3334 = vmatpush1.bf16.msra.mxu0 0
        %3335 = vmatprep.subr.bf16.mxu0 0
        %3336 = vmatpush1.bf16.msra.mxu0 %v3327
        %3337 = vmatprep.subr.bf16.mxu0 0
        %3338 = vmatpush1.bf16.msra.mxu0 %v3320
        %3339 = vmatprep.subr.bf16.mxu0 0
        %3340 = vmatpush1.bf16.msra.mxu0 %v3319
        %3341 = vmatprep.subr.bf16.mxu0 0
        %3342 = vmatpush1.bf16.msra.mxu0 %v3318
        %3343 = vmatprep.subr.bf16.mxu0 0
        %3344 = vmatpush1.bf16.msra.mxu0 %v3317
        %3345 = vmatprep.subr.bf16.mxu0 0
        %3346 = vmatpush2.bf16.msra.mxu0 0
        %3347 = vmatprep.subr.bf16.mxu0 0
        %3348 = vmatpush2.bf16.msra.mxu0 0
        %3349 = vmatprep.subr.bf16.mxu0 0
        %3350 = vmatpush2.bf16.msra.mxu0 0
        %3351 = vmatprep.subr.bf16.mxu0 0
        %3352 = vmatpush2.bf16.msra.mxu0 0
        %3353 = vmatprep.subr.bf16.mxu0 0
        %3354 = vmatpush2.bf16.msra.mxu0 0
        %3355 = vmatprep.subr.bf16.mxu0 0
        %3356 = vmatpush2.bf16.msra.mxu0 0
        %3357 = vmatprep.subr.bf16.mxu0 0
        %3358 = vmatpush2.bf16.msra.mxu0 0
        %3359 = vmatprep.subr.bf16.mxu0 0
        %3360 = vmatpush2.bf16.msra.mxu0 0
        %3361 = vmatprep.mubr.bf16.mxu0 0
        %3362 = vmatmul.mubr.bf16.gmra.mxu0 %v627
        %v3363 = vpop.f32.mrf.mxu0
        %v3364 = vadd.f32 0.0, %v3363
        %v3365 = vpop.f32.mrf.mxu0
        %v3366 = vpop.f32.mrf.mxu0
        %v3367 = vpop.f32.mrf.mxu0
        %3368 = vdwg.mxu0
        %v3369 = vadd.f32 %v324, %v3364
        %3370 = vrot.lane.b32.xlu0 %v3317, 127
        %v3371 = vpop.permute.xlu0 %3370
        %3372 = vrot.lane.b32.xlu0 %v3318, 127
        %v3373 = vpop.permute.xlu0 %3372
        %3374 = vrot.lane.b32.xlu0 %v3319, 127
        %v3375 = vpop.permute.xlu0 %3374
        %3376 = vrot.lane.b32.xlu0 %v3320, 127
        %v3377 = vpop.permute.xlu0 %3376
        %3378 = vrot.lane.b32.xlu0 %v3321, 127
        %v3379 = vpop.permute.xlu0 %3378
        %v3385 = vsel %vm620, %v3379, 0
        %3387 = vmatprep.subr.bf16.mxu0 0
        %3388 = vmatpush1.bf16.msra.mxu0 0
        %3389 = vmatprep.subr.bf16.mxu0 0
        %3390 = vmatpush1.bf16.msra.mxu0 0
        %3391 = vmatprep.subr.bf16.mxu0 0
        %3392 = vmatpush1.bf16.msra.mxu0 0
        %3393 = vmatprep.subr.bf16.mxu0 0
        %3394 = vmatpush1.bf16.msra.mxu0 %v3385
        %3395 = vmatprep.subr.bf16.mxu0 0
        %3396 = vmatpush1.bf16.msra.mxu0 %v3377
        %3397 = vmatprep.subr.bf16.mxu0 0
        %3398 = vmatpush1.bf16.msra.mxu0 %v3375
        %3399 = vmatprep.subr.bf16.mxu0 0
        %3400 = vmatpush1.bf16.msra.mxu0 %v3373
        %3401 = vmatprep.subr.bf16.mxu0 0
        %3402 = vmatpush1.bf16.msra.mxu0 %v3371
        %3403 = vmatprep.subr.bf16.mxu0 0
        %3404 = vmatpush2.bf16.msra.mxu0 0
        %3405 = vmatprep.subr.bf16.mxu0 0
        %3406 = vmatpush2.bf16.msra.mxu0 0
        %3407 = vmatprep.subr.bf16.mxu0 0
        %3408 = vmatpush2.bf16.msra.mxu0 0
        %3409 = vmatprep.subr.bf16.mxu0 0
        %3410 = vmatpush2.bf16.msra.mxu0 0
        %3411 = vmatprep.subr.bf16.mxu0 0
        %3412 = vmatpush2.bf16.msra.mxu0 0
        %3413 = vmatprep.subr.bf16.mxu0 0
        %3414 = vmatpush2.bf16.msra.mxu0 0
        %3415 = vmatprep.subr.bf16.mxu0 0
        %3416 = vmatpush2.bf16.msra.mxu0 0
        %3417 = vmatprep.subr.bf16.mxu0 0
        %3418 = vmatpush2.bf16.msra.mxu0 0
        %3419 = vmatprep.mubr.bf16.mxu0 0
        %3420 = vmatmul.mubr.bf16.gmra.mxu0 %v689
        %v3421 = vpop.f32.mrf.mxu0
        %v3422 = vadd.f32 0.0, %v3421
        %v3423 = vpop.f32.mrf.mxu0
        %v3424 = vpop.f32.mrf.mxu0
        %v3425 = vpop.f32.mrf.mxu0
        %3426 = vdwg.mxu0
        %v3427 = vadd.f32 %v3369, %v3422
        %3428 = vrot.lane.b32.xlu0 %v3317, 126
        %v3429 = vpop.permute.xlu0 %3428
        %3430 = vrot.lane.b32.xlu0 %v3318, 126
        %v3431 = vpop.permute.xlu0 %3430
        %3432 = vrot.lane.b32.xlu0 %v3319, 126
        %v3433 = vpop.permute.xlu0 %3432
        %3434 = vrot.lane.b32.xlu0 %v3320, 126
        %v3435 = vpop.permute.xlu0 %3434
        %3436 = vrot.lane.b32.xlu0 %v3321, 126
        %v3437 = vpop.permute.xlu0 %3436
        %v3443 = vsel %vm620, %v3437, 0
        %3445 = vmatprep.subr.bf16.mxu0 0
        %3446 = vmatpush1.bf16.msra.mxu0 0
        %3447 = vmatprep.subr.bf16.mxu0 0
        %3448 = vmatpush1.bf16.msra.mxu0 0
        %3449 = vmatprep.subr.bf16.mxu0 0
        %3450 = vmatpush1.bf16.msra.mxu0 0
        %3451 = vmatprep.subr.bf16.mxu0 0
        %3452 = vmatpush1.bf16.msra.mxu0 %v3443
        %3453 = vmatprep.subr.bf16.mxu0 0
        %3454 = vmatpush1.bf16.msra.mxu0 %v3435
        %3455 = vmatprep.subr.bf16.mxu0 0
        %3456 = vmatpush1.bf16.msra.mxu0 %v3433
        %3457 = vmatprep.subr.bf16.mxu0 0
        %3458 = vmatpush1.bf16.msra.mxu0 %v3431
        %3459 = vmatprep.subr.bf16.mxu0 0
        %3460 = vmatpush1.bf16.msra.mxu0 %v3429
        %3461 = vmatprep.subr.bf16.mxu0 0
        %3462 = vmatpush2.bf16.msra.mxu0 0
        %3463 = vmatprep.subr.bf16.mxu0 0
        %3464 = vmatpush2.bf16.msra.mxu0 0
        %3465 = vmatprep.subr.bf16.mxu0 0
        %3466 = vmatpush2.bf16.msra.mxu0 0
        %3467 = vmatprep.subr.bf16.mxu0 0
        %3468 = vmatpush2.bf16.msra.mxu0 0
        %3469 = vmatprep.subr.bf16.mxu0 0
        %3470 = vmatpush2.bf16.msra.mxu0 0
        %3471 = vmatprep.subr.bf16.mxu0 0
        %3472 = vmatpush2.bf16.msra.mxu0 0
        %3473 = vmatprep.subr.bf16.mxu0 0
        %3474 = vmatpush2.bf16.msra.mxu0 0
        %3475 = vmatprep.subr.bf16.mxu0 0
        %3476 = vmatpush2.bf16.msra.mxu0 0
        %3477 = vmatprep.mubr.bf16.mxu0 0
        %3478 = vmatmul.mubr.bf16.gmra.mxu0 %v750
        %v3479 = vpop.f32.mrf.mxu0
        %v3480 = vadd.f32 0.0, %v3479
        %v3481 = vpop.f32.mrf.mxu0
        %v3482 = vpop.f32.mrf.mxu0
        %v3483 = vpop.f32.mrf.mxu0
        %3484 = vdwg.mxu0
        %v3485 = vadd.f32 %v3427, %v3480
        %v3486 = vmax.f32 %v3485, 0.0
        %v3487 = vpack.c.bf16 %v3486, %v3486
        %v3489 = vunpack.c.l.b16 %v3487
        %v3490 = vpack.c.b16 %v3489, %v3489
        %3491 = vrot.lane.b32.xlu0 %v3490, 1
        %v3492 = vpop.permute.xlu0 %3491
        %s3494 = scalar_lea.vmem [#allocation2], 56
        %3495 = vst.msk [vmem:[%s3494] sm:$0xf] %vm805, %v3492
        %s3496 = scalar_lea.vmem %s302, 156
        %v3497 = vld [vmem:[%s3496] sm:$0xf]
        %v3498 = vld [vmem:[%s3496 + $0x4] sm:$0xf]
        %v3499 = vld [vmem:[%s3496 + $0x8] sm:$0xf]
        %v3500 = vld [vmem:[%s3496 + $0xc] sm:$0xf]
        %v3501 = vld [vmem:[%s3496 + $0x10] sm:$0xf]
        %v3502 = vld [vmem:[%s3496 + $0x14] sm:$0xf]
        %v3503 = vld [vmem:[%s3496 + $0x18] sm:$0xf]
        %v3504 = vld [vmem:[%s3496 + $0x1c] sm:$0xf]
        %v3505 = vld [vmem:[%s3496 + $0x20] sm:$0xf]
        %v3515 = vunpack.c.l.b16 %v3497
        %v3516 = vunpack.c.l.b16 %v3498
        %v3517 = vunpack.c.l.b16 %v3499
        %v3518 = vunpack.c.l.b16 %v3500
        %v3519 = vunpack.c.l.b16 %v3501
        %v3520 = vunpack.c.l.b16 %v3502
        %v3521 = vunpack.c.l.b16 %v3503
        %v3522 = vunpack.c.l.b16 %v3504
        %v3523 = vunpack.c.l.b16 %v3505
        %v3524 = vpack.c.b16 %v3516, %v3515
        %v3525 = vpack.c.b16 %v3518, %v3517
        %v3526 = vpack.c.b16 %v3520, %v3519
        %v3527 = vpack.c.b16 %v3522, %v3521
        %v3528 = vpack.c.b16 %v3523, %v3523
        %v3534 = vsel %vm620, %v3528, 0
        %3536 = vmatprep.subr.bf16.mxu0 0
        %3537 = vmatpush1.bf16.msra.mxu0 0
        %3538 = vmatprep.subr.bf16.mxu0 0
        %3539 = vmatpush1.bf16.msra.mxu0 0
        %3540 = vmatprep.subr.bf16.mxu0 0
        %3541 = vmatpush1.bf16.msra.mxu0 0
        %3542 = vmatprep.subr.bf16.mxu0 0
        %3543 = vmatpush1.bf16.msra.mxu0 %v3534
        %3544 = vmatprep.subr.bf16.mxu0 0
        %3545 = vmatpush1.bf16.msra.mxu0 %v3527
        %3546 = vmatprep.subr.bf16.mxu0 0
        %3547 = vmatpush1.bf16.msra.mxu0 %v3526
        %3548 = vmatprep.subr.bf16.mxu0 0
        %3549 = vmatpush1.bf16.msra.mxu0 %v3525
        %3550 = vmatprep.subr.bf16.mxu0 0
        %3551 = vmatpush1.bf16.msra.mxu0 %v3524
        %3552 = vmatprep.subr.bf16.mxu0 0
        %3553 = vmatpush2.bf16.msra.mxu0 0
        %3554 = vmatprep.subr.bf16.mxu0 0
        %3555 = vmatpush2.bf16.msra.mxu0 0
        %3556 = vmatprep.subr.bf16.mxu0 0
        %3557 = vmatpush2.bf16.msra.mxu0 0
        %3558 = vmatprep.subr.bf16.mxu0 0
        %3559 = vmatpush2.bf16.msra.mxu0 0
        %3560 = vmatprep.subr.bf16.mxu0 0
        %3561 = vmatpush2.bf16.msra.mxu0 0
        %3562 = vmatprep.subr.bf16.mxu0 0
        %3563 = vmatpush2.bf16.msra.mxu0 0
        %3564 = vmatprep.subr.bf16.mxu0 0
        %3565 = vmatpush2.bf16.msra.mxu0 0
        %3566 = vmatprep.subr.bf16.mxu0 0
        %3567 = vmatpush2.bf16.msra.mxu0 0
        %3568 = vmatprep.mubr.bf16.mxu0 0
        %3569 = vmatmul.mubr.bf16.gmra.mxu0 %v627
        %v3570 = vpop.f32.mrf.mxu0
        %v3571 = vadd.f32 0.0, %v3570
        %v3572 = vpop.f32.mrf.mxu0
        %v3573 = vpop.f32.mrf.mxu0
        %v3574 = vpop.f32.mrf.mxu0
        %3575 = vdwg.mxu0
        %v3576 = vadd.f32 %v324, %v3571
        %3577 = vrot.lane.b32.xlu0 %v3524, 127
        %v3578 = vpop.permute.xlu0 %3577
        %3579 = vrot.lane.b32.xlu0 %v3525, 127
        %v3580 = vpop.permute.xlu0 %3579
        %3581 = vrot.lane.b32.xlu0 %v3526, 127
        %v3582 = vpop.permute.xlu0 %3581
        %3583 = vrot.lane.b32.xlu0 %v3527, 127
        %v3584 = vpop.permute.xlu0 %3583
        %3585 = vrot.lane.b32.xlu0 %v3528, 127
        %v3586 = vpop.permute.xlu0 %3585
        %v3592 = vsel %vm620, %v3586, 0
        %3594 = vmatprep.subr.bf16.mxu0 0
        %3595 = vmatpush1.bf16.msra.mxu0 0
        %3596 = vmatprep.subr.bf16.mxu0 0
        %3597 = vmatpush1.bf16.msra.mxu0 0
        %3598 = vmatprep.subr.bf16.mxu0 0
        %3599 = vmatpush1.bf16.msra.mxu0 0
        %3600 = vmatprep.subr.bf16.mxu0 0
        %3601 = vmatpush1.bf16.msra.mxu0 %v3592
        %3602 = vmatprep.subr.bf16.mxu0 0
        %3603 = vmatpush1.bf16.msra.mxu0 %v3584
        %3604 = vmatprep.subr.bf16.mxu0 0
        %3605 = vmatpush1.bf16.msra.mxu0 %v3582
        %3606 = vmatprep.subr.bf16.mxu0 0
        %3607 = vmatpush1.bf16.msra.mxu0 %v3580
        %3608 = vmatprep.subr.bf16.mxu0 0
        %3609 = vmatpush1.bf16.msra.mxu0 %v3578
        %3610 = vmatprep.subr.bf16.mxu0 0
        %3611 = vmatpush2.bf16.msra.mxu0 0
        %3612 = vmatprep.subr.bf16.mxu0 0
        %3613 = vmatpush2.bf16.msra.mxu0 0
        %3614 = vmatprep.subr.bf16.mxu0 0
        %3615 = vmatpush2.bf16.msra.mxu0 0
        %3616 = vmatprep.subr.bf16.mxu0 0
        %3617 = vmatpush2.bf16.msra.mxu0 0
        %3618 = vmatprep.subr.bf16.mxu0 0
        %3619 = vmatpush2.bf16.msra.mxu0 0
        %3620 = vmatprep.subr.bf16.mxu0 0
        %3621 = vmatpush2.bf16.msra.mxu0 0
        %3622 = vmatprep.subr.bf16.mxu0 0
        %3623 = vmatpush2.bf16.msra.mxu0 0
        %3624 = vmatprep.subr.bf16.mxu0 0
        %3625 = vmatpush2.bf16.msra.mxu0 0
        %3626 = vmatprep.mubr.bf16.mxu0 0
        %3627 = vmatmul.mubr.bf16.gmra.mxu0 %v689
        %v3628 = vpop.f32.mrf.mxu0
        %v3629 = vadd.f32 0.0, %v3628
        %v3630 = vpop.f32.mrf.mxu0
        %v3631 = vpop.f32.mrf.mxu0
        %v3632 = vpop.f32.mrf.mxu0
        %3633 = vdwg.mxu0
        %v3634 = vadd.f32 %v3576, %v3629
        %3635 = vrot.lane.b32.xlu0 %v3524, 126
        %v3636 = vpop.permute.xlu0 %3635
        %3637 = vrot.lane.b32.xlu0 %v3525, 126
        %v3638 = vpop.permute.xlu0 %3637
        %3639 = vrot.lane.b32.xlu0 %v3526, 126
        %v3640 = vpop.permute.xlu0 %3639
        %3641 = vrot.lane.b32.xlu0 %v3527, 126
        %v3642 = vpop.permute.xlu0 %3641
        %3643 = vrot.lane.b32.xlu0 %v3528, 126
        %v3644 = vpop.permute.xlu0 %3643
        %v3650 = vsel %vm620, %v3644, 0
        %3652 = vmatprep.subr.bf16.mxu0 0
        %3653 = vmatpush1.bf16.msra.mxu0 0
        %3654 = vmatprep.subr.bf16.mxu0 0
        %3655 = vmatpush1.bf16.msra.mxu0 0
        %3656 = vmatprep.subr.bf16.mxu0 0
        %3657 = vmatpush1.bf16.msra.mxu0 0
        %3658 = vmatprep.subr.bf16.mxu0 0
        %3659 = vmatpush1.bf16.msra.mxu0 %v3650
        %3660 = vmatprep.subr.bf16.mxu0 0
        %3661 = vmatpush1.bf16.msra.mxu0 %v3642
        %3662 = vmatprep.subr.bf16.mxu0 0
        %3663 = vmatpush1.bf16.msra.mxu0 %v3640
        %3664 = vmatprep.subr.bf16.mxu0 0
        %3665 = vmatpush1.bf16.msra.mxu0 %v3638
        %3666 = vmatprep.subr.bf16.mxu0 0
        %3667 = vmatpush1.bf16.msra.mxu0 %v3636
        %3668 = vmatprep.subr.bf16.mxu0 0
        %3669 = vmatpush2.bf16.msra.mxu0 0
        %3670 = vmatprep.subr.bf16.mxu0 0
        %3671 = vmatpush2.bf16.msra.mxu0 0
        %3672 = vmatprep.subr.bf16.mxu0 0
        %3673 = vmatpush2.bf16.msra.mxu0 0
        %3674 = vmatprep.subr.bf16.mxu0 0
        %3675 = vmatpush2.bf16.msra.mxu0 0
        %3676 = vmatprep.subr.bf16.mxu0 0
        %3677 = vmatpush2.bf16.msra.mxu0 0
        %3678 = vmatprep.subr.bf16.mxu0 0
        %3679 = vmatpush2.bf16.msra.mxu0 0
        %3680 = vmatprep.subr.bf16.mxu0 0
        %3681 = vmatpush2.bf16.msra.mxu0 0
        %3682 = vmatprep.subr.bf16.mxu0 0
        %3683 = vmatpush2.bf16.msra.mxu0 0
        %3684 = vmatprep.mubr.bf16.mxu0 0
        %3685 = vmatmul.mubr.bf16.gmra.mxu0 %v750
        %v3686 = vpop.f32.mrf.mxu0
        %v3687 = vadd.f32 0.0, %v3686
        %v3688 = vpop.f32.mrf.mxu0
        %v3689 = vpop.f32.mrf.mxu0
        %v3690 = vpop.f32.mrf.mxu0
        %3691 = vdwg.mxu0
        %v3692 = vadd.f32 %v3634, %v3687
        %v3693 = vmax.f32 %v3692, 0.0
        %v3694 = vpack.c.bf16 %v3693, %v3693
        %v3696 = vunpack.c.l.b16 %v3694
        %v3697 = vpack.c.b16 %v3696, %v3696
        %3698 = vrot.lane.b32.xlu0 %v3697, 1
        %v3699 = vpop.permute.xlu0 %3698
        %s3701 = scalar_lea.vmem [#allocation2], 60
        %3702 = vst.msk [vmem:[%s3701] sm:$0xf] %vm805, %v3699
        %s3703 = scalar_lea.vmem %s302, 168
        %v3704 = vld [vmem:[%s3703] sm:$0xf]
        %v3705 = vld [vmem:[%s3703 + $0x4] sm:$0xf]
        %v3706 = vld [vmem:[%s3703 + $0x8] sm:$0xf]
        %s3707 = scalar_lea.vmem %s302, 180
        %v3708 = vld [vmem:[%s3707] sm:$0xf]
        %v3709 = vld [vmem:[%s3707 + $0x4] sm:$0xf]
        %v3710 = vld [vmem:[%s3707 + $0x8] sm:$0xf]
        %s3711 = scalar_lea.vmem %s311, 24
        %v3712 = vld [vmem:[%s3711] sm:$0xf]
        %v3713 = vld [vmem:[%s3711 + $0x4] sm:$0xf]
        %v3714 = vld [vmem:[%s3711 + $0x8] sm:$0xf]
        %v3718 = vunpack.c.l.b16 %v3704
        %v3719 = vunpack.c.l.b16 %v3705
        %v3720 = vunpack.c.l.b16 %v3706
        %v3721 = vpack.c.b16 %v3719, %v3718
        %v3722 = vpack.c.b16 %v3720, %v3720
        %v3727 = vunpack.c.l.b16 %v3708
        %v3728 = vunpack.c.l.b16 %v3709
        %v3729 = vunpack.c.l.b16 %v3710
        %v3730 = vpack.c.b16 %v3727, %v3727
        %v3731 = vpack.c.b16 %v3729, %v3728
        %v3736 = vunpack.c.l.b16 %v3712
        %v3737 = vunpack.c.l.b16 %v3713
        %v3738 = vunpack.c.l.b16 %v3714
        %v3739 = vpack.c.b16 %v3737, %v3736
        %v3740 = vpack.c.b16 %v3738, %v3738
        %v3744 = vsel %vm620, %v3722, %v3730
        %v3747 = vsel %vm620, %v3740, 0
        %3749 = vmatprep.subr.bf16.mxu0 0
        %3750 = vmatpush1.bf16.msra.mxu0 0
        %3751 = vmatprep.subr.bf16.mxu0 0
        %3752 = vmatpush1.bf16.msra.mxu0 0
        %3753 = vmatprep.subr.bf16.mxu0 0
        %3754 = vmatpush1.bf16.msra.mxu0 0
        %3755 = vmatprep.subr.bf16.mxu0 0
        %3756 = vmatpush1.bf16.msra.mxu0 %v3747
        %3757 = vmatprep.subr.bf16.mxu0 0
        %3758 = vmatpush1.bf16.msra.mxu0 %v3739
        %3759 = vmatprep.subr.bf16.mxu0 0
        %3760 = vmatpush1.bf16.msra.mxu0 %v3731
        %3761 = vmatprep.subr.bf16.mxu0 0
        %3762 = vmatpush1.bf16.msra.mxu0 %v3744
        %3763 = vmatprep.subr.bf16.mxu0 0
        %3764 = vmatpush1.bf16.msra.mxu0 %v3721
        %3765 = vmatprep.subr.bf16.mxu0 0
        %3766 = vmatpush2.bf16.msra.mxu0 0
        %3767 = vmatprep.subr.bf16.mxu0 0
        %3768 = vmatpush2.bf16.msra.mxu0 0
        %3769 = vmatprep.subr.bf16.mxu0 0
        %3770 = vmatpush2.bf16.msra.mxu0 0
        %3771 = vmatprep.subr.bf16.mxu0 0
        %3772 = vmatpush2.bf16.msra.mxu0 0
        %3773 = vmatprep.subr.bf16.mxu0 0
        %3774 = vmatpush2.bf16.msra.mxu0 0
        %3775 = vmatprep.subr.bf16.mxu0 0
        %3776 = vmatpush2.bf16.msra.mxu0 0
        %3777 = vmatprep.subr.bf16.mxu0 0
        %3778 = vmatpush2.bf16.msra.mxu0 0
        %3779 = vmatprep.subr.bf16.mxu0 0
        %3780 = vmatpush2.bf16.msra.mxu0 0
        %3781 = vmatprep.mubr.bf16.mxu0 0
        %3782 = vmatmul.mubr.bf16.gmra.mxu0 %v627
        %v3783 = vpop.f32.mrf.mxu0
        %v3784 = vadd.f32 0.0, %v3783
        %v3785 = vpop.f32.mrf.mxu0
        %v3786 = vpop.f32.mrf.mxu0
        %v3787 = vpop.f32.mrf.mxu0
        %3788 = vdwg.mxu0
        %v3789 = vadd.f32 %v324, %v3784
        %3791 = vrot.lane.b32.xlu0 %v3721, 127
        %v3792 = vpop.permute.xlu0 %3791
        %3793 = vrot.lane.b32.xlu0 %v3744, 127
        %v3794 = vpop.permute.xlu0 %3793
        %3795 = vrot.lane.b32.xlu0 %v3731, 127
        %v3796 = vpop.permute.xlu0 %3795
        %3797 = vrot.lane.b32.xlu0 %v3739, 127
        %v3798 = vpop.permute.xlu0 %3797
        %3799 = vrot.lane.b32.xlu0 %v3740, 127
        %v3800 = vpop.permute.xlu0 %3799
        %v3806 = vsel %vm620, %v3800, 0
        %3808 = vmatprep.subr.bf16.mxu0 0
        %3809 = vmatpush1.bf16.msra.mxu0 0
        %3810 = vmatprep.subr.bf16.mxu0 0
        %3811 = vmatpush1.bf16.msra.mxu0 0
        %3812 = vmatprep.subr.bf16.mxu0 0
        %3813 = vmatpush1.bf16.msra.mxu0 0
        %3814 = vmatprep.subr.bf16.mxu0 0
        %3815 = vmatpush1.bf16.msra.mxu0 %v3806
        %3816 = vmatprep.subr.bf16.mxu0 0
        %3817 = vmatpush1.bf16.msra.mxu0 %v3798
        %3818 = vmatprep.subr.bf16.mxu0 0
        %3819 = vmatpush1.bf16.msra.mxu0 %v3796
        %3820 = vmatprep.subr.bf16.mxu0 0
        %3821 = vmatpush1.bf16.msra.mxu0 %v3794
        %3822 = vmatprep.subr.bf16.mxu0 0
        %3823 = vmatpush1.bf16.msra.mxu0 %v3792
        %3824 = vmatprep.subr.bf16.mxu0 0
        %3825 = vmatpush2.bf16.msra.mxu0 0
        %3826 = vmatprep.subr.bf16.mxu0 0
        %3827 = vmatpush2.bf16.msra.mxu0 0
        %3828 = vmatprep.subr.bf16.mxu0 0
        %3829 = vmatpush2.bf16.msra.mxu0 0
        %3830 = vmatprep.subr.bf16.mxu0 0
        %3831 = vmatpush2.bf16.msra.mxu0 0
        %3832 = vmatprep.subr.bf16.mxu0 0
        %3833 = vmatpush2.bf16.msra.mxu0 0
        %3834 = vmatprep.subr.bf16.mxu0 0
        %3835 = vmatpush2.bf16.msra.mxu0 0
        %3836 = vmatprep.subr.bf16.mxu0 0
        %3837 = vmatpush2.bf16.msra.mxu0 0
        %3838 = vmatprep.subr.bf16.mxu0 0
        %3839 = vmatpush2.bf16.msra.mxu0 0
        %3840 = vmatprep.mubr.bf16.mxu0 0
        %3841 = vmatmul.mubr.bf16.gmra.mxu0 %v689
        %v3842 = vpop.f32.mrf.mxu0
        %v3843 = vadd.f32 0.0, %v3842
        %v3844 = vpop.f32.mrf.mxu0
        %v3845 = vpop.f32.mrf.mxu0
        %v3846 = vpop.f32.mrf.mxu0
        %3847 = vdwg.mxu0
        %v3848 = vadd.f32 %v3789, %v3843
        %3849 = vrot.lane.b32.xlu0 %v3721, 126
        %v3850 = vpop.permute.xlu0 %3849
        %3851 = vrot.lane.b32.xlu0 %v3744, 126
        %v3852 = vpop.permute.xlu0 %3851
        %3853 = vrot.lane.b32.xlu0 %v3731, 126
        %v3854 = vpop.permute.xlu0 %3853
        %3855 = vrot.lane.b32.xlu0 %v3739, 126
        %v3856 = vpop.permute.xlu0 %3855
        %3857 = vrot.lane.b32.xlu0 %v3740, 126
        %v3858 = vpop.permute.xlu0 %3857
        %v3864 = vsel %vm620, %v3858, 0
        %3866 = vmatprep.subr.bf16.mxu0 0
        %3867 = vmatpush1.bf16.msra.mxu0 0
        %3868 = vmatprep.subr.bf16.mxu0 0
        %3869 = vmatpush1.bf16.msra.mxu0 0
        %3870 = vmatprep.subr.bf16.mxu0 0
        %3871 = vmatpush1.bf16.msra.mxu0 0
        %3872 = vmatprep.subr.bf16.mxu0 0
        %3873 = vmatpush1.bf16.msra.mxu0 %v3864
        %3874 = vmatprep.subr.bf16.mxu0 0
        %3875 = vmatpush1.bf16.msra.mxu0 %v3856
        %3876 = vmatprep.subr.bf16.mxu0 0
        %3877 = vmatpush1.bf16.msra.mxu0 %v3854
        %3878 = vmatprep.subr.bf16.mxu0 0
        %3879 = vmatpush1.bf16.msra.mxu0 %v3852
        %3880 = vmatprep.subr.bf16.mxu0 0
        %3881 = vmatpush1.bf16.msra.mxu0 %v3850
        %3882 = vmatprep.subr.bf16.mxu0 0
        %3883 = vmatpush2.bf16.msra.mxu0 0
        %3884 = vmatprep.subr.bf16.mxu0 0
        %3885 = vmatpush2.bf16.msra.mxu0 0
        %3886 = vmatprep.subr.bf16.mxu0 0
        %3887 = vmatpush2.bf16.msra.mxu0 0
        %3888 = vmatprep.subr.bf16.mxu0 0
        %3889 = vmatpush2.bf16.msra.mxu0 0
        %3890 = vmatprep.subr.bf16.mxu0 0
        %3891 = vmatpush2.bf16.msra.mxu0 0
        %3892 = vmatprep.subr.bf16.mxu0 0
        %3893 = vmatpush2.bf16.msra.mxu0 0
        %3894 = vmatprep.subr.bf16.mxu0 0
        %3895 = vmatpush2.bf16.msra.mxu0 0
        %3896 = vmatprep.subr.bf16.mxu0 0
        %3897 = vmatpush2.bf16.msra.mxu0 0
        %3898 = vmatprep.mubr.bf16.mxu0 0
        %3899 = vmatmul.mubr.bf16.gmra.mxu0 %v750
        %v3900 = vpop.f32.mrf.mxu0
        %v3901 = vadd.f32 0.0, %v3900
        %v3902 = vpop.f32.mrf.mxu0
        %v3903 = vpop.f32.mrf.mxu0
        %v3904 = vpop.f32.mrf.mxu0
        %3905 = vdwg.mxu0
        %v3906 = vadd.f32 %v3848, %v3901
        %v3907 = vmax.f32 %v3906, 0.0
        %v3908 = vpack.c.bf16 %v3907, %v3907
        %v3910 = vunpack.c.l.b16 %v3908
        %v3911 = vpack.c.b16 %v3910, %v3910
        %3912 = vrot.lane.b32.xlu0 %v3911, 1
        %v3913 = vpop.permute.xlu0 %3912
        %s3915 = scalar_lea.vmem [#allocation2], 64
        %3916 = vst.msk [vmem:[%s3915] sm:$0xf] %vm805, %v3913
        %s3917 = sadd.s32 %s351, 16
        %p3918 = scmp.ge.s32.totalorder %s3917, 0
        %p3919 = scmp.lt.s32.totalorder %s3917, 32
        %p3920 = pnand %p3918, %p3919
        %p3921 = pneg %p3920
        // Predicated region
        $region49: #{_lambda_.1} parent=43 // pred_check
          _
        $region50: #{_lambda_.1} parent=43 // pred_check_branch
          %3923 = sbr.rel (%p3920) target = $region52
        $region51: #{_lambda_.1} parent=43 // pred_region
          %v3924 = vld [vmem:[%s3707] sm:$0xf]
          %v3925 = vld [vmem:[%s3707 + $0x4] sm:$0xf]
          %v3926 = vld [vmem:[%s3707 + $0x8] sm:$0xf]
          %v3927 = vld [vmem:[%s3711] sm:$0xf]
          %v3928 = vld [vmem:[%s3711 + $0x4] sm:$0xf]
          %v3929 = vld [vmem:[%s3711 + $0x8] sm:$0xf]
          %s3930 = scalar_lea.vmem %s311, 36
          %v3931 = vld [vmem:[%s3930] sm:$0xf]
          %v3932 = vld [vmem:[%s3930 + $0x4] sm:$0xf]
          %v3933 = vld [vmem:[%s3930 + $0x8] sm:$0xf]
          %v3937 = vunpack.c.l.b16 %v3924
          %v3938 = vunpack.c.l.b16 %v3925
          %v3939 = vunpack.c.l.b16 %v3926
          %v3940 = vpack.c.b16 %v3938, %v3937
          %v3941 = vpack.c.b16 %v3939, %v3939
          %v3946 = vunpack.c.l.b16 %v3927
          %v3947 = vunpack.c.l.b16 %v3928
          %v3948 = vunpack.c.l.b16 %v3929
          %v3949 = vpack.c.b16 %v3946, %v3946
          %v3950 = vpack.c.b16 %v3948, %v3947
          %v3955 = vunpack.c.l.b16 %v3931
          %v3956 = vunpack.c.l.b16 %v3932
          %v3957 = vunpack.c.l.b16 %v3933
          %v3958 = vpack.c.b16 %v3956, %v3955
          %v3959 = vpack.c.b16 %v3957, %v3957
          %v3963 = vsel %vm620, %v3941, %v3949
          %v3966 = vsel %vm620, %v3959, 0
          %3968 = vmatprep.subr.bf16.mxu0 0
          %3969 = vmatpush1.bf16.msra.mxu0 0
          %3970 = vmatprep.subr.bf16.mxu0 0
          %3971 = vmatpush1.bf16.msra.mxu0 0
          %3972 = vmatprep.subr.bf16.mxu0 0
          %3973 = vmatpush1.bf16.msra.mxu0 0
          %3974 = vmatprep.subr.bf16.mxu0 0
          %3975 = vmatpush1.bf16.msra.mxu0 %v3966
          %3976 = vmatprep.subr.bf16.mxu0 0
          %3977 = vmatpush1.bf16.msra.mxu0 %v3958
          %3978 = vmatprep.subr.bf16.mxu0 0
          %3979 = vmatpush1.bf16.msra.mxu0 %v3950
          %3980 = vmatprep.subr.bf16.mxu0 0
          %3981 = vmatpush1.bf16.msra.mxu0 %v3963
          %3982 = vmatprep.subr.bf16.mxu0 0
          %3983 = vmatpush1.bf16.msra.mxu0 %v3940
          %3984 = vmatprep.subr.bf16.mxu0 0
          %3985 = vmatpush2.bf16.msra.mxu0 0
          %3986 = vmatprep.subr.bf16.mxu0 0
          %3987 = vmatpush2.bf16.msra.mxu0 0
          %3988 = vmatprep.subr.bf16.mxu0 0
          %3989 = vmatpush2.bf16.msra.mxu0 0
          %3990 = vmatprep.subr.bf16.mxu0 0
          %3991 = vmatpush2.bf16.msra.mxu0 0
          %3992 = vmatprep.subr.bf16.mxu0 0
          %3993 = vmatpush2.bf16.msra.mxu0 0
          %3994 = vmatprep.subr.bf16.mxu0 0
          %3995 = vmatpush2.bf16.msra.mxu0 0
          %3996 = vmatprep.subr.bf16.mxu0 0
          %3997 = vmatpush2.bf16.msra.mxu0 0
          %3998 = vmatprep.subr.bf16.mxu0 0
          %3999 = vmatpush2.bf16.msra.mxu0 0
          %4000 = vmatprep.mubr.bf16.mxu0 0
          %4001 = vmatmul.mubr.bf16.gmra.mxu0 %v627
          %v4002 = vpop.f32.mrf.mxu0
          %v4003 = vadd.f32 0.0, %v4002
          %v4004 = vpop.f32.mrf.mxu0
          %v4005 = vpop.f32.mrf.mxu0
          %v4006 = vpop.f32.mrf.mxu0
          %4007 = vdwg.mxu0
          %v4008 = vadd.f32 %v324, %v4003
          %4010 = vrot.lane.b32.xlu0 %v3940, 127
          %v4011 = vpop.permute.xlu0 %4010
          %4012 = vrot.lane.b32.xlu0 %v3963, 127
          %v4013 = vpop.permute.xlu0 %4012
          %4014 = vrot.lane.b32.xlu0 %v3950, 127
          %v4015 = vpop.permute.xlu0 %4014
          %4016 = vrot.lane.b32.xlu0 %v3958, 127
          %v4017 = vpop.permute.xlu0 %4016
          %4018 = vrot.lane.b32.xlu0 %v3959, 127
          %v4019 = vpop.permute.xlu0 %4018
          %v4025 = vsel %vm620, %v4019, 0
          %4027 = vmatprep.subr.bf16.mxu0 0
          %4028 = vmatpush1.bf16.msra.mxu0 0
          %4029 = vmatprep.subr.bf16.mxu0 0
          %4030 = vmatpush1.bf16.msra.mxu0 0
          %4031 = vmatprep.subr.bf16.mxu0 0
          %4032 = vmatpush1.bf16.msra.mxu0 0
          %4033 = vmatprep.subr.bf16.mxu0 0
          %4034 = vmatpush1.bf16.msra.mxu0 %v4025
          %4035 = vmatprep.subr.bf16.mxu0 0
          %4036 = vmatpush1.bf16.msra.mxu0 %v4017
          %4037 = vmatprep.subr.bf16.mxu0 0
          %4038 = vmatpush1.bf16.msra.mxu0 %v4015
          %4039 = vmatprep.subr.bf16.mxu0 0
          %4040 = vmatpush1.bf16.msra.mxu0 %v4013
          %4041 = vmatprep.subr.bf16.mxu0 0
          %4042 = vmatpush1.bf16.msra.mxu0 %v4011
          %4043 = vmatprep.subr.bf16.mxu0 0
          %4044 = vmatpush2.bf16.msra.mxu0 0
          %4045 = vmatprep.subr.bf16.mxu0 0
          %4046 = vmatpush2.bf16.msra.mxu0 0
          %4047 = vmatprep.subr.bf16.mxu0 0
          %4048 = vmatpush2.bf16.msra.mxu0 0
          %4049 = vmatprep.subr.bf16.mxu0 0
          %4050 = vmatpush2.bf16.msra.mxu0 0
          %4051 = vmatprep.subr.bf16.mxu0 0
          %4052 = vmatpush2.bf16.msra.mxu0 0
          %4053 = vmatprep.subr.bf16.mxu0 0
          %4054 = vmatpush2.bf16.msra.mxu0 0
          %4055 = vmatprep.subr.bf16.mxu0 0
          %4056 = vmatpush2.bf16.msra.mxu0 0
          %4057 = vmatprep.subr.bf16.mxu0 0
          %4058 = vmatpush2.bf16.msra.mxu0 0
          %4059 = vmatprep.mubr.bf16.mxu0 0
          %4060 = vmatmul.mubr.bf16.gmra.mxu0 %v689
          %v4061 = vpop.f32.mrf.mxu0
          %v4062 = vadd.f32 0.0, %v4061
          %v4063 = vpop.f32.mrf.mxu0
          %v4064 = vpop.f32.mrf.mxu0
          %v4065 = vpop.f32.mrf.mxu0
          %4066 = vdwg.mxu0
          %v4067 = vadd.f32 %v4008, %v4062
          %4068 = vrot.lane.b32.xlu0 %v3940, 126
          %v4069 = vpop.permute.xlu0 %4068
          %4070 = vrot.lane.b32.xlu0 %v3963, 126
          %v4071 = vpop.permute.xlu0 %4070
          %4072 = vrot.lane.b32.xlu0 %v3950, 126
          %v4073 = vpop.permute.xlu0 %4072
          %4074 = vrot.lane.b32.xlu0 %v3958, 126
          %v4075 = vpop.permute.xlu0 %4074
          %4076 = vrot.lane.b32.xlu0 %v3959, 126
          %v4077 = vpop.permute.xlu0 %4076
          %v4083 = vsel %vm620, %v4077, 0
          %4085 = vmatprep.subr.bf16.mxu0 0
          %4086 = vmatpush1.bf16.msra.mxu0 0
          %4087 = vmatprep.subr.bf16.mxu0 0
          %4088 = vmatpush1.bf16.msra.mxu0 0
          %4089 = vmatprep.subr.bf16.mxu0 0
          %4090 = vmatpush1.bf16.msra.mxu0 0
          %4091 = vmatprep.subr.bf16.mxu0 0
          %4092 = vmatpush1.bf16.msra.mxu0 %v4083
          %4093 = vmatprep.subr.bf16.mxu0 0
          %4094 = vmatpush1.bf16.msra.mxu0 %v4075
          %4095 = vmatprep.subr.bf16.mxu0 0
          %4096 = vmatpush1.bf16.msra.mxu0 %v4073
          %4097 = vmatprep.subr.bf16.mxu0 0
          %4098 = vmatpush1.bf16.msra.mxu0 %v4071
          %4099 = vmatprep.subr.bf16.mxu0 0
          %4100 = vmatpush1.bf16.msra.mxu0 %v4069
          %4101 = vmatprep.subr.bf16.mxu0 0
          %4102 = vmatpush2.bf16.msra.mxu0 0
          %4103 = vmatprep.subr.bf16.mxu0 0
          %4104 = vmatpush2.bf16.msra.mxu0 0
          %4105 = vmatprep.subr.bf16.mxu0 0
          %4106 = vmatpush2.bf16.msra.mxu0 0
          %4107 = vmatprep.subr.bf16.mxu0 0
          %4108 = vmatpush2.bf16.msra.mxu0 0
          %4109 = vmatprep.subr.bf16.mxu0 0
          %4110 = vmatpush2.bf16.msra.mxu0 0
          %4111 = vmatprep.subr.bf16.mxu0 0
          %4112 = vmatpush2.bf16.msra.mxu0 0
          %4113 = vmatprep.subr.bf16.mxu0 0
          %4114 = vmatpush2.bf16.msra.mxu0 0
          %4115 = vmatprep.subr.bf16.mxu0 0
          %4116 = vmatpush2.bf16.msra.mxu0 0
          %4117 = vmatprep.mubr.bf16.mxu0 0
          %4118 = vmatmul.mubr.bf16.gmra.mxu0 %v750
          %v4119 = vpop.f32.mrf.mxu0
          %v4120 = vadd.f32 0.0, %v4119
          %v4121 = vpop.f32.mrf.mxu0
          %v4122 = vpop.f32.mrf.mxu0
          %v4123 = vpop.f32.mrf.mxu0
          %4124 = vdwg.mxu0
          %v4125 = vadd.f32 %v4067, %v4120
          %v4126 = vmax.f32 %v4125, 0.0
          %v4127 = vpack.c.bf16 %v4126, %v4126
          %v4129 = vunpack.c.l.b16 %v4127
          %v4130 = vpack.c.b16 %v4129, %v4129
          %4131 = vrot.lane.b32.xlu0 %v4130, 1
          %v4132 = vpop.permute.xlu0 %4131
          %s4134 = scalar_lea.vmem [#allocation2], 68
          %4135 = vst.msk [vmem:[%s4134] sm:$0xf] %vm805, %v4132
        $region52: #{_lambda_.1} parent=43 // pred_fallthru
          _
        %v4136 = vld [vmem:[#allocation2] sm:$0xf]
        %v4137 = vld [vmem:[#allocation2 + $0x4] sm:$0xf]
        %v4138 = vld [vmem:[#allocation2 + $0x8] sm:$0xf]
        %v4142 = vunpack.c.l.b16 %v4136
        %v4143 = vunpack.c.l.b16 %v4137
        %v4144 = vunpack.c.l.b16 %v4138
        %v4145 = vpack.c.b16 %v4143, %v4142
        %v4146 = vpack.c.b16 %v4144, %v4144
        %vm4148 = vcmask 195584
        %v4150 = vsel %vm4148, %v317, 0
        %v4153 = vsel %vm620, %v4146, 0
        %4155 = vmatprep.subr.bf16.mxu0 0
        %4156 = vmatpush1.bf16.msra.mxu0 0
        %4157 = vmatprep.subr.bf16.mxu0 0
        %4158 = vmatpush1.bf16.msra.mxu0 0
        %4159 = vmatprep.subr.bf16.mxu0 0
        %4160 = vmatpush1.bf16.msra.mxu0 0
        %4161 = vmatprep.subr.bf16.mxu0 0
        %4162 = vmatpush1.bf16.msra.mxu0 0
        %4163 = vmatprep.subr.bf16.mxu0 0
        %4164 = vmatpush1.bf16.msra.mxu0 0
        %4165 = vmatprep.subr.bf16.mxu0 0
        %4166 = vmatpush1.bf16.msra.mxu0 0
        %4167 = vmatprep.subr.bf16.mxu0 0
        %4168 = vmatpush1.bf16.msra.mxu0 %v4153
        %4169 = vmatprep.subr.bf16.mxu0 0
        %4170 = vmatpush1.bf16.msra.mxu0 %v4145
        %4171 = vmatprep.subr.bf16.mxu0 0
        %4172 = vmatpush2.bf16.msra.mxu0 0
        %4173 = vmatprep.subr.bf16.mxu0 0
        %4174 = vmatpush2.bf16.msra.mxu0 0
        %4175 = vmatprep.subr.bf16.mxu0 0
        %4176 = vmatpush2.bf16.msra.mxu0 0
        %4177 = vmatprep.subr.bf16.mxu0 0
        %4178 = vmatpush2.bf16.msra.mxu0 0
        %4179 = vmatprep.subr.bf16.mxu0 0
        %4180 = vmatpush2.bf16.msra.mxu0 0
        %4181 = vmatprep.subr.bf16.mxu0 0
        %4182 = vmatpush2.bf16.msra.mxu0 0
        %4183 = vmatprep.subr.bf16.mxu0 0
        %4184 = vmatpush2.bf16.msra.mxu0 0
        %4185 = vmatprep.subr.bf16.mxu0 0
        %4186 = vmatpush2.bf16.msra.mxu0 0
        %4187 = vmatprep.mubr.bf16.mxu0 0
        %4188 = vmatmul.mubr.bf16.gmra.mxu0 %v4150
        %v4189 = vpop.f32.mrf.mxu0
        %v4190 = vadd.f32 0.0, %v4189
        %v4191 = vpop.f32.mrf.mxu0
        %v4192 = vpop.f32.mrf.mxu0
        %v4193 = vpop.f32.mrf.mxu0
        %4194 = vdwg.mxu0
        %v4195 = vadd.f32 %v330, %v4190
        %4196 = vrot.lane.b32.xlu0 %v4145, 127
        %v4197 = vpop.permute.xlu0 %4196
        %4198 = vrot.lane.b32.xlu0 %v4146, 127
        %v4199 = vpop.permute.xlu0 %4198
        %v4202 = vsel %vm4148, %v318, 0
        %v4205 = vsel %vm620, %v4199, 0
        %4207 = vmatprep.subr.bf16.mxu0 0
        %4208 = vmatpush1.bf16.msra.mxu0 0
        %4209 = vmatprep.subr.bf16.mxu0 0
        %4210 = vmatpush1.bf16.msra.mxu0 0
        %4211 = vmatprep.subr.bf16.mxu0 0
        %4212 = vmatpush1.bf16.msra.mxu0 0
        %4213 = vmatprep.subr.bf16.mxu0 0
        %4214 = vmatpush1.bf16.msra.mxu0 0
        %4215 = vmatprep.subr.bf16.mxu0 0
        %4216 = vmatpush1.bf16.msra.mxu0 0
        %4217 = vmatprep.subr.bf16.mxu0 0
        %4218 = vmatpush1.bf16.msra.mxu0 0
        %4219 = vmatprep.subr.bf16.mxu0 0
        %4220 = vmatpush1.bf16.msra.mxu0 %v4205
        %4221 = vmatprep.subr.bf16.mxu0 0
        %4222 = vmatpush1.bf16.msra.mxu0 %v4197
        %4223 = vmatprep.subr.bf16.mxu0 0
        %4224 = vmatpush2.bf16.msra.mxu0 0
        %4225 = vmatprep.subr.bf16.mxu0 0
        %4226 = vmatpush2.bf16.msra.mxu0 0
        %4227 = vmatprep.subr.bf16.mxu0 0
        %4228 = vmatpush2.bf16.msra.mxu0 0
        %4229 = vmatprep.subr.bf16.mxu0 0
        %4230 = vmatpush2.bf16.msra.mxu0 0
        %4231 = vmatprep.subr.bf16.mxu0 0
        %4232 = vmatpush2.bf16.msra.mxu0 0
        %4233 = vmatprep.subr.bf16.mxu0 0
        %4234 = vmatpush2.bf16.msra.mxu0 0
        %4235 = vmatprep.subr.bf16.mxu0 0
        %4236 = vmatpush2.bf16.msra.mxu0 0
        %4237 = vmatprep.subr.bf16.mxu0 0
        %4238 = vmatpush2.bf16.msra.mxu0 0
        %4239 = vmatprep.mubr.bf16.mxu0 0
        %4240 = vmatmul.mubr.bf16.gmra.mxu0 %v4202
        %v4241 = vpop.f32.mrf.mxu0
        %v4242 = vadd.f32 0.0, %v4241
        %v4243 = vpop.f32.mrf.mxu0
        %v4244 = vpop.f32.mrf.mxu0
        %v4245 = vpop.f32.mrf.mxu0
        %4246 = vdwg.mxu0
        %v4247 = vadd.f32 %v4195, %v4242
        %4248 = vrot.lane.b32.xlu0 %v4145, 126
        %v4249 = vpop.permute.xlu0 %4248
        %4250 = vrot.lane.b32.xlu0 %v4146, 126
        %v4251 = vpop.permute.xlu0 %4250
        %v4254 = vsel %vm4148, %v319, 0
        %v4257 = vsel %vm620, %v4251, 0
        %4259 = vmatprep.subr.bf16.mxu0 0
        %4260 = vmatpush1.bf16.msra.mxu0 0
        %4261 = vmatprep.subr.bf16.mxu0 0
        %4262 = vmatpush1.bf16.msra.mxu0 0
        %4263 = vmatprep.subr.bf16.mxu0 0
        %4264 = vmatpush1.bf16.msra.mxu0 0
        %4265 = vmatprep.subr.bf16.mxu0 0
        %4266 = vmatpush1.bf16.msra.mxu0 0
        %4267 = vmatprep.subr.bf16.mxu0 0
        %4268 = vmatpush1.bf16.msra.mxu0 0
        %4269 = vmatprep.subr.bf16.mxu0 0
        %4270 = vmatpush1.bf16.msra.mxu0 0
        %4271 = vmatprep.subr.bf16.mxu0 0
        %4272 = vmatpush1.bf16.msra.mxu0 %v4257
        %4273 = vmatprep.subr.bf16.mxu0 0
        %4274 = vmatpush1.bf16.msra.mxu0 %v4249
        %4275 = vmatprep.subr.bf16.mxu0 0
        %4276 = vmatpush2.bf16.msra.mxu0 0
        %4277 = vmatprep.subr.bf16.mxu0 0
        %4278 = vmatpush2.bf16.msra.mxu0 0
        %4279 = vmatprep.subr.bf16.mxu0 0
        %4280 = vmatpush2.bf16.msra.mxu0 0
        %4281 = vmatprep.subr.bf16.mxu0 0
        %4282 = vmatpush2.bf16.msra.mxu0 0
        %4283 = vmatprep.subr.bf16.mxu0 0
        %4284 = vmatpush2.bf16.msra.mxu0 0
        %4285 = vmatprep.subr.bf16.mxu0 0
        %4286 = vmatpush2.bf16.msra.mxu0 0
        %4287 = vmatprep.subr.bf16.mxu0 0
        %4288 = vmatpush2.bf16.msra.mxu0 0
        %4289 = vmatprep.subr.bf16.mxu0 0
        %4290 = vmatpush2.bf16.msra.mxu0 0
        %4291 = vmatprep.mubr.bf16.mxu0 0
        %4292 = vmatmul.mubr.bf16.gmra.mxu0 %v4254
        %v4293 = vpop.f32.mrf.mxu0
        %v4294 = vadd.f32 0.0, %v4293
        %v4295 = vpop.f32.mrf.mxu0
        %v4296 = vpop.f32.mrf.mxu0
        %v4297 = vpop.f32.mrf.mxu0
        %4298 = vdwg.mxu0
        %v4299 = vadd.f32 %v4247, %v4294
        %v4300 = vmax.f32 %v4299, 0.0
        %v4301 = vpack.c.bf16 %v4300, %v4300
        %v4304 = vunpack.c.l.s4 1966171168
        %v4305 = vunpack.c.0.s8 %v4304
        %v4306 = vlaneseq
        %v4307 = vshrl.u32 %v4306, 7
        %v4308 = vsub.s32 %v4305, %v4307
        %v4309 = vrot.slane %v4301, %v4308
        %v4310 = vcombine.high %v4309, %v4309
        %v4312 = vunpack.c.l.s4 1966171168
        %v4313 = vunpack.c.0.s8 %v4312
        %v4314 = vlaneseq
        %v4315 = vshrl.u32 %v4314, 7
        %v4316 = vsub.s32 %v4313, %v4315
        %v4317 = vrot.slane %v4309, %v4316
        %v4319 = vunpack.c.l.s4 1966171168
        %v4320 = vunpack.c.0.s8 %v4319
        %v4321 = vlaneseq
        %v4322 = vshrl.u32 %v4321, 7
        %v4323 = vsub.s32 %v4320, %v4322
        %v4324 = vrot.slane %v4310, %v4323
        %v4325 = vcombine.high %v4317, %v4317
        %v4326 = vcombine.high %v4324, %v4324
        %v4327 = vunpack.i.l.s16 %v4317
        %v4328 = vunpack.i.h.s16 %v4317
        %v4329 = vunpack.i.l.s16 %v4324
        %v4330 = vunpack.i.h.s16 %v4324
        %v4331 = vunpack.i.l.s16 %v4325
        %v4332 = vunpack.i.h.s16 %v4325
        %v4333 = vunpack.i.l.s16 %v4326
        %v4334 = vunpack.i.h.s16 %v4326
        %v4335 = vpack.i.b16 %v4327, %v4327
        %v4336 = vpack.i.b16 %v4328, %v4328
        %v4337 = vpack.i.b16 %v4329, %v4329
        %v4338 = vpack.i.b16 %v4330, %v4330
        %v4339 = vpack.i.b16 %v4331, %v4331
        %v4340 = vpack.i.b16 %v4332, %v4332
        %v4341 = vpack.i.b16 %v4333, %v4333
        %v4342 = vpack.i.b16 %v4334, %v4334
        %v4344 = vunpack.c.l.s4 286326784
        %v4345 = vunpack.c.0.s8 %v4344
        %v4346 = vlaneseq
        %v4347 = vshrl.u32 %v4346, 7
        %v4348 = vsub.s32 %v4345, %v4347
        %v4349 = vrot.slane %v4335, %v4348
        %v4351 = vunpack.c.l.s4 286326784
        %v4352 = vunpack.c.0.s8 %v4351
        %v4353 = vlaneseq
        %v4354 = vshrl.u32 %v4353, 7
        %v4355 = vsub.s32 %v4352, %v4354
        %v4356 = vrot.slane %v4336, %v4355
        %v4358 = vunpack.c.l.s4 286326784
        %v4359 = vunpack.c.0.s8 %v4358
        %v4360 = vlaneseq
        %v4361 = vshrl.u32 %v4360, 7
        %v4362 = vsub.s32 %v4359, %v4361
        %v4363 = vrot.slane %v4337, %v4362
        %v4365 = vunpack.c.l.s4 286326784
        %v4366 = vunpack.c.0.s8 %v4365
        %v4367 = vlaneseq
        %v4368 = vshrl.u32 %v4367, 7
        %v4369 = vsub.s32 %v4366, %v4368
        %v4370 = vrot.slane %v4338, %v4369
        %v4372 = vunpack.c.l.s4 286326784
        %v4373 = vunpack.c.0.s8 %v4372
        %v4374 = vlaneseq
        %v4375 = vshrl.u32 %v4374, 7
        %v4376 = vsub.s32 %v4373, %v4375
        %v4377 = vrot.slane %v4339, %v4376
        %v4379 = vunpack.c.l.s4 286326784
        %v4380 = vunpack.c.0.s8 %v4379
        %v4381 = vlaneseq
        %v4382 = vshrl.u32 %v4381, 7
        %v4383 = vsub.s32 %v4380, %v4382
        %v4384 = vrot.slane %v4340, %v4383
        %v4386 = vunpack.c.l.s4 286326784
        %v4387 = vunpack.c.0.s8 %v4386
        %v4388 = vlaneseq
        %v4389 = vshrl.u32 %v4388, 7
        %v4390 = vsub.s32 %v4387, %v4389
        %v4391 = vrot.slane %v4341, %v4390
        %v4393 = vunpack.c.l.s4 286326784
        %v4394 = vunpack.c.0.s8 %v4393
        %v4395 = vlaneseq
        %v4396 = vshrl.u32 %v4395, 7
        %v4397 = vsub.s32 %v4394, %v4396
        %v4398 = vrot.slane %v4342, %v4397
        %vm4407 = vcmask 253952
        %vm4408 = vsmask.f32 256
        %vm4409 = vmand %vm4407, %vm4408
        %v4410 = vld [vmem:[%s293] sm:$0x1]
        %v4411 = vsel %vm4409, %v4349, %v4410
        %4412 = vst [vmem:[%s293] sm:$0x1] %v4411
        %v4413 = vld [vmem:[%s293 + $0x8] sm:$0x1]
        %v4414 = vsel %vm4409, %v4356, %v4413
        %4415 = vst [vmem:[%s293 + $0x8] sm:$0x1] %v4414
        %v4416 = vld [vmem:[%s293 + $0x10] sm:$0x1]
        %v4417 = vsel %vm4409, %v4363, %v4416
        %4418 = vst [vmem:[%s293 + $0x10] sm:$0x1] %v4417
        %v4419 = vld [vmem:[%s293 + $0x18] sm:$0x1]
        %v4420 = vsel %vm4409, %v4370, %v4419
        %4421 = vst [vmem:[%s293 + $0x18] sm:$0x1] %v4420
        %v4422 = vld [vmem:[%s293 + $0x20] sm:$0x1]
        %v4423 = vsel %vm4409, %v4377, %v4422
        %4424 = vst [vmem:[%s293 + $0x20] sm:$0x1] %v4423
        %v4425 = vld [vmem:[%s293 + $0x28] sm:$0x1]
        %v4426 = vsel %vm4409, %v4384, %v4425
        %4427 = vst [vmem:[%s293 + $0x28] sm:$0x1] %v4426
        %v4428 = vld [vmem:[%s293 + $0x30] sm:$0x1]
        %v4429 = vsel %vm4409, %v4391, %v4428
        %4430 = vst [vmem:[%s293 + $0x30] sm:$0x1] %v4429
        %v4431 = vld [vmem:[%s293 + $0x38] sm:$0x1]
        %v4432 = vsel %vm4409, %v4398, %v4431
        %4433 = vst [vmem:[%s293 + $0x38] sm:$0x1] %v4432
        %v4434 = vld [vmem:[%s804] sm:$0xf]
        %v4435 = vld [vmem:[%s804 + $0x4] sm:$0xf]
        %v4436 = vld [vmem:[%s804 + $0x8] sm:$0xf]
        %v4440 = vunpack.c.l.b16 %v4434
        %v4441 = vunpack.c.l.b16 %v4435
        %v4442 = vunpack.c.l.b16 %v4436
        %v4443 = vpack.c.b16 %v4441, %v4440
        %v4444 = vpack.c.b16 %v4442, %v4442
        %v4447 = vsel %vm620, %v4444, 0
        %4449 = vmatprep.subr.bf16.mxu0 0
        %4450 = vmatpush1.bf16.msra.mxu0 0
        %4451 = vmatprep.subr.bf16.mxu0 0
        %4452 = vmatpush1.bf16.msra.mxu0 0
        %4453 = vmatprep.subr.bf16.mxu0 0
        %4454 = vmatpush1.bf16.msra.mxu0 0
        %4455 = vmatprep.subr.bf16.mxu0 0
        %4456 = vmatpush1.bf16.msra.mxu0 0
        %4457 = vmatprep.subr.bf16.mxu0 0
        %4458 = vmatpush1.bf16.msra.mxu0 0
        %4459 = vmatprep.subr.bf16.mxu0 0
        %4460 = vmatpush1.bf16.msra.mxu0 0
        %4461 = vmatprep.subr.bf16.mxu0 0
        %4462 = vmatpush1.bf16.msra.mxu0 %v4447
        %4463 = vmatprep.subr.bf16.mxu0 0
        %4464 = vmatpush1.bf16.msra.mxu0 %v4443
        %4465 = vmatprep.subr.bf16.mxu0 0
        %4466 = vmatpush2.bf16.msra.mxu0 0
        %4467 = vmatprep.subr.bf16.mxu0 0
        %4468 = vmatpush2.bf16.msra.mxu0 0
        %4469 = vmatprep.subr.bf16.mxu0 0
        %4470 = vmatpush2.bf16.msra.mxu0 0
        %4471 = vmatprep.subr.bf16.mxu0 0
        %4472 = vmatpush2.bf16.msra.mxu0 0
        %4473 = vmatprep.subr.bf16.mxu0 0
        %4474 = vmatpush2.bf16.msra.mxu0 0
        %4475 = vmatprep.subr.bf16.mxu0 0
        %4476 = vmatpush2.bf16.msra.mxu0 0
        %4477 = vmatprep.subr.bf16.mxu0 0
        %4478 = vmatpush2.bf16.msra.mxu0 0
        %4479 = vmatprep.subr.bf16.mxu0 0
        %4480 = vmatpush2.bf16.msra.mxu0 0
        %4481 = vmatprep.mubr.bf16.mxu0 0
        %4482 = vmatmul.mubr.bf16.gmra.mxu0 %v4150
        %v4483 = vpop.f32.mrf.mxu0
        %v4484 = vadd.f32 0.0, %v4483
        %v4485 = vpop.f32.mrf.mxu0
        %v4486 = vpop.f32.mrf.mxu0
        %v4487 = vpop.f32.mrf.mxu0
        %4488 = vdwg.mxu0
        %v4489 = vadd.f32 %v330, %v4484
        %4490 = vrot.lane.b32.xlu0 %v4443, 127
        %v4491 = vpop.permute.xlu0 %4490
        %4492 = vrot.lane.b32.xlu0 %v4444, 127
        %v4493 = vpop.permute.xlu0 %4492
        %v4496 = vsel %vm620, %v4493, 0
        %4498 = vmatprep.subr.bf16.mxu0 0
        %4499 = vmatpush1.bf16.msra.mxu0 0
        %4500 = vmatprep.subr.bf16.mxu0 0
        %4501 = vmatpush1.bf16.msra.mxu0 0
        %4502 = vmatprep.subr.bf16.mxu0 0
        %4503 = vmatpush1.bf16.msra.mxu0 0
        %4504 = vmatprep.subr.bf16.mxu0 0
        %4505 = vmatpush1.bf16.msra.mxu0 0
        %4506 = vmatprep.subr.bf16.mxu0 0
        %4507 = vmatpush1.bf16.msra.mxu0 0
        %4508 = vmatprep.subr.bf16.mxu0 0
        %4509 = vmatpush1.bf16.msra.mxu0 0
        %4510 = vmatprep.subr.bf16.mxu0 0
        %4511 = vmatpush1.bf16.msra.mxu0 %v4496
        %4512 = vmatprep.subr.bf16.mxu0 0
        %4513 = vmatpush1.bf16.msra.mxu0 %v4491
        %4514 = vmatprep.subr.bf16.mxu0 0
        %4515 = vmatpush2.bf16.msra.mxu0 0
        %4516 = vmatprep.subr.bf16.mxu0 0
        %4517 = vmatpush2.bf16.msra.mxu0 0
        %4518 = vmatprep.subr.bf16.mxu0 0
        %4519 = vmatpush2.bf16.msra.mxu0 0
        %4520 = vmatprep.subr.bf16.mxu0 0
        %4521 = vmatpush2.bf16.msra.mxu0 0
        %4522 = vmatprep.subr.bf16.mxu0 0
        %4523 = vmatpush2.bf16.msra.mxu0 0
        %4524 = vmatprep.subr.bf16.mxu0 0
        %4525 = vmatpush2.bf16.msra.mxu0 0
        %4526 = vmatprep.subr.bf16.mxu0 0
        %4527 = vmatpush2.bf16.msra.mxu0 0
        %4528 = vmatprep.subr.bf16.mxu0 0
        %4529 = vmatpush2.bf16.msra.mxu0 0
        %4530 = vmatprep.mubr.bf16.mxu0 0
        %4531 = vmatmul.mubr.bf16.gmra.mxu0 %v4202
        %v4532 = vpop.f32.mrf.mxu0
        %v4533 = vadd.f32 0.0, %v4532
        %v4534 = vpop.f32.mrf.mxu0
        %v4535 = vpop.f32.mrf.mxu0
        %v4536 = vpop.f32.mrf.mxu0
        %4537 = vdwg.mxu0
        %v4538 = vadd.f32 %v4489, %v4533
        %4539 = vrot.lane.b32.xlu0 %v4443, 126
        %v4540 = vpop.permute.xlu0 %4539
        %4541 = vrot.lane.b32.xlu0 %v4444, 126
        %v4542 = vpop.permute.xlu0 %4541
        %v4545 = vsel %vm620, %v4542, 0
        %4547 = vmatprep.subr.bf16.mxu0 0
        %4548 = vmatpush1.bf16.msra.mxu0 0
        %4549 = vmatprep.subr.bf16.mxu0 0
        %4550 = vmatpush1.bf16.msra.mxu0 0
        %4551 = vmatprep.subr.bf16.mxu0 0
        %4552 = vmatpush1.bf16.msra.mxu0 0
        %4553 = vmatprep.subr.bf16.mxu0 0
        %4554 = vmatpush1.bf16.msra.mxu0 0
        %4555 = vmatprep.subr.bf16.mxu0 0
        %4556 = vmatpush1.bf16.msra.mxu0 0
        %4557 = vmatprep.subr.bf16.mxu0 0
        %4558 = vmatpush1.bf16.msra.mxu0 0
        %4559 = vmatprep.subr.bf16.mxu0 0
        %4560 = vmatpush1.bf16.msra.mxu0 %v4545
        %4561 = vmatprep.subr.bf16.mxu0 0
        %4562 = vmatpush1.bf16.msra.mxu0 %v4540
        %4563 = vmatprep.subr.bf16.mxu0 0
        %4564 = vmatpush2.bf16.msra.mxu0 0
        %4565 = vmatprep.subr.bf16.mxu0 0
        %4566 = vmatpush2.bf16.msra.mxu0 0
        %4567 = vmatprep.subr.bf16.mxu0 0
        %4568 = vmatpush2.bf16.msra.mxu0 0
        %4569 = vmatprep.subr.bf16.mxu0 0
        %4570 = vmatpush2.bf16.msra.mxu0 0
        %4571 = vmatprep.subr.bf16.mxu0 0
        %4572 = vmatpush2.bf16.msra.mxu0 0
        %4573 = vmatprep.subr.bf16.mxu0 0
        %4574 = vmatpush2.bf16.msra.mxu0 0
        %4575 = vmatprep.subr.bf16.mxu0 0
        %4576 = vmatpush2.bf16.msra.mxu0 0
        %4577 = vmatprep.subr.bf16.mxu0 0
        %4578 = vmatpush2.bf16.msra.mxu0 0
        %4579 = vmatprep.mubr.bf16.mxu0 0
        %4580 = vmatmul.mubr.bf16.gmra.mxu0 %v4254
        %v4581 = vpop.f32.mrf.mxu0
        %v4582 = vadd.f32 0.0, %v4581
        %v4583 = vpop.f32.mrf.mxu0
        %v4584 = vpop.f32.mrf.mxu0
        %v4585 = vpop.f32.mrf.mxu0
        %4586 = vdwg.mxu0
        %v4587 = vadd.f32 %v4538, %v4582
        %v4588 = vmax.f32 %v4587, 0.0
        %v4589 = vpack.c.bf16 %v4588, %v4588
        %v4592 = vunpack.c.l.s4 1966171168
        %v4593 = vunpack.c.0.s8 %v4592
        %v4594 = vlaneseq
        %v4595 = vshrl.u32 %v4594, 7
        %v4596 = vsub.s32 %v4593, %v4595
        %v4597 = vrot.slane %v4589, %v4596
        %v4598 = vcombine.high %v4597, %v4597
        %v4600 = vunpack.c.l.s4 1966171168
        %v4601 = vunpack.c.0.s8 %v4600
        %v4602 = vlaneseq
        %v4603 = vshrl.u32 %v4602, 7
        %v4604 = vsub.s32 %v4601, %v4603
        %v4605 = vrot.slane %v4597, %v4604
        %v4607 = vunpack.c.l.s4 1966171168
        %v4608 = vunpack.c.0.s8 %v4607
        %v4609 = vlaneseq
        %v4610 = vshrl.u32 %v4609, 7
        %v4611 = vsub.s32 %v4608, %v4610
        %v4612 = vrot.slane %v4598, %v4611
        %v4613 = vcombine.high %v4605, %v4605
        %v4614 = vcombine.high %v4612, %v4612
        %v4615 = vunpack.i.l.s16 %v4605
        %v4616 = vunpack.i.h.s16 %v4605
        %v4617 = vunpack.i.l.s16 %v4612
        %v4618 = vunpack.i.h.s16 %v4612
        %v4619 = vunpack.i.l.s16 %v4613
        %v4620 = vunpack.i.h.s16 %v4613
        %v4621 = vunpack.i.l.s16 %v4614
        %v4622 = vunpack.i.h.s16 %v4614
        %v4623 = vpack.i.b16 %v4615, %v4615
        %v4624 = vpack.i.b16 %v4616, %v4616
        %v4625 = vpack.i.b16 %v4617, %v4617
        %v4626 = vpack.i.b16 %v4618, %v4618
        %v4627 = vpack.i.b16 %v4619, %v4619
        %v4628 = vpack.i.b16 %v4620, %v4620
        %v4629 = vpack.i.b16 %v4621, %v4621
        %v4630 = vpack.i.b16 %v4622, %v4622
        %v4632 = vunpack.c.l.s4 286326784
        %v4633 = vunpack.c.0.s8 %v4632
        %v4634 = vlaneseq
        %v4635 = vshrl.u32 %v4634, 7
        %v4636 = vsub.s32 %v4633, %v4635
        %v4637 = vrot.slane %v4623, %v4636
        %v4639 = vunpack.c.l.s4 286326784
        %v4640 = vunpack.c.0.s8 %v4639
        %v4641 = vlaneseq
        %v4642 = vshrl.u32 %v4641, 7
        %v4643 = vsub.s32 %v4640, %v4642
        %v4644 = vrot.slane %v4624, %v4643
        %v4646 = vunpack.c.l.s4 286326784
        %v4647 = vunpack.c.0.s8 %v4646
        %v4648 = vlaneseq
        %v4649 = vshrl.u32 %v4648, 7
        %v4650 = vsub.s32 %v4647, %v4649
        %v4651 = vrot.slane %v4625, %v4650
        %v4653 = vunpack.c.l.s4 286326784
        %v4654 = vunpack.c.0.s8 %v4653
        %v4655 = vlaneseq
        %v4656 = vshrl.u32 %v4655, 7
        %v4657 = vsub.s32 %v4654, %v4656
        %v4658 = vrot.slane %v4626, %v4657
        %v4660 = vunpack.c.l.s4 286326784
        %v4661 = vunpack.c.0.s8 %v4660
        %v4662 = vlaneseq
        %v4663 = vshrl.u32 %v4662, 7
        %v4664 = vsub.s32 %v4661, %v4663
        %v4665 = vrot.slane %v4627, %v4664
        %v4667 = vunpack.c.l.s4 286326784
        %v4668 = vunpack.c.0.s8 %v4667
        %v4669 = vlaneseq
        %v4670 = vshrl.u32 %v4669, 7
        %v4671 = vsub.s32 %v4668, %v4670
        %v4672 = vrot.slane %v4628, %v4671
        %v4674 = vunpack.c.l.s4 286326784
        %v4675 = vunpack.c.0.s8 %v4674
        %v4676 = vlaneseq
        %v4677 = vshrl.u32 %v4676, 7
        %v4678 = vsub.s32 %v4675, %v4677
        %v4679 = vrot.slane %v4629, %v4678
        %v4681 = vunpack.c.l.s4 286326784
        %v4682 = vunpack.c.0.s8 %v4681
        %v4683 = vlaneseq
        %v4684 = vshrl.u32 %v4683, 7
        %v4685 = vsub.s32 %v4682, %v4684
        %v4686 = vrot.slane %v4630, %v4685
        %vm4695 = vsmask.f32 7938
        %vm4696 = vmand %vm4407, %vm4695
        %v4697 = vld [vmem:[%s293] sm:$0x1]
        %v4698 = vsel %vm4696, %v4637, %v4697
        %4699 = vst [vmem:[%s293] sm:$0x1] %v4698
        %v4700 = vld [vmem:[%s293 + $0x8] sm:$0x1]
        %v4701 = vsel %vm4696, %v4644, %v4700
        %4702 = vst [vmem:[%s293 + $0x8] sm:$0x1] %v4701
        %v4703 = vld [vmem:[%s293 + $0x10] sm:$0x1]
        %v4704 = vsel %vm4696, %v4651, %v4703
        %4705 = vst [vmem:[%s293 + $0x10] sm:$0x1] %v4704
        %v4706 = vld [vmem:[%s293 + $0x18] sm:$0x1]
        %v4707 = vsel %vm4696, %v4658, %v4706
        %4708 = vst [vmem:[%s293 + $0x18] sm:$0x1] %v4707
        %v4709 = vld [vmem:[%s293 + $0x20] sm:$0x1]
        %v4710 = vsel %vm4696, %v4665, %v4709
        %4711 = vst [vmem:[%s293 + $0x20] sm:$0x1] %v4710
        %v4712 = vld [vmem:[%s293 + $0x28] sm:$0x1]
        %v4713 = vsel %vm4696, %v4672, %v4712
        %4714 = vst [vmem:[%s293 + $0x28] sm:$0x1] %v4713
        %v4715 = vld [vmem:[%s293 + $0x30] sm:$0x1]
        %v4716 = vsel %vm4696, %v4679, %v4715
        %4717 = vst [vmem:[%s293 + $0x30] sm:$0x1] %v4716
        %v4718 = vld [vmem:[%s293 + $0x38] sm:$0x1]
        %v4719 = vsel %vm4696, %v4686, %v4718
        %4720 = vst [vmem:[%s293 + $0x38] sm:$0x1] %v4719
        %v4721 = vld [vmem:[%s1011] sm:$0xf]
        %v4722 = vld [vmem:[%s1011 + $0x4] sm:$0xf]
        %v4723 = vld [vmem:[%s1011 + $0x8] sm:$0xf]
        %v4727 = vunpack.c.l.b16 %v4721
        %v4728 = vunpack.c.l.b16 %v4722
        %v4729 = vunpack.c.l.b16 %v4723
        %v4730 = vpack.c.b16 %v4728, %v4727
        %v4731 = vpack.c.b16 %v4729, %v4729
        %v4734 = vsel %vm620, %v4731, 0
        %4736 = vmatprep.subr.bf16.mxu0 0
        %4737 = vmatpush1.bf16.msra.mxu0 0
        %4738 = vmatprep.subr.bf16.mxu0 0
        %4739 = vmatpush1.bf16.msra.mxu0 0
        %4740 = vmatprep.subr.bf16.mxu0 0
        %4741 = vmatpush1.bf16.msra.mxu0 0
        %4742 = vmatprep.subr.bf16.mxu0 0
        %4743 = vmatpush1.bf16.msra.mxu0 0
        %4744 = vmatprep.subr.bf16.mxu0 0
        %4745 = vmatpush1.bf16.msra.mxu0 0
        %4746 = vmatprep.subr.bf16.mxu0 0
        %4747 = vmatpush1.bf16.msra.mxu0 0
        %4748 = vmatprep.subr.bf16.mxu0 0
        %4749 = vmatpush1.bf16.msra.mxu0 %v4734
        %4750 = vmatprep.subr.bf16.mxu0 0
        %4751 = vmatpush1.bf16.msra.mxu0 %v4730
        %4752 = vmatprep.subr.bf16.mxu0 0
        %4753 = vmatpush2.bf16.msra.mxu0 0
        %4754 = vmatprep.subr.bf16.mxu0 0
        %4755 = vmatpush2.bf16.msra.mxu0 0
        %4756 = vmatprep.subr.bf16.mxu0 0
        %4757 = vmatpush2.bf16.msra.mxu0 0
        %4758 = vmatprep.subr.bf16.mxu0 0
        %4759 = vmatpush2.bf16.msra.mxu0 0
        %4760 = vmatprep.subr.bf16.mxu0 0
        %4761 = vmatpush2.bf16.msra.mxu0 0
        %4762 = vmatprep.subr.bf16.mxu0 0
        %4763 = vmatpush2.bf16.msra.mxu0 0
        %4764 = vmatprep.subr.bf16.mxu0 0
        %4765 = vmatpush2.bf16.msra.mxu0 0
        %4766 = vmatprep.subr.bf16.mxu0 0
        %4767 = vmatpush2.bf16.msra.mxu0 0
        %4768 = vmatprep.mubr.bf16.mxu0 0
        %4769 = vmatmul.mubr.bf16.gmra.mxu0 %v4150
        %v4770 = vpop.f32.mrf.mxu0
        %v4771 = vadd.f32 0.0, %v4770
        %v4772 = vpop.f32.mrf.mxu0
        %v4773 = vpop.f32.mrf.mxu0
        %v4774 = vpop.f32.mrf.mxu0
        %4775 = vdwg.mxu0
        %v4776 = vadd.f32 %v330, %v4771
        %4777 = vrot.lane.b32.xlu0 %v4730, 127
        %v4778 = vpop.permute.xlu0 %4777
        %4779 = vrot.lane.b32.xlu0 %v4731, 127
        %v4780 = vpop.permute.xlu0 %4779
        %v4783 = vsel %vm620, %v4780, 0
        %4785 = vmatprep.subr.bf16.mxu0 0
        %4786 = vmatpush1.bf16.msra.mxu0 0
        %4787 = vmatprep.subr.bf16.mxu0 0
        %4788 = vmatpush1.bf16.msra.mxu0 0
        %4789 = vmatprep.subr.bf16.mxu0 0
        %4790 = vmatpush1.bf16.msra.mxu0 0
        %4791 = vmatprep.subr.bf16.mxu0 0
        %4792 = vmatpush1.bf16.msra.mxu0 0
        %4793 = vmatprep.subr.bf16.mxu0 0
        %4794 = vmatpush1.bf16.msra.mxu0 0
        %4795 = vmatprep.subr.bf16.mxu0 0
        %4796 = vmatpush1.bf16.msra.mxu0 0
        %4797 = vmatprep.subr.bf16.mxu0 0
        %4798 = vmatpush1.bf16.msra.mxu0 %v4783
        %4799 = vmatprep.subr.bf16.mxu0 0
        %4800 = vmatpush1.bf16.msra.mxu0 %v4778
        %4801 = vmatprep.subr.bf16.mxu0 0
        %4802 = vmatpush2.bf16.msra.mxu0 0
        %4803 = vmatprep.subr.bf16.mxu0 0
        %4804 = vmatpush2.bf16.msra.mxu0 0
        %4805 = vmatprep.subr.bf16.mxu0 0
        %4806 = vmatpush2.bf16.msra.mxu0 0
        %4807 = vmatprep.subr.bf16.mxu0 0
        %4808 = vmatpush2.bf16.msra.mxu0 0
        %4809 = vmatprep.subr.bf16.mxu0 0
        %4810 = vmatpush2.bf16.msra.mxu0 0
        %4811 = vmatprep.subr.bf16.mxu0 0
        %4812 = vmatpush2.bf16.msra.mxu0 0
        %4813 = vmatprep.subr.bf16.mxu0 0
        %4814 = vmatpush2.bf16.msra.mxu0 0
        %4815 = vmatprep.subr.bf16.mxu0 0
        %4816 = vmatpush2.bf16.msra.mxu0 0
        %4817 = vmatprep.mubr.bf16.mxu0 0
        %4818 = vmatmul.mubr.bf16.gmra.mxu0 %v4202
        %v4819 = vpop.f32.mrf.mxu0
        %v4820 = vadd.f32 0.0, %v4819
        %v4821 = vpop.f32.mrf.mxu0
        %v4822 = vpop.f32.mrf.mxu0
        %v4823 = vpop.f32.mrf.mxu0
        %4824 = vdwg.mxu0
        %v4825 = vadd.f32 %v4776, %v4820
        %4826 = vrot.lane.b32.xlu0 %v4730, 126
        %v4827 = vpop.permute.xlu0 %4826
        %4828 = vrot.lane.b32.xlu0 %v4731, 126
        %v4829 = vpop.permute.xlu0 %4828
        %v4832 = vsel %vm620, %v4829, 0
        %4834 = vmatprep.subr.bf16.mxu0 0
        %4835 = vmatpush1.bf16.msra.mxu0 0
        %4836 = vmatprep.subr.bf16.mxu0 0
        %4837 = vmatpush1.bf16.msra.mxu0 0
        %4838 = vmatprep.subr.bf16.mxu0 0
        %4839 = vmatpush1.bf16.msra.mxu0 0
        %4840 = vmatprep.subr.bf16.mxu0 0
        %4841 = vmatpush1.bf16.msra.mxu0 0
        %4842 = vmatprep.subr.bf16.mxu0 0
        %4843 = vmatpush1.bf16.msra.mxu0 0
        %4844 = vmatprep.subr.bf16.mxu0 0
        %4845 = vmatpush1.bf16.msra.mxu0 0
        %4846 = vmatprep.subr.bf16.mxu0 0
        %4847 = vmatpush1.bf16.msra.mxu0 %v4832
        %4848 = vmatprep.subr.bf16.mxu0 0
        %4849 = vmatpush1.bf16.msra.mxu0 %v4827
        %4850 = vmatprep.subr.bf16.mxu0 0
        %4851 = vmatpush2.bf16.msra.mxu0 0
        %4852 = vmatprep.subr.bf16.mxu0 0
        %4853 = vmatpush2.bf16.msra.mxu0 0
        %4854 = vmatprep.subr.bf16.mxu0 0
        %4855 = vmatpush2.bf16.msra.mxu0 0
        %4856 = vmatprep.subr.bf16.mxu0 0
        %4857 = vmatpush2.bf16.msra.mxu0 0
        %4858 = vmatprep.subr.bf16.mxu0 0
        %4859 = vmatpush2.bf16.msra.mxu0 0
        %4860 = vmatprep.subr.bf16.mxu0 0
        %4861 = vmatpush2.bf16.msra.mxu0 0
        %4862 = vmatprep.subr.bf16.mxu0 0
        %4863 = vmatpush2.bf16.msra.mxu0 0
        %4864 = vmatprep.subr.bf16.mxu0 0
        %4865 = vmatpush2.bf16.msra.mxu0 0
        %4866 = vmatprep.mubr.bf16.mxu0 0
        %4867 = vmatmul.mubr.bf16.gmra.mxu0 %v4254
        %v4868 = vpop.f32.mrf.mxu0
        %v4869 = vadd.f32 0.0, %v4868
        %v4870 = vpop.f32.mrf.mxu0
        %v4871 = vpop.f32.mrf.mxu0
        %v4872 = vpop.f32.mrf.mxu0
        %4873 = vdwg.mxu0
        %v4874 = vadd.f32 %v4825, %v4869
        %v4875 = vmax.f32 %v4874, 0.0
        %v4876 = vpack.c.bf16 %v4875, %v4875
        %v4879 = vunpack.c.l.s4 1966171168
        %v4880 = vunpack.c.0.s8 %v4879
        %v4881 = vlaneseq
        %v4882 = vshrl.u32 %v4881, 7
        %v4883 = vsub.s32 %v4880, %v4882
        %v4884 = vrot.slane %v4876, %v4883
        %v4885 = vcombine.high %v4884, %v4884
        %v4887 = vunpack.c.l.s4 1966171168
        %v4888 = vunpack.c.0.s8 %v4887
        %v4889 = vlaneseq
        %v4890 = vshrl.u32 %v4889, 7
        %v4891 = vsub.s32 %v4888, %v4890
        %v4892 = vrot.slane %v4884, %v4891
        %v4894 = vunpack.c.l.s4 1966171168
        %v4895 = vunpack.c.0.s8 %v4894
        %v4896 = vlaneseq
        %v4897 = vshrl.u32 %v4896, 7
        %v4898 = vsub.s32 %v4895, %v4897
        %v4899 = vrot.slane %v4885, %v4898
        %v4900 = vcombine.high %v4892, %v4892
        %v4901 = vcombine.high %v4899, %v4899
        %v4902 = vunpack.i.l.s16 %v4892
        %v4903 = vunpack.i.h.s16 %v4892
        %v4904 = vunpack.i.l.s16 %v4899
        %v4905 = vunpack.i.h.s16 %v4899
        %v4906 = vunpack.i.l.s16 %v4900
        %v4907 = vunpack.i.h.s16 %v4900
        %v4908 = vunpack.i.l.s16 %v4901
        %v4909 = vunpack.i.h.s16 %v4901
        %v4910 = vpack.i.b16 %v4902, %v4902
        %v4911 = vpack.i.b16 %v4903, %v4903
        %v4912 = vpack.i.b16 %v4904, %v4904
        %v4913 = vpack.i.b16 %v4905, %v4905
        %v4914 = vpack.i.b16 %v4906, %v4906
        %v4915 = vpack.i.b16 %v4907, %v4907
        %v4916 = vpack.i.b16 %v4908, %v4908
        %v4917 = vpack.i.b16 %v4909, %v4909
        %v4919 = vunpack.c.l.s4 286326784
        %v4920 = vunpack.c.0.s8 %v4919
        %v4921 = vlaneseq
        %v4922 = vshrl.u32 %v4921, 7
        %v4923 = vsub.s32 %v4920, %v4922
        %v4924 = vrot.slane %v4910, %v4923
        %v4926 = vunpack.c.l.s4 286326784
        %v4927 = vunpack.c.0.s8 %v4926
        %v4928 = vlaneseq
        %v4929 = vshrl.u32 %v4928, 7
        %v4930 = vsub.s32 %v4927, %v4929
        %v4931 = vrot.slane %v4911, %v4930
        %v4933 = vunpack.c.l.s4 286326784
        %v4934 = vunpack.c.0.s8 %v4933
        %v4935 = vlaneseq
        %v4936 = vshrl.u32 %v4935, 7
        %v4937 = vsub.s32 %v4934, %v4936
        %v4938 = vrot.slane %v4912, %v4937
        %v4940 = vunpack.c.l.s4 286326784
        %v4941 = vunpack.c.0.s8 %v4940
        %v4942 = vlaneseq
        %v4943 = vshrl.u32 %v4942, 7
        %v4944 = vsub.s32 %v4941, %v4943
        %v4945 = vrot.slane %v4913, %v4944
        %v4947 = vunpack.c.l.s4 286326784
        %v4948 = vunpack.c.0.s8 %v4947
        %v4949 = vlaneseq
        %v4950 = vshrl.u32 %v4949, 7
        %v4951 = vsub.s32 %v4948, %v4950
        %v4952 = vrot.slane %v4914, %v4951
        %v4954 = vunpack.c.l.s4 286326784
        %v4955 = vunpack.c.0.s8 %v4954
        %v4956 = vlaneseq
        %v4957 = vshrl.u32 %v4956, 7
        %v4958 = vsub.s32 %v4955, %v4957
        %v4959 = vrot.slane %v4915, %v4958
        %v4961 = vunpack.c.l.s4 286326784
        %v4962 = vunpack.c.0.s8 %v4961
        %v4963 = vlaneseq
        %v4964 = vshrl.u32 %v4963, 7
        %v4965 = vsub.s32 %v4962, %v4964
        %v4966 = vrot.slane %v4916, %v4965
        %v4968 = vunpack.c.l.s4 286326784
        %v4969 = vunpack.c.0.s8 %v4968
        %v4970 = vlaneseq
        %v4971 = vshrl.u32 %v4970, 7
        %v4972 = vsub.s32 %v4969, %v4971
        %v4973 = vrot.slane %v4917, %v4972
        %vm4982 = vcmask 254977
        %vm4983 = vsmask.f32 1280
        %vm4984 = vmand %vm4982, %vm4983
        %v4985 = vld [vmem:[%s293] sm:$0x2]
        %v4986 = vsel %vm4984, %v4924, %v4985
        %4987 = vst [vmem:[%s293] sm:$0x2] %v4986
        %v4988 = vld [vmem:[%s293 + $0x8] sm:$0x2]
        %v4989 = vsel %vm4984, %v4931, %v4988
        %4990 = vst [vmem:[%s293 + $0x8] sm:$0x2] %v4989
        %v4991 = vld [vmem:[%s293 + $0x10] sm:$0x2]
        %v4992 = vsel %vm4984, %v4938, %v4991
        %4993 = vst [vmem:[%s293 + $0x10] sm:$0x2] %v4992
        %v4994 = vld [vmem:[%s293 + $0x18] sm:$0x2]
        %v4995 = vsel %vm4984, %v4945, %v4994
        %4996 = vst [vmem:[%s293 + $0x18] sm:$0x2] %v4995
        %v4997 = vld [vmem:[%s293 + $0x20] sm:$0x2]
        %v4998 = vsel %vm4984, %v4952, %v4997
        %4999 = vst [vmem:[%s293 + $0x20] sm:$0x2] %v4998
        %v5000 = vld [vmem:[%s293 + $0x28] sm:$0x2]
        %v5001 = vsel %vm4984, %v4959, %v5000
        %5002 = vst [vmem:[%s293 + $0x28] sm:$0x2] %v5001
        %v5003 = vld [vmem:[%s293 + $0x30] sm:$0x2]
        %v5004 = vsel %vm4984, %v4966, %v5003
        %5005 = vst [vmem:[%s293 + $0x30] sm:$0x2] %v5004
        %v5006 = vld [vmem:[%s293 + $0x38] sm:$0x2]
        %v5007 = vsel %vm4984, %v4973, %v5006
        %5008 = vst [vmem:[%s293 + $0x38] sm:$0x2] %v5007
        %v5009 = vld [vmem:[%s1217] sm:$0xf]
        %v5010 = vld [vmem:[%s1217 + $0x4] sm:$0xf]
        %v5011 = vld [vmem:[%s1217 + $0x8] sm:$0xf]
        %v5015 = vunpack.c.l.b16 %v5009
        %v5016 = vunpack.c.l.b16 %v5010
        %v5017 = vunpack.c.l.b16 %v5011
        %v5018 = vpack.c.b16 %v5016, %v5015
        %v5019 = vpack.c.b16 %v5017, %v5017
        %v5022 = vsel %vm620, %v5019, 0
        %5024 = vmatprep.subr.bf16.mxu0 0
        %5025 = vmatpush1.bf16.msra.mxu0 0
        %5026 = vmatprep.subr.bf16.mxu0 0
        %5027 = vmatpush1.bf16.msra.mxu0 0
        %5028 = vmatprep.subr.bf16.mxu0 0
        %5029 = vmatpush1.bf16.msra.mxu0 0
        %5030 = vmatprep.subr.bf16.mxu0 0
        %5031 = vmatpush1.bf16.msra.mxu0 0
        %5032 = vmatprep.subr.bf16.mxu0 0
        %5033 = vmatpush1.bf16.msra.mxu0 0
        %5034 = vmatprep.subr.bf16.mxu0 0
        %5035 = vmatpush1.bf16.msra.mxu0 0
        %5036 = vmatprep.subr.bf16.mxu0 0
        %5037 = vmatpush1.bf16.msra.mxu0 %v5022
        %5038 = vmatprep.subr.bf16.mxu0 0
        %5039 = vmatpush1.bf16.msra.mxu0 %v5018
        %5040 = vmatprep.subr.bf16.mxu0 0
        %5041 = vmatpush2.bf16.msra.mxu0 0
        %5042 = vmatprep.subr.bf16.mxu0 0
        %5043 = vmatpush2.bf16.msra.mxu0 0
        %5044 = vmatprep.subr.bf16.mxu0 0
        %5045 = vmatpush2.bf16.msra.mxu0 0
        %5046 = vmatprep.subr.bf16.mxu0 0
        %5047 = vmatpush2.bf16.msra.mxu0 0
        %5048 = vmatprep.subr.bf16.mxu0 0
        %5049 = vmatpush2.bf16.msra.mxu0 0
        %5050 = vmatprep.subr.bf16.mxu0 0
        %5051 = vmatpush2.bf16.msra.mxu0 0
        %5052 = vmatprep.subr.bf16.mxu0 0
        %5053 = vmatpush2.bf16.msra.mxu0 0
        %5054 = vmatprep.subr.bf16.mxu0 0
        %5055 = vmatpush2.bf16.msra.mxu0 0
        %5056 = vmatprep.mubr.bf16.mxu0 0
        %5057 = vmatmul.mubr.bf16.gmra.mxu0 %v4150
        %v5058 = vpop.f32.mrf.mxu0
        %v5059 = vadd.f32 0.0, %v5058
        %v5060 = vpop.f32.mrf.mxu0
        %v5061 = vpop.f32.mrf.mxu0
        %v5062 = vpop.f32.mrf.mxu0
        %5063 = vdwg.mxu0
        %v5064 = vadd.f32 %v330, %v5059
        %5065 = vrot.lane.b32.xlu0 %v5018, 127
        %v5066 = vpop.permute.xlu0 %5065
        %5067 = vrot.lane.b32.xlu0 %v5019, 127
        %v5068 = vpop.permute.xlu0 %5067
        %v5071 = vsel %vm620, %v5068, 0
        %5073 = vmatprep.subr.bf16.mxu0 0
        %5074 = vmatpush1.bf16.msra.mxu0 0
        %5075 = vmatprep.subr.bf16.mxu0 0
        %5076 = vmatpush1.bf16.msra.mxu0 0
        %5077 = vmatprep.subr.bf16.mxu0 0
        %5078 = vmatpush1.bf16.msra.mxu0 0
        %5079 = vmatprep.subr.bf16.mxu0 0
        %5080 = vmatpush1.bf16.msra.mxu0 0
        %5081 = vmatprep.subr.bf16.mxu0 0
        %5082 = vmatpush1.bf16.msra.mxu0 0
        %5083 = vmatprep.subr.bf16.mxu0 0
        %5084 = vmatpush1.bf16.msra.mxu0 0
        %5085 = vmatprep.subr.bf16.mxu0 0
        %5086 = vmatpush1.bf16.msra.mxu0 %v5071
        %5087 = vmatprep.subr.bf16.mxu0 0
        %5088 = vmatpush1.bf16.msra.mxu0 %v5066
        %5089 = vmatprep.subr.bf16.mxu0 0
        %5090 = vmatpush2.bf16.msra.mxu0 0
        %5091 = vmatprep.subr.bf16.mxu0 0
        %5092 = vmatpush2.bf16.msra.mxu0 0
        %5093 = vmatprep.subr.bf16.mxu0 0
        %5094 = vmatpush2.bf16.msra.mxu0 0
        %5095 = vmatprep.subr.bf16.mxu0 0
        %5096 = vmatpush2.bf16.msra.mxu0 0
        %5097 = vmatprep.subr.bf16.mxu0 0
        %5098 = vmatpush2.bf16.msra.mxu0 0
        %5099 = vmatprep.subr.bf16.mxu0 0
        %5100 = vmatpush2.bf16.msra.mxu0 0
        %5101 = vmatprep.subr.bf16.mxu0 0
        %5102 = vmatpush2.bf16.msra.mxu0 0
        %5103 = vmatprep.subr.bf16.mxu0 0
        %5104 = vmatpush2.bf16.msra.mxu0 0
        %5105 = vmatprep.mubr.bf16.mxu0 0
        %5106 = vmatmul.mubr.bf16.gmra.mxu0 %v4202
        %v5107 = vpop.f32.mrf.mxu0
        %v5108 = vadd.f32 0.0, %v5107
        %v5109 = vpop.f32.mrf.mxu0
        %v5110 = vpop.f32.mrf.mxu0
        %v5111 = vpop.f32.mrf.mxu0
        %5112 = vdwg.mxu0
        %v5113 = vadd.f32 %v5064, %v5108
        %5114 = vrot.lane.b32.xlu0 %v5018, 126
        %v5115 = vpop.permute.xlu0 %5114
        %5116 = vrot.lane.b32.xlu0 %v5019, 126
        %v5117 = vpop.permute.xlu0 %5116
        %v5120 = vsel %vm620, %v5117, 0
        %5122 = vmatprep.subr.bf16.mxu0 0
        %5123 = vmatpush1.bf16.msra.mxu0 0
        %5124 = vmatprep.subr.bf16.mxu0 0
        %5125 = vmatpush1.bf16.msra.mxu0 0
        %5126 = vmatprep.subr.bf16.mxu0 0
        %5127 = vmatpush1.bf16.msra.mxu0 0
        %5128 = vmatprep.subr.bf16.mxu0 0
        %5129 = vmatpush1.bf16.msra.mxu0 0
        %5130 = vmatprep.subr.bf16.mxu0 0
        %5131 = vmatpush1.bf16.msra.mxu0 0
        %5132 = vmatprep.subr.bf16.mxu0 0
        %5133 = vmatpush1.bf16.msra.mxu0 0
        %5134 = vmatprep.subr.bf16.mxu0 0
        %5135 = vmatpush1.bf16.msra.mxu0 %v5120
        %5136 = vmatprep.subr.bf16.mxu0 0
        %5137 = vmatpush1.bf16.msra.mxu0 %v5115
        %5138 = vmatprep.subr.bf16.mxu0 0
        %5139 = vmatpush2.bf16.msra.mxu0 0
        %5140 = vmatprep.subr.bf16.mxu0 0
        %5141 = vmatpush2.bf16.msra.mxu0 0
        %5142 = vmatprep.subr.bf16.mxu0 0
        %5143 = vmatpush2.bf16.msra.mxu0 0
        %5144 = vmatprep.subr.bf16.mxu0 0
        %5145 = vmatpush2.bf16.msra.mxu0 0
        %5146 = vmatprep.subr.bf16.mxu0 0
        %5147 = vmatpush2.bf16.msra.mxu0 0
        %5148 = vmatprep.subr.bf16.mxu0 0
        %5149 = vmatpush2.bf16.msra.mxu0 0
        %5150 = vmatprep.subr.bf16.mxu0 0
        %5151 = vmatpush2.bf16.msra.mxu0 0
        %5152 = vmatprep.subr.bf16.mxu0 0
        %5153 = vmatpush2.bf16.msra.mxu0 0
        %5154 = vmatprep.mubr.bf16.mxu0 0
        %5155 = vmatmul.mubr.bf16.gmra.mxu0 %v4254
        %v5156 = vpop.f32.mrf.mxu0
        %v5157 = vadd.f32 0.0, %v5156
        %v5158 = vpop.f32.mrf.mxu0
        %v5159 = vpop.f32.mrf.mxu0
        %v5160 = vpop.f32.mrf.mxu0
        %5161 = vdwg.mxu0
        %v5162 = vadd.f32 %v5113, %v5157
        %v5163 = vmax.f32 %v5162, 0.0
        %v5164 = vpack.c.bf16 %v5163, %v5163
        %v5167 = vunpack.c.l.s4 1966171168
        %v5168 = vunpack.c.0.s8 %v5167
        %v5169 = vlaneseq
        %v5170 = vshrl.u32 %v5169, 7
        %v5171 = vsub.s32 %v5168, %v5170
        %v5172 = vrot.slane %v5164, %v5171
        %v5173 = vcombine.high %v5172, %v5172
        %v5175 = vunpack.c.l.s4 1966171168
        %v5176 = vunpack.c.0.s8 %v5175
        %v5177 = vlaneseq
        %v5178 = vshrl.u32 %v5177, 7
        %v5179 = vsub.s32 %v5176, %v5178
        %v5180 = vrot.slane %v5172, %v5179
        %v5182 = vunpack.c.l.s4 1966171168
        %v5183 = vunpack.c.0.s8 %v5182
        %v5184 = vlaneseq
        %v5185 = vshrl.u32 %v5184, 7
        %v5186 = vsub.s32 %v5183, %v5185
        %v5187 = vrot.slane %v5173, %v5186
        %v5188 = vcombine.high %v5180, %v5180
        %v5189 = vcombine.high %v5187, %v5187
        %v5190 = vunpack.i.l.s16 %v5180
        %v5191 = vunpack.i.h.s16 %v5180
        %v5192 = vunpack.i.l.s16 %v5187
        %v5193 = vunpack.i.h.s16 %v5187
        %v5194 = vunpack.i.l.s16 %v5188
        %v5195 = vunpack.i.h.s16 %v5188
        %v5196 = vunpack.i.l.s16 %v5189
        %v5197 = vunpack.i.h.s16 %v5189
        %v5198 = vpack.i.b16 %v5190, %v5190
        %v5199 = vpack.i.b16 %v5191, %v5191
        %v5200 = vpack.i.b16 %v5192, %v5192
        %v5201 = vpack.i.b16 %v5193, %v5193
        %v5202 = vpack.i.b16 %v5194, %v5194
        %v5203 = vpack.i.b16 %v5195, %v5195
        %v5204 = vpack.i.b16 %v5196, %v5196
        %v5205 = vpack.i.b16 %v5197, %v5197
        %v5207 = vunpack.c.l.s4 286326784
        %v5208 = vunpack.c.0.s8 %v5207
        %v5209 = vlaneseq
        %v5210 = vshrl.u32 %v5209, 7
        %v5211 = vsub.s32 %v5208, %v5210
        %v5212 = vrot.slane %v5198, %v5211
        %v5214 = vunpack.c.l.s4 286326784
        %v5215 = vunpack.c.0.s8 %v5214
        %v5216 = vlaneseq
        %v5217 = vshrl.u32 %v5216, 7
        %v5218 = vsub.s32 %v5215, %v5217
        %v5219 = vrot.slane %v5199, %v5218
        %v5221 = vunpack.c.l.s4 286326784
        %v5222 = vunpack.c.0.s8 %v5221
        %v5223 = vlaneseq
        %v5224 = vshrl.u32 %v5223, 7
        %v5225 = vsub.s32 %v5222, %v5224
        %v5226 = vrot.slane %v5200, %v5225
        %v5228 = vunpack.c.l.s4 286326784
        %v5229 = vunpack.c.0.s8 %v5228
        %v5230 = vlaneseq
        %v5231 = vshrl.u32 %v5230, 7
        %v5232 = vsub.s32 %v5229, %v5231
        %v5233 = vrot.slane %v5201, %v5232
        %v5235 = vunpack.c.l.s4 286326784
        %v5236 = vunpack.c.0.s8 %v5235
        %v5237 = vlaneseq
        %v5238 = vshrl.u32 %v5237, 7
        %v5239 = vsub.s32 %v5236, %v5238
        %v5240 = vrot.slane %v5202, %v5239
        %v5242 = vunpack.c.l.s4 286326784
        %v5243 = vunpack.c.0.s8 %v5242
        %v5244 = vlaneseq
        %v5245 = vshrl.u32 %v5244, 7
        %v5246 = vsub.s32 %v5243, %v5245
        %v5247 = vrot.slane %v5203, %v5246
        %v5249 = vunpack.c.l.s4 286326784
        %v5250 = vunpack.c.0.s8 %v5249
        %v5251 = vlaneseq
        %v5252 = vshrl.u32 %v5251, 7
        %v5253 = vsub.s32 %v5250, %v5252
        %v5254 = vrot.slane %v5204, %v5253
        %v5256 = vunpack.c.l.s4 286326784
        %v5257 = vunpack.c.0.s8 %v5256
        %v5258 = vlaneseq
        %v5259 = vshrl.u32 %v5258, 7
        %v5260 = vsub.s32 %v5257, %v5259
        %v5261 = vrot.slane %v5205, %v5260
        %vm5270 = vsmask.f32 7942
        %vm5271 = vmand %vm4982, %vm5270
        %v5272 = vld [vmem:[%s293] sm:$0x2]
        %v5273 = vsel %vm5271, %v5212, %v5272
        %5274 = vst [vmem:[%s293] sm:$0x2] %v5273
        %v5275 = vld [vmem:[%s293 + $0x8] sm:$0x2]
        %v5276 = vsel %vm5271, %v5219, %v5275
        %5277 = vst [vmem:[%s293 + $0x8] sm:$0x2] %v5276
        %v5278 = vld [vmem:[%s293 + $0x10] sm:$0x2]
        %v5279 = vsel %vm5271, %v5226, %v5278
        %5280 = vst [vmem:[%s293 + $0x10] sm:$0x2] %v5279
        %v5281 = vld [vmem:[%s293 + $0x18] sm:$0x2]
        %v5282 = vsel %vm5271, %v5233, %v5281
        %5283 = vst [vmem:[%s293 + $0x18] sm:$0x2] %v5282
        %v5284 = vld [vmem:[%s293 + $0x20] sm:$0x2]
        %v5285 = vsel %vm5271, %v5240, %v5284
        %5286 = vst [vmem:[%s293 + $0x20] sm:$0x2] %v5285
        %v5287 = vld [vmem:[%s293 + $0x28] sm:$0x2]
        %v5288 = vsel %vm5271, %v5247, %v5287
        %5289 = vst [vmem:[%s293 + $0x28] sm:$0x2] %v5288
        %v5290 = vld [vmem:[%s293 + $0x30] sm:$0x2]
        %v5291 = vsel %vm5271, %v5254, %v5290
        %5292 = vst [vmem:[%s293 + $0x30] sm:$0x2] %v5291
        %v5293 = vld [vmem:[%s293 + $0x38] sm:$0x2]
        %v5294 = vsel %vm5271, %v5261, %v5293
        %5295 = vst [vmem:[%s293 + $0x38] sm:$0x2] %v5294
        %v5296 = vld [vmem:[%s1424] sm:$0xf]
        %v5297 = vld [vmem:[%s1424 + $0x4] sm:$0xf]
        %v5298 = vld [vmem:[%s1424 + $0x8] sm:$0xf]
        %v5302 = vunpack.c.l.b16 %v5296
        %v5303 = vunpack.c.l.b16 %v5297
        %v5304 = vunpack.c.l.b16 %v5298
        %v5305 = vpack.c.b16 %v5303, %v5302
        %v5306 = vpack.c.b16 %v5304, %v5304
        %v5309 = vsel %vm620, %v5306, 0
        %5311 = vmatprep.subr.bf16.mxu0 0
        %5312 = vmatpush1.bf16.msra.mxu0 0
        %5313 = vmatprep.subr.bf16.mxu0 0
        %5314 = vmatpush1.bf16.msra.mxu0 0
        %5315 = vmatprep.subr.bf16.mxu0 0
        %5316 = vmatpush1.bf16.msra.mxu0 0
        %5317 = vmatprep.subr.bf16.mxu0 0
        %5318 = vmatpush1.bf16.msra.mxu0 0
        %5319 = vmatprep.subr.bf16.mxu0 0
        %5320 = vmatpush1.bf16.msra.mxu0 0
        %5321 = vmatprep.subr.bf16.mxu0 0
        %5322 = vmatpush1.bf16.msra.mxu0 0
        %5323 = vmatprep.subr.bf16.mxu0 0
        %5324 = vmatpush1.bf16.msra.mxu0 %v5309
        %5325 = vmatprep.subr.bf16.mxu0 0
        %5326 = vmatpush1.bf16.msra.mxu0 %v5305
        %5327 = vmatprep.subr.bf16.mxu0 0
        %5328 = vmatpush2.bf16.msra.mxu0 0
        %5329 = vmatprep.subr.bf16.mxu0 0
        %5330 = vmatpush2.bf16.msra.mxu0 0
        %5331 = vmatprep.subr.bf16.mxu0 0
        %5332 = vmatpush2.bf16.msra.mxu0 0
        %5333 = vmatprep.subr.bf16.mxu0 0
        %5334 = vmatpush2.bf16.msra.mxu0 0
        %5335 = vmatprep.subr.bf16.mxu0 0
        %5336 = vmatpush2.bf16.msra.mxu0 0
        %5337 = vmatprep.subr.bf16.mxu0 0
        %5338 = vmatpush2.bf16.msra.mxu0 0
        %5339 = vmatprep.subr.bf16.mxu0 0
        %5340 = vmatpush2.bf16.msra.mxu0 0
        %5341 = vmatprep.subr.bf16.mxu0 0
        %5342 = vmatpush2.bf16.msra.mxu0 0
        %5343 = vmatprep.mubr.bf16.mxu0 0
        %5344 = vmatmul.mubr.bf16.gmra.mxu0 %v4150
        %v5345 = vpop.f32.mrf.mxu0
        %v5346 = vadd.f32 0.0, %v5345
        %v5347 = vpop.f32.mrf.mxu0
        %v5348 = vpop.f32.mrf.mxu0
        %v5349 = vpop.f32.mrf.mxu0
        %5350 = vdwg.mxu0
        %v5351 = vadd.f32 %v330, %v5346
        %5352 = vrot.lane.b32.xlu0 %v5305, 127
        %v5353 = vpop.permute.xlu0 %5352
        %5354 = vrot.lane.b32.xlu0 %v5306, 127
        %v5355 = vpop.permute.xlu0 %5354
        %v5358 = vsel %vm620, %v5355, 0
        %5360 = vmatprep.subr.bf16.mxu0 0
        %5361 = vmatpush1.bf16.msra.mxu0 0
        %5362 = vmatprep.subr.bf16.mxu0 0
        %5363 = vmatpush1.bf16.msra.mxu0 0
        %5364 = vmatprep.subr.bf16.mxu0 0
        %5365 = vmatpush1.bf16.msra.mxu0 0
        %5366 = vmatprep.subr.bf16.mxu0 0
        %5367 = vmatpush1.bf16.msra.mxu0 0
        %5368 = vmatprep.subr.bf16.mxu0 0
        %5369 = vmatpush1.bf16.msra.mxu0 0
        %5370 = vmatprep.subr.bf16.mxu0 0
        %5371 = vmatpush1.bf16.msra.mxu0 0
        %5372 = vmatprep.subr.bf16.mxu0 0
        %5373 = vmatpush1.bf16.msra.mxu0 %v5358
        %5374 = vmatprep.subr.bf16.mxu0 0
        %5375 = vmatpush1.bf16.msra.mxu0 %v5353
        %5376 = vmatprep.subr.bf16.mxu0 0
        %5377 = vmatpush2.bf16.msra.mxu0 0
        %5378 = vmatprep.subr.bf16.mxu0 0
        %5379 = vmatpush2.bf16.msra.mxu0 0
        %5380 = vmatprep.subr.bf16.mxu0 0
        %5381 = vmatpush2.bf16.msra.mxu0 0
        %5382 = vmatprep.subr.bf16.mxu0 0
        %5383 = vmatpush2.bf16.msra.mxu0 0
        %5384 = vmatprep.subr.bf16.mxu0 0
        %5385 = vmatpush2.bf16.msra.mxu0 0
        %5386 = vmatprep.subr.bf16.mxu0 0
        %5387 = vmatpush2.bf16.msra.mxu0 0
        %5388 = vmatprep.subr.bf16.mxu0 0
        %5389 = vmatpush2.bf16.msra.mxu0 0
        %5390 = vmatprep.subr.bf16.mxu0 0
        %5391 = vmatpush2.bf16.msra.mxu0 0
        %5392 = vmatprep.mubr.bf16.mxu0 0
        %5393 = vmatmul.mubr.bf16.gmra.mxu0 %v4202
        %v5394 = vpop.f32.mrf.mxu0
        %v5395 = vadd.f32 0.0, %v5394
        %v5396 = vpop.f32.mrf.mxu0
        %v5397 = vpop.f32.mrf.mxu0
        %v5398 = vpop.f32.mrf.mxu0
        %5399 = vdwg.mxu0
        %v5400 = vadd.f32 %v5351, %v5395
        %5401 = vrot.lane.b32.xlu0 %v5305, 126
        %v5402 = vpop.permute.xlu0 %5401
        %5403 = vrot.lane.b32.xlu0 %v5306, 126
        %v5404 = vpop.permute.xlu0 %5403
        %v5407 = vsel %vm620, %v5404, 0
        %5409 = vmatprep.subr.bf16.mxu0 0
        %5410 = vmatpush1.bf16.msra.mxu0 0
        %5411 = vmatprep.subr.bf16.mxu0 0
        %5412 = vmatpush1.bf16.msra.mxu0 0
        %5413 = vmatprep.subr.bf16.mxu0 0
        %5414 = vmatpush1.bf16.msra.mxu0 0
        %5415 = vmatprep.subr.bf16.mxu0 0
        %5416 = vmatpush1.bf16.msra.mxu0 0
        %5417 = vmatprep.subr.bf16.mxu0 0
        %5418 = vmatpush1.bf16.msra.mxu0 0
        %5419 = vmatprep.subr.bf16.mxu0 0
        %5420 = vmatpush1.bf16.msra.mxu0 0
        %5421 = vmatprep.subr.bf16.mxu0 0
        %5422 = vmatpush1.bf16.msra.mxu0 %v5407
        %5423 = vmatprep.subr.bf16.mxu0 0
        %5424 = vmatpush1.bf16.msra.mxu0 %v5402
        %5425 = vmatprep.subr.bf16.mxu0 0
        %5426 = vmatpush2.bf16.msra.mxu0 0
        %5427 = vmatprep.subr.bf16.mxu0 0
        %5428 = vmatpush2.bf16.msra.mxu0 0
        %5429 = vmatprep.subr.bf16.mxu0 0
        %5430 = vmatpush2.bf16.msra.mxu0 0
        %5431 = vmatprep.subr.bf16.mxu0 0
        %5432 = vmatpush2.bf16.msra.mxu0 0
        %5433 = vmatprep.subr.bf16.mxu0 0
        %5434 = vmatpush2.bf16.msra.mxu0 0
        %5435 = vmatprep.subr.bf16.mxu0 0
        %5436 = vmatpush2.bf16.msra.mxu0 0
        %5437 = vmatprep.subr.bf16.mxu0 0
        %5438 = vmatpush2.bf16.msra.mxu0 0
        %5439 = vmatprep.subr.bf16.mxu0 0
        %5440 = vmatpush2.bf16.msra.mxu0 0
        %5441 = vmatprep.mubr.bf16.mxu0 0
        %5442 = vmatmul.mubr.bf16.gmra.mxu0 %v4254
        %v5443 = vpop.f32.mrf.mxu0
        %v5444 = vadd.f32 0.0, %v5443
        %v5445 = vpop.f32.mrf.mxu0
        %v5446 = vpop.f32.mrf.mxu0
        %v5447 = vpop.f32.mrf.mxu0
        %5448 = vdwg.mxu0
        %v5449 = vadd.f32 %v5400, %v5444
        %v5450 = vmax.f32 %v5449, 0.0
        %v5451 = vpack.c.bf16 %v5450, %v5450
        %v5454 = vunpack.c.l.s4 1966171168
        %v5455 = vunpack.c.0.s8 %v5454
        %v5456 = vlaneseq
        %v5457 = vshrl.u32 %v5456, 7
        %v5458 = vsub.s32 %v5455, %v5457
        %v5459 = vrot.slane %v5451, %v5458
        %v5460 = vcombine.high %v5459, %v5459
        %v5462 = vunpack.c.l.s4 1966171168
        %v5463 = vunpack.c.0.s8 %v5462
        %v5464 = vlaneseq
        %v5465 = vshrl.u32 %v5464, 7
        %v5466 = vsub.s32 %v5463, %v5465
        %v5467 = vrot.slane %v5459, %v5466
        %v5469 = vunpack.c.l.s4 1966171168
        %v5470 = vunpack.c.0.s8 %v5469
        %v5471 = vlaneseq
        %v5472 = vshrl.u32 %v5471, 7
        %v5473 = vsub.s32 %v5470, %v5472
        %v5474 = vrot.slane %v5460, %v5473
        %v5475 = vcombine.high %v5467, %v5467
        %v5476 = vcombine.high %v5474, %v5474
        %v5477 = vunpack.i.l.s16 %v5467
        %v5478 = vunpack.i.h.s16 %v5467
        %v5479 = vunpack.i.l.s16 %v5474
        %v5480 = vunpack.i.h.s16 %v5474
        %v5481 = vunpack.i.l.s16 %v5475
        %v5482 = vunpack.i.h.s16 %v5475
        %v5483 = vunpack.i.l.s16 %v5476
        %v5484 = vunpack.i.h.s16 %v5476
        %v5485 = vpack.i.b16 %v5477, %v5477
        %v5486 = vpack.i.b16 %v5478, %v5478
        %v5487 = vpack.i.b16 %v5479, %v5479
        %v5488 = vpack.i.b16 %v5480, %v5480
        %v5489 = vpack.i.b16 %v5481, %v5481
        %v5490 = vpack.i.b16 %v5482, %v5482
        %v5491 = vpack.i.b16 %v5483, %v5483
        %v5492 = vpack.i.b16 %v5484, %v5484
        %v5494 = vunpack.c.l.s4 286326784
        %v5495 = vunpack.c.0.s8 %v5494
        %v5496 = vlaneseq
        %v5497 = vshrl.u32 %v5496, 7
        %v5498 = vsub.s32 %v5495, %v5497
        %v5499 = vrot.slane %v5485, %v5498
        %v5501 = vunpack.c.l.s4 286326784
        %v5502 = vunpack.c.0.s8 %v5501
        %v5503 = vlaneseq
        %v5504 = vshrl.u32 %v5503, 7
        %v5505 = vsub.s32 %v5502, %v5504
        %v5506 = vrot.slane %v5486, %v5505
        %v5508 = vunpack.c.l.s4 286326784
        %v5509 = vunpack.c.0.s8 %v5508
        %v5510 = vlaneseq
        %v5511 = vshrl.u32 %v5510, 7
        %v5512 = vsub.s32 %v5509, %v5511
        %v5513 = vrot.slane %v5487, %v5512
        %v5515 = vunpack.c.l.s4 286326784
        %v5516 = vunpack.c.0.s8 %v5515
        %v5517 = vlaneseq
        %v5518 = vshrl.u32 %v5517, 7
        %v5519 = vsub.s32 %v5516, %v5518
        %v5520 = vrot.slane %v5488, %v5519
        %v5522 = vunpack.c.l.s4 286326784
        %v5523 = vunpack.c.0.s8 %v5522
        %v5524 = vlaneseq
        %v5525 = vshrl.u32 %v5524, 7
        %v5526 = vsub.s32 %v5523, %v5525
        %v5527 = vrot.slane %v5489, %v5526
        %v5529 = vunpack.c.l.s4 286326784
        %v5530 = vunpack.c.0.s8 %v5529
        %v5531 = vlaneseq
        %v5532 = vshrl.u32 %v5531, 7
        %v5533 = vsub.s32 %v5530, %v5532
        %v5534 = vrot.slane %v5490, %v5533
        %v5536 = vunpack.c.l.s4 286326784
        %v5537 = vunpack.c.0.s8 %v5536
        %v5538 = vlaneseq
        %v5539 = vshrl.u32 %v5538, 7
        %v5540 = vsub.s32 %v5537, %v5539
        %v5541 = vrot.slane %v5491, %v5540
        %v5543 = vunpack.c.l.s4 286326784
        %v5544 = vunpack.c.0.s8 %v5543
        %v5545 = vlaneseq
        %v5546 = vshrl.u32 %v5545, 7
        %v5547 = vsub.s32 %v5544, %v5546
        %v5548 = vrot.slane %v5492, %v5547
        %vm5557 = vcmask 256002
        %vm5558 = vsmask.f32 2304
        %vm5559 = vmand %vm5557, %vm5558
        %v5560 = vld [vmem:[%s293] sm:$0x4]
        %v5561 = vsel %vm5559, %v5499, %v5560
        %5562 = vst [vmem:[%s293] sm:$0x4] %v5561
        %v5563 = vld [vmem:[%s293 + $0x8] sm:$0x4]
        %v5564 = vsel %vm5559, %v5506, %v5563
        %5565 = vst [vmem:[%s293 + $0x8] sm:$0x4] %v5564
        %v5566 = vld [vmem:[%s293 + $0x10] sm:$0x4]
        %v5567 = vsel %vm5559, %v5513, %v5566
        %5568 = vst [vmem:[%s293 + $0x10] sm:$0x4] %v5567
        %v5569 = vld [vmem:[%s293 + $0x18] sm:$0x4]
        %v5570 = vsel %vm5559, %v5520, %v5569
        %5571 = vst [vmem:[%s293 + $0x18] sm:$0x4] %v5570
        %v5572 = vld [vmem:[%s293 + $0x20] sm:$0x4]
        %v5573 = vsel %vm5559, %v5527, %v5572
        %5574 = vst [vmem:[%s293 + $0x20] sm:$0x4] %v5573
        %v5575 = vld [vmem:[%s293 + $0x28] sm:$0x4]
        %v5576 = vsel %vm5559, %v5534, %v5575
        %5577 = vst [vmem:[%s293 + $0x28] sm:$0x4] %v5576
        %v5578 = vld [vmem:[%s293 + $0x30] sm:$0x4]
        %v5579 = vsel %vm5559, %v5541, %v5578
        %5580 = vst [vmem:[%s293 + $0x30] sm:$0x4] %v5579
        %v5581 = vld [vmem:[%s293 + $0x38] sm:$0x4]
        %v5582 = vsel %vm5559, %v5548, %v5581
        %5583 = vst [vmem:[%s293 + $0x38] sm:$0x4] %v5582
        %v5584 = vld [vmem:[%s1631] sm:$0xf]
        %v5585 = vld [vmem:[%s1631 + $0x4] sm:$0xf]
        %v5586 = vld [vmem:[%s1631 + $0x8] sm:$0xf]
        %v5590 = vunpack.c.l.b16 %v5584
        %v5591 = vunpack.c.l.b16 %v5585
        %v5592 = vunpack.c.l.b16 %v5586
        %v5593 = vpack.c.b16 %v5591, %v5590
        %v5594 = vpack.c.b16 %v5592, %v5592
        %v5597 = vsel %vm620, %v5594, 0
        %5599 = vmatprep.subr.bf16.mxu0 0
        %5600 = vmatpush1.bf16.msra.mxu0 0
        %5601 = vmatprep.subr.bf16.mxu0 0
        %5602 = vmatpush1.bf16.msra.mxu0 0
        %5603 = vmatprep.subr.bf16.mxu0 0
        %5604 = vmatpush1.bf16.msra.mxu0 0
        %5605 = vmatprep.subr.bf16.mxu0 0
        %5606 = vmatpush1.bf16.msra.mxu0 0
        %5607 = vmatprep.subr.bf16.mxu0 0
        %5608 = vmatpush1.bf16.msra.mxu0 0
        %5609 = vmatprep.subr.bf16.mxu0 0
        %5610 = vmatpush1.bf16.msra.mxu0 0
        %5611 = vmatprep.subr.bf16.mxu0 0
        %5612 = vmatpush1.bf16.msra.mxu0 %v5597
        %5613 = vmatprep.subr.bf16.mxu0 0
        %5614 = vmatpush1.bf16.msra.mxu0 %v5593
        %5615 = vmatprep.subr.bf16.mxu0 0
        %5616 = vmatpush2.bf16.msra.mxu0 0
        %5617 = vmatprep.subr.bf16.mxu0 0
        %5618 = vmatpush2.bf16.msra.mxu0 0
        %5619 = vmatprep.subr.bf16.mxu0 0
        %5620 = vmatpush2.bf16.msra.mxu0 0
        %5621 = vmatprep.subr.bf16.mxu0 0
        %5622 = vmatpush2.bf16.msra.mxu0 0
        %5623 = vmatprep.subr.bf16.mxu0 0
        %5624 = vmatpush2.bf16.msra.mxu0 0
        %5625 = vmatprep.subr.bf16.mxu0 0
        %5626 = vmatpush2.bf16.msra.mxu0 0
        %5627 = vmatprep.subr.bf16.mxu0 0
        %5628 = vmatpush2.bf16.msra.mxu0 0
        %5629 = vmatprep.subr.bf16.mxu0 0
        %5630 = vmatpush2.bf16.msra.mxu0 0
        %5631 = vmatprep.mubr.bf16.mxu0 0
        %5632 = vmatmul.mubr.bf16.gmra.mxu0 %v4150
        %v5633 = vpop.f32.mrf.mxu0
        %v5634 = vadd.f32 0.0, %v5633
        %v5635 = vpop.f32.mrf.mxu0
        %v5636 = vpop.f32.mrf.mxu0
        %v5637 = vpop.f32.mrf.mxu0
        %5638 = vdwg.mxu0
        %v5639 = vadd.f32 %v330, %v5634
        %5640 = vrot.lane.b32.xlu0 %v5593, 127
        %v5641 = vpop.permute.xlu0 %5640
        %5642 = vrot.lane.b32.xlu0 %v5594, 127
        %v5643 = vpop.permute.xlu0 %5642
        %v5646 = vsel %vm620, %v5643, 0
        %5648 = vmatprep.subr.bf16.mxu0 0
        %5649 = vmatpush1.bf16.msra.mxu0 0
        %5650 = vmatprep.subr.bf16.mxu0 0
        %5651 = vmatpush1.bf16.msra.mxu0 0
        %5652 = vmatprep.subr.bf16.mxu0 0
        %5653 = vmatpush1.bf16.msra.mxu0 0
        %5654 = vmatprep.subr.bf16.mxu0 0
        %5655 = vmatpush1.bf16.msra.mxu0 0
        %5656 = vmatprep.subr.bf16.mxu0 0
        %5657 = vmatpush1.bf16.msra.mxu0 0
        %5658 = vmatprep.subr.bf16.mxu0 0
        %5659 = vmatpush1.bf16.msra.mxu0 0
        %5660 = vmatprep.subr.bf16.mxu0 0
        %5661 = vmatpush1.bf16.msra.mxu0 %v5646
        %5662 = vmatprep.subr.bf16.mxu0 0
        %5663 = vmatpush1.bf16.msra.mxu0 %v5641
        %5664 = vmatprep.subr.bf16.mxu0 0
        %5665 = vmatpush2.bf16.msra.mxu0 0
        %5666 = vmatprep.subr.bf16.mxu0 0
        %5667 = vmatpush2.bf16.msra.mxu0 0
        %5668 = vmatprep.subr.bf16.mxu0 0
        %5669 = vmatpush2.bf16.msra.mxu0 0
        %5670 = vmatprep.subr.bf16.mxu0 0
        %5671 = vmatpush2.bf16.msra.mxu0 0
        %5672 = vmatprep.subr.bf16.mxu0 0
        %5673 = vmatpush2.bf16.msra.mxu0 0
        %5674 = vmatprep.subr.bf16.mxu0 0
        %5675 = vmatpush2.bf16.msra.mxu0 0
        %5676 = vmatprep.subr.bf16.mxu0 0
        %5677 = vmatpush2.bf16.msra.mxu0 0
        %5678 = vmatprep.subr.bf16.mxu0 0
        %5679 = vmatpush2.bf16.msra.mxu0 0
        %5680 = vmatprep.mubr.bf16.mxu0 0
        %5681 = vmatmul.mubr.bf16.gmra.mxu0 %v4202
        %v5682 = vpop.f32.mrf.mxu0
        %v5683 = vadd.f32 0.0, %v5682
        %v5684 = vpop.f32.mrf.mxu0
        %v5685 = vpop.f32.mrf.mxu0
        %v5686 = vpop.f32.mrf.mxu0
        %5687 = vdwg.mxu0
        %v5688 = vadd.f32 %v5639, %v5683
        %5689 = vrot.lane.b32.xlu0 %v5593, 126
        %v5690 = vpop.permute.xlu0 %5689
        %5691 = vrot.lane.b32.xlu0 %v5594, 126
        %v5692 = vpop.permute.xlu0 %5691
        %v5695 = vsel %vm620, %v5692, 0
        %5697 = vmatprep.subr.bf16.mxu0 0
        %5698 = vmatpush1.bf16.msra.mxu0 0
        %5699 = vmatprep.subr.bf16.mxu0 0
        %5700 = vmatpush1.bf16.msra.mxu0 0
        %5701 = vmatprep.subr.bf16.mxu0 0
        %5702 = vmatpush1.bf16.msra.mxu0 0
        %5703 = vmatprep.subr.bf16.mxu0 0
        %5704 = vmatpush1.bf16.msra.mxu0 0
        %5705 = vmatprep.subr.bf16.mxu0 0
        %5706 = vmatpush1.bf16.msra.mxu0 0
        %5707 = vmatprep.subr.bf16.mxu0 0
        %5708 = vmatpush1.bf16.msra.mxu0 0
        %5709 = vmatprep.subr.bf16.mxu0 0
        %5710 = vmatpush1.bf16.msra.mxu0 %v5695
        %5711 = vmatprep.subr.bf16.mxu0 0
        %5712 = vmatpush1.bf16.msra.mxu0 %v5690
        %5713 = vmatprep.subr.bf16.mxu0 0
        %5714 = vmatpush2.bf16.msra.mxu0 0
        %5715 = vmatprep.subr.bf16.mxu0 0
        %5716 = vmatpush2.bf16.msra.mxu0 0
        %5717 = vmatprep.subr.bf16.mxu0 0
        %5718 = vmatpush2.bf16.msra.mxu0 0
        %5719 = vmatprep.subr.bf16.mxu0 0
        %5720 = vmatpush2.bf16.msra.mxu0 0
        %5721 = vmatprep.subr.bf16.mxu0 0
        %5722 = vmatpush2.bf16.msra.mxu0 0
        %5723 = vmatprep.subr.bf16.mxu0 0
        %5724 = vmatpush2.bf16.msra.mxu0 0
        %5725 = vmatprep.subr.bf16.mxu0 0
        %5726 = vmatpush2.bf16.msra.mxu0 0
        %5727 = vmatprep.subr.bf16.mxu0 0
        %5728 = vmatpush2.bf16.msra.mxu0 0
        %5729 = vmatprep.mubr.bf16.mxu0 0
        %5730 = vmatmul.mubr.bf16.gmra.mxu0 %v4254
        %v5731 = vpop.f32.mrf.mxu0
        %v5732 = vadd.f32 0.0, %v5731
        %v5733 = vpop.f32.mrf.mxu0
        %v5734 = vpop.f32.mrf.mxu0
        %v5735 = vpop.f32.mrf.mxu0
        %5736 = vdwg.mxu0
        %v5737 = vadd.f32 %v5688, %v5732
        %v5738 = vmax.f32 %v5737, 0.0
        %v5739 = vpack.c.bf16 %v5738, %v5738
        %v5742 = vunpack.c.l.s4 1966171168
        %v5743 = vunpack.c.0.s8 %v5742
        %v5744 = vlaneseq
        %v5745 = vshrl.u32 %v5744, 7
        %v5746 = vsub.s32 %v5743, %v5745
        %v5747 = vrot.slane %v5739, %v5746
        %v5748 = vcombine.high %v5747, %v5747
        %v5750 = vunpack.c.l.s4 1966171168
        %v5751 = vunpack.c.0.s8 %v5750
        %v5752 = vlaneseq
        %v5753 = vshrl.u32 %v5752, 7
        %v5754 = vsub.s32 %v5751, %v5753
        %v5755 = vrot.slane %v5747, %v5754
        %v5757 = vunpack.c.l.s4 1966171168
        %v5758 = vunpack.c.0.s8 %v5757
        %v5759 = vlaneseq
        %v5760 = vshrl.u32 %v5759, 7
        %v5761 = vsub.s32 %v5758, %v5760
        %v5762 = vrot.slane %v5748, %v5761
        %v5763 = vcombine.high %v5755, %v5755
        %v5764 = vcombine.high %v5762, %v5762
        %v5765 = vunpack.i.l.s16 %v5755
        %v5766 = vunpack.i.h.s16 %v5755
        %v5767 = vunpack.i.l.s16 %v5762
        %v5768 = vunpack.i.h.s16 %v5762
        %v5769 = vunpack.i.l.s16 %v5763
        %v5770 = vunpack.i.h.s16 %v5763
        %v5771 = vunpack.i.l.s16 %v5764
        %v5772 = vunpack.i.h.s16 %v5764
        %v5773 = vpack.i.b16 %v5765, %v5765
        %v5774 = vpack.i.b16 %v5766, %v5766
        %v5775 = vpack.i.b16 %v5767, %v5767
        %v5776 = vpack.i.b16 %v5768, %v5768
        %v5777 = vpack.i.b16 %v5769, %v5769
        %v5778 = vpack.i.b16 %v5770, %v5770
        %v5779 = vpack.i.b16 %v5771, %v5771
        %v5780 = vpack.i.b16 %v5772, %v5772
        %v5782 = vunpack.c.l.s4 286326784
        %v5783 = vunpack.c.0.s8 %v5782
        %v5784 = vlaneseq
        %v5785 = vshrl.u32 %v5784, 7
        %v5786 = vsub.s32 %v5783, %v5785
        %v5787 = vrot.slane %v5773, %v5786
        %v5789 = vunpack.c.l.s4 286326784
        %v5790 = vunpack.c.0.s8 %v5789
        %v5791 = vlaneseq
        %v5792 = vshrl.u32 %v5791, 7
        %v5793 = vsub.s32 %v5790, %v5792
        %v5794 = vrot.slane %v5774, %v5793
        %v5796 = vunpack.c.l.s4 286326784
        %v5797 = vunpack.c.0.s8 %v5796
        %v5798 = vlaneseq
        %v5799 = vshrl.u32 %v5798, 7
        %v5800 = vsub.s32 %v5797, %v5799
        %v5801 = vrot.slane %v5775, %v5800
        %v5803 = vunpack.c.l.s4 286326784
        %v5804 = vunpack.c.0.s8 %v5803
        %v5805 = vlaneseq
        %v5806 = vshrl.u32 %v5805, 7
        %v5807 = vsub.s32 %v5804, %v5806
        %v5808 = vrot.slane %v5776, %v5807
        %v5810 = vunpack.c.l.s4 286326784
        %v5811 = vunpack.c.0.s8 %v5810
        %v5812 = vlaneseq
        %v5813 = vshrl.u32 %v5812, 7
        %v5814 = vsub.s32 %v5811, %v5813
        %v5815 = vrot.slane %v5777, %v5814
        %v5817 = vunpack.c.l.s4 286326784
        %v5818 = vunpack.c.0.s8 %v5817
        %v5819 = vlaneseq
        %v5820 = vshrl.u32 %v5819, 7
        %v5821 = vsub.s32 %v5818, %v5820
        %v5822 = vrot.slane %v5778, %v5821
        %v5824 = vunpack.c.l.s4 286326784
        %v5825 = vunpack.c.0.s8 %v5824
        %v5826 = vlaneseq
        %v5827 = vshrl.u32 %v5826, 7
        %v5828 = vsub.s32 %v5825, %v5827
        %v5829 = vrot.slane %v5779, %v5828
        %v5831 = vunpack.c.l.s4 286326784
        %v5832 = vunpack.c.0.s8 %v5831
        %v5833 = vlaneseq
        %v5834 = vshrl.u32 %v5833, 7
        %v5835 = vsub.s32 %v5832, %v5834
        %v5836 = vrot.slane %v5780, %v5835
        %vm5845 = vsmask.f32 7946
        %vm5846 = vmand %vm5557, %vm5845
        %v5847 = vld [vmem:[%s293] sm:$0x4]
        %v5848 = vsel %vm5846, %v5787, %v5847
        %5849 = vst [vmem:[%s293] sm:$0x4] %v5848
        %v5850 = vld [vmem:[%s293 + $0x8] sm:$0x4]
        %v5851 = vsel %vm5846, %v5794, %v5850
        %5852 = vst [vmem:[%s293 + $0x8] sm:$0x4] %v5851
        %v5853 = vld [vmem:[%s293 + $0x10] sm:$0x4]
        %v5854 = vsel %vm5846, %v5801, %v5853
        %5855 = vst [vmem:[%s293 + $0x10] sm:$0x4] %v5854
        %v5856 = vld [vmem:[%s293 + $0x18] sm:$0x4]
        %v5857 = vsel %vm5846, %v5808, %v5856
        %5858 = vst [vmem:[%s293 + $0x18] sm:$0x4] %v5857
        %v5859 = vld [vmem:[%s293 + $0x20] sm:$0x4]
        %v5860 = vsel %vm5846, %v5815, %v5859
        %5861 = vst [vmem:[%s293 + $0x20] sm:$0x4] %v5860
        %v5862 = vld [vmem:[%s293 + $0x28] sm:$0x4]
        %v5863 = vsel %vm5846, %v5822, %v5862
        %5864 = vst [vmem:[%s293 + $0x28] sm:$0x4] %v5863
        %v5865 = vld [vmem:[%s293 + $0x30] sm:$0x4]
        %v5866 = vsel %vm5846, %v5829, %v5865
        %5867 = vst [vmem:[%s293 + $0x30] sm:$0x4] %v5866
        %v5868 = vld [vmem:[%s293 + $0x38] sm:$0x4]
        %v5869 = vsel %vm5846, %v5836, %v5868
        %5870 = vst [vmem:[%s293 + $0x38] sm:$0x4] %v5869
        %v5871 = vld [vmem:[%s1838] sm:$0xf]
        %v5872 = vld [vmem:[%s1838 + $0x4] sm:$0xf]
        %v5873 = vld [vmem:[%s1838 + $0x8] sm:$0xf]
        %v5877 = vunpack.c.l.b16 %v5871
        %v5878 = vunpack.c.l.b16 %v5872
        %v5879 = vunpack.c.l.b16 %v5873
        %v5880 = vpack.c.b16 %v5878, %v5877
        %v5881 = vpack.c.b16 %v5879, %v5879
        %v5884 = vsel %vm620, %v5881, 0
        %5886 = vmatprep.subr.bf16.mxu0 0
        %5887 = vmatpush1.bf16.msra.mxu0 0
        %5888 = vmatprep.subr.bf16.mxu0 0
        %5889 = vmatpush1.bf16.msra.mxu0 0
        %5890 = vmatprep.subr.bf16.mxu0 0
        %5891 = vmatpush1.bf16.msra.mxu0 0
        %5892 = vmatprep.subr.bf16.mxu0 0
        %5893 = vmatpush1.bf16.msra.mxu0 0
        %5894 = vmatprep.subr.bf16.mxu0 0
        %5895 = vmatpush1.bf16.msra.mxu0 0
        %5896 = vmatprep.subr.bf16.mxu0 0
        %5897 = vmatpush1.bf16.msra.mxu0 0
        %5898 = vmatprep.subr.bf16.mxu0 0
        %5899 = vmatpush1.bf16.msra.mxu0 %v5884
        %5900 = vmatprep.subr.bf16.mxu0 0
        %5901 = vmatpush1.bf16.msra.mxu0 %v5880
        %5902 = vmatprep.subr.bf16.mxu0 0
        %5903 = vmatpush2.bf16.msra.mxu0 0
        %5904 = vmatprep.subr.bf16.mxu0 0
        %5905 = vmatpush2.bf16.msra.mxu0 0
        %5906 = vmatprep.subr.bf16.mxu0 0
        %5907 = vmatpush2.bf16.msra.mxu0 0
        %5908 = vmatprep.subr.bf16.mxu0 0
        %5909 = vmatpush2.bf16.msra.mxu0 0
        %5910 = vmatprep.subr.bf16.mxu0 0
        %5911 = vmatpush2.bf16.msra.mxu0 0
        %5912 = vmatprep.subr.bf16.mxu0 0
        %5913 = vmatpush2.bf16.msra.mxu0 0
        %5914 = vmatprep.subr.bf16.mxu0 0
        %5915 = vmatpush2.bf16.msra.mxu0 0
        %5916 = vmatprep.subr.bf16.mxu0 0
        %5917 = vmatpush2.bf16.msra.mxu0 0
        %5918 = vmatprep.mubr.bf16.mxu0 0
        %5919 = vmatmul.mubr.bf16.gmra.mxu0 %v4150
        %v5920 = vpop.f32.mrf.mxu0
        %v5921 = vadd.f32 0.0, %v5920
        %v5922 = vpop.f32.mrf.mxu0
        %v5923 = vpop.f32.mrf.mxu0
        %v5924 = vpop.f32.mrf.mxu0
        %5925 = vdwg.mxu0
        %v5926 = vadd.f32 %v330, %v5921
        %5927 = vrot.lane.b32.xlu0 %v5880, 127
        %v5928 = vpop.permute.xlu0 %5927
        %5929 = vrot.lane.b32.xlu0 %v5881, 127
        %v5930 = vpop.permute.xlu0 %5929
        %v5933 = vsel %vm620, %v5930, 0
        %5935 = vmatprep.subr.bf16.mxu0 0
        %5936 = vmatpush1.bf16.msra.mxu0 0
        %5937 = vmatprep.subr.bf16.mxu0 0
        %5938 = vmatpush1.bf16.msra.mxu0 0
        %5939 = vmatprep.subr.bf16.mxu0 0
        %5940 = vmatpush1.bf16.msra.mxu0 0
        %5941 = vmatprep.subr.bf16.mxu0 0
        %5942 = vmatpush1.bf16.msra.mxu0 0
        %5943 = vmatprep.subr.bf16.mxu0 0
        %5944 = vmatpush1.bf16.msra.mxu0 0
        %5945 = vmatprep.subr.bf16.mxu0 0
        %5946 = vmatpush1.bf16.msra.mxu0 0
        %5947 = vmatprep.subr.bf16.mxu0 0
        %5948 = vmatpush1.bf16.msra.mxu0 %v5933
        %5949 = vmatprep.subr.bf16.mxu0 0
        %5950 = vmatpush1.bf16.msra.mxu0 %v5928
        %5951 = vmatprep.subr.bf16.mxu0 0
        %5952 = vmatpush2.bf16.msra.mxu0 0
        %5953 = vmatprep.subr.bf16.mxu0 0
        %5954 = vmatpush2.bf16.msra.mxu0 0
        %5955 = vmatprep.subr.bf16.mxu0 0
        %5956 = vmatpush2.bf16.msra.mxu0 0
        %5957 = vmatprep.subr.bf16.mxu0 0
        %5958 = vmatpush2.bf16.msra.mxu0 0
        %5959 = vmatprep.subr.bf16.mxu0 0
        %5960 = vmatpush2.bf16.msra.mxu0 0
        %5961 = vmatprep.subr.bf16.mxu0 0
        %5962 = vmatpush2.bf16.msra.mxu0 0
        %5963 = vmatprep.subr.bf16.mxu0 0
        %5964 = vmatpush2.bf16.msra.mxu0 0
        %5965 = vmatprep.subr.bf16.mxu0 0
        %5966 = vmatpush2.bf16.msra.mxu0 0
        %5967 = vmatprep.mubr.bf16.mxu0 0
        %5968 = vmatmul.mubr.bf16.gmra.mxu0 %v4202
        %v5969 = vpop.f32.mrf.mxu0
        %v5970 = vadd.f32 0.0, %v5969
        %v5971 = vpop.f32.mrf.mxu0
        %v5972 = vpop.f32.mrf.mxu0
        %v5973 = vpop.f32.mrf.mxu0
        %5974 = vdwg.mxu0
        %v5975 = vadd.f32 %v5926, %v5970
        %5976 = vrot.lane.b32.xlu0 %v5880, 126
        %v5977 = vpop.permute.xlu0 %5976
        %5978 = vrot.lane.b32.xlu0 %v5881, 126
        %v5979 = vpop.permute.xlu0 %5978
        %v5982 = vsel %vm620, %v5979, 0
        %5984 = vmatprep.subr.bf16.mxu0 0
        %5985 = vmatpush1.bf16.msra.mxu0 0
        %5986 = vmatprep.subr.bf16.mxu0 0
        %5987 = vmatpush1.bf16.msra.mxu0 0
        %5988 = vmatprep.subr.bf16.mxu0 0
        %5989 = vmatpush1.bf16.msra.mxu0 0
        %5990 = vmatprep.subr.bf16.mxu0 0
        %5991 = vmatpush1.bf16.msra.mxu0 0
        %5992 = vmatprep.subr.bf16.mxu0 0
        %5993 = vmatpush1.bf16.msra.mxu0 0
        %5994 = vmatprep.subr.bf16.mxu0 0
        %5995 = vmatpush1.bf16.msra.mxu0 0
        %5996 = vmatprep.subr.bf16.mxu0 0
        %5997 = vmatpush1.bf16.msra.mxu0 %v5982
        %5998 = vmatprep.subr.bf16.mxu0 0
        %5999 = vmatpush1.bf16.msra.mxu0 %v5977
        %6000 = vmatprep.subr.bf16.mxu0 0
        %6001 = vmatpush2.bf16.msra.mxu0 0
        %6002 = vmatprep.subr.bf16.mxu0 0
        %6003 = vmatpush2.bf16.msra.mxu0 0
        %6004 = vmatprep.subr.bf16.mxu0 0
        %6005 = vmatpush2.bf16.msra.mxu0 0
        %6006 = vmatprep.subr.bf16.mxu0 0
        %6007 = vmatpush2.bf16.msra.mxu0 0
        %6008 = vmatprep.subr.bf16.mxu0 0
        %6009 = vmatpush2.bf16.msra.mxu0 0
        %6010 = vmatprep.subr.bf16.mxu0 0
        %6011 = vmatpush2.bf16.msra.mxu0 0
        %6012 = vmatprep.subr.bf16.mxu0 0
        %6013 = vmatpush2.bf16.msra.mxu0 0
        %6014 = vmatprep.subr.bf16.mxu0 0
        %6015 = vmatpush2.bf16.msra.mxu0 0
        %6016 = vmatprep.mubr.bf16.mxu0 0
        %6017 = vmatmul.mubr.bf16.gmra.mxu0 %v4254
        %v6018 = vpop.f32.mrf.mxu0
        %v6019 = vadd.f32 0.0, %v6018
        %v6020 = vpop.f32.mrf.mxu0
        %v6021 = vpop.f32.mrf.mxu0
        %v6022 = vpop.f32.mrf.mxu0
        %6023 = vdwg.mxu0
        %v6024 = vadd.f32 %v5975, %v6019
        %v6025 = vmax.f32 %v6024, 0.0
        %v6026 = vpack.c.bf16 %v6025, %v6025
        %v6029 = vunpack.c.l.s4 1966171168
        %v6030 = vunpack.c.0.s8 %v6029
        %v6031 = vlaneseq
        %v6032 = vshrl.u32 %v6031, 7
        %v6033 = vsub.s32 %v6030, %v6032
        %v6034 = vrot.slane %v6026, %v6033
        %v6035 = vcombine.high %v6034, %v6034
        %v6037 = vunpack.c.l.s4 1966171168
        %v6038 = vunpack.c.0.s8 %v6037
        %v6039 = vlaneseq
        %v6040 = vshrl.u32 %v6039, 7
        %v6041 = vsub.s32 %v6038, %v6040
        %v6042 = vrot.slane %v6034, %v6041
        %v6044 = vunpack.c.l.s4 1966171168
        %v6045 = vunpack.c.0.s8 %v6044
        %v6046 = vlaneseq
        %v6047 = vshrl.u32 %v6046, 7
        %v6048 = vsub.s32 %v6045, %v6047
        %v6049 = vrot.slane %v6035, %v6048
        %v6050 = vcombine.high %v6042, %v6042
        %v6051 = vcombine.high %v6049, %v6049
        %v6052 = vunpack.i.l.s16 %v6042
        %v6053 = vunpack.i.h.s16 %v6042
        %v6054 = vunpack.i.l.s16 %v6049
        %v6055 = vunpack.i.h.s16 %v6049
        %v6056 = vunpack.i.l.s16 %v6050
        %v6057 = vunpack.i.h.s16 %v6050
        %v6058 = vunpack.i.l.s16 %v6051
        %v6059 = vunpack.i.h.s16 %v6051
        %v6060 = vpack.i.b16 %v6052, %v6052
        %v6061 = vpack.i.b16 %v6053, %v6053
        %v6062 = vpack.i.b16 %v6054, %v6054
        %v6063 = vpack.i.b16 %v6055, %v6055
        %v6064 = vpack.i.b16 %v6056, %v6056
        %v6065 = vpack.i.b16 %v6057, %v6057
        %v6066 = vpack.i.b16 %v6058, %v6058
        %v6067 = vpack.i.b16 %v6059, %v6059
        %v6069 = vunpack.c.l.s4 286326784
        %v6070 = vunpack.c.0.s8 %v6069
        %v6071 = vlaneseq
        %v6072 = vshrl.u32 %v6071, 7
        %v6073 = vsub.s32 %v6070, %v6072
        %v6074 = vrot.slane %v6060, %v6073
        %v6076 = vunpack.c.l.s4 286326784
        %v6077 = vunpack.c.0.s8 %v6076
        %v6078 = vlaneseq
        %v6079 = vshrl.u32 %v6078, 7
        %v6080 = vsub.s32 %v6077, %v6079
        %v6081 = vrot.slane %v6061, %v6080
        %v6083 = vunpack.c.l.s4 286326784
        %v6084 = vunpack.c.0.s8 %v6083
        %v6085 = vlaneseq
        %v6086 = vshrl.u32 %v6085, 7
        %v6087 = vsub.s32 %v6084, %v6086
        %v6088 = vrot.slane %v6062, %v6087
        %v6090 = vunpack.c.l.s4 286326784
        %v6091 = vunpack.c.0.s8 %v6090
        %v6092 = vlaneseq
        %v6093 = vshrl.u32 %v6092, 7
        %v6094 = vsub.s32 %v6091, %v6093
        %v6095 = vrot.slane %v6063, %v6094
        %v6097 = vunpack.c.l.s4 286326784
        %v6098 = vunpack.c.0.s8 %v6097
        %v6099 = vlaneseq
        %v6100 = vshrl.u32 %v6099, 7
        %v6101 = vsub.s32 %v6098, %v6100
        %v6102 = vrot.slane %v6064, %v6101
        %v6104 = vunpack.c.l.s4 286326784
        %v6105 = vunpack.c.0.s8 %v6104
        %v6106 = vlaneseq
        %v6107 = vshrl.u32 %v6106, 7
        %v6108 = vsub.s32 %v6105, %v6107
        %v6109 = vrot.slane %v6065, %v6108
        %v6111 = vunpack.c.l.s4 286326784
        %v6112 = vunpack.c.0.s8 %v6111
        %v6113 = vlaneseq
        %v6114 = vshrl.u32 %v6113, 7
        %v6115 = vsub.s32 %v6112, %v6114
        %v6116 = vrot.slane %v6066, %v6115
        %v6118 = vunpack.c.l.s4 286326784
        %v6119 = vunpack.c.0.s8 %v6118
        %v6120 = vlaneseq
        %v6121 = vshrl.u32 %v6120, 7
        %v6122 = vsub.s32 %v6119, %v6121
        %v6123 = vrot.slane %v6067, %v6122
        %vm6132 = vcmask 257027
        %vm6133 = vsmask.f32 3328
        %vm6134 = vmand %vm6132, %vm6133
        %v6135 = vld [vmem:[%s293] sm:$0x8]
        %v6136 = vsel %vm6134, %v6074, %v6135
        %6137 = vst [vmem:[%s293] sm:$0x8] %v6136
        %v6138 = vld [vmem:[%s293 + $0x8] sm:$0x8]
        %v6139 = vsel %vm6134, %v6081, %v6138
        %6140 = vst [vmem:[%s293 + $0x8] sm:$0x8] %v6139
        %v6141 = vld [vmem:[%s293 + $0x10] sm:$0x8]
        %v6142 = vsel %vm6134, %v6088, %v6141
        %6143 = vst [vmem:[%s293 + $0x10] sm:$0x8] %v6142
        %v6144 = vld [vmem:[%s293 + $0x18] sm:$0x8]
        %v6145 = vsel %vm6134, %v6095, %v6144
        %6146 = vst [vmem:[%s293 + $0x18] sm:$0x8] %v6145
        %v6147 = vld [vmem:[%s293 + $0x20] sm:$0x8]
        %v6148 = vsel %vm6134, %v6102, %v6147
        %6149 = vst [vmem:[%s293 + $0x20] sm:$0x8] %v6148
        %v6150 = vld [vmem:[%s293 + $0x28] sm:$0x8]
        %v6151 = vsel %vm6134, %v6109, %v6150
        %6152 = vst [vmem:[%s293 + $0x28] sm:$0x8] %v6151
        %v6153 = vld [vmem:[%s293 + $0x30] sm:$0x8]
        %v6154 = vsel %vm6134, %v6116, %v6153
        %6155 = vst [vmem:[%s293 + $0x30] sm:$0x8] %v6154
        %v6156 = vld [vmem:[%s293 + $0x38] sm:$0x8]
        %v6157 = vsel %vm6134, %v6123, %v6156
        %6158 = vst [vmem:[%s293 + $0x38] sm:$0x8] %v6157
        %v6159 = vld [vmem:[%s2045] sm:$0xf]
        %v6160 = vld [vmem:[%s2045 + $0x4] sm:$0xf]
        %v6161 = vld [vmem:[%s2045 + $0x8] sm:$0xf]
        %v6165 = vunpack.c.l.b16 %v6159
        %v6166 = vunpack.c.l.b16 %v6160
        %v6167 = vunpack.c.l.b16 %v6161
        %v6168 = vpack.c.b16 %v6166, %v6165
        %v6169 = vpack.c.b16 %v6167, %v6167
        %v6172 = vsel %vm620, %v6169, 0
        %6174 = vmatprep.subr.bf16.mxu0 0
        %6175 = vmatpush1.bf16.msra.mxu0 0
        %6176 = vmatprep.subr.bf16.mxu0 0
        %6177 = vmatpush1.bf16.msra.mxu0 0
        %6178 = vmatprep.subr.bf16.mxu0 0
        %6179 = vmatpush1.bf16.msra.mxu0 0
        %6180 = vmatprep.subr.bf16.mxu0 0
        %6181 = vmatpush1.bf16.msra.mxu0 0
        %6182 = vmatprep.subr.bf16.mxu0 0
        %6183 = vmatpush1.bf16.msra.mxu0 0
        %6184 = vmatprep.subr.bf16.mxu0 0
        %6185 = vmatpush1.bf16.msra.mxu0 0
        %6186 = vmatprep.subr.bf16.mxu0 0
        %6187 = vmatpush1.bf16.msra.mxu0 %v6172
        %6188 = vmatprep.subr.bf16.mxu0 0
        %6189 = vmatpush1.bf16.msra.mxu0 %v6168
        %6190 = vmatprep.subr.bf16.mxu0 0
        %6191 = vmatpush2.bf16.msra.mxu0 0
        %6192 = vmatprep.subr.bf16.mxu0 0
        %6193 = vmatpush2.bf16.msra.mxu0 0
        %6194 = vmatprep.subr.bf16.mxu0 0
        %6195 = vmatpush2.bf16.msra.mxu0 0
        %6196 = vmatprep.subr.bf16.mxu0 0
        %6197 = vmatpush2.bf16.msra.mxu0 0
        %6198 = vmatprep.subr.bf16.mxu0 0
        %6199 = vmatpush2.bf16.msra.mxu0 0
        %6200 = vmatprep.subr.bf16.mxu0 0
        %6201 = vmatpush2.bf16.msra.mxu0 0
        %6202 = vmatprep.subr.bf16.mxu0 0
        %6203 = vmatpush2.bf16.msra.mxu0 0
        %6204 = vmatprep.subr.bf16.mxu0 0
        %6205 = vmatpush2.bf16.msra.mxu0 0
        %6206 = vmatprep.mubr.bf16.mxu0 0
        %6207 = vmatmul.mubr.bf16.gmra.mxu0 %v4150
        %v6208 = vpop.f32.mrf.mxu0
        %v6209 = vadd.f32 0.0, %v6208
        %v6210 = vpop.f32.mrf.mxu0
        %v6211 = vpop.f32.mrf.mxu0
        %v6212 = vpop.f32.mrf.mxu0
        %6213 = vdwg.mxu0
        %v6214 = vadd.f32 %v330, %v6209
        %6215 = vrot.lane.b32.xlu0 %v6168, 127
        %v6216 = vpop.permute.xlu0 %6215
        %6217 = vrot.lane.b32.xlu0 %v6169, 127
        %v6218 = vpop.permute.xlu0 %6217
        %v6221 = vsel %vm620, %v6218, 0
        %6223 = vmatprep.subr.bf16.mxu0 0
        %6224 = vmatpush1.bf16.msra.mxu0 0
        %6225 = vmatprep.subr.bf16.mxu0 0
        %6226 = vmatpush1.bf16.msra.mxu0 0
        %6227 = vmatprep.subr.bf16.mxu0 0
        %6228 = vmatpush1.bf16.msra.mxu0 0
        %6229 = vmatprep.subr.bf16.mxu0 0
        %6230 = vmatpush1.bf16.msra.mxu0 0
        %6231 = vmatprep.subr.bf16.mxu0 0
        %6232 = vmatpush1.bf16.msra.mxu0 0
        %6233 = vmatprep.subr.bf16.mxu0 0
        %6234 = vmatpush1.bf16.msra.mxu0 0
        %6235 = vmatprep.subr.bf16.mxu0 0
        %6236 = vmatpush1.bf16.msra.mxu0 %v6221
        %6237 = vmatprep.subr.bf16.mxu0 0
        %6238 = vmatpush1.bf16.msra.mxu0 %v6216
        %6239 = vmatprep.subr.bf16.mxu0 0
        %6240 = vmatpush2.bf16.msra.mxu0 0
        %6241 = vmatprep.subr.bf16.mxu0 0
        %6242 = vmatpush2.bf16.msra.mxu0 0
        %6243 = vmatprep.subr.bf16.mxu0 0
        %6244 = vmatpush2.bf16.msra.mxu0 0
        %6245 = vmatprep.subr.bf16.mxu0 0
        %6246 = vmatpush2.bf16.msra.mxu0 0
        %6247 = vmatprep.subr.bf16.mxu0 0
        %6248 = vmatpush2.bf16.msra.mxu0 0
        %6249 = vmatprep.subr.bf16.mxu0 0
        %6250 = vmatpush2.bf16.msra.mxu0 0
        %6251 = vmatprep.subr.bf16.mxu0 0
        %6252 = vmatpush2.bf16.msra.mxu0 0
        %6253 = vmatprep.subr.bf16.mxu0 0
        %6254 = vmatpush2.bf16.msra.mxu0 0
        %6255 = vmatprep.mubr.bf16.mxu0 0
        %6256 = vmatmul.mubr.bf16.gmra.mxu0 %v4202
        %v6257 = vpop.f32.mrf.mxu0
        %v6258 = vadd.f32 0.0, %v6257
        %v6259 = vpop.f32.mrf.mxu0
        %v6260 = vpop.f32.mrf.mxu0
        %v6261 = vpop.f32.mrf.mxu0
        %6262 = vdwg.mxu0
        %v6263 = vadd.f32 %v6214, %v6258
        %6264 = vrot.lane.b32.xlu0 %v6168, 126
        %v6265 = vpop.permute.xlu0 %6264
        %6266 = vrot.lane.b32.xlu0 %v6169, 126
        %v6267 = vpop.permute.xlu0 %6266
        %v6270 = vsel %vm620, %v6267, 0
        %6272 = vmatprep.subr.bf16.mxu0 0
        %6273 = vmatpush1.bf16.msra.mxu0 0
        %6274 = vmatprep.subr.bf16.mxu0 0
        %6275 = vmatpush1.bf16.msra.mxu0 0
        %6276 = vmatprep.subr.bf16.mxu0 0
        %6277 = vmatpush1.bf16.msra.mxu0 0
        %6278 = vmatprep.subr.bf16.mxu0 0
        %6279 = vmatpush1.bf16.msra.mxu0 0
        %6280 = vmatprep.subr.bf16.mxu0 0
        %6281 = vmatpush1.bf16.msra.mxu0 0
        %6282 = vmatprep.subr.bf16.mxu0 0
        %6283 = vmatpush1.bf16.msra.mxu0 0
        %6284 = vmatprep.subr.bf16.mxu0 0
        %6285 = vmatpush1.bf16.msra.mxu0 %v6270
        %6286 = vmatprep.subr.bf16.mxu0 0
        %6287 = vmatpush1.bf16.msra.mxu0 %v6265
        %6288 = vmatprep.subr.bf16.mxu0 0
        %6289 = vmatpush2.bf16.msra.mxu0 0
        %6290 = vmatprep.subr.bf16.mxu0 0
        %6291 = vmatpush2.bf16.msra.mxu0 0
        %6292 = vmatprep.subr.bf16.mxu0 0
        %6293 = vmatpush2.bf16.msra.mxu0 0
        %6294 = vmatprep.subr.bf16.mxu0 0
        %6295 = vmatpush2.bf16.msra.mxu0 0
        %6296 = vmatprep.subr.bf16.mxu0 0
        %6297 = vmatpush2.bf16.msra.mxu0 0
        %6298 = vmatprep.subr.bf16.mxu0 0
        %6299 = vmatpush2.bf16.msra.mxu0 0
        %6300 = vmatprep.subr.bf16.mxu0 0
        %6301 = vmatpush2.bf16.msra.mxu0 0
        %6302 = vmatprep.subr.bf16.mxu0 0
        %6303 = vmatpush2.bf16.msra.mxu0 0
        %6304 = vmatprep.mubr.bf16.mxu0 0
        %6305 = vmatmul.mubr.bf16.gmra.mxu0 %v4254
        %v6306 = vpop.f32.mrf.mxu0
        %v6307 = vadd.f32 0.0, %v6306
        %v6308 = vpop.f32.mrf.mxu0
        %v6309 = vpop.f32.mrf.mxu0
        %v6310 = vpop.f32.mrf.mxu0
        %6311 = vdwg.mxu0
        %v6312 = vadd.f32 %v6263, %v6307
        %v6313 = vmax.f32 %v6312, 0.0
        %v6314 = vpack.c.bf16 %v6313, %v6313
        %v6317 = vunpack.c.l.s4 1966171168
        %v6318 = vunpack.c.0.s8 %v6317
        %v6319 = vlaneseq
        %v6320 = vshrl.u32 %v6319, 7
        %v6321 = vsub.s32 %v6318, %v6320
        %v6322 = vrot.slane %v6314, %v6321
        %v6323 = vcombine.high %v6322, %v6322
        %v6325 = vunpack.c.l.s4 1966171168
        %v6326 = vunpack.c.0.s8 %v6325
        %v6327 = vlaneseq
        %v6328 = vshrl.u32 %v6327, 7
        %v6329 = vsub.s32 %v6326, %v6328
        %v6330 = vrot.slane %v6322, %v6329
        %v6332 = vunpack.c.l.s4 1966171168
        %v6333 = vunpack.c.0.s8 %v6332
        %v6334 = vlaneseq
        %v6335 = vshrl.u32 %v6334, 7
        %v6336 = vsub.s32 %v6333, %v6335
        %v6337 = vrot.slane %v6323, %v6336
        %v6338 = vcombine.high %v6330, %v6330
        %v6339 = vcombine.high %v6337, %v6337
        %v6340 = vunpack.i.l.s16 %v6330
        %v6341 = vunpack.i.h.s16 %v6330
        %v6342 = vunpack.i.l.s16 %v6337
        %v6343 = vunpack.i.h.s16 %v6337
        %v6344 = vunpack.i.l.s16 %v6338
        %v6345 = vunpack.i.h.s16 %v6338
        %v6346 = vunpack.i.l.s16 %v6339
        %v6347 = vunpack.i.h.s16 %v6339
        %v6348 = vpack.i.b16 %v6340, %v6340
        %v6349 = vpack.i.b16 %v6341, %v6341
        %v6350 = vpack.i.b16 %v6342, %v6342
        %v6351 = vpack.i.b16 %v6343, %v6343
        %v6352 = vpack.i.b16 %v6344, %v6344
        %v6353 = vpack.i.b16 %v6345, %v6345
        %v6354 = vpack.i.b16 %v6346, %v6346
        %v6355 = vpack.i.b16 %v6347, %v6347
        %v6357 = vunpack.c.l.s4 286326784
        %v6358 = vunpack.c.0.s8 %v6357
        %v6359 = vlaneseq
        %v6360 = vshrl.u32 %v6359, 7
        %v6361 = vsub.s32 %v6358, %v6360
        %v6362 = vrot.slane %v6348, %v6361
        %v6364 = vunpack.c.l.s4 286326784
        %v6365 = vunpack.c.0.s8 %v6364
        %v6366 = vlaneseq
        %v6367 = vshrl.u32 %v6366, 7
        %v6368 = vsub.s32 %v6365, %v6367
        %v6369 = vrot.slane %v6349, %v6368
        %v6371 = vunpack.c.l.s4 286326784
        %v6372 = vunpack.c.0.s8 %v6371
        %v6373 = vlaneseq
        %v6374 = vshrl.u32 %v6373, 7
        %v6375 = vsub.s32 %v6372, %v6374
        %v6376 = vrot.slane %v6350, %v6375
        %v6378 = vunpack.c.l.s4 286326784
        %v6379 = vunpack.c.0.s8 %v6378
        %v6380 = vlaneseq
        %v6381 = vshrl.u32 %v6380, 7
        %v6382 = vsub.s32 %v6379, %v6381
        %v6383 = vrot.slane %v6351, %v6382
        %v6385 = vunpack.c.l.s4 286326784
        %v6386 = vunpack.c.0.s8 %v6385
        %v6387 = vlaneseq
        %v6388 = vshrl.u32 %v6387, 7
        %v6389 = vsub.s32 %v6386, %v6388
        %v6390 = vrot.slane %v6352, %v6389
        %v6392 = vunpack.c.l.s4 286326784
        %v6393 = vunpack.c.0.s8 %v6392
        %v6394 = vlaneseq
        %v6395 = vshrl.u32 %v6394, 7
        %v6396 = vsub.s32 %v6393, %v6395
        %v6397 = vrot.slane %v6353, %v6396
        %v6399 = vunpack.c.l.s4 286326784
        %v6400 = vunpack.c.0.s8 %v6399
        %v6401 = vlaneseq
        %v6402 = vshrl.u32 %v6401, 7
        %v6403 = vsub.s32 %v6400, %v6402
        %v6404 = vrot.slane %v6354, %v6403
        %v6406 = vunpack.c.l.s4 286326784
        %v6407 = vunpack.c.0.s8 %v6406
        %v6408 = vlaneseq
        %v6409 = vshrl.u32 %v6408, 7
        %v6410 = vsub.s32 %v6407, %v6409
        %v6411 = vrot.slane %v6355, %v6410
        %vm6420 = vsmask.f32 7950
        %vm6421 = vmand %vm6132, %vm6420
        %v6422 = vld [vmem:[%s293] sm:$0x8]
        %v6423 = vsel %vm6421, %v6362, %v6422
        %6424 = vst [vmem:[%s293] sm:$0x8] %v6423
        %v6425 = vld [vmem:[%s293 + $0x8] sm:$0x8]
        %v6426 = vsel %vm6421, %v6369, %v6425
        %6427 = vst [vmem:[%s293 + $0x8] sm:$0x8] %v6426
        %v6428 = vld [vmem:[%s293 + $0x10] sm:$0x8]
        %v6429 = vsel %vm6421, %v6376, %v6428
        %6430 = vst [vmem:[%s293 + $0x10] sm:$0x8] %v6429
        %v6431 = vld [vmem:[%s293 + $0x18] sm:$0x8]
        %v6432 = vsel %vm6421, %v6383, %v6431
        %6433 = vst [vmem:[%s293 + $0x18] sm:$0x8] %v6432
        %v6434 = vld [vmem:[%s293 + $0x20] sm:$0x8]
        %v6435 = vsel %vm6421, %v6390, %v6434
        %6436 = vst [vmem:[%s293 + $0x20] sm:$0x8] %v6435
        %v6437 = vld [vmem:[%s293 + $0x28] sm:$0x8]
        %v6438 = vsel %vm6421, %v6397, %v6437
        %6439 = vst [vmem:[%s293 + $0x28] sm:$0x8] %v6438
        %v6440 = vld [vmem:[%s293 + $0x30] sm:$0x8]
        %v6441 = vsel %vm6421, %v6404, %v6440
        %6442 = vst [vmem:[%s293 + $0x30] sm:$0x8] %v6441
        %v6443 = vld [vmem:[%s293 + $0x38] sm:$0x8]
        %v6444 = vsel %vm6421, %v6411, %v6443
        %6445 = vst [vmem:[%s293 + $0x38] sm:$0x8] %v6444
        %v6446 = vld [vmem:[%s2252] sm:$0xf]
        %v6447 = vld [vmem:[%s2252 + $0x4] sm:$0xf]
        %v6448 = vld [vmem:[%s2252 + $0x8] sm:$0xf]
        %v6452 = vunpack.c.l.b16 %v6446
        %v6453 = vunpack.c.l.b16 %v6447
        %v6454 = vunpack.c.l.b16 %v6448
        %v6455 = vpack.c.b16 %v6453, %v6452
        %v6456 = vpack.c.b16 %v6454, %v6454
        %v6459 = vsel %vm620, %v6456, 0
        %6461 = vmatprep.subr.bf16.mxu0 0
        %6462 = vmatpush1.bf16.msra.mxu0 0
        %6463 = vmatprep.subr.bf16.mxu0 0
        %6464 = vmatpush1.bf16.msra.mxu0 0
        %6465 = vmatprep.subr.bf16.mxu0 0
        %6466 = vmatpush1.bf16.msra.mxu0 0
        %6467 = vmatprep.subr.bf16.mxu0 0
        %6468 = vmatpush1.bf16.msra.mxu0 0
        %6469 = vmatprep.subr.bf16.mxu0 0
        %6470 = vmatpush1.bf16.msra.mxu0 0
        %6471 = vmatprep.subr.bf16.mxu0 0
        %6472 = vmatpush1.bf16.msra.mxu0 0
        %6473 = vmatprep.subr.bf16.mxu0 0
        %6474 = vmatpush1.bf16.msra.mxu0 %v6459
        %6475 = vmatprep.subr.bf16.mxu0 0
        %6476 = vmatpush1.bf16.msra.mxu0 %v6455
        %6477 = vmatprep.subr.bf16.mxu0 0
        %6478 = vmatpush2.bf16.msra.mxu0 0
        %6479 = vmatprep.subr.bf16.mxu0 0
        %6480 = vmatpush2.bf16.msra.mxu0 0
        %6481 = vmatprep.subr.bf16.mxu0 0
        %6482 = vmatpush2.bf16.msra.mxu0 0
        %6483 = vmatprep.subr.bf16.mxu0 0
        %6484 = vmatpush2.bf16.msra.mxu0 0
        %6485 = vmatprep.subr.bf16.mxu0 0
        %6486 = vmatpush2.bf16.msra.mxu0 0
        %6487 = vmatprep.subr.bf16.mxu0 0
        %6488 = vmatpush2.bf16.msra.mxu0 0
        %6489 = vmatprep.subr.bf16.mxu0 0
        %6490 = vmatpush2.bf16.msra.mxu0 0
        %6491 = vmatprep.subr.bf16.mxu0 0
        %6492 = vmatpush2.bf16.msra.mxu0 0
        %6493 = vmatprep.mubr.bf16.mxu0 0
        %6494 = vmatmul.mubr.bf16.gmra.mxu0 %v4150
        %v6495 = vpop.f32.mrf.mxu0
        %v6496 = vadd.f32 0.0, %v6495
        %v6497 = vpop.f32.mrf.mxu0
        %v6498 = vpop.f32.mrf.mxu0
        %v6499 = vpop.f32.mrf.mxu0
        %6500 = vdwg.mxu0
        %v6501 = vadd.f32 %v330, %v6496
        %6502 = vrot.lane.b32.xlu0 %v6455, 127
        %v6503 = vpop.permute.xlu0 %6502
        %6504 = vrot.lane.b32.xlu0 %v6456, 127
        %v6505 = vpop.permute.xlu0 %6504
        %v6508 = vsel %vm620, %v6505, 0
        %6510 = vmatprep.subr.bf16.mxu0 0
        %6511 = vmatpush1.bf16.msra.mxu0 0
        %6512 = vmatprep.subr.bf16.mxu0 0
        %6513 = vmatpush1.bf16.msra.mxu0 0
        %6514 = vmatprep.subr.bf16.mxu0 0
        %6515 = vmatpush1.bf16.msra.mxu0 0
        %6516 = vmatprep.subr.bf16.mxu0 0
        %6517 = vmatpush1.bf16.msra.mxu0 0
        %6518 = vmatprep.subr.bf16.mxu0 0
        %6519 = vmatpush1.bf16.msra.mxu0 0
        %6520 = vmatprep.subr.bf16.mxu0 0
        %6521 = vmatpush1.bf16.msra.mxu0 0
        %6522 = vmatprep.subr.bf16.mxu0 0
        %6523 = vmatpush1.bf16.msra.mxu0 %v6508
        %6524 = vmatprep.subr.bf16.mxu0 0
        %6525 = vmatpush1.bf16.msra.mxu0 %v6503
        %6526 = vmatprep.subr.bf16.mxu0 0
        %6527 = vmatpush2.bf16.msra.mxu0 0
        %6528 = vmatprep.subr.bf16.mxu0 0
        %6529 = vmatpush2.bf16.msra.mxu0 0
        %6530 = vmatprep.subr.bf16.mxu0 0
        %6531 = vmatpush2.bf16.msra.mxu0 0
        %6532 = vmatprep.subr.bf16.mxu0 0
        %6533 = vmatpush2.bf16.msra.mxu0 0
        %6534 = vmatprep.subr.bf16.mxu0 0
        %6535 = vmatpush2.bf16.msra.mxu0 0
        %6536 = vmatprep.subr.bf16.mxu0 0
        %6537 = vmatpush2.bf16.msra.mxu0 0
        %6538 = vmatprep.subr.bf16.mxu0 0
        %6539 = vmatpush2.bf16.msra.mxu0 0
        %6540 = vmatprep.subr.bf16.mxu0 0
        %6541 = vmatpush2.bf16.msra.mxu0 0
        %6542 = vmatprep.mubr.bf16.mxu0 0
        %6543 = vmatmul.mubr.bf16.gmra.mxu0 %v4202
        %v6544 = vpop.f32.mrf.mxu0
        %v6545 = vadd.f32 0.0, %v6544
        %v6546 = vpop.f32.mrf.mxu0
        %v6547 = vpop.f32.mrf.mxu0
        %v6548 = vpop.f32.mrf.mxu0
        %6549 = vdwg.mxu0
        %v6550 = vadd.f32 %v6501, %v6545
        %6551 = vrot.lane.b32.xlu0 %v6455, 126
        %v6552 = vpop.permute.xlu0 %6551
        %6553 = vrot.lane.b32.xlu0 %v6456, 126
        %v6554 = vpop.permute.xlu0 %6553
        %v6557 = vsel %vm620, %v6554, 0
        %6559 = vmatprep.subr.bf16.mxu0 0
        %6560 = vmatpush1.bf16.msra.mxu0 0
        %6561 = vmatprep.subr.bf16.mxu0 0
        %6562 = vmatpush1.bf16.msra.mxu0 0
        %6563 = vmatprep.subr.bf16.mxu0 0
        %6564 = vmatpush1.bf16.msra.mxu0 0
        %6565 = vmatprep.subr.bf16.mxu0 0
        %6566 = vmatpush1.bf16.msra.mxu0 0
        %6567 = vmatprep.subr.bf16.mxu0 0
        %6568 = vmatpush1.bf16.msra.mxu0 0
        %6569 = vmatprep.subr.bf16.mxu0 0
        %6570 = vmatpush1.bf16.msra.mxu0 0
        %6571 = vmatprep.subr.bf16.mxu0 0
        %6572 = vmatpush1.bf16.msra.mxu0 %v6557
        %6573 = vmatprep.subr.bf16.mxu0 0
        %6574 = vmatpush1.bf16.msra.mxu0 %v6552
        %6575 = vmatprep.subr.bf16.mxu0 0
        %6576 = vmatpush2.bf16.msra.mxu0 0
        %6577 = vmatprep.subr.bf16.mxu0 0
        %6578 = vmatpush2.bf16.msra.mxu0 0
        %6579 = vmatprep.subr.bf16.mxu0 0
        %6580 = vmatpush2.bf16.msra.mxu0 0
        %6581 = vmatprep.subr.bf16.mxu0 0
        %6582 = vmatpush2.bf16.msra.mxu0 0
        %6583 = vmatprep.subr.bf16.mxu0 0
        %6584 = vmatpush2.bf16.msra.mxu0 0
        %6585 = vmatprep.subr.bf16.mxu0 0
        %6586 = vmatpush2.bf16.msra.mxu0 0
        %6587 = vmatprep.subr.bf16.mxu0 0
        %6588 = vmatpush2.bf16.msra.mxu0 0
        %6589 = vmatprep.subr.bf16.mxu0 0
        %6590 = vmatpush2.bf16.msra.mxu0 0
        %6591 = vmatprep.mubr.bf16.mxu0 0
        %6592 = vmatmul.mubr.bf16.gmra.mxu0 %v4254
        %v6593 = vpop.f32.mrf.mxu0
        %v6594 = vadd.f32 0.0, %v6593
        %v6595 = vpop.f32.mrf.mxu0
        %v6596 = vpop.f32.mrf.mxu0
        %v6597 = vpop.f32.mrf.mxu0
        %6598 = vdwg.mxu0
        %v6599 = vadd.f32 %v6550, %v6594
        %v6600 = vmax.f32 %v6599, 0.0
        %v6601 = vpack.c.bf16 %v6600, %v6600
        %v6604 = vunpack.c.l.s4 1966171168
        %v6605 = vunpack.c.0.s8 %v6604
        %v6606 = vlaneseq
        %v6607 = vshrl.u32 %v6606, 7
        %v6608 = vsub.s32 %v6605, %v6607
        %v6609 = vrot.slane %v6601, %v6608
        %v6610 = vcombine.high %v6609, %v6609
        %v6612 = vunpack.c.l.s4 1966171168
        %v6613 = vunpack.c.0.s8 %v6612
        %v6614 = vlaneseq
        %v6615 = vshrl.u32 %v6614, 7
        %v6616 = vsub.s32 %v6613, %v6615
        %v6617 = vrot.slane %v6609, %v6616
        %v6619 = vunpack.c.l.s4 1966171168
        %v6620 = vunpack.c.0.s8 %v6619
        %v6621 = vlaneseq
        %v6622 = vshrl.u32 %v6621, 7
        %v6623 = vsub.s32 %v6620, %v6622
        %v6624 = vrot.slane %v6610, %v6623
        %v6625 = vcombine.high %v6617, %v6617
        %v6626 = vcombine.high %v6624, %v6624
        %v6627 = vunpack.i.l.s16 %v6617
        %v6628 = vunpack.i.h.s16 %v6617
        %v6629 = vunpack.i.l.s16 %v6624
        %v6630 = vunpack.i.h.s16 %v6624
        %v6631 = vunpack.i.l.s16 %v6625
        %v6632 = vunpack.i.h.s16 %v6625
        %v6633 = vunpack.i.l.s16 %v6626
        %v6634 = vunpack.i.h.s16 %v6626
        %v6635 = vpack.i.b16 %v6627, %v6627
        %v6636 = vpack.i.b16 %v6628, %v6628
        %v6637 = vpack.i.b16 %v6629, %v6629
        %v6638 = vpack.i.b16 %v6630, %v6630
        %v6639 = vpack.i.b16 %v6631, %v6631
        %v6640 = vpack.i.b16 %v6632, %v6632
        %v6641 = vpack.i.b16 %v6633, %v6633
        %v6642 = vpack.i.b16 %v6634, %v6634
        %v6644 = vunpack.c.l.s4 286326784
        %v6645 = vunpack.c.0.s8 %v6644
        %v6646 = vlaneseq
        %v6647 = vshrl.u32 %v6646, 7
        %v6648 = vsub.s32 %v6645, %v6647
        %v6649 = vrot.slane %v6635, %v6648
        %v6651 = vunpack.c.l.s4 286326784
        %v6652 = vunpack.c.0.s8 %v6651
        %v6653 = vlaneseq
        %v6654 = vshrl.u32 %v6653, 7
        %v6655 = vsub.s32 %v6652, %v6654
        %v6656 = vrot.slane %v6636, %v6655
        %v6658 = vunpack.c.l.s4 286326784
        %v6659 = vunpack.c.0.s8 %v6658
        %v6660 = vlaneseq
        %v6661 = vshrl.u32 %v6660, 7
        %v6662 = vsub.s32 %v6659, %v6661
        %v6663 = vrot.slane %v6637, %v6662
        %v6665 = vunpack.c.l.s4 286326784
        %v6666 = vunpack.c.0.s8 %v6665
        %v6667 = vlaneseq
        %v6668 = vshrl.u32 %v6667, 7
        %v6669 = vsub.s32 %v6666, %v6668
        %v6670 = vrot.slane %v6638, %v6669
        %v6672 = vunpack.c.l.s4 286326784
        %v6673 = vunpack.c.0.s8 %v6672
        %v6674 = vlaneseq
        %v6675 = vshrl.u32 %v6674, 7
        %v6676 = vsub.s32 %v6673, %v6675
        %v6677 = vrot.slane %v6639, %v6676
        %v6679 = vunpack.c.l.s4 286326784
        %v6680 = vunpack.c.0.s8 %v6679
        %v6681 = vlaneseq
        %v6682 = vshrl.u32 %v6681, 7
        %v6683 = vsub.s32 %v6680, %v6682
        %v6684 = vrot.slane %v6640, %v6683
        %v6686 = vunpack.c.l.s4 286326784
        %v6687 = vunpack.c.0.s8 %v6686
        %v6688 = vlaneseq
        %v6689 = vshrl.u32 %v6688, 7
        %v6690 = vsub.s32 %v6687, %v6689
        %v6691 = vrot.slane %v6641, %v6690
        %v6693 = vunpack.c.l.s4 286326784
        %v6694 = vunpack.c.0.s8 %v6693
        %v6695 = vlaneseq
        %v6696 = vshrl.u32 %v6695, 7
        %v6697 = vsub.s32 %v6694, %v6696
        %v6698 = vrot.slane %v6642, %v6697
        %v6707 = vld [vmem:[%s293 + $0x4] sm:$0x1]
        %v6708 = vsel %vm4409, %v6649, %v6707
        %6709 = vst [vmem:[%s293 + $0x4] sm:$0x1] %v6708
        %v6710 = vld [vmem:[%s293 + $0xc] sm:$0x1]
        %v6711 = vsel %vm4409, %v6656, %v6710
        %6712 = vst [vmem:[%s293 + $0xc] sm:$0x1] %v6711
        %v6713 = vld [vmem:[%s293 + $0x14] sm:$0x1]
        %v6714 = vsel %vm4409, %v6663, %v6713
        %6715 = vst [vmem:[%s293 + $0x14] sm:$0x1] %v6714
        %v6716 = vld [vmem:[%s293 + $0x1c] sm:$0x1]
        %v6717 = vsel %vm4409, %v6670, %v6716
        %6718 = vst [vmem:[%s293 + $0x1c] sm:$0x1] %v6717
        %v6719 = vld [vmem:[%s293 + $0x24] sm:$0x1]
        %v6720 = vsel %vm4409, %v6677, %v6719
        %6721 = vst [vmem:[%s293 + $0x24] sm:$0x1] %v6720
        %v6722 = vld [vmem:[%s293 + $0x2c] sm:$0x1]
        %v6723 = vsel %vm4409, %v6684, %v6722
        %6724 = vst [vmem:[%s293 + $0x2c] sm:$0x1] %v6723
        %v6725 = vld [vmem:[%s293 + $0x34] sm:$0x1]
        %v6726 = vsel %vm4409, %v6691, %v6725
        %6727 = vst [vmem:[%s293 + $0x34] sm:$0x1] %v6726
        %v6728 = vld [vmem:[%s293 + $0x3c] sm:$0x1]
        %v6729 = vsel %vm4409, %v6698, %v6728
        %6730 = vst [vmem:[%s293 + $0x3c] sm:$0x1] %v6729
        %v6731 = vld [vmem:[%s2459] sm:$0xf]
        %v6732 = vld [vmem:[%s2459 + $0x4] sm:$0xf]
        %v6733 = vld [vmem:[%s2459 + $0x8] sm:$0xf]
        %v6737 = vunpack.c.l.b16 %v6731
        %v6738 = vunpack.c.l.b16 %v6732
        %v6739 = vunpack.c.l.b16 %v6733
        %v6740 = vpack.c.b16 %v6738, %v6737
        %v6741 = vpack.c.b16 %v6739, %v6739
        %v6744 = vsel %vm620, %v6741, 0
        %6746 = vmatprep.subr.bf16.mxu0 0
        %6747 = vmatpush1.bf16.msra.mxu0 0
        %6748 = vmatprep.subr.bf16.mxu0 0
        %6749 = vmatpush1.bf16.msra.mxu0 0
        %6750 = vmatprep.subr.bf16.mxu0 0
        %6751 = vmatpush1.bf16.msra.mxu0 0
        %6752 = vmatprep.subr.bf16.mxu0 0
        %6753 = vmatpush1.bf16.msra.mxu0 0
        %6754 = vmatprep.subr.bf16.mxu0 0
        %6755 = vmatpush1.bf16.msra.mxu0 0
        %6756 = vmatprep.subr.bf16.mxu0 0
        %6757 = vmatpush1.bf16.msra.mxu0 0
        %6758 = vmatprep.subr.bf16.mxu0 0
        %6759 = vmatpush1.bf16.msra.mxu0 %v6744
        %6760 = vmatprep.subr.bf16.mxu0 0
        %6761 = vmatpush1.bf16.msra.mxu0 %v6740
        %6762 = vmatprep.subr.bf16.mxu0 0
        %6763 = vmatpush2.bf16.msra.mxu0 0
        %6764 = vmatprep.subr.bf16.mxu0 0
        %6765 = vmatpush2.bf16.msra.mxu0 0
        %6766 = vmatprep.subr.bf16.mxu0 0
        %6767 = vmatpush2.bf16.msra.mxu0 0
        %6768 = vmatprep.subr.bf16.mxu0 0
        %6769 = vmatpush2.bf16.msra.mxu0 0
        %6770 = vmatprep.subr.bf16.mxu0 0
        %6771 = vmatpush2.bf16.msra.mxu0 0
        %6772 = vmatprep.subr.bf16.mxu0 0
        %6773 = vmatpush2.bf16.msra.mxu0 0
        %6774 = vmatprep.subr.bf16.mxu0 0
        %6775 = vmatpush2.bf16.msra.mxu0 0
        %6776 = vmatprep.subr.bf16.mxu0 0
        %6777 = vmatpush2.bf16.msra.mxu0 0
        %6778 = vmatprep.mubr.bf16.mxu0 0
        %6779 = vmatmul.mubr.bf16.gmra.mxu0 %v4150
        %v6780 = vpop.f32.mrf.mxu0
        %v6781 = vadd.f32 0.0, %v6780
        %v6782 = vpop.f32.mrf.mxu0
        %v6783 = vpop.f32.mrf.mxu0
        %v6784 = vpop.f32.mrf.mxu0
        %6785 = vdwg.mxu0
        %v6786 = vadd.f32 %v330, %v6781
        %6787 = vrot.lane.b32.xlu0 %v6740, 127
        %v6788 = vpop.permute.xlu0 %6787
        %6789 = vrot.lane.b32.xlu0 %v6741, 127
        %v6790 = vpop.permute.xlu0 %6789
        %v6793 = vsel %vm620, %v6790, 0
        %6795 = vmatprep.subr.bf16.mxu0 0
        %6796 = vmatpush1.bf16.msra.mxu0 0
        %6797 = vmatprep.subr.bf16.mxu0 0
        %6798 = vmatpush1.bf16.msra.mxu0 0
        %6799 = vmatprep.subr.bf16.mxu0 0
        %6800 = vmatpush1.bf16.msra.mxu0 0
        %6801 = vmatprep.subr.bf16.mxu0 0
        %6802 = vmatpush1.bf16.msra.mxu0 0
        %6803 = vmatprep.subr.bf16.mxu0 0
        %6804 = vmatpush1.bf16.msra.mxu0 0
        %6805 = vmatprep.subr.bf16.mxu0 0
        %6806 = vmatpush1.bf16.msra.mxu0 0
        %6807 = vmatprep.subr.bf16.mxu0 0
        %6808 = vmatpush1.bf16.msra.mxu0 %v6793
        %6809 = vmatprep.subr.bf16.mxu0 0
        %6810 = vmatpush1.bf16.msra.mxu0 %v6788
        %6811 = vmatprep.subr.bf16.mxu0 0
        %6812 = vmatpush2.bf16.msra.mxu0 0
        %6813 = vmatprep.subr.bf16.mxu0 0
        %6814 = vmatpush2.bf16.msra.mxu0 0
        %6815 = vmatprep.subr.bf16.mxu0 0
        %6816 = vmatpush2.bf16.msra.mxu0 0
        %6817 = vmatprep.subr.bf16.mxu0 0
        %6818 = vmatpush2.bf16.msra.mxu0 0
        %6819 = vmatprep.subr.bf16.mxu0 0
        %6820 = vmatpush2.bf16.msra.mxu0 0
        %6821 = vmatprep.subr.bf16.mxu0 0
        %6822 = vmatpush2.bf16.msra.mxu0 0
        %6823 = vmatprep.subr.bf16.mxu0 0
        %6824 = vmatpush2.bf16.msra.mxu0 0
        %6825 = vmatprep.subr.bf16.mxu0 0
        %6826 = vmatpush2.bf16.msra.mxu0 0
        %6827 = vmatprep.mubr.bf16.mxu0 0
        %6828 = vmatmul.mubr.bf16.gmra.mxu0 %v4202
        %v6829 = vpop.f32.mrf.mxu0
        %v6830 = vadd.f32 0.0, %v6829
        %v6831 = vpop.f32.mrf.mxu0
        %v6832 = vpop.f32.mrf.mxu0
        %v6833 = vpop.f32.mrf.mxu0
        %6834 = vdwg.mxu0
        %v6835 = vadd.f32 %v6786, %v6830
        %6836 = vrot.lane.b32.xlu0 %v6740, 126
        %v6837 = vpop.permute.xlu0 %6836
        %6838 = vrot.lane.b32.xlu0 %v6741, 126
        %v6839 = vpop.permute.xlu0 %6838
        %v6842 = vsel %vm620, %v6839, 0
        %6844 = vmatprep.subr.bf16.mxu0 0
        %6845 = vmatpush1.bf16.msra.mxu0 0
        %6846 = vmatprep.subr.bf16.mxu0 0
        %6847 = vmatpush1.bf16.msra.mxu0 0
        %6848 = vmatprep.subr.bf16.mxu0 0
        %6849 = vmatpush1.bf16.msra.mxu0 0
        %6850 = vmatprep.subr.bf16.mxu0 0
        %6851 = vmatpush1.bf16.msra.mxu0 0
        %6852 = vmatprep.subr.bf16.mxu0 0
        %6853 = vmatpush1.bf16.msra.mxu0 0
        %6854 = vmatprep.subr.bf16.mxu0 0
        %6855 = vmatpush1.bf16.msra.mxu0 0
        %6856 = vmatprep.subr.bf16.mxu0 0
        %6857 = vmatpush1.bf16.msra.mxu0 %v6842
        %6858 = vmatprep.subr.bf16.mxu0 0
        %6859 = vmatpush1.bf16.msra.mxu0 %v6837
        %6860 = vmatprep.subr.bf16.mxu0 0
        %6861 = vmatpush2.bf16.msra.mxu0 0
        %6862 = vmatprep.subr.bf16.mxu0 0
        %6863 = vmatpush2.bf16.msra.mxu0 0
        %6864 = vmatprep.subr.bf16.mxu0 0
        %6865 = vmatpush2.bf16.msra.mxu0 0
        %6866 = vmatprep.subr.bf16.mxu0 0
        %6867 = vmatpush2.bf16.msra.mxu0 0
        %6868 = vmatprep.subr.bf16.mxu0 0
        %6869 = vmatpush2.bf16.msra.mxu0 0
        %6870 = vmatprep.subr.bf16.mxu0 0
        %6871 = vmatpush2.bf16.msra.mxu0 0
        %6872 = vmatprep.subr.bf16.mxu0 0
        %6873 = vmatpush2.bf16.msra.mxu0 0
        %6874 = vmatprep.subr.bf16.mxu0 0
        %6875 = vmatpush2.bf16.msra.mxu0 0
        %6876 = vmatprep.mubr.bf16.mxu0 0
        %6877 = vmatmul.mubr.bf16.gmra.mxu0 %v4254
        %v6878 = vpop.f32.mrf.mxu0
        %v6879 = vadd.f32 0.0, %v6878
        %v6880 = vpop.f32.mrf.mxu0
        %v6881 = vpop.f32.mrf.mxu0
        %v6882 = vpop.f32.mrf.mxu0
        %6883 = vdwg.mxu0
        %v6884 = vadd.f32 %v6835, %v6879
        %v6885 = vmax.f32 %v6884, 0.0
        %v6886 = vpack.c.bf16 %v6885, %v6885
        %v6889 = vunpack.c.l.s4 1966171168
        %v6890 = vunpack.c.0.s8 %v6889
        %v6891 = vlaneseq
        %v6892 = vshrl.u32 %v6891, 7
        %v6893 = vsub.s32 %v6890, %v6892
        %v6894 = vrot.slane %v6886, %v6893
        %v6895 = vcombine.high %v6894, %v6894
        %v6897 = vunpack.c.l.s4 1966171168
        %v6898 = vunpack.c.0.s8 %v6897
        %v6899 = vlaneseq
        %v6900 = vshrl.u32 %v6899, 7
        %v6901 = vsub.s32 %v6898, %v6900
        %v6902 = vrot.slane %v6894, %v6901
        %v6904 = vunpack.c.l.s4 1966171168
        %v6905 = vunpack.c.0.s8 %v6904
        %v6906 = vlaneseq
        %v6907 = vshrl.u32 %v6906, 7
        %v6908 = vsub.s32 %v6905, %v6907
        %v6909 = vrot.slane %v6895, %v6908
        %v6910 = vcombine.high %v6902, %v6902
        %v6911 = vcombine.high %v6909, %v6909
        %v6912 = vunpack.i.l.s16 %v6902
        %v6913 = vunpack.i.h.s16 %v6902
        %v6914 = vunpack.i.l.s16 %v6909
        %v6915 = vunpack.i.h.s16 %v6909
        %v6916 = vunpack.i.l.s16 %v6910
        %v6917 = vunpack.i.h.s16 %v6910
        %v6918 = vunpack.i.l.s16 %v6911
        %v6919 = vunpack.i.h.s16 %v6911
        %v6920 = vpack.i.b16 %v6912, %v6912
        %v6921 = vpack.i.b16 %v6913, %v6913
        %v6922 = vpack.i.b16 %v6914, %v6914
        %v6923 = vpack.i.b16 %v6915, %v6915
        %v6924 = vpack.i.b16 %v6916, %v6916
        %v6925 = vpack.i.b16 %v6917, %v6917
        %v6926 = vpack.i.b16 %v6918, %v6918
        %v6927 = vpack.i.b16 %v6919, %v6919
        %v6929 = vunpack.c.l.s4 286326784
        %v6930 = vunpack.c.0.s8 %v6929
        %v6931 = vlaneseq
        %v6932 = vshrl.u32 %v6931, 7
        %v6933 = vsub.s32 %v6930, %v6932
        %v6934 = vrot.slane %v6920, %v6933
        %v6936 = vunpack.c.l.s4 286326784
        %v6937 = vunpack.c.0.s8 %v6936
        %v6938 = vlaneseq
        %v6939 = vshrl.u32 %v6938, 7
        %v6940 = vsub.s32 %v6937, %v6939
        %v6941 = vrot.slane %v6921, %v6940
        %v6943 = vunpack.c.l.s4 286326784
        %v6944 = vunpack.c.0.s8 %v6943
        %v6945 = vlaneseq
        %v6946 = vshrl.u32 %v6945, 7
        %v6947 = vsub.s32 %v6944, %v6946
        %v6948 = vrot.slane %v6922, %v6947
        %v6950 = vunpack.c.l.s4 286326784
        %v6951 = vunpack.c.0.s8 %v6950
        %v6952 = vlaneseq
        %v6953 = vshrl.u32 %v6952, 7
        %v6954 = vsub.s32 %v6951, %v6953
        %v6955 = vrot.slane %v6923, %v6954
        %v6957 = vunpack.c.l.s4 286326784
        %v6958 = vunpack.c.0.s8 %v6957
        %v6959 = vlaneseq
        %v6960 = vshrl.u32 %v6959, 7
        %v6961 = vsub.s32 %v6958, %v6960
        %v6962 = vrot.slane %v6924, %v6961
        %v6964 = vunpack.c.l.s4 286326784
        %v6965 = vunpack.c.0.s8 %v6964
        %v6966 = vlaneseq
        %v6967 = vshrl.u32 %v6966, 7
        %v6968 = vsub.s32 %v6965, %v6967
        %v6969 = vrot.slane %v6925, %v6968
        %v6971 = vunpack.c.l.s4 286326784
        %v6972 = vunpack.c.0.s8 %v6971
        %v6973 = vlaneseq
        %v6974 = vshrl.u32 %v6973, 7
        %v6975 = vsub.s32 %v6972, %v6974
        %v6976 = vrot.slane %v6926, %v6975
        %v6978 = vunpack.c.l.s4 286326784
        %v6979 = vunpack.c.0.s8 %v6978
        %v6980 = vlaneseq
        %v6981 = vshrl.u32 %v6980, 7
        %v6982 = vsub.s32 %v6979, %v6981
        %v6983 = vrot.slane %v6927, %v6982
        %v6992 = vld [vmem:[%s293 + $0x4] sm:$0x1]
        %v6993 = vsel %vm4696, %v6934, %v6992
        %6994 = vst [vmem:[%s293 + $0x4] sm:$0x1] %v6993
        %v6995 = vld [vmem:[%s293 + $0xc] sm:$0x1]
        %v6996 = vsel %vm4696, %v6941, %v6995
        %6997 = vst [vmem:[%s293 + $0xc] sm:$0x1] %v6996
        %v6998 = vld [vmem:[%s293 + $0x14] sm:$0x1]
        %v6999 = vsel %vm4696, %v6948, %v6998
        %7000 = vst [vmem:[%s293 + $0x14] sm:$0x1] %v6999
        %v7001 = vld [vmem:[%s293 + $0x1c] sm:$0x1]
        %v7002 = vsel %vm4696, %v6955, %v7001
        %7003 = vst [vmem:[%s293 + $0x1c] sm:$0x1] %v7002
        %v7004 = vld [vmem:[%s293 + $0x24] sm:$0x1]
        %v7005 = vsel %vm4696, %v6962, %v7004
        %7006 = vst [vmem:[%s293 + $0x24] sm:$0x1] %v7005
        %v7007 = vld [vmem:[%s293 + $0x2c] sm:$0x1]
        %v7008 = vsel %vm4696, %v6969, %v7007
        %7009 = vst [vmem:[%s293 + $0x2c] sm:$0x1] %v7008
        %v7010 = vld [vmem:[%s293 + $0x34] sm:$0x1]
        %v7011 = vsel %vm4696, %v6976, %v7010
        %7012 = vst [vmem:[%s293 + $0x34] sm:$0x1] %v7011
        %v7013 = vld [vmem:[%s293 + $0x3c] sm:$0x1]
        %v7014 = vsel %vm4696, %v6983, %v7013
        %7015 = vst [vmem:[%s293 + $0x3c] sm:$0x1] %v7014
        %v7016 = vld [vmem:[%s2666] sm:$0xf]
        %v7017 = vld [vmem:[%s2666 + $0x4] sm:$0xf]
        %v7018 = vld [vmem:[%s2666 + $0x8] sm:$0xf]
        %v7022 = vunpack.c.l.b16 %v7016
        %v7023 = vunpack.c.l.b16 %v7017
        %v7024 = vunpack.c.l.b16 %v7018
        %v7025 = vpack.c.b16 %v7023, %v7022
        %v7026 = vpack.c.b16 %v7024, %v7024
        %v7029 = vsel %vm620, %v7026, 0
        %7031 = vmatprep.subr.bf16.mxu0 0
        %7032 = vmatpush1.bf16.msra.mxu0 0
        %7033 = vmatprep.subr.bf16.mxu0 0
        %7034 = vmatpush1.bf16.msra.mxu0 0
        %7035 = vmatprep.subr.bf16.mxu0 0
        %7036 = vmatpush1.bf16.msra.mxu0 0
        %7037 = vmatprep.subr.bf16.mxu0 0
        %7038 = vmatpush1.bf16.msra.mxu0 0
        %7039 = vmatprep.subr.bf16.mxu0 0
        %7040 = vmatpush1.bf16.msra.mxu0 0
        %7041 = vmatprep.subr.bf16.mxu0 0
        %7042 = vmatpush1.bf16.msra.mxu0 0
        %7043 = vmatprep.subr.bf16.mxu0 0
        %7044 = vmatpush1.bf16.msra.mxu0 %v7029
        %7045 = vmatprep.subr.bf16.mxu0 0
        %7046 = vmatpush1.bf16.msra.mxu0 %v7025
        %7047 = vmatprep.subr.bf16.mxu0 0
        %7048 = vmatpush2.bf16.msra.mxu0 0
        %7049 = vmatprep.subr.bf16.mxu0 0
        %7050 = vmatpush2.bf16.msra.mxu0 0
        %7051 = vmatprep.subr.bf16.mxu0 0
        %7052 = vmatpush2.bf16.msra.mxu0 0
        %7053 = vmatprep.subr.bf16.mxu0 0
        %7054 = vmatpush2.bf16.msra.mxu0 0
        %7055 = vmatprep.subr.bf16.mxu0 0
        %7056 = vmatpush2.bf16.msra.mxu0 0
        %7057 = vmatprep.subr.bf16.mxu0 0
        %7058 = vmatpush2.bf16.msra.mxu0 0
        %7059 = vmatprep.subr.bf16.mxu0 0
        %7060 = vmatpush2.bf16.msra.mxu0 0
        %7061 = vmatprep.subr.bf16.mxu0 0
        %7062 = vmatpush2.bf16.msra.mxu0 0
        %7063 = vmatprep.mubr.bf16.mxu0 0
        %7064 = vmatmul.mubr.bf16.gmra.mxu0 %v4150
        %v7065 = vpop.f32.mrf.mxu0
        %v7066 = vadd.f32 0.0, %v7065
        %v7067 = vpop.f32.mrf.mxu0
        %v7068 = vpop.f32.mrf.mxu0
        %v7069 = vpop.f32.mrf.mxu0
        %7070 = vdwg.mxu0
        %v7071 = vadd.f32 %v330, %v7066
        %7072 = vrot.lane.b32.xlu0 %v7025, 127
        %v7073 = vpop.permute.xlu0 %7072
        %7074 = vrot.lane.b32.xlu0 %v7026, 127
        %v7075 = vpop.permute.xlu0 %7074
        %v7078 = vsel %vm620, %v7075, 0
        %7080 = vmatprep.subr.bf16.mxu0 0
        %7081 = vmatpush1.bf16.msra.mxu0 0
        %7082 = vmatprep.subr.bf16.mxu0 0
        %7083 = vmatpush1.bf16.msra.mxu0 0
        %7084 = vmatprep.subr.bf16.mxu0 0
        %7085 = vmatpush1.bf16.msra.mxu0 0
        %7086 = vmatprep.subr.bf16.mxu0 0
        %7087 = vmatpush1.bf16.msra.mxu0 0
        %7088 = vmatprep.subr.bf16.mxu0 0
        %7089 = vmatpush1.bf16.msra.mxu0 0
        %7090 = vmatprep.subr.bf16.mxu0 0
        %7091 = vmatpush1.bf16.msra.mxu0 0
        %7092 = vmatprep.subr.bf16.mxu0 0
        %7093 = vmatpush1.bf16.msra.mxu0 %v7078
        %7094 = vmatprep.subr.bf16.mxu0 0
        %7095 = vmatpush1.bf16.msra.mxu0 %v7073
        %7096 = vmatprep.subr.bf16.mxu0 0
        %7097 = vmatpush2.bf16.msra.mxu0 0
        %7098 = vmatprep.subr.bf16.mxu0 0
        %7099 = vmatpush2.bf16.msra.mxu0 0
        %7100 = vmatprep.subr.bf16.mxu0 0
        %7101 = vmatpush2.bf16.msra.mxu0 0
        %7102 = vmatprep.subr.bf16.mxu0 0
        %7103 = vmatpush2.bf16.msra.mxu0 0
        %7104 = vmatprep.subr.bf16.mxu0 0
        %7105 = vmatpush2.bf16.msra.mxu0 0
        %7106 = vmatprep.subr.bf16.mxu0 0
        %7107 = vmatpush2.bf16.msra.mxu0 0
        %7108 = vmatprep.subr.bf16.mxu0 0
        %7109 = vmatpush2.bf16.msra.mxu0 0
        %7110 = vmatprep.subr.bf16.mxu0 0
        %7111 = vmatpush2.bf16.msra.mxu0 0
        %7112 = vmatprep.mubr.bf16.mxu0 0
        %7113 = vmatmul.mubr.bf16.gmra.mxu0 %v4202
        %v7114 = vpop.f32.mrf.mxu0
        %v7115 = vadd.f32 0.0, %v7114
        %v7116 = vpop.f32.mrf.mxu0
        %v7117 = vpop.f32.mrf.mxu0
        %v7118 = vpop.f32.mrf.mxu0
        %7119 = vdwg.mxu0
        %v7120 = vadd.f32 %v7071, %v7115
        %7121 = vrot.lane.b32.xlu0 %v7025, 126
        %v7122 = vpop.permute.xlu0 %7121
        %7123 = vrot.lane.b32.xlu0 %v7026, 126
        %v7124 = vpop.permute.xlu0 %7123
        %v7127 = vsel %vm620, %v7124, 0
        %7129 = vmatprep.subr.bf16.mxu0 0
        %7130 = vmatpush1.bf16.msra.mxu0 0
        %7131 = vmatprep.subr.bf16.mxu0 0
        %7132 = vmatpush1.bf16.msra.mxu0 0
        %7133 = vmatprep.subr.bf16.mxu0 0
        %7134 = vmatpush1.bf16.msra.mxu0 0
        %7135 = vmatprep.subr.bf16.mxu0 0
        %7136 = vmatpush1.bf16.msra.mxu0 0
        %7137 = vmatprep.subr.bf16.mxu0 0
        %7138 = vmatpush1.bf16.msra.mxu0 0
        %7139 = vmatprep.subr.bf16.mxu0 0
        %7140 = vmatpush1.bf16.msra.mxu0 0
        %7141 = vmatprep.subr.bf16.mxu0 0
        %7142 = vmatpush1.bf16.msra.mxu0 %v7127
        %7143 = vmatprep.subr.bf16.mxu0 0
        %7144 = vmatpush1.bf16.msra.mxu0 %v7122
        %7145 = vmatprep.subr.bf16.mxu0 0
        %7146 = vmatpush2.bf16.msra.mxu0 0
        %7147 = vmatprep.subr.bf16.mxu0 0
        %7148 = vmatpush2.bf16.msra.mxu0 0
        %7149 = vmatprep.subr.bf16.mxu0 0
        %7150 = vmatpush2.bf16.msra.mxu0 0
        %7151 = vmatprep.subr.bf16.mxu0 0
        %7152 = vmatpush2.bf16.msra.mxu0 0
        %7153 = vmatprep.subr.bf16.mxu0 0
        %7154 = vmatpush2.bf16.msra.mxu0 0
        %7155 = vmatprep.subr.bf16.mxu0 0
        %7156 = vmatpush2.bf16.msra.mxu0 0
        %7157 = vmatprep.subr.bf16.mxu0 0
        %7158 = vmatpush2.bf16.msra.mxu0 0
        %7159 = vmatprep.subr.bf16.mxu0 0
        %7160 = vmatpush2.bf16.msra.mxu0 0
        %7161 = vmatprep.mubr.bf16.mxu0 0
        %7162 = vmatmul.mubr.bf16.gmra.mxu0 %v4254
        %v7163 = vpop.f32.mrf.mxu0
        %v7164 = vadd.f32 0.0, %v7163
        %v7165 = vpop.f32.mrf.mxu0
        %v7166 = vpop.f32.mrf.mxu0
        %v7167 = vpop.f32.mrf.mxu0
        %7168 = vdwg.mxu0
        %v7169 = vadd.f32 %v7120, %v7164
        %v7170 = vmax.f32 %v7169, 0.0
        %v7171 = vpack.c.bf16 %v7170, %v7170
        %v7174 = vunpack.c.l.s4 1966171168
        %v7175 = vunpack.c.0.s8 %v7174
        %v7176 = vlaneseq
        %v7177 = vshrl.u32 %v7176, 7
        %v7178 = vsub.s32 %v7175, %v7177
        %v7179 = vrot.slane %v7171, %v7178
        %v7180 = vcombine.high %v7179, %v7179
        %v7182 = vunpack.c.l.s4 1966171168
        %v7183 = vunpack.c.0.s8 %v7182
        %v7184 = vlaneseq
        %v7185 = vshrl.u32 %v7184, 7
        %v7186 = vsub.s32 %v7183, %v7185
        %v7187 = vrot.slane %v7179, %v7186
        %v7189 = vunpack.c.l.s4 1966171168
        %v7190 = vunpack.c.0.s8 %v7189
        %v7191 = vlaneseq
        %v7192 = vshrl.u32 %v7191, 7
        %v7193 = vsub.s32 %v7190, %v7192
        %v7194 = vrot.slane %v7180, %v7193
        %v7195 = vcombine.high %v7187, %v7187
        %v7196 = vcombine.high %v7194, %v7194
        %v7197 = vunpack.i.l.s16 %v7187
        %v7198 = vunpack.i.h.s16 %v7187
        %v7199 = vunpack.i.l.s16 %v7194
        %v7200 = vunpack.i.h.s16 %v7194
        %v7201 = vunpack.i.l.s16 %v7195
        %v7202 = vunpack.i.h.s16 %v7195
        %v7203 = vunpack.i.l.s16 %v7196
        %v7204 = vunpack.i.h.s16 %v7196
        %v7205 = vpack.i.b16 %v7197, %v7197
        %v7206 = vpack.i.b16 %v7198, %v7198
        %v7207 = vpack.i.b16 %v7199, %v7199
        %v7208 = vpack.i.b16 %v7200, %v7200
        %v7209 = vpack.i.b16 %v7201, %v7201
        %v7210 = vpack.i.b16 %v7202, %v7202
        %v7211 = vpack.i.b16 %v7203, %v7203
        %v7212 = vpack.i.b16 %v7204, %v7204
        %v7214 = vunpack.c.l.s4 286326784
        %v7215 = vunpack.c.0.s8 %v7214
        %v7216 = vlaneseq
        %v7217 = vshrl.u32 %v7216, 7
        %v7218 = vsub.s32 %v7215, %v7217
        %v7219 = vrot.slane %v7205, %v7218
        %v7221 = vunpack.c.l.s4 286326784
        %v7222 = vunpack.c.0.s8 %v7221
        %v7223 = vlaneseq
        %v7224 = vshrl.u32 %v7223, 7
        %v7225 = vsub.s32 %v7222, %v7224
        %v7226 = vrot.slane %v7206, %v7225
        %v7228 = vunpack.c.l.s4 286326784
        %v7229 = vunpack.c.0.s8 %v7228
        %v7230 = vlaneseq
        %v7231 = vshrl.u32 %v7230, 7
        %v7232 = vsub.s32 %v7229, %v7231
        %v7233 = vrot.slane %v7207, %v7232
        %v7235 = vunpack.c.l.s4 286326784
        %v7236 = vunpack.c.0.s8 %v7235
        %v7237 = vlaneseq
        %v7238 = vshrl.u32 %v7237, 7
        %v7239 = vsub.s32 %v7236, %v7238
        %v7240 = vrot.slane %v7208, %v7239
        %v7242 = vunpack.c.l.s4 286326784
        %v7243 = vunpack.c.0.s8 %v7242
        %v7244 = vlaneseq
        %v7245 = vshrl.u32 %v7244, 7
        %v7246 = vsub.s32 %v7243, %v7245
        %v7247 = vrot.slane %v7209, %v7246
        %v7249 = vunpack.c.l.s4 286326784
        %v7250 = vunpack.c.0.s8 %v7249
        %v7251 = vlaneseq
        %v7252 = vshrl.u32 %v7251, 7
        %v7253 = vsub.s32 %v7250, %v7252
        %v7254 = vrot.slane %v7210, %v7253
        %v7256 = vunpack.c.l.s4 286326784
        %v7257 = vunpack.c.0.s8 %v7256
        %v7258 = vlaneseq
        %v7259 = vshrl.u32 %v7258, 7
        %v7260 = vsub.s32 %v7257, %v7259
        %v7261 = vrot.slane %v7211, %v7260
        %v7263 = vunpack.c.l.s4 286326784
        %v7264 = vunpack.c.0.s8 %v7263
        %v7265 = vlaneseq
        %v7266 = vshrl.u32 %v7265, 7
        %v7267 = vsub.s32 %v7264, %v7266
        %v7268 = vrot.slane %v7212, %v7267
        %v7277 = vld [vmem:[%s293 + $0x4] sm:$0x2]
        %v7278 = vsel %vm4984, %v7219, %v7277
        %7279 = vst [vmem:[%s293 + $0x4] sm:$0x2] %v7278
        %v7280 = vld [vmem:[%s293 + $0xc] sm:$0x2]
        %v7281 = vsel %vm4984, %v7226, %v7280
        %7282 = vst [vmem:[%s293 + $0xc] sm:$0x2] %v7281
        %v7283 = vld [vmem:[%s293 + $0x14] sm:$0x2]
        %v7284 = vsel %vm4984, %v7233, %v7283
        %7285 = vst [vmem:[%s293 + $0x14] sm:$0x2] %v7284
        %v7286 = vld [vmem:[%s293 + $0x1c] sm:$0x2]
        %v7287 = vsel %vm4984, %v7240, %v7286
        %7288 = vst [vmem:[%s293 + $0x1c] sm:$0x2] %v7287
        %v7289 = vld [vmem:[%s293 + $0x24] sm:$0x2]
        %v7290 = vsel %vm4984, %v7247, %v7289
        %7291 = vst [vmem:[%s293 + $0x24] sm:$0x2] %v7290
        %v7292 = vld [vmem:[%s293 + $0x2c] sm:$0x2]
        %v7293 = vsel %vm4984, %v7254, %v7292
        %7294 = vst [vmem:[%s293 + $0x2c] sm:$0x2] %v7293
        %v7295 = vld [vmem:[%s293 + $0x34] sm:$0x2]
        %v7296 = vsel %vm4984, %v7261, %v7295
        %7297 = vst [vmem:[%s293 + $0x34] sm:$0x2] %v7296
        %v7298 = vld [vmem:[%s293 + $0x3c] sm:$0x2]
        %v7299 = vsel %vm4984, %v7268, %v7298
        %7300 = vst [vmem:[%s293 + $0x3c] sm:$0x2] %v7299
        %v7301 = vld [vmem:[%s2873] sm:$0xf]
        %v7302 = vld [vmem:[%s2873 + $0x4] sm:$0xf]
        %v7303 = vld [vmem:[%s2873 + $0x8] sm:$0xf]
        %v7307 = vunpack.c.l.b16 %v7301
        %v7308 = vunpack.c.l.b16 %v7302
        %v7309 = vunpack.c.l.b16 %v7303
        %v7310 = vpack.c.b16 %v7308, %v7307
        %v7311 = vpack.c.b16 %v7309, %v7309
        %v7314 = vsel %vm620, %v7311, 0
        %7316 = vmatprep.subr.bf16.mxu0 0
        %7317 = vmatpush1.bf16.msra.mxu0 0
        %7318 = vmatprep.subr.bf16.mxu0 0
        %7319 = vmatpush1.bf16.msra.mxu0 0
        %7320 = vmatprep.subr.bf16.mxu0 0
        %7321 = vmatpush1.bf16.msra.mxu0 0
        %7322 = vmatprep.subr.bf16.mxu0 0
        %7323 = vmatpush1.bf16.msra.mxu0 0
        %7324 = vmatprep.subr.bf16.mxu0 0
        %7325 = vmatpush1.bf16.msra.mxu0 0
        %7326 = vmatprep.subr.bf16.mxu0 0
        %7327 = vmatpush1.bf16.msra.mxu0 0
        %7328 = vmatprep.subr.bf16.mxu0 0
        %7329 = vmatpush1.bf16.msra.mxu0 %v7314
        %7330 = vmatprep.subr.bf16.mxu0 0
        %7331 = vmatpush1.bf16.msra.mxu0 %v7310
        %7332 = vmatprep.subr.bf16.mxu0 0
        %7333 = vmatpush2.bf16.msra.mxu0 0
        %7334 = vmatprep.subr.bf16.mxu0 0
        %7335 = vmatpush2.bf16.msra.mxu0 0
        %7336 = vmatprep.subr.bf16.mxu0 0
        %7337 = vmatpush2.bf16.msra.mxu0 0
        %7338 = vmatprep.subr.bf16.mxu0 0
        %7339 = vmatpush2.bf16.msra.mxu0 0
        %7340 = vmatprep.subr.bf16.mxu0 0
        %7341 = vmatpush2.bf16.msra.mxu0 0
        %7342 = vmatprep.subr.bf16.mxu0 0
        %7343 = vmatpush2.bf16.msra.mxu0 0
        %7344 = vmatprep.subr.bf16.mxu0 0
        %7345 = vmatpush2.bf16.msra.mxu0 0
        %7346 = vmatprep.subr.bf16.mxu0 0
        %7347 = vmatpush2.bf16.msra.mxu0 0
        %7348 = vmatprep.mubr.bf16.mxu0 0
        %7349 = vmatmul.mubr.bf16.gmra.mxu0 %v4150
        %v7350 = vpop.f32.mrf.mxu0
        %v7351 = vadd.f32 0.0, %v7350
        %v7352 = vpop.f32.mrf.mxu0
        %v7353 = vpop.f32.mrf.mxu0
        %v7354 = vpop.f32.mrf.mxu0
        %7355 = vdwg.mxu0
        %v7356 = vadd.f32 %v330, %v7351
        %7357 = vrot.lane.b32.xlu0 %v7310, 127
        %v7358 = vpop.permute.xlu0 %7357
        %7359 = vrot.lane.b32.xlu0 %v7311, 127
        %v7360 = vpop.permute.xlu0 %7359
        %v7363 = vsel %vm620, %v7360, 0
        %7365 = vmatprep.subr.bf16.mxu0 0
        %7366 = vmatpush1.bf16.msra.mxu0 0
        %7367 = vmatprep.subr.bf16.mxu0 0
        %7368 = vmatpush1.bf16.msra.mxu0 0
        %7369 = vmatprep.subr.bf16.mxu0 0
        %7370 = vmatpush1.bf16.msra.mxu0 0
        %7371 = vmatprep.subr.bf16.mxu0 0
        %7372 = vmatpush1.bf16.msra.mxu0 0
        %7373 = vmatprep.subr.bf16.mxu0 0
        %7374 = vmatpush1.bf16.msra.mxu0 0
        %7375 = vmatprep.subr.bf16.mxu0 0
        %7376 = vmatpush1.bf16.msra.mxu0 0
        %7377 = vmatprep.subr.bf16.mxu0 0
        %7378 = vmatpush1.bf16.msra.mxu0 %v7363
        %7379 = vmatprep.subr.bf16.mxu0 0
        %7380 = vmatpush1.bf16.msra.mxu0 %v7358
        %7381 = vmatprep.subr.bf16.mxu0 0
        %7382 = vmatpush2.bf16.msra.mxu0 0
        %7383 = vmatprep.subr.bf16.mxu0 0
        %7384 = vmatpush2.bf16.msra.mxu0 0
        %7385 = vmatprep.subr.bf16.mxu0 0
        %7386 = vmatpush2.bf16.msra.mxu0 0
        %7387 = vmatprep.subr.bf16.mxu0 0
        %7388 = vmatpush2.bf16.msra.mxu0 0
        %7389 = vmatprep.subr.bf16.mxu0 0
        %7390 = vmatpush2.bf16.msra.mxu0 0
        %7391 = vmatprep.subr.bf16.mxu0 0
        %7392 = vmatpush2.bf16.msra.mxu0 0
        %7393 = vmatprep.subr.bf16.mxu0 0
        %7394 = vmatpush2.bf16.msra.mxu0 0
        %7395 = vmatprep.subr.bf16.mxu0 0
        %7396 = vmatpush2.bf16.msra.mxu0 0
        %7397 = vmatprep.mubr.bf16.mxu0 0
        %7398 = vmatmul.mubr.bf16.gmra.mxu0 %v4202
        %v7399 = vpop.f32.mrf.mxu0
        %v7400 = vadd.f32 0.0, %v7399
        %v7401 = vpop.f32.mrf.mxu0
        %v7402 = vpop.f32.mrf.mxu0
        %v7403 = vpop.f32.mrf.mxu0
        %7404 = vdwg.mxu0
        %v7405 = vadd.f32 %v7356, %v7400
        %7406 = vrot.lane.b32.xlu0 %v7310, 126
        %v7407 = vpop.permute.xlu0 %7406
        %7408 = vrot.lane.b32.xlu0 %v7311, 126
        %v7409 = vpop.permute.xlu0 %7408
        %v7412 = vsel %vm620, %v7409, 0
        %7414 = vmatprep.subr.bf16.mxu0 0
        %7415 = vmatpush1.bf16.msra.mxu0 0
        %7416 = vmatprep.subr.bf16.mxu0 0
        %7417 = vmatpush1.bf16.msra.mxu0 0
        %7418 = vmatprep.subr.bf16.mxu0 0
        %7419 = vmatpush1.bf16.msra.mxu0 0
        %7420 = vmatprep.subr.bf16.mxu0 0
        %7421 = vmatpush1.bf16.msra.mxu0 0
        %7422 = vmatprep.subr.bf16.mxu0 0
        %7423 = vmatpush1.bf16.msra.mxu0 0
        %7424 = vmatprep.subr.bf16.mxu0 0
        %7425 = vmatpush1.bf16.msra.mxu0 0
        %7426 = vmatprep.subr.bf16.mxu0 0
        %7427 = vmatpush1.bf16.msra.mxu0 %v7412
        %7428 = vmatprep.subr.bf16.mxu0 0
        %7429 = vmatpush1.bf16.msra.mxu0 %v7407
        %7430 = vmatprep.subr.bf16.mxu0 0
        %7431 = vmatpush2.bf16.msra.mxu0 0
        %7432 = vmatprep.subr.bf16.mxu0 0
        %7433 = vmatpush2.bf16.msra.mxu0 0
        %7434 = vmatprep.subr.bf16.mxu0 0
        %7435 = vmatpush2.bf16.msra.mxu0 0
        %7436 = vmatprep.subr.bf16.mxu0 0
        %7437 = vmatpush2.bf16.msra.mxu0 0
        %7438 = vmatprep.subr.bf16.mxu0 0
        %7439 = vmatpush2.bf16.msra.mxu0 0
        %7440 = vmatprep.subr.bf16.mxu0 0
        %7441 = vmatpush2.bf16.msra.mxu0 0
        %7442 = vmatprep.subr.bf16.mxu0 0
        %7443 = vmatpush2.bf16.msra.mxu0 0
        %7444 = vmatprep.subr.bf16.mxu0 0
        %7445 = vmatpush2.bf16.msra.mxu0 0
        %7446 = vmatprep.mubr.bf16.mxu0 0
        %7447 = vmatmul.mubr.bf16.gmra.mxu0 %v4254
        %v7448 = vpop.f32.mrf.mxu0
        %v7449 = vadd.f32 0.0, %v7448
        %v7450 = vpop.f32.mrf.mxu0
        %v7451 = vpop.f32.mrf.mxu0
        %v7452 = vpop.f32.mrf.mxu0
        %7453 = vdwg.mxu0
        %v7454 = vadd.f32 %v7405, %v7449
        %v7455 = vmax.f32 %v7454, 0.0
        %v7456 = vpack.c.bf16 %v7455, %v7455
        %v7459 = vunpack.c.l.s4 1966171168
        %v7460 = vunpack.c.0.s8 %v7459
        %v7461 = vlaneseq
        %v7462 = vshrl.u32 %v7461, 7
        %v7463 = vsub.s32 %v7460, %v7462
        %v7464 = vrot.slane %v7456, %v7463
        %v7465 = vcombine.high %v7464, %v7464
        %v7467 = vunpack.c.l.s4 1966171168
        %v7468 = vunpack.c.0.s8 %v7467
        %v7469 = vlaneseq
        %v7470 = vshrl.u32 %v7469, 7
        %v7471 = vsub.s32 %v7468, %v7470
        %v7472 = vrot.slane %v7464, %v7471
        %v7474 = vunpack.c.l.s4 1966171168
        %v7475 = vunpack.c.0.s8 %v7474
        %v7476 = vlaneseq
        %v7477 = vshrl.u32 %v7476, 7
        %v7478 = vsub.s32 %v7475, %v7477
        %v7479 = vrot.slane %v7465, %v7478
        %v7480 = vcombine.high %v7472, %v7472
        %v7481 = vcombine.high %v7479, %v7479
        %v7482 = vunpack.i.l.s16 %v7472
        %v7483 = vunpack.i.h.s16 %v7472
        %v7484 = vunpack.i.l.s16 %v7479
        %v7485 = vunpack.i.h.s16 %v7479
        %v7486 = vunpack.i.l.s16 %v7480
        %v7487 = vunpack.i.h.s16 %v7480
        %v7488 = vunpack.i.l.s16 %v7481
        %v7489 = vunpack.i.h.s16 %v7481
        %v7490 = vpack.i.b16 %v7482, %v7482
        %v7491 = vpack.i.b16 %v7483, %v7483
        %v7492 = vpack.i.b16 %v7484, %v7484
        %v7493 = vpack.i.b16 %v7485, %v7485
        %v7494 = vpack.i.b16 %v7486, %v7486
        %v7495 = vpack.i.b16 %v7487, %v7487
        %v7496 = vpack.i.b16 %v7488, %v7488
        %v7497 = vpack.i.b16 %v7489, %v7489
        %v7499 = vunpack.c.l.s4 286326784
        %v7500 = vunpack.c.0.s8 %v7499
        %v7501 = vlaneseq
        %v7502 = vshrl.u32 %v7501, 7
        %v7503 = vsub.s32 %v7500, %v7502
        %v7504 = vrot.slane %v7490, %v7503
        %v7506 = vunpack.c.l.s4 286326784
        %v7507 = vunpack.c.0.s8 %v7506
        %v7508 = vlaneseq
        %v7509 = vshrl.u32 %v7508, 7
        %v7510 = vsub.s32 %v7507, %v7509
        %v7511 = vrot.slane %v7491, %v7510
        %v7513 = vunpack.c.l.s4 286326784
        %v7514 = vunpack.c.0.s8 %v7513
        %v7515 = vlaneseq
        %v7516 = vshrl.u32 %v7515, 7
        %v7517 = vsub.s32 %v7514, %v7516
        %v7518 = vrot.slane %v7492, %v7517
        %v7520 = vunpack.c.l.s4 286326784
        %v7521 = vunpack.c.0.s8 %v7520
        %v7522 = vlaneseq
        %v7523 = vshrl.u32 %v7522, 7
        %v7524 = vsub.s32 %v7521, %v7523
        %v7525 = vrot.slane %v7493, %v7524
        %v7527 = vunpack.c.l.s4 286326784
        %v7528 = vunpack.c.0.s8 %v7527
        %v7529 = vlaneseq
        %v7530 = vshrl.u32 %v7529, 7
        %v7531 = vsub.s32 %v7528, %v7530
        %v7532 = vrot.slane %v7494, %v7531
        %v7534 = vunpack.c.l.s4 286326784
        %v7535 = vunpack.c.0.s8 %v7534
        %v7536 = vlaneseq
        %v7537 = vshrl.u32 %v7536, 7
        %v7538 = vsub.s32 %v7535, %v7537
        %v7539 = vrot.slane %v7495, %v7538
        %v7541 = vunpack.c.l.s4 286326784
        %v7542 = vunpack.c.0.s8 %v7541
        %v7543 = vlaneseq
        %v7544 = vshrl.u32 %v7543, 7
        %v7545 = vsub.s32 %v7542, %v7544
        %v7546 = vrot.slane %v7496, %v7545
        %v7548 = vunpack.c.l.s4 286326784
        %v7549 = vunpack.c.0.s8 %v7548
        %v7550 = vlaneseq
        %v7551 = vshrl.u32 %v7550, 7
        %v7552 = vsub.s32 %v7549, %v7551
        %v7553 = vrot.slane %v7497, %v7552
        %v7562 = vld [vmem:[%s293 + $0x4] sm:$0x2]
        %v7563 = vsel %vm5271, %v7504, %v7562
        %7564 = vst [vmem:[%s293 + $0x4] sm:$0x2] %v7563
        %v7565 = vld [vmem:[%s293 + $0xc] sm:$0x2]
        %v7566 = vsel %vm5271, %v7511, %v7565
        %7567 = vst [vmem:[%s293 + $0xc] sm:$0x2] %v7566
        %v7568 = vld [vmem:[%s293 + $0x14] sm:$0x2]
        %v7569 = vsel %vm5271, %v7518, %v7568
        %7570 = vst [vmem:[%s293 + $0x14] sm:$0x2] %v7569
        %v7571 = vld [vmem:[%s293 + $0x1c] sm:$0x2]
        %v7572 = vsel %vm5271, %v7525, %v7571
        %7573 = vst [vmem:[%s293 + $0x1c] sm:$0x2] %v7572
        %v7574 = vld [vmem:[%s293 + $0x24] sm:$0x2]
        %v7575 = vsel %vm5271, %v7532, %v7574
        %7576 = vst [vmem:[%s293 + $0x24] sm:$0x2] %v7575
        %v7577 = vld [vmem:[%s293 + $0x2c] sm:$0x2]
        %v7578 = vsel %vm5271, %v7539, %v7577
        %7579 = vst [vmem:[%s293 + $0x2c] sm:$0x2] %v7578
        %v7580 = vld [vmem:[%s293 + $0x34] sm:$0x2]
        %v7581 = vsel %vm5271, %v7546, %v7580
        %7582 = vst [vmem:[%s293 + $0x34] sm:$0x2] %v7581
        %v7583 = vld [vmem:[%s293 + $0x3c] sm:$0x2]
        %v7584 = vsel %vm5271, %v7553, %v7583
        %7585 = vst [vmem:[%s293 + $0x3c] sm:$0x2] %v7584
        %v7586 = vld [vmem:[%s3080] sm:$0xf]
        %v7587 = vld [vmem:[%s3080 + $0x4] sm:$0xf]
        %v7588 = vld [vmem:[%s3080 + $0x8] sm:$0xf]
        %v7592 = vunpack.c.l.b16 %v7586
        %v7593 = vunpack.c.l.b16 %v7587
        %v7594 = vunpack.c.l.b16 %v7588
        %v7595 = vpack.c.b16 %v7593, %v7592
        %v7596 = vpack.c.b16 %v7594, %v7594
        %v7599 = vsel %vm620, %v7596, 0
        %7601 = vmatprep.subr.bf16.mxu0 0
        %7602 = vmatpush1.bf16.msra.mxu0 0
        %7603 = vmatprep.subr.bf16.mxu0 0
        %7604 = vmatpush1.bf16.msra.mxu0 0
        %7605 = vmatprep.subr.bf16.mxu0 0
        %7606 = vmatpush1.bf16.msra.mxu0 0
        %7607 = vmatprep.subr.bf16.mxu0 0
        %7608 = vmatpush1.bf16.msra.mxu0 0
        %7609 = vmatprep.subr.bf16.mxu0 0
        %7610 = vmatpush1.bf16.msra.mxu0 0
        %7611 = vmatprep.subr.bf16.mxu0 0
        %7612 = vmatpush1.bf16.msra.mxu0 0
        %7613 = vmatprep.subr.bf16.mxu0 0
        %7614 = vmatpush1.bf16.msra.mxu0 %v7599
        %7615 = vmatprep.subr.bf16.mxu0 0
        %7616 = vmatpush1.bf16.msra.mxu0 %v7595
        %7617 = vmatprep.subr.bf16.mxu0 0
        %7618 = vmatpush2.bf16.msra.mxu0 0
        %7619 = vmatprep.subr.bf16.mxu0 0
        %7620 = vmatpush2.bf16.msra.mxu0 0
        %7621 = vmatprep.subr.bf16.mxu0 0
        %7622 = vmatpush2.bf16.msra.mxu0 0
        %7623 = vmatprep.subr.bf16.mxu0 0
        %7624 = vmatpush2.bf16.msra.mxu0 0
        %7625 = vmatprep.subr.bf16.mxu0 0
        %7626 = vmatpush2.bf16.msra.mxu0 0
        %7627 = vmatprep.subr.bf16.mxu0 0
        %7628 = vmatpush2.bf16.msra.mxu0 0
        %7629 = vmatprep.subr.bf16.mxu0 0
        %7630 = vmatpush2.bf16.msra.mxu0 0
        %7631 = vmatprep.subr.bf16.mxu0 0
        %7632 = vmatpush2.bf16.msra.mxu0 0
        %7633 = vmatprep.mubr.bf16.mxu0 0
        %7634 = vmatmul.mubr.bf16.gmra.mxu0 %v4150
        %v7635 = vpop.f32.mrf.mxu0
        %v7636 = vadd.f32 0.0, %v7635
        %v7637 = vpop.f32.mrf.mxu0
        %v7638 = vpop.f32.mrf.mxu0
        %v7639 = vpop.f32.mrf.mxu0
        %7640 = vdwg.mxu0
        %v7641 = vadd.f32 %v330, %v7636
        %7642 = vrot.lane.b32.xlu0 %v7595, 127
        %v7643 = vpop.permute.xlu0 %7642
        %7644 = vrot.lane.b32.xlu0 %v7596, 127
        %v7645 = vpop.permute.xlu0 %7644
        %v7648 = vsel %vm620, %v7645, 0
        %7650 = vmatprep.subr.bf16.mxu0 0
        %7651 = vmatpush1.bf16.msra.mxu0 0
        %7652 = vmatprep.subr.bf16.mxu0 0
        %7653 = vmatpush1.bf16.msra.mxu0 0
        %7654 = vmatprep.subr.bf16.mxu0 0
        %7655 = vmatpush1.bf16.msra.mxu0 0
        %7656 = vmatprep.subr.bf16.mxu0 0
        %7657 = vmatpush1.bf16.msra.mxu0 0
        %7658 = vmatprep.subr.bf16.mxu0 0
        %7659 = vmatpush1.bf16.msra.mxu0 0
        %7660 = vmatprep.subr.bf16.mxu0 0
        %7661 = vmatpush1.bf16.msra.mxu0 0
        %7662 = vmatprep.subr.bf16.mxu0 0
        %7663 = vmatpush1.bf16.msra.mxu0 %v7648
        %7664 = vmatprep.subr.bf16.mxu0 0
        %7665 = vmatpush1.bf16.msra.mxu0 %v7643
        %7666 = vmatprep.subr.bf16.mxu0 0
        %7667 = vmatpush2.bf16.msra.mxu0 0
        %7668 = vmatprep.subr.bf16.mxu0 0
        %7669 = vmatpush2.bf16.msra.mxu0 0
        %7670 = vmatprep.subr.bf16.mxu0 0
        %7671 = vmatpush2.bf16.msra.mxu0 0
        %7672 = vmatprep.subr.bf16.mxu0 0
        %7673 = vmatpush2.bf16.msra.mxu0 0
        %7674 = vmatprep.subr.bf16.mxu0 0
        %7675 = vmatpush2.bf16.msra.mxu0 0
        %7676 = vmatprep.subr.bf16.mxu0 0
        %7677 = vmatpush2.bf16.msra.mxu0 0
        %7678 = vmatprep.subr.bf16.mxu0 0
        %7679 = vmatpush2.bf16.msra.mxu0 0
        %7680 = vmatprep.subr.bf16.mxu0 0
        %7681 = vmatpush2.bf16.msra.mxu0 0
        %7682 = vmatprep.mubr.bf16.mxu0 0
        %7683 = vmatmul.mubr.bf16.gmra.mxu0 %v4202
        %v7684 = vpop.f32.mrf.mxu0
        %v7685 = vadd.f32 0.0, %v7684
        %v7686 = vpop.f32.mrf.mxu0
        %v7687 = vpop.f32.mrf.mxu0
        %v7688 = vpop.f32.mrf.mxu0
        %7689 = vdwg.mxu0
        %v7690 = vadd.f32 %v7641, %v7685
        %7691 = vrot.lane.b32.xlu0 %v7595, 126
        %v7692 = vpop.permute.xlu0 %7691
        %7693 = vrot.lane.b32.xlu0 %v7596, 126
        %v7694 = vpop.permute.xlu0 %7693
        %v7697 = vsel %vm620, %v7694, 0
        %7699 = vmatprep.subr.bf16.mxu0 0
        %7700 = vmatpush1.bf16.msra.mxu0 0
        %7701 = vmatprep.subr.bf16.mxu0 0
        %7702 = vmatpush1.bf16.msra.mxu0 0
        %7703 = vmatprep.subr.bf16.mxu0 0
        %7704 = vmatpush1.bf16.msra.mxu0 0
        %7705 = vmatprep.subr.bf16.mxu0 0
        %7706 = vmatpush1.bf16.msra.mxu0 0
        %7707 = vmatprep.subr.bf16.mxu0 0
        %7708 = vmatpush1.bf16.msra.mxu0 0
        %7709 = vmatprep.subr.bf16.mxu0 0
        %7710 = vmatpush1.bf16.msra.mxu0 0
        %7711 = vmatprep.subr.bf16.mxu0 0
        %7712 = vmatpush1.bf16.msra.mxu0 %v7697
        %7713 = vmatprep.subr.bf16.mxu0 0
        %7714 = vmatpush1.bf16.msra.mxu0 %v7692
        %7715 = vmatprep.subr.bf16.mxu0 0
        %7716 = vmatpush2.bf16.msra.mxu0 0
        %7717 = vmatprep.subr.bf16.mxu0 0
        %7718 = vmatpush2.bf16.msra.mxu0 0
        %7719 = vmatprep.subr.bf16.mxu0 0
        %7720 = vmatpush2.bf16.msra.mxu0 0
        %7721 = vmatprep.subr.bf16.mxu0 0
        %7722 = vmatpush2.bf16.msra.mxu0 0
        %7723 = vmatprep.subr.bf16.mxu0 0
        %7724 = vmatpush2.bf16.msra.mxu0 0
        %7725 = vmatprep.subr.bf16.mxu0 0
        %7726 = vmatpush2.bf16.msra.mxu0 0
        %7727 = vmatprep.subr.bf16.mxu0 0
        %7728 = vmatpush2.bf16.msra.mxu0 0
        %7729 = vmatprep.subr.bf16.mxu0 0
        %7730 = vmatpush2.bf16.msra.mxu0 0
        %7731 = vmatprep.mubr.bf16.mxu0 0
        %7732 = vmatmul.mubr.bf16.gmra.mxu0 %v4254
        %v7733 = vpop.f32.mrf.mxu0
        %v7734 = vadd.f32 0.0, %v7733
        %v7735 = vpop.f32.mrf.mxu0
        %v7736 = vpop.f32.mrf.mxu0
        %v7737 = vpop.f32.mrf.mxu0
        %7738 = vdwg.mxu0
        %v7739 = vadd.f32 %v7690, %v7734
        %v7740 = vmax.f32 %v7739, 0.0
        %v7741 = vpack.c.bf16 %v7740, %v7740
        %v7744 = vunpack.c.l.s4 1966171168
        %v7745 = vunpack.c.0.s8 %v7744
        %v7746 = vlaneseq
        %v7747 = vshrl.u32 %v7746, 7
        %v7748 = vsub.s32 %v7745, %v7747
        %v7749 = vrot.slane %v7741, %v7748
        %v7750 = vcombine.high %v7749, %v7749
        %v7752 = vunpack.c.l.s4 1966171168
        %v7753 = vunpack.c.0.s8 %v7752
        %v7754 = vlaneseq
        %v7755 = vshrl.u32 %v7754, 7
        %v7756 = vsub.s32 %v7753, %v7755
        %v7757 = vrot.slane %v7749, %v7756
        %v7759 = vunpack.c.l.s4 1966171168
        %v7760 = vunpack.c.0.s8 %v7759
        %v7761 = vlaneseq
        %v7762 = vshrl.u32 %v7761, 7
        %v7763 = vsub.s32 %v7760, %v7762
        %v7764 = vrot.slane %v7750, %v7763
        %v7765 = vcombine.high %v7757, %v7757
        %v7766 = vcombine.high %v7764, %v7764
        %v7767 = vunpack.i.l.s16 %v7757
        %v7768 = vunpack.i.h.s16 %v7757
        %v7769 = vunpack.i.l.s16 %v7764
        %v7770 = vunpack.i.h.s16 %v7764
        %v7771 = vunpack.i.l.s16 %v7765
        %v7772 = vunpack.i.h.s16 %v7765
        %v7773 = vunpack.i.l.s16 %v7766
        %v7774 = vunpack.i.h.s16 %v7766
        %v7775 = vpack.i.b16 %v7767, %v7767
        %v7776 = vpack.i.b16 %v7768, %v7768
        %v7777 = vpack.i.b16 %v7769, %v7769
        %v7778 = vpack.i.b16 %v7770, %v7770
        %v7779 = vpack.i.b16 %v7771, %v7771
        %v7780 = vpack.i.b16 %v7772, %v7772
        %v7781 = vpack.i.b16 %v7773, %v7773
        %v7782 = vpack.i.b16 %v7774, %v7774
        %v7784 = vunpack.c.l.s4 286326784
        %v7785 = vunpack.c.0.s8 %v7784
        %v7786 = vlaneseq
        %v7787 = vshrl.u32 %v7786, 7
        %v7788 = vsub.s32 %v7785, %v7787
        %v7789 = vrot.slane %v7775, %v7788
        %v7791 = vunpack.c.l.s4 286326784
        %v7792 = vunpack.c.0.s8 %v7791
        %v7793 = vlaneseq
        %v7794 = vshrl.u32 %v7793, 7
        %v7795 = vsub.s32 %v7792, %v7794
        %v7796 = vrot.slane %v7776, %v7795
        %v7798 = vunpack.c.l.s4 286326784
        %v7799 = vunpack.c.0.s8 %v7798
        %v7800 = vlaneseq
        %v7801 = vshrl.u32 %v7800, 7
        %v7802 = vsub.s32 %v7799, %v7801
        %v7803 = vrot.slane %v7777, %v7802
        %v7805 = vunpack.c.l.s4 286326784
        %v7806 = vunpack.c.0.s8 %v7805
        %v7807 = vlaneseq
        %v7808 = vshrl.u32 %v7807, 7
        %v7809 = vsub.s32 %v7806, %v7808
        %v7810 = vrot.slane %v7778, %v7809
        %v7812 = vunpack.c.l.s4 286326784
        %v7813 = vunpack.c.0.s8 %v7812
        %v7814 = vlaneseq
        %v7815 = vshrl.u32 %v7814, 7
        %v7816 = vsub.s32 %v7813, %v7815
        %v7817 = vrot.slane %v7779, %v7816
        %v7819 = vunpack.c.l.s4 286326784
        %v7820 = vunpack.c.0.s8 %v7819
        %v7821 = vlaneseq
        %v7822 = vshrl.u32 %v7821, 7
        %v7823 = vsub.s32 %v7820, %v7822
        %v7824 = vrot.slane %v7780, %v7823
        %v7826 = vunpack.c.l.s4 286326784
        %v7827 = vunpack.c.0.s8 %v7826
        %v7828 = vlaneseq
        %v7829 = vshrl.u32 %v7828, 7
        %v7830 = vsub.s32 %v7827, %v7829
        %v7831 = vrot.slane %v7781, %v7830
        %v7833 = vunpack.c.l.s4 286326784
        %v7834 = vunpack.c.0.s8 %v7833
        %v7835 = vlaneseq
        %v7836 = vshrl.u32 %v7835, 7
        %v7837 = vsub.s32 %v7834, %v7836
        %v7838 = vrot.slane %v7782, %v7837
        %v7847 = vld [vmem:[%s293 + $0x4] sm:$0x4]
        %v7848 = vsel %vm5559, %v7789, %v7847
        %7849 = vst [vmem:[%s293 + $0x4] sm:$0x4] %v7848
        %v7850 = vld [vmem:[%s293 + $0xc] sm:$0x4]
        %v7851 = vsel %vm5559, %v7796, %v7850
        %7852 = vst [vmem:[%s293 + $0xc] sm:$0x4] %v7851
        %v7853 = vld [vmem:[%s293 + $0x14] sm:$0x4]
        %v7854 = vsel %vm5559, %v7803, %v7853
        %7855 = vst [vmem:[%s293 + $0x14] sm:$0x4] %v7854
        %v7856 = vld [vmem:[%s293 + $0x1c] sm:$0x4]
        %v7857 = vsel %vm5559, %v7810, %v7856
        %7858 = vst [vmem:[%s293 + $0x1c] sm:$0x4] %v7857
        %v7859 = vld [vmem:[%s293 + $0x24] sm:$0x4]
        %v7860 = vsel %vm5559, %v7817, %v7859
        %7861 = vst [vmem:[%s293 + $0x24] sm:$0x4] %v7860
        %v7862 = vld [vmem:[%s293 + $0x2c] sm:$0x4]
        %v7863 = vsel %vm5559, %v7824, %v7862
        %7864 = vst [vmem:[%s293 + $0x2c] sm:$0x4] %v7863
        %v7865 = vld [vmem:[%s293 + $0x34] sm:$0x4]
        %v7866 = vsel %vm5559, %v7831, %v7865
        %7867 = vst [vmem:[%s293 + $0x34] sm:$0x4] %v7866
        %v7868 = vld [vmem:[%s293 + $0x3c] sm:$0x4]
        %v7869 = vsel %vm5559, %v7838, %v7868
        %7870 = vst [vmem:[%s293 + $0x3c] sm:$0x4] %v7869
        %v7871 = vld [vmem:[%s3287] sm:$0xf]
        %v7872 = vld [vmem:[%s3287 + $0x4] sm:$0xf]
        %v7873 = vld [vmem:[%s3287 + $0x8] sm:$0xf]
        %v7877 = vunpack.c.l.b16 %v7871
        %v7878 = vunpack.c.l.b16 %v7872
        %v7879 = vunpack.c.l.b16 %v7873
        %v7880 = vpack.c.b16 %v7878, %v7877
        %v7881 = vpack.c.b16 %v7879, %v7879
        %v7884 = vsel %vm620, %v7881, 0
        %7886 = vmatprep.subr.bf16.mxu0 0
        %7887 = vmatpush1.bf16.msra.mxu0 0
        %7888 = vmatprep.subr.bf16.mxu0 0
        %7889 = vmatpush1.bf16.msra.mxu0 0
        %7890 = vmatprep.subr.bf16.mxu0 0
        %7891 = vmatpush1.bf16.msra.mxu0 0
        %7892 = vmatprep.subr.bf16.mxu0 0
        %7893 = vmatpush1.bf16.msra.mxu0 0
        %7894 = vmatprep.subr.bf16.mxu0 0
        %7895 = vmatpush1.bf16.msra.mxu0 0
        %7896 = vmatprep.subr.bf16.mxu0 0
        %7897 = vmatpush1.bf16.msra.mxu0 0
        %7898 = vmatprep.subr.bf16.mxu0 0
        %7899 = vmatpush1.bf16.msra.mxu0 %v7884
        %7900 = vmatprep.subr.bf16.mxu0 0
        %7901 = vmatpush1.bf16.msra.mxu0 %v7880
        %7902 = vmatprep.subr.bf16.mxu0 0
        %7903 = vmatpush2.bf16.msra.mxu0 0
        %7904 = vmatprep.subr.bf16.mxu0 0
        %7905 = vmatpush2.bf16.msra.mxu0 0
        %7906 = vmatprep.subr.bf16.mxu0 0
        %7907 = vmatpush2.bf16.msra.mxu0 0
        %7908 = vmatprep.subr.bf16.mxu0 0
        %7909 = vmatpush2.bf16.msra.mxu0 0
        %7910 = vmatprep.subr.bf16.mxu0 0
        %7911 = vmatpush2.bf16.msra.mxu0 0
        %7912 = vmatprep.subr.bf16.mxu0 0
        %7913 = vmatpush2.bf16.msra.mxu0 0
        %7914 = vmatprep.subr.bf16.mxu0 0
        %7915 = vmatpush2.bf16.msra.mxu0 0
        %7916 = vmatprep.subr.bf16.mxu0 0
        %7917 = vmatpush2.bf16.msra.mxu0 0
        %7918 = vmatprep.mubr.bf16.mxu0 0
        %7919 = vmatmul.mubr.bf16.gmra.mxu0 %v4150
        %v7920 = vpop.f32.mrf.mxu0
        %v7921 = vadd.f32 0.0, %v7920
        %v7922 = vpop.f32.mrf.mxu0
        %v7923 = vpop.f32.mrf.mxu0
        %v7924 = vpop.f32.mrf.mxu0
        %7925 = vdwg.mxu0
        %v7926 = vadd.f32 %v330, %v7921
        %7927 = vrot.lane.b32.xlu0 %v7880, 127
        %v7928 = vpop.permute.xlu0 %7927
        %7929 = vrot.lane.b32.xlu0 %v7881, 127
        %v7930 = vpop.permute.xlu0 %7929
        %v7933 = vsel %vm620, %v7930, 0
        %7935 = vmatprep.subr.bf16.mxu0 0
        %7936 = vmatpush1.bf16.msra.mxu0 0
        %7937 = vmatprep.subr.bf16.mxu0 0
        %7938 = vmatpush1.bf16.msra.mxu0 0
        %7939 = vmatprep.subr.bf16.mxu0 0
        %7940 = vmatpush1.bf16.msra.mxu0 0
        %7941 = vmatprep.subr.bf16.mxu0 0
        %7942 = vmatpush1.bf16.msra.mxu0 0
        %7943 = vmatprep.subr.bf16.mxu0 0
        %7944 = vmatpush1.bf16.msra.mxu0 0
        %7945 = vmatprep.subr.bf16.mxu0 0
        %7946 = vmatpush1.bf16.msra.mxu0 0
        %7947 = vmatprep.subr.bf16.mxu0 0
        %7948 = vmatpush1.bf16.msra.mxu0 %v7933
        %7949 = vmatprep.subr.bf16.mxu0 0
        %7950 = vmatpush1.bf16.msra.mxu0 %v7928
        %7951 = vmatprep.subr.bf16.mxu0 0
        %7952 = vmatpush2.bf16.msra.mxu0 0
        %7953 = vmatprep.subr.bf16.mxu0 0
        %7954 = vmatpush2.bf16.msra.mxu0 0
        %7955 = vmatprep.subr.bf16.mxu0 0
        %7956 = vmatpush2.bf16.msra.mxu0 0
        %7957 = vmatprep.subr.bf16.mxu0 0
        %7958 = vmatpush2.bf16.msra.mxu0 0
        %7959 = vmatprep.subr.bf16.mxu0 0
        %7960 = vmatpush2.bf16.msra.mxu0 0
        %7961 = vmatprep.subr.bf16.mxu0 0
        %7962 = vmatpush2.bf16.msra.mxu0 0
        %7963 = vmatprep.subr.bf16.mxu0 0
        %7964 = vmatpush2.bf16.msra.mxu0 0
        %7965 = vmatprep.subr.bf16.mxu0 0
        %7966 = vmatpush2.bf16.msra.mxu0 0
        %7967 = vmatprep.mubr.bf16.mxu0 0
        %7968 = vmatmul.mubr.bf16.gmra.mxu0 %v4202
        %v7969 = vpop.f32.mrf.mxu0
        %v7970 = vadd.f32 0.0, %v7969
        %v7971 = vpop.f32.mrf.mxu0
        %v7972 = vpop.f32.mrf.mxu0
        %v7973 = vpop.f32.mrf.mxu0
        %7974 = vdwg.mxu0
        %v7975 = vadd.f32 %v7926, %v7970
        %7976 = vrot.lane.b32.xlu0 %v7880, 126
        %v7977 = vpop.permute.xlu0 %7976
        %7978 = vrot.lane.b32.xlu0 %v7881, 126
        %v7979 = vpop.permute.xlu0 %7978
        %v7982 = vsel %vm620, %v7979, 0
        %7984 = vmatprep.subr.bf16.mxu0 0
        %7985 = vmatpush1.bf16.msra.mxu0 0
        %7986 = vmatprep.subr.bf16.mxu0 0
        %7987 = vmatpush1.bf16.msra.mxu0 0
        %7988 = vmatprep.subr.bf16.mxu0 0
        %7989 = vmatpush1.bf16.msra.mxu0 0
        %7990 = vmatprep.subr.bf16.mxu0 0
        %7991 = vmatpush1.bf16.msra.mxu0 0
        %7992 = vmatprep.subr.bf16.mxu0 0
        %7993 = vmatpush1.bf16.msra.mxu0 0
        %7994 = vmatprep.subr.bf16.mxu0 0
        %7995 = vmatpush1.bf16.msra.mxu0 0
        %7996 = vmatprep.subr.bf16.mxu0 0
        %7997 = vmatpush1.bf16.msra.mxu0 %v7982
        %7998 = vmatprep.subr.bf16.mxu0 0
        %7999 = vmatpush1.bf16.msra.mxu0 %v7977
        %8000 = vmatprep.subr.bf16.mxu0 0
        %8001 = vmatpush2.bf16.msra.mxu0 0
        %8002 = vmatprep.subr.bf16.mxu0 0
        %8003 = vmatpush2.bf16.msra.mxu0 0
        %8004 = vmatprep.subr.bf16.mxu0 0
        %8005 = vmatpush2.bf16.msra.mxu0 0
        %8006 = vmatprep.subr.bf16.mxu0 0
        %8007 = vmatpush2.bf16.msra.mxu0 0
        %8008 = vmatprep.subr.bf16.mxu0 0
        %8009 = vmatpush2.bf16.msra.mxu0 0
        %8010 = vmatprep.subr.bf16.mxu0 0
        %8011 = vmatpush2.bf16.msra.mxu0 0
        %8012 = vmatprep.subr.bf16.mxu0 0
        %8013 = vmatpush2.bf16.msra.mxu0 0
        %8014 = vmatprep.subr.bf16.mxu0 0
        %8015 = vmatpush2.bf16.msra.mxu0 0
        %8016 = vmatprep.mubr.bf16.mxu0 0
        %8017 = vmatmul.mubr.bf16.gmra.mxu0 %v4254
        %v8018 = vpop.f32.mrf.mxu0
        %v8019 = vadd.f32 0.0, %v8018
        %v8020 = vpop.f32.mrf.mxu0
        %v8021 = vpop.f32.mrf.mxu0
        %v8022 = vpop.f32.mrf.mxu0
        %8023 = vdwg.mxu0
        %v8024 = vadd.f32 %v7975, %v8019
        %v8025 = vmax.f32 %v8024, 0.0
        %v8026 = vpack.c.bf16 %v8025, %v8025
        %v8029 = vunpack.c.l.s4 1966171168
        %v8030 = vunpack.c.0.s8 %v8029
        %v8031 = vlaneseq
        %v8032 = vshrl.u32 %v8031, 7
        %v8033 = vsub.s32 %v8030, %v8032
        %v8034 = vrot.slane %v8026, %v8033
        %v8035 = vcombine.high %v8034, %v8034
        %v8037 = vunpack.c.l.s4 1966171168
        %v8038 = vunpack.c.0.s8 %v8037
        %v8039 = vlaneseq
        %v8040 = vshrl.u32 %v8039, 7
        %v8041 = vsub.s32 %v8038, %v8040
        %v8042 = vrot.slane %v8034, %v8041
        %v8044 = vunpack.c.l.s4 1966171168
        %v8045 = vunpack.c.0.s8 %v8044
        %v8046 = vlaneseq
        %v8047 = vshrl.u32 %v8046, 7
        %v8048 = vsub.s32 %v8045, %v8047
        %v8049 = vrot.slane %v8035, %v8048
        %v8050 = vcombine.high %v8042, %v8042
        %v8051 = vcombine.high %v8049, %v8049
        %v8052 = vunpack.i.l.s16 %v8042
        %v8053 = vunpack.i.h.s16 %v8042
        %v8054 = vunpack.i.l.s16 %v8049
        %v8055 = vunpack.i.h.s16 %v8049
        %v8056 = vunpack.i.l.s16 %v8050
        %v8057 = vunpack.i.h.s16 %v8050
        %v8058 = vunpack.i.l.s16 %v8051
        %v8059 = vunpack.i.h.s16 %v8051
        %v8060 = vpack.i.b16 %v8052, %v8052
        %v8061 = vpack.i.b16 %v8053, %v8053
        %v8062 = vpack.i.b16 %v8054, %v8054
        %v8063 = vpack.i.b16 %v8055, %v8055
        %v8064 = vpack.i.b16 %v8056, %v8056
        %v8065 = vpack.i.b16 %v8057, %v8057
        %v8066 = vpack.i.b16 %v8058, %v8058
        %v8067 = vpack.i.b16 %v8059, %v8059
        %v8069 = vunpack.c.l.s4 286326784
        %v8070 = vunpack.c.0.s8 %v8069
        %v8071 = vlaneseq
        %v8072 = vshrl.u32 %v8071, 7
        %v8073 = vsub.s32 %v8070, %v8072
        %v8074 = vrot.slane %v8060, %v8073
        %v8076 = vunpack.c.l.s4 286326784
        %v8077 = vunpack.c.0.s8 %v8076
        %v8078 = vlaneseq
        %v8079 = vshrl.u32 %v8078, 7
        %v8080 = vsub.s32 %v8077, %v8079
        %v8081 = vrot.slane %v8061, %v8080
        %v8083 = vunpack.c.l.s4 286326784
        %v8084 = vunpack.c.0.s8 %v8083
        %v8085 = vlaneseq
        %v8086 = vshrl.u32 %v8085, 7
        %v8087 = vsub.s32 %v8084, %v8086
        %v8088 = vrot.slane %v8062, %v8087
        %v8090 = vunpack.c.l.s4 286326784
        %v8091 = vunpack.c.0.s8 %v8090
        %v8092 = vlaneseq
        %v8093 = vshrl.u32 %v8092, 7
        %v8094 = vsub.s32 %v8091, %v8093
        %v8095 = vrot.slane %v8063, %v8094
        %v8097 = vunpack.c.l.s4 286326784
        %v8098 = vunpack.c.0.s8 %v8097
        %v8099 = vlaneseq
        %v8100 = vshrl.u32 %v8099, 7
        %v8101 = vsub.s32 %v8098, %v8100
        %v8102 = vrot.slane %v8064, %v8101
        %v8104 = vunpack.c.l.s4 286326784
        %v8105 = vunpack.c.0.s8 %v8104
        %v8106 = vlaneseq
        %v8107 = vshrl.u32 %v8106, 7
        %v8108 = vsub.s32 %v8105, %v8107
        %v8109 = vrot.slane %v8065, %v8108
        %v8111 = vunpack.c.l.s4 286326784
        %v8112 = vunpack.c.0.s8 %v8111
        %v8113 = vlaneseq
        %v8114 = vshrl.u32 %v8113, 7
        %v8115 = vsub.s32 %v8112, %v8114
        %v8116 = vrot.slane %v8066, %v8115
        %v8118 = vunpack.c.l.s4 286326784
        %v8119 = vunpack.c.0.s8 %v8118
        %v8120 = vlaneseq
        %v8121 = vshrl.u32 %v8120, 7
        %v8122 = vsub.s32 %v8119, %v8121
        %v8123 = vrot.slane %v8067, %v8122
        %v8132 = vld [vmem:[%s293 + $0x4] sm:$0x4]
        %v8133 = vsel %vm5846, %v8074, %v8132
        %8134 = vst [vmem:[%s293 + $0x4] sm:$0x4] %v8133
        %v8135 = vld [vmem:[%s293 + $0xc] sm:$0x4]
        %v8136 = vsel %vm5846, %v8081, %v8135
        %8137 = vst [vmem:[%s293 + $0xc] sm:$0x4] %v8136
        %v8138 = vld [vmem:[%s293 + $0x14] sm:$0x4]
        %v8139 = vsel %vm5846, %v8088, %v8138
        %8140 = vst [vmem:[%s293 + $0x14] sm:$0x4] %v8139
        %v8141 = vld [vmem:[%s293 + $0x1c] sm:$0x4]
        %v8142 = vsel %vm5846, %v8095, %v8141
        %8143 = vst [vmem:[%s293 + $0x1c] sm:$0x4] %v8142
        %v8144 = vld [vmem:[%s293 + $0x24] sm:$0x4]
        %v8145 = vsel %vm5846, %v8102, %v8144
        %8146 = vst [vmem:[%s293 + $0x24] sm:$0x4] %v8145
        %v8147 = vld [vmem:[%s293 + $0x2c] sm:$0x4]
        %v8148 = vsel %vm5846, %v8109, %v8147
        %8149 = vst [vmem:[%s293 + $0x2c] sm:$0x4] %v8148
        %v8150 = vld [vmem:[%s293 + $0x34] sm:$0x4]
        %v8151 = vsel %vm5846, %v8116, %v8150
        %8152 = vst [vmem:[%s293 + $0x34] sm:$0x4] %v8151
        %v8153 = vld [vmem:[%s293 + $0x3c] sm:$0x4]
        %v8154 = vsel %vm5846, %v8123, %v8153
        %8155 = vst [vmem:[%s293 + $0x3c] sm:$0x4] %v8154
        %v8156 = vld [vmem:[%s3494] sm:$0xf]
        %v8157 = vld [vmem:[%s3494 + $0x4] sm:$0xf]
        %v8158 = vld [vmem:[%s3494 + $0x8] sm:$0xf]
        %v8162 = vunpack.c.l.b16 %v8156
        %v8163 = vunpack.c.l.b16 %v8157
        %v8164 = vunpack.c.l.b16 %v8158
        %v8165 = vpack.c.b16 %v8163, %v8162
        %v8166 = vpack.c.b16 %v8164, %v8164
        %v8169 = vsel %vm620, %v8166, 0
        %8171 = vmatprep.subr.bf16.mxu0 0
        %8172 = vmatpush1.bf16.msra.mxu0 0
        %8173 = vmatprep.subr.bf16.mxu0 0
        %8174 = vmatpush1.bf16.msra.mxu0 0
        %8175 = vmatprep.subr.bf16.mxu0 0
        %8176 = vmatpush1.bf16.msra.mxu0 0
        %8177 = vmatprep.subr.bf16.mxu0 0
        %8178 = vmatpush1.bf16.msra.mxu0 0
        %8179 = vmatprep.subr.bf16.mxu0 0
        %8180 = vmatpush1.bf16.msra.mxu0 0
        %8181 = vmatprep.subr.bf16.mxu0 0
        %8182 = vmatpush1.bf16.msra.mxu0 0
        %8183 = vmatprep.subr.bf16.mxu0 0
        %8184 = vmatpush1.bf16.msra.mxu0 %v8169
        %8185 = vmatprep.subr.bf16.mxu0 0
        %8186 = vmatpush1.bf16.msra.mxu0 %v8165
        %8187 = vmatprep.subr.bf16.mxu0 0
        %8188 = vmatpush2.bf16.msra.mxu0 0
        %8189 = vmatprep.subr.bf16.mxu0 0
        %8190 = vmatpush2.bf16.msra.mxu0 0
        %8191 = vmatprep.subr.bf16.mxu0 0
        %8192 = vmatpush2.bf16.msra.mxu0 0
        %8193 = vmatprep.subr.bf16.mxu0 0
        %8194 = vmatpush2.bf16.msra.mxu0 0
        %8195 = vmatprep.subr.bf16.mxu0 0
        %8196 = vmatpush2.bf16.msra.mxu0 0
        %8197 = vmatprep.subr.bf16.mxu0 0
        %8198 = vmatpush2.bf16.msra.mxu0 0
        %8199 = vmatprep.subr.bf16.mxu0 0
        %8200 = vmatpush2.bf16.msra.mxu0 0
        %8201 = vmatprep.subr.bf16.mxu0 0
        %8202 = vmatpush2.bf16.msra.mxu0 0
        %8203 = vmatprep.mubr.bf16.mxu0 0
        %8204 = vmatmul.mubr.bf16.gmra.mxu0 %v4150
        %v8205 = vpop.f32.mrf.mxu0
        %v8206 = vadd.f32 0.0, %v8205
        %v8207 = vpop.f32.mrf.mxu0
        %v8208 = vpop.f32.mrf.mxu0
        %v8209 = vpop.f32.mrf.mxu0
        %8210 = vdwg.mxu0
        %v8211 = vadd.f32 %v330, %v8206
        %8212 = vrot.lane.b32.xlu0 %v8165, 127
        %v8213 = vpop.permute.xlu0 %8212
        %8214 = vrot.lane.b32.xlu0 %v8166, 127
        %v8215 = vpop.permute.xlu0 %8214
        %v8218 = vsel %vm620, %v8215, 0
        %8220 = vmatprep.subr.bf16.mxu0 0
        %8221 = vmatpush1.bf16.msra.mxu0 0
        %8222 = vmatprep.subr.bf16.mxu0 0
        %8223 = vmatpush1.bf16.msra.mxu0 0
        %8224 = vmatprep.subr.bf16.mxu0 0
        %8225 = vmatpush1.bf16.msra.mxu0 0
        %8226 = vmatprep.subr.bf16.mxu0 0
        %8227 = vmatpush1.bf16.msra.mxu0 0
        %8228 = vmatprep.subr.bf16.mxu0 0
        %8229 = vmatpush1.bf16.msra.mxu0 0
        %8230 = vmatprep.subr.bf16.mxu0 0
        %8231 = vmatpush1.bf16.msra.mxu0 0
        %8232 = vmatprep.subr.bf16.mxu0 0
        %8233 = vmatpush1.bf16.msra.mxu0 %v8218
        %8234 = vmatprep.subr.bf16.mxu0 0
        %8235 = vmatpush1.bf16.msra.mxu0 %v8213
        %8236 = vmatprep.subr.bf16.mxu0 0
        %8237 = vmatpush2.bf16.msra.mxu0 0
        %8238 = vmatprep.subr.bf16.mxu0 0
        %8239 = vmatpush2.bf16.msra.mxu0 0
        %8240 = vmatprep.subr.bf16.mxu0 0
        %8241 = vmatpush2.bf16.msra.mxu0 0
        %8242 = vmatprep.subr.bf16.mxu0 0
        %8243 = vmatpush2.bf16.msra.mxu0 0
        %8244 = vmatprep.subr.bf16.mxu0 0
        %8245 = vmatpush2.bf16.msra.mxu0 0
        %8246 = vmatprep.subr.bf16.mxu0 0
        %8247 = vmatpush2.bf16.msra.mxu0 0
        %8248 = vmatprep.subr.bf16.mxu0 0
        %8249 = vmatpush2.bf16.msra.mxu0 0
        %8250 = vmatprep.subr.bf16.mxu0 0
        %8251 = vmatpush2.bf16.msra.mxu0 0
        %8252 = vmatprep.mubr.bf16.mxu0 0
        %8253 = vmatmul.mubr.bf16.gmra.mxu0 %v4202
        %v8254 = vpop.f32.mrf.mxu0
        %v8255 = vadd.f32 0.0, %v8254
        %v8256 = vpop.f32.mrf.mxu0
        %v8257 = vpop.f32.mrf.mxu0
        %v8258 = vpop.f32.mrf.mxu0
        %8259 = vdwg.mxu0
        %v8260 = vadd.f32 %v8211, %v8255
        %8261 = vrot.lane.b32.xlu0 %v8165, 126
        %v8262 = vpop.permute.xlu0 %8261
        %8263 = vrot.lane.b32.xlu0 %v8166, 126
        %v8264 = vpop.permute.xlu0 %8263
        %v8267 = vsel %vm620, %v8264, 0
        %8269 = vmatprep.subr.bf16.mxu0 0
        %8270 = vmatpush1.bf16.msra.mxu0 0
        %8271 = vmatprep.subr.bf16.mxu0 0
        %8272 = vmatpush1.bf16.msra.mxu0 0
        %8273 = vmatprep.subr.bf16.mxu0 0
        %8274 = vmatpush1.bf16.msra.mxu0 0
        %8275 = vmatprep.subr.bf16.mxu0 0
        %8276 = vmatpush1.bf16.msra.mxu0 0
        %8277 = vmatprep.subr.bf16.mxu0 0
        %8278 = vmatpush1.bf16.msra.mxu0 0
        %8279 = vmatprep.subr.bf16.mxu0 0
        %8280 = vmatpush1.bf16.msra.mxu0 0
        %8281 = vmatprep.subr.bf16.mxu0 0
        %8282 = vmatpush1.bf16.msra.mxu0 %v8267
        %8283 = vmatprep.subr.bf16.mxu0 0
        %8284 = vmatpush1.bf16.msra.mxu0 %v8262
        %8285 = vmatprep.subr.bf16.mxu0 0
        %8286 = vmatpush2.bf16.msra.mxu0 0
        %8287 = vmatprep.subr.bf16.mxu0 0
        %8288 = vmatpush2.bf16.msra.mxu0 0
        %8289 = vmatprep.subr.bf16.mxu0 0
        %8290 = vmatpush2.bf16.msra.mxu0 0
        %8291 = vmatprep.subr.bf16.mxu0 0
        %8292 = vmatpush2.bf16.msra.mxu0 0
        %8293 = vmatprep.subr.bf16.mxu0 0
        %8294 = vmatpush2.bf16.msra.mxu0 0
        %8295 = vmatprep.subr.bf16.mxu0 0
        %8296 = vmatpush2.bf16.msra.mxu0 0
        %8297 = vmatprep.subr.bf16.mxu0 0
        %8298 = vmatpush2.bf16.msra.mxu0 0
        %8299 = vmatprep.subr.bf16.mxu0 0
        %8300 = vmatpush2.bf16.msra.mxu0 0
        %8301 = vmatprep.mubr.bf16.mxu0 0
        %8302 = vmatmul.mubr.bf16.gmra.mxu0 %v4254
        %v8303 = vpop.f32.mrf.mxu0
        %v8304 = vadd.f32 0.0, %v8303
        %v8305 = vpop.f32.mrf.mxu0
        %v8306 = vpop.f32.mrf.mxu0
        %v8307 = vpop.f32.mrf.mxu0
        %8308 = vdwg.mxu0
        %v8309 = vadd.f32 %v8260, %v8304
        %v8310 = vmax.f32 %v8309, 0.0
        %v8311 = vpack.c.bf16 %v8310, %v8310
        %v8314 = vunpack.c.l.s4 1966171168
        %v8315 = vunpack.c.0.s8 %v8314
        %v8316 = vlaneseq
        %v8317 = vshrl.u32 %v8316, 7
        %v8318 = vsub.s32 %v8315, %v8317
        %v8319 = vrot.slane %v8311, %v8318
        %v8320 = vcombine.high %v8319, %v8319
        %v8322 = vunpack.c.l.s4 1966171168
        %v8323 = vunpack.c.0.s8 %v8322
        %v8324 = vlaneseq
        %v8325 = vshrl.u32 %v8324, 7
        %v8326 = vsub.s32 %v8323, %v8325
        %v8327 = vrot.slane %v8319, %v8326
        %v8329 = vunpack.c.l.s4 1966171168
        %v8330 = vunpack.c.0.s8 %v8329
        %v8331 = vlaneseq
        %v8332 = vshrl.u32 %v8331, 7
        %v8333 = vsub.s32 %v8330, %v8332
        %v8334 = vrot.slane %v8320, %v8333
        %v8335 = vcombine.high %v8327, %v8327
        %v8336 = vcombine.high %v8334, %v8334
        %v8337 = vunpack.i.l.s16 %v8327
        %v8338 = vunpack.i.h.s16 %v8327
        %v8339 = vunpack.i.l.s16 %v8334
        %v8340 = vunpack.i.h.s16 %v8334
        %v8341 = vunpack.i.l.s16 %v8335
        %v8342 = vunpack.i.h.s16 %v8335
        %v8343 = vunpack.i.l.s16 %v8336
        %v8344 = vunpack.i.h.s16 %v8336
        %v8345 = vpack.i.b16 %v8337, %v8337
        %v8346 = vpack.i.b16 %v8338, %v8338
        %v8347 = vpack.i.b16 %v8339, %v8339
        %v8348 = vpack.i.b16 %v8340, %v8340
        %v8349 = vpack.i.b16 %v8341, %v8341
        %v8350 = vpack.i.b16 %v8342, %v8342
        %v8351 = vpack.i.b16 %v8343, %v8343
        %v8352 = vpack.i.b16 %v8344, %v8344
        %v8354 = vunpack.c.l.s4 286326784
        %v8355 = vunpack.c.0.s8 %v8354
        %v8356 = vlaneseq
        %v8357 = vshrl.u32 %v8356, 7
        %v8358 = vsub.s32 %v8355, %v8357
        %v8359 = vrot.slane %v8345, %v8358
        %v8361 = vunpack.c.l.s4 286326784
        %v8362 = vunpack.c.0.s8 %v8361
        %v8363 = vlaneseq
        %v8364 = vshrl.u32 %v8363, 7
        %v8365 = vsub.s32 %v8362, %v8364
        %v8366 = vrot.slane %v8346, %v8365
        %v8368 = vunpack.c.l.s4 286326784
        %v8369 = vunpack.c.0.s8 %v8368
        %v8370 = vlaneseq
        %v8371 = vshrl.u32 %v8370, 7
        %v8372 = vsub.s32 %v8369, %v8371
        %v8373 = vrot.slane %v8347, %v8372
        %v8375 = vunpack.c.l.s4 286326784
        %v8376 = vunpack.c.0.s8 %v8375
        %v8377 = vlaneseq
        %v8378 = vshrl.u32 %v8377, 7
        %v8379 = vsub.s32 %v8376, %v8378
        %v8380 = vrot.slane %v8348, %v8379
        %v8382 = vunpack.c.l.s4 286326784
        %v8383 = vunpack.c.0.s8 %v8382
        %v8384 = vlaneseq
        %v8385 = vshrl.u32 %v8384, 7
        %v8386 = vsub.s32 %v8383, %v8385
        %v8387 = vrot.slane %v8349, %v8386
        %v8389 = vunpack.c.l.s4 286326784
        %v8390 = vunpack.c.0.s8 %v8389
        %v8391 = vlaneseq
        %v8392 = vshrl.u32 %v8391, 7
        %v8393 = vsub.s32 %v8390, %v8392
        %v8394 = vrot.slane %v8350, %v8393
        %v8396 = vunpack.c.l.s4 286326784
        %v8397 = vunpack.c.0.s8 %v8396
        %v8398 = vlaneseq
        %v8399 = vshrl.u32 %v8398, 7
        %v8400 = vsub.s32 %v8397, %v8399
        %v8401 = vrot.slane %v8351, %v8400
        %v8403 = vunpack.c.l.s4 286326784
        %v8404 = vunpack.c.0.s8 %v8403
        %v8405 = vlaneseq
        %v8406 = vshrl.u32 %v8405, 7
        %v8407 = vsub.s32 %v8404, %v8406
        %v8408 = vrot.slane %v8352, %v8407
        %v8417 = vld [vmem:[%s293 + $0x4] sm:$0x8]
        %v8418 = vsel %vm6134, %v8359, %v8417
        %8419 = vst [vmem:[%s293 + $0x4] sm:$0x8] %v8418
        %v8420 = vld [vmem:[%s293 + $0xc] sm:$0x8]
        %v8421 = vsel %vm6134, %v8366, %v8420
        %8422 = vst [vmem:[%s293 + $0xc] sm:$0x8] %v8421
        %v8423 = vld [vmem:[%s293 + $0x14] sm:$0x8]
        %v8424 = vsel %vm6134, %v8373, %v8423
        %8425 = vst [vmem:[%s293 + $0x14] sm:$0x8] %v8424
        %v8426 = vld [vmem:[%s293 + $0x1c] sm:$0x8]
        %v8427 = vsel %vm6134, %v8380, %v8426
        %8428 = vst [vmem:[%s293 + $0x1c] sm:$0x8] %v8427
        %v8429 = vld [vmem:[%s293 + $0x24] sm:$0x8]
        %v8430 = vsel %vm6134, %v8387, %v8429
        %8431 = vst [vmem:[%s293 + $0x24] sm:$0x8] %v8430
        %v8432 = vld [vmem:[%s293 + $0x2c] sm:$0x8]
        %v8433 = vsel %vm6134, %v8394, %v8432
        %8434 = vst [vmem:[%s293 + $0x2c] sm:$0x8] %v8433
        %v8435 = vld [vmem:[%s293 + $0x34] sm:$0x8]
        %v8436 = vsel %vm6134, %v8401, %v8435
        %8437 = vst [vmem:[%s293 + $0x34] sm:$0x8] %v8436
        %v8438 = vld [vmem:[%s293 + $0x3c] sm:$0x8]
        %v8439 = vsel %vm6134, %v8408, %v8438
        %8440 = vst [vmem:[%s293 + $0x3c] sm:$0x8] %v8439
        %v8441 = vld [vmem:[%s3701] sm:$0xf]
        %v8442 = vld [vmem:[%s3701 + $0x4] sm:$0xf]
        %v8443 = vld [vmem:[%s3701 + $0x8] sm:$0xf]
        %v8447 = vunpack.c.l.b16 %v8441
        %v8448 = vunpack.c.l.b16 %v8442
        %v8449 = vunpack.c.l.b16 %v8443
        %v8450 = vpack.c.b16 %v8448, %v8447
        %v8451 = vpack.c.b16 %v8449, %v8449
        %v8454 = vsel %vm620, %v8451, 0
        %8456 = vmatprep.subr.bf16.mxu0 0
        %8457 = vmatpush1.bf16.msra.mxu0 0
        %8458 = vmatprep.subr.bf16.mxu0 0
        %8459 = vmatpush1.bf16.msra.mxu0 0
        %8460 = vmatprep.subr.bf16.mxu0 0
        %8461 = vmatpush1.bf16.msra.mxu0 0
        %8462 = vmatprep.subr.bf16.mxu0 0
        %8463 = vmatpush1.bf16.msra.mxu0 0
        %8464 = vmatprep.subr.bf16.mxu0 0
        %8465 = vmatpush1.bf16.msra.mxu0 0
        %8466 = vmatprep.subr.bf16.mxu0 0
        %8467 = vmatpush1.bf16.msra.mxu0 0
        %8468 = vmatprep.subr.bf16.mxu0 0
        %8469 = vmatpush1.bf16.msra.mxu0 %v8454
        %8470 = vmatprep.subr.bf16.mxu0 0
        %8471 = vmatpush1.bf16.msra.mxu0 %v8450
        %8472 = vmatprep.subr.bf16.mxu0 0
        %8473 = vmatpush2.bf16.msra.mxu0 0
        %8474 = vmatprep.subr.bf16.mxu0 0
        %8475 = vmatpush2.bf16.msra.mxu0 0
        %8476 = vmatprep.subr.bf16.mxu0 0
        %8477 = vmatpush2.bf16.msra.mxu0 0
        %8478 = vmatprep.subr.bf16.mxu0 0
        %8479 = vmatpush2.bf16.msra.mxu0 0
        %8480 = vmatprep.subr.bf16.mxu0 0
        %8481 = vmatpush2.bf16.msra.mxu0 0
        %8482 = vmatprep.subr.bf16.mxu0 0
        %8483 = vmatpush2.bf16.msra.mxu0 0
        %8484 = vmatprep.subr.bf16.mxu0 0
        %8485 = vmatpush2.bf16.msra.mxu0 0
        %8486 = vmatprep.subr.bf16.mxu0 0
        %8487 = vmatpush2.bf16.msra.mxu0 0
        %8488 = vmatprep.mubr.bf16.mxu0 0
        %8489 = vmatmul.mubr.bf16.gmra.mxu0 %v4150
        %v8490 = vpop.f32.mrf.mxu0
        %v8491 = vadd.f32 0.0, %v8490
        %v8492 = vpop.f32.mrf.mxu0
        %v8493 = vpop.f32.mrf.mxu0
        %v8494 = vpop.f32.mrf.mxu0
        %8495 = vdwg.mxu0
        %v8496 = vadd.f32 %v330, %v8491
        %8497 = vrot.lane.b32.xlu0 %v8450, 127
        %v8498 = vpop.permute.xlu0 %8497
        %8499 = vrot.lane.b32.xlu0 %v8451, 127
        %v8500 = vpop.permute.xlu0 %8499
        %v8503 = vsel %vm620, %v8500, 0
        %8505 = vmatprep.subr.bf16.mxu0 0
        %8506 = vmatpush1.bf16.msra.mxu0 0
        %8507 = vmatprep.subr.bf16.mxu0 0
        %8508 = vmatpush1.bf16.msra.mxu0 0
        %8509 = vmatprep.subr.bf16.mxu0 0
        %8510 = vmatpush1.bf16.msra.mxu0 0
        %8511 = vmatprep.subr.bf16.mxu0 0
        %8512 = vmatpush1.bf16.msra.mxu0 0
        %8513 = vmatprep.subr.bf16.mxu0 0
        %8514 = vmatpush1.bf16.msra.mxu0 0
        %8515 = vmatprep.subr.bf16.mxu0 0
        %8516 = vmatpush1.bf16.msra.mxu0 0
        %8517 = vmatprep.subr.bf16.mxu0 0
        %8518 = vmatpush1.bf16.msra.mxu0 %v8503
        %8519 = vmatprep.subr.bf16.mxu0 0
        %8520 = vmatpush1.bf16.msra.mxu0 %v8498
        %8521 = vmatprep.subr.bf16.mxu0 0
        %8522 = vmatpush2.bf16.msra.mxu0 0
        %8523 = vmatprep.subr.bf16.mxu0 0
        %8524 = vmatpush2.bf16.msra.mxu0 0
        %8525 = vmatprep.subr.bf16.mxu0 0
        %8526 = vmatpush2.bf16.msra.mxu0 0
        %8527 = vmatprep.subr.bf16.mxu0 0
        %8528 = vmatpush2.bf16.msra.mxu0 0
        %8529 = vmatprep.subr.bf16.mxu0 0
        %8530 = vmatpush2.bf16.msra.mxu0 0
        %8531 = vmatprep.subr.bf16.mxu0 0
        %8532 = vmatpush2.bf16.msra.mxu0 0
        %8533 = vmatprep.subr.bf16.mxu0 0
        %8534 = vmatpush2.bf16.msra.mxu0 0
        %8535 = vmatprep.subr.bf16.mxu0 0
        %8536 = vmatpush2.bf16.msra.mxu0 0
        %8537 = vmatprep.mubr.bf16.mxu0 0
        %8538 = vmatmul.mubr.bf16.gmra.mxu0 %v4202
        %v8539 = vpop.f32.mrf.mxu0
        %v8540 = vadd.f32 0.0, %v8539
        %v8541 = vpop.f32.mrf.mxu0
        %v8542 = vpop.f32.mrf.mxu0
        %v8543 = vpop.f32.mrf.mxu0
        %8544 = vdwg.mxu0
        %v8545 = vadd.f32 %v8496, %v8540
        %8546 = vrot.lane.b32.xlu0 %v8450, 126
        %v8547 = vpop.permute.xlu0 %8546
        %8548 = vrot.lane.b32.xlu0 %v8451, 126
        %v8549 = vpop.permute.xlu0 %8548
        %v8552 = vsel %vm620, %v8549, 0
        %8554 = vmatprep.subr.bf16.mxu0 0
        %8555 = vmatpush1.bf16.msra.mxu0 0
        %8556 = vmatprep.subr.bf16.mxu0 0
        %8557 = vmatpush1.bf16.msra.mxu0 0
        %8558 = vmatprep.subr.bf16.mxu0 0
        %8559 = vmatpush1.bf16.msra.mxu0 0
        %8560 = vmatprep.subr.bf16.mxu0 0
        %8561 = vmatpush1.bf16.msra.mxu0 0
        %8562 = vmatprep.subr.bf16.mxu0 0
        %8563 = vmatpush1.bf16.msra.mxu0 0
        %8564 = vmatprep.subr.bf16.mxu0 0
        %8565 = vmatpush1.bf16.msra.mxu0 0
        %8566 = vmatprep.subr.bf16.mxu0 0
        %8567 = vmatpush1.bf16.msra.mxu0 %v8552
        %8568 = vmatprep.subr.bf16.mxu0 0
        %8569 = vmatpush1.bf16.msra.mxu0 %v8547
        %8570 = vmatprep.subr.bf16.mxu0 0
        %8571 = vmatpush2.bf16.msra.mxu0 0
        %8572 = vmatprep.subr.bf16.mxu0 0
        %8573 = vmatpush2.bf16.msra.mxu0 0
        %8574 = vmatprep.subr.bf16.mxu0 0
        %8575 = vmatpush2.bf16.msra.mxu0 0
        %8576 = vmatprep.subr.bf16.mxu0 0
        %8577 = vmatpush2.bf16.msra.mxu0 0
        %8578 = vmatprep.subr.bf16.mxu0 0
        %8579 = vmatpush2.bf16.msra.mxu0 0
        %8580 = vmatprep.subr.bf16.mxu0 0
        %8581 = vmatpush2.bf16.msra.mxu0 0
        %8582 = vmatprep.subr.bf16.mxu0 0
        %8583 = vmatpush2.bf16.msra.mxu0 0
        %8584 = vmatprep.subr.bf16.mxu0 0
        %8585 = vmatpush2.bf16.msra.mxu0 0
        %8586 = vmatprep.mubr.bf16.mxu0 0
        %8587 = vmatmul.mubr.bf16.gmra.mxu0 %v4254
        %v8588 = vpop.f32.mrf.mxu0
        %v8589 = vadd.f32 0.0, %v8588
        %v8590 = vpop.f32.mrf.mxu0
        %v8591 = vpop.f32.mrf.mxu0
        %v8592 = vpop.f32.mrf.mxu0
        %8593 = vdwg.mxu0
        %v8594 = vadd.f32 %v8545, %v8589
        %v8595 = vmax.f32 %v8594, 0.0
        %v8596 = vpack.c.bf16 %v8595, %v8595
        %v8599 = vunpack.c.l.s4 1966171168
        %v8600 = vunpack.c.0.s8 %v8599
        %v8601 = vlaneseq
        %v8602 = vshrl.u32 %v8601, 7
        %v8603 = vsub.s32 %v8600, %v8602
        %v8604 = vrot.slane %v8596, %v8603
        %v8605 = vcombine.high %v8604, %v8604
        %v8607 = vunpack.c.l.s4 1966171168
        %v8608 = vunpack.c.0.s8 %v8607
        %v8609 = vlaneseq
        %v8610 = vshrl.u32 %v8609, 7
        %v8611 = vsub.s32 %v8608, %v8610
        %v8612 = vrot.slane %v8604, %v8611
        %v8614 = vunpack.c.l.s4 1966171168
        %v8615 = vunpack.c.0.s8 %v8614
        %v8616 = vlaneseq
        %v8617 = vshrl.u32 %v8616, 7
        %v8618 = vsub.s32 %v8615, %v8617
        %v8619 = vrot.slane %v8605, %v8618
        %v8620 = vcombine.high %v8612, %v8612
        %v8621 = vcombine.high %v8619, %v8619
        %v8622 = vunpack.i.l.s16 %v8612
        %v8623 = vunpack.i.h.s16 %v8612
        %v8624 = vunpack.i.l.s16 %v8619
        %v8625 = vunpack.i.h.s16 %v8619
        %v8626 = vunpack.i.l.s16 %v8620
        %v8627 = vunpack.i.h.s16 %v8620
        %v8628 = vunpack.i.l.s16 %v8621
        %v8629 = vunpack.i.h.s16 %v8621
        %v8630 = vpack.i.b16 %v8622, %v8622
        %v8631 = vpack.i.b16 %v8623, %v8623
        %v8632 = vpack.i.b16 %v8624, %v8624
        %v8633 = vpack.i.b16 %v8625, %v8625
        %v8634 = vpack.i.b16 %v8626, %v8626
        %v8635 = vpack.i.b16 %v8627, %v8627
        %v8636 = vpack.i.b16 %v8628, %v8628
        %v8637 = vpack.i.b16 %v8629, %v8629
        %v8639 = vunpack.c.l.s4 286326784
        %v8640 = vunpack.c.0.s8 %v8639
        %v8641 = vlaneseq
        %v8642 = vshrl.u32 %v8641, 7
        %v8643 = vsub.s32 %v8640, %v8642
        %v8644 = vrot.slane %v8630, %v8643
        %v8646 = vunpack.c.l.s4 286326784
        %v8647 = vunpack.c.0.s8 %v8646
        %v8648 = vlaneseq
        %v8649 = vshrl.u32 %v8648, 7
        %v8650 = vsub.s32 %v8647, %v8649
        %v8651 = vrot.slane %v8631, %v8650
        %v8653 = vunpack.c.l.s4 286326784
        %v8654 = vunpack.c.0.s8 %v8653
        %v8655 = vlaneseq
        %v8656 = vshrl.u32 %v8655, 7
        %v8657 = vsub.s32 %v8654, %v8656
        %v8658 = vrot.slane %v8632, %v8657
        %v8660 = vunpack.c.l.s4 286326784
        %v8661 = vunpack.c.0.s8 %v8660
        %v8662 = vlaneseq
        %v8663 = vshrl.u32 %v8662, 7
        %v8664 = vsub.s32 %v8661, %v8663
        %v8665 = vrot.slane %v8633, %v8664
        %v8667 = vunpack.c.l.s4 286326784
        %v8668 = vunpack.c.0.s8 %v8667
        %v8669 = vlaneseq
        %v8670 = vshrl.u32 %v8669, 7
        %v8671 = vsub.s32 %v8668, %v8670
        %v8672 = vrot.slane %v8634, %v8671
        %v8674 = vunpack.c.l.s4 286326784
        %v8675 = vunpack.c.0.s8 %v8674
        %v8676 = vlaneseq
        %v8677 = vshrl.u32 %v8676, 7
        %v8678 = vsub.s32 %v8675, %v8677
        %v8679 = vrot.slane %v8635, %v8678
        %v8681 = vunpack.c.l.s4 286326784
        %v8682 = vunpack.c.0.s8 %v8681
        %v8683 = vlaneseq
        %v8684 = vshrl.u32 %v8683, 7
        %v8685 = vsub.s32 %v8682, %v8684
        %v8686 = vrot.slane %v8636, %v8685
        %v8688 = vunpack.c.l.s4 286326784
        %v8689 = vunpack.c.0.s8 %v8688
        %v8690 = vlaneseq
        %v8691 = vshrl.u32 %v8690, 7
        %v8692 = vsub.s32 %v8689, %v8691
        %v8693 = vrot.slane %v8637, %v8692
        %v8702 = vld [vmem:[%s293 + $0x4] sm:$0x8]
        %v8703 = vsel %vm6421, %v8644, %v8702
        %8704 = vst [vmem:[%s293 + $0x4] sm:$0x8] %v8703
        %v8705 = vld [vmem:[%s293 + $0xc] sm:$0x8]
        %v8706 = vsel %vm6421, %v8651, %v8705
        %8707 = vst [vmem:[%s293 + $0xc] sm:$0x8] %v8706
        %v8708 = vld [vmem:[%s293 + $0x14] sm:$0x8]
        %v8709 = vsel %vm6421, %v8658, %v8708
        %8710 = vst [vmem:[%s293 + $0x14] sm:$0x8] %v8709
        %v8711 = vld [vmem:[%s293 + $0x1c] sm:$0x8]
        %v8712 = vsel %vm6421, %v8665, %v8711
        %8713 = vst [vmem:[%s293 + $0x1c] sm:$0x8] %v8712
        %v8714 = vld [vmem:[%s293 + $0x24] sm:$0x8]
        %v8715 = vsel %vm6421, %v8672, %v8714
        %8716 = vst [vmem:[%s293 + $0x24] sm:$0x8] %v8715
        %v8717 = vld [vmem:[%s293 + $0x2c] sm:$0x8]
        %v8718 = vsel %vm6421, %v8679, %v8717
        %8719 = vst [vmem:[%s293 + $0x2c] sm:$0x8] %v8718
        %v8720 = vld [vmem:[%s293 + $0x34] sm:$0x8]
        %v8721 = vsel %vm6421, %v8686, %v8720
        %8722 = vst [vmem:[%s293 + $0x34] sm:$0x8] %v8721
        %v8723 = vld [vmem:[%s293 + $0x3c] sm:$0x8]
        %v8724 = vsel %vm6421, %v8693, %v8723
        %8725 = vst [vmem:[%s293 + $0x3c] sm:$0x8] %v8724
        %s8726 = sand.u32 %s182, 1
        %s8727 = scalar_lea.sflag [#allocation4], %s8726
        %s8728 = sand.u32 %s182, 1
        %s8729 = smul.addr %s8728, 64
        %s8730 = scalar_lea.vmem [#allocation3], %s8729
        // Predicated region
        $region53: #{_lambda_.1} parent=43 // pred_check
          %p8731 = pneg %p192
        $region54: #{_lambda_.1} parent=43 // pred_check_branch
          %8733 = sbr.rel (%p8731) target = $region56
        $region55: #{_lambda_.1} parent=43 // pred_region
          #allocation6 [shape = 'u32[6]{0}', space=smem, size = 0x18, scoped, tag = 'DMA stride descriptor']
          %s8734 = smul.u32 2, %s25
          %s8736 = ssub.s32 1024, 1024
          %8737 = vsyncadd %s8727, %s8736
          %s8738 = smul.addr %s24, 32
          %s8739 = sadd.s32 %s8734, %s8738
          %s8740 = smul.addr %s8739, 64
          %s8741 = scalar_lea.hbm %s6, %s8740
          %s8743 = sshll.u32 1, 14
          %s8744 = sxor.u32 4294967295, %s8743
          %s8747 = sshll.u32 7, 18
          %s8748 = sxor.u32 4294967295, %s8747
          %s8749 = sand.u32 0, %s8748
          %s8751 = sor.u32 %s8749, 0
          %s8752 = sshll.u32 %s8730, 4
          %s8753 = int_to_ptr.vmem [resolvable:$true] %s8752
          %8759 = sst [smem:[#allocation6]] 128
          %s8760 = scalar_lea.smem [#allocation6], 1
          %8761 = sst [smem:[%s8760]] 256
          %s8762 = scalar_lea.smem [#allocation6], 2
          %8763 = sst [smem:[%s8762]] 2
          %s8764 = scalar_lea.smem [#allocation6], 3
          %8765 = sst [smem:[%s8764]] 64
          %s8766 = scalar_lea.smem [#allocation6], 4
          %8767 = sst [smem:[%s8766]] 64
          %s8768 = scalar_lea.smem [#allocation6], 5
          %8769 = sst [smem:[%s8768]] 4
          %8771 = dma.general %s8753, 1024, %s8741, %s8727, 131072, [#allocation6], %s8751, 0
        $region56: #{_lambda_.1} parent=43 // pred_fallthru
          _
      $region44: #{_lambda_.1} parent=5 // pred_fallthru
        _
      %p8772 = scmp.le.s32.totalorder 2, %s15
      // Predicated region
      $region57: #{_lambda_.1} parent=5 // pred_check
        %p8773 = pneg %p8772
      $region58: #{_lambda_.1} parent=5 // pred_check_branch
        %8775 = sbr.rel (%p8773) target = $region60
      $region59: #{_lambda_.1} parent=5 // pred_region
        %s8776 = ssub.s32 %s15, 2
        // Predicated region
        $region61: #{_lambda_.1} parent=59 // pred_check
          %p8777 = pneg %p198
        $region62: #{_lambda_.1} parent=59 // pred_check_branch
          %8779 = sbr.rel (%p8777) target = $region64
        $region63: #{_lambda_.1} parent=59 // pred_region
          %s8780 = sand.u32 %s183, 1
          %s8781 = scalar_lea.sflag [#allocation4], %s8780
          %s8782 = sand.u32 %s183, 1
          %s8783 = smul.addr %s8782, 64
          %s8784 = scalar_lea.vmem [#allocation3], %s8783
          %8785 = dma.done %s8781, 1024
        $region64: #{_lambda_.1} parent=59 // pred_fallthru
          _
      $region60: #{_lambda_.1} parent=5 // pred_fallthru
        _
    $region6: #{_lambda_.1} parent=1 // loop_footer
      %s19 = sadd.s32 1, %s15
    $region7: #{_lambda_.1} parent=1 // loop_footer_branch
      %14 = sbr.rel target = $region3
    $region8: #{_lambda_.1} parent=1 // loop_exit
      _
    %8786 = vsyncpa [#allocation4], 1
    %s8787 = scalar_lea.sflag [#allocation4], 1
    %8788 = vsyncpa %s8787, 1

</llo_original>
